<compile_context>
chip_gen: v6e
topology: v6e:2x2x1
jax: 0.10.0
libtpu: 0.0.40
codegen_flags: <defaults>
</compile_context>

<pallas_src>
import jax
import jax.numpy as jnp
from jax import lax
from jax.experimental import pallas as pl
from jax.experimental.pallas import tpu as pltpu

EPS = 1e-12  # torch F.normalize default eps


def _l2_normalize_kernel(x_ref, o_ref):
    # x_ref: (tm, Dp) tile in VMEM. Rows are independent; reduce over lanes (dim=1).
    x = x_ref[...]
    xf = x.astype(jnp.float32)
    # Row-wise sum of squares (XLU lane reduction). On v7x with small D / bf16 input this
    # could move to the otherwise-idle MXU (xf^2 @ ones(D,128)) if a bundle dump shows the
    # XLU slot binding; kept on the XLU here since v5e/v6e are clearly HBM-bound.
    sq_sum = jnp.sum(xf * xf, axis=-1, keepdims=True)
    # rsqrt(max(sum_sq, eps^2)) == 1 / clamp_min(norm, eps): EUP rsqrt + one VPU multiply.
    inv = lax.rsqrt(jnp.maximum(sq_sum, EPS * EPS))
    if x.dtype == jnp.float32:
        o_ref[...] = xf * inv
    else:
        # Keep the (large) scaling multiply in the narrow input dtype; only the
        # reduction above is f32.
        o_ref[...] = (x * inv.astype(x.dtype)).astype(o_ref.dtype)


def _jnp_fallback(x):
    xf = x.astype(jnp.float32)
    sq_sum = jnp.sum(xf * xf, axis=1, keepdims=True)
    inv = lax.rsqrt(jnp.maximum(sq_sum, EPS * EPS))
    if x.dtype == jnp.float32:
        return xf * inv
    return (x * inv.astype(x.dtype)).astype(x.dtype)


def _round_up(v, m):
    return ((v + m - 1) // m) * m


def l2_normalize_embedding(x, *, tm=None, small_input_bytes=256 << 10):
    """Pallas TPU implementation of torch.nn.functional.normalize(x) (p=2, dim=1, eps=1e-12)."""
    if x.ndim != 2:
        raise ValueError(f"expected a 2-D (N, D) embedding batch, got shape {x.shape}")
    if not jnp.issubdtype(x.dtype, jnp.floating):
        raise TypeError(f"l2 normalization requires a floating dtype, got {x.dtype}")

    N, D = x.shape
    itemsize = jnp.dtype(x.dtype).itemsize

    # Tiny inputs: kernel dispatch + DMA setup (~µs) dwarfs the work; let XLA fuse it.
    if N * D * itemsize < small_input_bytes:
        return _jnp_fallback(x)

    # Sublane packing per dtype (f32: 8, bf16/f16: 16).
    sublane = {4: 8, 2: 16}.get(itemsize, 8)

    # Lane-dense output: pad D to a multiple of 128 (zeros don't change row norms).
    Dp = _round_up(D, 128)
    xp = x if Dp == D else jnp.pad(x, ((0, 0), (0, Dp - D)))

    # Generation-aware VMEM budget: ~3/4 of per-core physical VMEM, capped at 64 MiB
    # (v5e/v6e: 128 MiB -> 64 MiB limit; v7x: 64 MiB -> 48 MiB limit).
    try:
        vmem_cap = int(pltpu.get_tpu_info().vmem_capacity_bytes)
    except Exception:
        vmem_cap = 64 << 20
    vmem_limit = min(64 << 20, (vmem_cap * 3) // 4)

    # Detect v7x (2 TensorCores / chip); v5e / v6e have a single TC.
    try:
        kind = jax.devices()[0].device_kind.lower()
    except Exception:
        kind = ""
    n_tc = 2 if ("v7" in kind or "tpu7" in kind) else 1

    if tm is None:
        # 2 in + 2 out double-buffered (tm, Dp) tiles; target ~4 MiB per buffer (and at
        # most a quarter of the compiler limit across the 4 buffers), leaving the rest of
        # the limit for in-kernel f32 temporaries / compiler scratch.
        per_buffer_bytes = max(Dp * itemsize * sublane, min(4 << 20, vmem_limit // 8))
        tm = max(sublane, (per_buffer_bytes // (Dp * itemsize)) // sublane * sublane)
        if n_tc > 1:
            # Keep >= 2*n_tc grid steps so both v7x TensorCores stream.
            tm = min(tm, max(sublane, _round_up(-(-N // (2 * n_tc)), sublane)))
    else:
        tm = max(sublane, (tm // sublane) * sublane)

    if N <= tm:
        tm = N  # single full-array block (full array dims are always a legal block shape)

    num_blocks = pl.cdiv(N, tm)
    if n_tc > 1 and num_blocks >= 2:
        dim_sem = (pltpu.CORE_PARALLEL,)  # split row tiles across v7x's 2 TensorCores
    else:
        dim_sem = ("parallel",)           # neutral on single-TC v5e/v6e

    out = pl.pallas_call(
        _l2_normalize_kernel,
        out_shape=jax.ShapeDtypeStruct((N, Dp), x.dtype),
        grid=(num_blocks,),
        in_specs=[pl.BlockSpec((tm, Dp), lambda i: (i, 0))],
        out_specs=pl.BlockSpec((tm, Dp), lambda i: (i, 0)),
        compiler_params=pltpu.CompilerParams(
            dimension_semantics=dim_sem,
            vmem_limit_bytes=vmem_limit,
        ),
    )(xp)

    return out if Dp == D else out[:, :D]


def _ref(x):
    xf = x.astype(jnp.float32)
    n = jnp.maximum(jnp.linalg.norm(xf, axis=1, keepdims=True), EPS)
    return (xf / n).astype(x.dtype)


if __name__ == "__main__":
    key = jax.random.PRNGKey(0)
    k0, k1, k2, k3 = jax.random.split(key, 4)

    # 1) Small embedding batch matching the module's forward (tiny -> fused jnp fallback).
    x0 = jax.random.normal(k0, (16, 256), dtype=jnp.float32)
    o0 = jax.block_until_ready(l2_normalize_embedding(x0))
    assert o0.shape == x0.shape and o0.dtype == x0.dtype
    assert jnp.allclose(o0, _ref(x0), atol=1e-6, rtol=1e-5)

    # 2) Large enough for the Pallas path with default (byte-capped) tiling, multi-step grid.
    x1 = jax.random.normal(k1, (8192, 256), dtype=jnp.float32)
    o1 = jax.block_until_ready(l2_normalize_embedding(x1))
    assert o1.shape == x1.shape and o1.dtype == x1.dtype
    assert jnp.allclose(o1, _ref(x1), atol=1e-6, rtol=1e-5)

    # 3) Tail rows (grid = cdiv, clipped last block) + D not a multiple of 128 (lane padding).
    x2 = jax.random.normal(k2, (200, 320), dtype=jnp.float32)
    o2 = jax.block_until_ready(l2_normalize_embedding(x2, tm=64, small_input_bytes=0))
    assert o2.shape == x2.shape and o2.dtype == x2.dtype
    assert jnp.allclose(o2, _ref(x2), atol=1e-6, rtol=1e-5)

    # 4) bf16 input: f32 reduction, input-dtype scaling multiply.
    x3 = jax.random.normal(k3, (512, 256), dtype=jnp.bfloat16)
    o3 = jax.block_until_ready(l2_normalize_embedding(x3, small_input_bytes=0))
    assert o3.shape == x3.shape and o3.dtype == x3.dtype
    assert jnp.allclose(o3.astype(jnp.float32), _ref(x3).astype(jnp.float32),
                        atol=2e-2, rtol=2e-2)

    print("KERNEL_OK")
</pallas_src>

<mosaic_0001>
module attributes {stable_mosaic.version = 11 : i64} {
  func.func @_l2_normalize_kernel(%arg0: i32, %arg1: memref<4096x256xf32, #tpu.memory_space<vmem>>, %arg2: memref<4096x256xf32, #tpu.memory_space<vmem>>) attributes {dimension_semantics = [#tpu.dimension_semantics<parallel>], iteration_bounds = array<i64: 2>, scalar_prefetch = 0 : i64, scratch_operands = 0 : i64, tpu.core_type = #tpu.core_type<tc>, window_params = [{transform_indices = @transform_0, window_bounds = array<i64: 4096, 256>}, {transform_indices = @transform_1, window_bounds = array<i64: 4096, 256>}]} {
    %c0 = arith.constant 0 : index
    %c0_0 = arith.constant 0 : index
    %0 = vector.load %arg1[%c0, %c0_0] : memref<4096x256xf32, #tpu.memory_space<vmem>>, vector<4096x256xf32>
    %1 = arith.mulf %0, %0 : vector<4096x256xf32>
    %cst = arith.constant dense<0.000000e+00> : vector<4096xf32>
    %2 = vector.multi_reduction <add>, %1, %cst [1] : vector<4096x256xf32> to vector<4096xf32>
    %3 = vector.shape_cast %2 : vector<4096xf32> to vector<4096x1xf32>
    %cst_1 = arith.constant 1.000000e-24 : f32
    %4 = vector.broadcast %cst_1 : f32 to vector<4096x1xf32>
    %5 = arith.maximumf %3, %4 : vector<4096x1xf32>
    %6 = math.rsqrt %5 : vector<4096x1xf32>
    %7 = vector.broadcast %6 : vector<4096x1xf32> to vector<4096x256xf32>
    %8 = arith.mulf %0, %7 : vector<4096x256xf32>
    %c0_2 = arith.constant 0 : index
    %c0_3 = arith.constant 0 : index
    %9 = vector.load %arg2[%c0_2, %c0_3] : memref<4096x256xf32, #tpu.memory_space<vmem>>, vector<4096x256xf32>
    tpu.vector_store %arg2[%c0_2, %c0_3], %8 {strides = array<i32>} : memref<4096x256xf32, #tpu.memory_space<vmem>>, vector<4096x256xf32>,
    return
  }
  func.func @transform_0(%arg0: i32) -> (i32, i32) {
    %c0_i32 = arith.constant 0 : i32
    %c0_i32_0 = arith.constant 0 : i32
    return %arg0, %c0_i32 : i32, i32
  }
  func.func @transform_1(%arg0: i32) -> (i32, i32) {
    %c0_i32 = arith.constant 0 : i32
    %c0_i32_0 = arith.constant 0 : i32
    return %arg0, %c0_i32 : i32, i32
  }
}

</mosaic_0001>

<llo_original>
// kernel: tpu_custom_call.1
$region0: #{tpu_custom_call.1}
  #allocation0 [shape = 'u32[]', space=smem, size = 0x4, offset = 0x4, fixed_abs, tag = 'smem constant byte address 0x4 - core index']
  #allocation1 [shape = 'u32[144,128]{1,0:T(1,128)}', space=vmem, size = 0x12000, scoped, tag = 'internal scratch']
  %s0 = inlined_call_operand.hbm [shape: f32[8192,256], index: 0, kind: input, shape index: {}]
  %s1 = inlined_call_operand.hbm [shape: f32[8192,256], index: 1, kind: output, shape index: {}]
  %s2 = sld [smem:[#allocation0]]
  $region41: #{tpu_custom_call.1} parent=0
    _
  %s4 = ssub.s32 1, %s2
  %s5 = scalar_select 0, %s4, %s2
  $region1: #{tpu_custom_call.1} parent=0
    #allocation2 [shape = 'u8[8388608]{0}', space=vmem, size = 0x800000, scoped, tag = 'input window, operand 0']
    #allocation3 [shape = 's32[2]{0}', space=sflag, size = 0x8, scoped, tag = 'scoped memory for tpu_custom_call.1']
    #allocation4 [shape = 's32[2]{0}', space=sflag, size = 0x8, scoped, tag = 'scoped memory for tpu_custom_call.1']
    #allocation5 [shape = 'u8[8388608]{0}', space=vmem, size = 0x800000, scoped, tag = 'output window, operand 0']
    %6 = vsyncpa [#allocation3], 0
    %s7 = scalar_lea.sflag [#allocation3], 1
    %8 = vsyncpa %s7, 0
    %9 = vsyncpa [#allocation4], 0
    %s10 = scalar_lea.sflag [#allocation4], 1
    %11 = vsyncpa %s10, 0
    loop: start=0, step=1, limit=4
    $region2: #{tpu_custom_call.1} parent=1 // loop_pre_header
      _
    $region3: #{tpu_custom_call.1} parent=1 // loop_header
      %s13 = sphi 0, %s17
      %p14 = scmp.ge.s32.totalorder %s13, 4
      %s23 = sphi 0, %s25
      %s26 = sphi 0, %s23
      %s27 = sphi 0, %s26
      %s43 = sphi 0, %s27
      %s49 = sphi 0, %s51
      %s52 = sphi 0, %s49
      %s53 = sphi 0, %s52
      %s69 = sphi 0, %s53
    $region4: #{tpu_custom_call.1} parent=1 // loop_header_branch
      %16 = sbr.rel (%p14) target = $region8
    $region5: #{tpu_custom_call.1} parent=1 // loop_body
      %s18 = ssub.s32 %s13, 1
      %s19 = ssub.s32 %s13, 2
      %s20 = sadd.s32 %s13, 1
      %s21 = ssub.s32 %s13, %s20
      %p22 = scmp.eq.s32.totalorder %s21, 0
      %s24 = sadd.s32 %s23, 1
      %s25 = scalar_select %p22, %s23, %s24
      %p28 = pneg %p22
      %p29 = scmp.eq.s32.totalorder %s13, 1
      %p30 = por %p28, %p29
      %p31 = scmp.ne.s32.totalorder %s23, %s26
      %p32 = scmp.eq.s32.totalorder %s13, 0
      %p33 = por %p31, %p32
      %p34 = scmp.ne.s32.totalorder %s23, %s26
      %p35 = scmp.eq.s32.totalorder %s18, 1
      %p36 = por %p34, %p35
      %p37 = scmp.ne.s32.totalorder %s26, %s27
      %p38 = scmp.eq.s32.totalorder %s18, 0
      %p39 = por %p37, %p38
      %p40 = scmp.ne.s32.totalorder %s26, %s27
      %p41 = scmp.eq.s32.totalorder %s19, 1
      %p42 = por %p40, %p41
      %p44 = scmp.ne.s32.totalorder %s27, %s43
      %p45 = scmp.eq.s32.totalorder %s19, 0
      %p46 = por %p44, %p45
      %s47 = ssub.s32 %s13, %s20
      %p48 = scmp.eq.s32.totalorder %s47, 0
      %s50 = sadd.s32 %s49, 1
      %s51 = scalar_select %p48, %s49, %s50
      %p54 = pneg %p48
      %p55 = scmp.eq.s32.totalorder %s13, 1
      %p56 = por %p54, %p55
      %p57 = scmp.ne.s32.totalorder %s49, %s52
      %p58 = scmp.eq.s32.totalorder %s13, 0
      %p59 = por %p57, %p58
      %p60 = scmp.ne.s32.totalorder %s49, %s52
      %p61 = scmp.eq.s32.totalorder %s18, 1
      %p62 = por %p60, %p61
      %p63 = scmp.ne.s32.totalorder %s52, %s53
      %p64 = scmp.eq.s32.totalorder %s18, 0
      %p65 = por %p63, %p64
      %p66 = scmp.ne.s32.totalorder %s52, %s53
      %p67 = scmp.eq.s32.totalorder %s19, 1
      %p68 = por %p66, %p67
      %p70 = scmp.ne.s32.totalorder %s53, %s69
      %p71 = scmp.eq.s32.totalorder %s19, 0
      %p72 = por %p70, %p71
      %p73 = scmp.le.s32.totalorder 1, %s13
      %p74 = scmp.lt.s32.totalorder %s13, 3
      %p75 = pnand %p73, %p74
      %p76 = pneg %p75
      // Predicated region
      $region9: #{tpu_custom_call.1} parent=5 // pred_check
        _
      $region10: #{tpu_custom_call.1} parent=5 // pred_check_branch
        %78 = sbr.rel (%p75) target = $region12
      $region11: #{tpu_custom_call.1} parent=5 // pred_region
        %s79 = ssub.s32 %s13, 1
      $region12: #{tpu_custom_call.1} parent=5 // pred_fallthru
        _
      %p80 = scmp.lt.s32.totalorder %s13, 2
      // Predicated region
      $region13: #{tpu_custom_call.1} parent=5 // pred_check
        %p81 = pneg %p80
      $region14: #{tpu_custom_call.1} parent=5 // pred_check_branch
        %83 = sbr.rel (%p81) target = $region16
      $region15: #{tpu_custom_call.1} parent=5 // pred_region
        // Predicated region
        $region17: #{tpu_custom_call.1} parent=15 // pred_check
          %p84 = pneg %p33
        $region18: #{tpu_custom_call.1} parent=15 // pred_check_branch
          %86 = sbr.rel (%p84) target = $region20
        $region19: #{tpu_custom_call.1} parent=15 // pred_region
          %s87 = sand.u32 %s23, 1
          %s88 = scalar_lea.sflag [#allocation3], %s87
          %s89 = sand.u32 %s23, 1
          %s90 = smul.addr %s89, 8192
          %s91 = scalar_lea.vmem [#allocation2], %s90
          %s92 = smul.u32 512, %s13
          %s94 = ssub.s32 131072, 131072
          %95 = vsyncadd %s88, %s94
          %s96 = smul.addr %s92, 2
          %s97 = smul.addr %s96, 128
          %s98 = scalar_lea.hbm %s0, %s97
          %s99 = sshll.u32 %s91, 4
          %s100 = int_to_ptr.vmem [resolvable:$true] %s99
          %105 = dma.hbm_to_vmem [thread:$0]  %s98, 131072, %s100, %s88, 256, 256, 16
        $region20: #{tpu_custom_call.1} parent=15 // pred_fallthru
          _
      $region16: #{tpu_custom_call.1} parent=5 // pred_fallthru
        _
      %p106 = scmp.le.s32.totalorder 1, %s13
      %p107 = scmp.lt.s32.totalorder %s13, 3
      %p108 = pnand %p106, %p107
      %p109 = pneg %p108
      // Predicated region
      $region21: #{tpu_custom_call.1} parent=5 // pred_check
        _
      $region22: #{tpu_custom_call.1} parent=5 // pred_check_branch
        %111 = sbr.rel (%p108) target = $region24
      $region23: #{tpu_custom_call.1} parent=5 // pred_region
        %s112 = ssub.s32 %s13, 1
        %s113 = sand.u32 %s26, 1
        %s114 = scalar_lea.sflag [#allocation3], %s113
        %s115 = sand.u32 %s26, 1
        %s116 = smul.addr %s115, 8192
        %s117 = scalar_lea.vmem [#allocation2], %s116
        // Predicated region
        $region25: #{tpu_custom_call.1} parent=23 // pred_check
          %p118 = pneg %p39
        $region26: #{tpu_custom_call.1} parent=23 // pred_check_branch
          %120 = sbr.rel (%p118) target = $region28
        $region27: #{tpu_custom_call.1} parent=23 // pred_region
          %121 = dma.done %s114, 131072
        $region28: #{tpu_custom_call.1} parent=23 // pred_fallthru
          _
        %s122 = sand.u32 %s26, 1
        %s123 = scalar_lea.sflag [#allocation3], %s122
        %s124 = sand.u32 %s26, 1
        %s125 = smul.addr %s124, 8192
        %s126 = scalar_lea.vmem [#allocation2], %s125
        %p127 = pneg %p39
        %p128 = pneg %p36
        %p129 = pneg %p65
        %p130 = pneg %p62
        %s131 = sand.u32 %s52, 1
        %s132 = scalar_lea.sflag [#allocation4], %s131
        %s133 = sand.u32 %s52, 1
        %s134 = smul.addr %s133, 8192
        %s135 = scalar_lea.vmem [#allocation5], %s134
        %s136 = smul.u32 512, %s18
        %s137 = smul.u32 512, %s18
        %v138 = vld [vmem:[%s117] sm:$0xff]
        %v139 = vld [vmem:[%s117 + $0x8] sm:$0xff]
        %v140 = vld [vmem:[%s117 + $0x10] sm:$0xff]
        %v141 = vld [vmem:[%s117 + $0x18] sm:$0xff]
        %v142 = vld [vmem:[%s117 + $0x20] sm:$0xff]
        %v143 = vld [vmem:[%s117 + $0x28] sm:$0xff]
        %v144 = vld [vmem:[%s117 + $0x30] sm:$0xff]
        %v145 = vld [vmem:[%s117 + $0x38] sm:$0xff]
        %v146 = vld [vmem:[%s117 + $0x40] sm:$0xff]
        %v147 = vld [vmem:[%s117 + $0x48] sm:$0xff]
        %v148 = vld [vmem:[%s117 + $0x50] sm:$0xff]
        %v149 = vld [vmem:[%s117 + $0x58] sm:$0xff]
        %v150 = vld [vmem:[%s117 + $0x60] sm:$0xff]
        %v151 = vld [vmem:[%s117 + $0x68] sm:$0xff]
        %v152 = vld [vmem:[%s117 + $0x70] sm:$0xff]
        %v153 = vld [vmem:[%s117 + $0x78] sm:$0xff]
        %v154 = vld [vmem:[%s117 + $0x80] sm:$0xff]
        %v155 = vld [vmem:[%s117 + $0x88] sm:$0xff]
        %v156 = vld [vmem:[%s117 + $0x90] sm:$0xff]
        %v157 = vld [vmem:[%s117 + $0x98] sm:$0xff]
        %v158 = vld [vmem:[%s117 + $0xa0] sm:$0xff]
        %v159 = vld [vmem:[%s117 + $0xa8] sm:$0xff]
        %v160 = vld [vmem:[%s117 + $0xb0] sm:$0xff]
        %v161 = vld [vmem:[%s117 + $0xb8] sm:$0xff]
        %v162 = vld [vmem:[%s117 + $0xc0] sm:$0xff]
        %v163 = vld [vmem:[%s117 + $0xc8] sm:$0xff]
        %v164 = vld [vmem:[%s117 + $0xd0] sm:$0xff]
        %v165 = vld [vmem:[%s117 + $0xd8] sm:$0xff]
        %v166 = vld [vmem:[%s117 + $0xe0] sm:$0xff]
        %v167 = vld [vmem:[%s117 + $0xe8] sm:$0xff]
        %v168 = vld [vmem:[%s117 + $0xf0] sm:$0xff]
        %v169 = vld [vmem:[%s117 + $0xf8] sm:$0xff]
        %v170 = vld [vmem:[%s117 + $0x100] sm:$0xff]
        %v171 = vld [vmem:[%s117 + $0x108] sm:$0xff]
        %v172 = vld [vmem:[%s117 + $0x110] sm:$0xff]
        %v173 = vld [vmem:[%s117 + $0x118] sm:$0xff]
        %v174 = vld [vmem:[%s117 + $0x120] sm:$0xff]
        %v175 = vld [vmem:[%s117 + $0x128] sm:$0xff]
        %v176 = vld [vmem:[%s117 + $0x130] sm:$0xff]
        %v177 = vld [vmem:[%s117 + $0x138] sm:$0xff]
        %v178 = vld [vmem:[%s117 + $0x140] sm:$0xff]
        %v179 = vld [vmem:[%s117 + $0x148] sm:$0xff]
        %v180 = vld [vmem:[%s117 + $0x150] sm:$0xff]
        %v181 = vld [vmem:[%s117 + $0x158] sm:$0xff]
        %v182 = vld [vmem:[%s117 + $0x160] sm:$0xff]
        %v183 = vld [vmem:[%s117 + $0x168] sm:$0xff]
        %v184 = vld [vmem:[%s117 + $0x170] sm:$0xff]
        %v185 = vld [vmem:[%s117 + $0x178] sm:$0xff]
        %v186 = vld [vmem:[%s117 + $0x180] sm:$0xff]
        %v187 = vld [vmem:[%s117 + $0x188] sm:$0xff]
        %v188 = vld [vmem:[%s117 + $0x190] sm:$0xff]
        %v189 = vld [vmem:[%s117 + $0x198] sm:$0xff]
        %v190 = vld [vmem:[%s117 + $0x1a0] sm:$0xff]
        %v191 = vld [vmem:[%s117 + $0x1a8] sm:$0xff]
        %v192 = vld [vmem:[%s117 + $0x1b0] sm:$0xff]
        %v193 = vld [vmem:[%s117 + $0x1b8] sm:$0xff]
        %v194 = vld [vmem:[%s117 + $0x1c0] sm:$0xff]
        %v195 = vld [vmem:[%s117 + $0x1c8] sm:$0xff]
        %v196 = vld [vmem:[%s117 + $0x1d0] sm:$0xff]
        %v197 = vld [vmem:[%s117 + $0x1d8] sm:$0xff]
        %v198 = vld [vmem:[%s117 + $0x1e0] sm:$0xff]
        %v199 = vld [vmem:[%s117 + $0x1e8] sm:$0xff]
        %v200 = vld [vmem:[%s117 + $0x1f0] sm:$0xff]
        %v201 = vld [vmem:[%s117 + $0x1f8] sm:$0xff]
        %v202 = vld [vmem:[%s117 + $0x200] sm:$0xff]
        %v203 = vld [vmem:[%s117 + $0x208] sm:$0xff]
        %v204 = vld [vmem:[%s117 + $0x210] sm:$0xff]
        %v205 = vld [vmem:[%s117 + $0x218] sm:$0xff]
        %v206 = vld [vmem:[%s117 + $0x220] sm:$0xff]
        %v207 = vld [vmem:[%s117 + $0x228] sm:$0xff]
        %v208 = vld [vmem:[%s117 + $0x230] sm:$0xff]
        %v209 = vld [vmem:[%s117 + $0x238] sm:$0xff]
        %v210 = vld [vmem:[%s117 + $0x240] sm:$0xff]
        %v211 = vld [vmem:[%s117 + $0x248] sm:$0xff]
        %v212 = vld [vmem:[%s117 + $0x250] sm:$0xff]
        %v213 = vld [vmem:[%s117 + $0x258] sm:$0xff]
        %v214 = vld [vmem:[%s117 + $0x260] sm:$0xff]
        %v215 = vld [vmem:[%s117 + $0x268] sm:$0xff]
        %v216 = vld [vmem:[%s117 + $0x270] sm:$0xff]
        %v217 = vld [vmem:[%s117 + $0x278] sm:$0xff]
        %v218 = vld [vmem:[%s117 + $0x280] sm:$0xff]
        %v219 = vld [vmem:[%s117 + $0x288] sm:$0xff]
        %v220 = vld [vmem:[%s117 + $0x290] sm:$0xff]
        %v221 = vld [vmem:[%s117 + $0x298] sm:$0xff]
        %v222 = vld [vmem:[%s117 + $0x2a0] sm:$0xff]
        %v223 = vld [vmem:[%s117 + $0x2a8] sm:$0xff]
        %v224 = vld [vmem:[%s117 + $0x2b0] sm:$0xff]
        %v225 = vld [vmem:[%s117 + $0x2b8] sm:$0xff]
        %v226 = vld [vmem:[%s117 + $0x2c0] sm:$0xff]
        %v227 = vld [vmem:[%s117 + $0x2c8] sm:$0xff]
        %v228 = vld [vmem:[%s117 + $0x2d0] sm:$0xff]
        %v229 = vld [vmem:[%s117 + $0x2d8] sm:$0xff]
        %v230 = vld [vmem:[%s117 + $0x2e0] sm:$0xff]
        %v231 = vld [vmem:[%s117 + $0x2e8] sm:$0xff]
        %v232 = vld [vmem:[%s117 + $0x2f0] sm:$0xff]
        %v233 = vld [vmem:[%s117 + $0x2f8] sm:$0xff]
        %v234 = vld [vmem:[%s117 + $0x300] sm:$0xff]
        %v235 = vld [vmem:[%s117 + $0x308] sm:$0xff]
        %v236 = vld [vmem:[%s117 + $0x310] sm:$0xff]
        %v237 = vld [vmem:[%s117 + $0x318] sm:$0xff]
        %v238 = vld [vmem:[%s117 + $0x320] sm:$0xff]
        %v239 = vld [vmem:[%s117 + $0x328] sm:$0xff]
        %v240 = vld [vmem:[%s117 + $0x330] sm:$0xff]
        %v241 = vld [vmem:[%s117 + $0x338] sm:$0xff]
        %v242 = vld [vmem:[%s117 + $0x340] sm:$0xff]
        %v243 = vld [vmem:[%s117 + $0x348] sm:$0xff]
        %v244 = vld [vmem:[%s117 + $0x350] sm:$0xff]
        %v245 = vld [vmem:[%s117 + $0x358] sm:$0xff]
        %v246 = vld [vmem:[%s117 + $0x360] sm:$0xff]
        %v247 = vld [vmem:[%s117 + $0x368] sm:$0xff]
        %v248 = vld [vmem:[%s117 + $0x370] sm:$0xff]
        %v249 = vld [vmem:[%s117 + $0x378] sm:$0xff]
        %v250 = vld [vmem:[%s117 + $0x380] sm:$0xff]
        %v251 = vld [vmem:[%s117 + $0x388] sm:$0xff]
        %v252 = vld [vmem:[%s117 + $0x390] sm:$0xff]
        %v253 = vld [vmem:[%s117 + $0x398] sm:$0xff]
        %v254 = vld [vmem:[%s117 + $0x3a0] sm:$0xff]
        %v255 = vld [vmem:[%s117 + $0x3a8] sm:$0xff]
        %v256 = vld [vmem:[%s117 + $0x3b0] sm:$0xff]
        %v257 = vld [vmem:[%s117 + $0x3b8] sm:$0xff]
        %v258 = vld [vmem:[%s117 + $0x3c0] sm:$0xff]
        %v259 = vld [vmem:[%s117 + $0x3c8] sm:$0xff]
        %v260 = vld [vmem:[%s117 + $0x3d0] sm:$0xff]
        %v261 = vld [vmem:[%s117 + $0x3d8] sm:$0xff]
        %v262 = vld [vmem:[%s117 + $0x3e0] sm:$0xff]
        %v263 = vld [vmem:[%s117 + $0x3e8] sm:$0xff]
        %v264 = vld [vmem:[%s117 + $0x3f0] sm:$0xff]
        %v265 = vld [vmem:[%s117 + $0x3f8] sm:$0xff]
        %v266 = vld [vmem:[%s117 + $0x400] sm:$0xff]
        %v267 = vld [vmem:[%s117 + $0x408] sm:$0xff]
        %v268 = vld [vmem:[%s117 + $0x410] sm:$0xff]
        %v269 = vld [vmem:[%s117 + $0x418] sm:$0xff]
        %v270 = vld [vmem:[%s117 + $0x420] sm:$0xff]
        %v271 = vld [vmem:[%s117 + $0x428] sm:$0xff]
        %v272 = vld [vmem:[%s117 + $0x430] sm:$0xff]
        %v273 = vld [vmem:[%s117 + $0x438] sm:$0xff]
        %v274 = vld [vmem:[%s117 + $0x440] sm:$0xff]
        %v275 = vld [vmem:[%s117 + $0x448] sm:$0xff]
        %v276 = vld [vmem:[%s117 + $0x450] sm:$0xff]
        %v277 = vld [vmem:[%s117 + $0x458] sm:$0xff]
        %v278 = vld [vmem:[%s117 + $0x460] sm:$0xff]
        %v279 = vld [vmem:[%s117 + $0x468] sm:$0xff]
        %v280 = vld [vmem:[%s117 + $0x470] sm:$0xff]
        %v281 = vld [vmem:[%s117 + $0x478] sm:$0xff]
        %v282 = vld [vmem:[%s117 + $0x480] sm:$0xff]
        %v283 = vld [vmem:[%s117 + $0x488] sm:$0xff]
        %v284 = vld [vmem:[%s117 + $0x490] sm:$0xff]
        %v285 = vld [vmem:[%s117 + $0x498] sm:$0xff]
        %v286 = vld [vmem:[%s117 + $0x4a0] sm:$0xff]
        %v287 = vld [vmem:[%s117 + $0x4a8] sm:$0xff]
        %v288 = vld [vmem:[%s117 + $0x4b0] sm:$0xff]
        %v289 = vld [vmem:[%s117 + $0x4b8] sm:$0xff]
        %v290 = vld [vmem:[%s117 + $0x4c0] sm:$0xff]
        %v291 = vld [vmem:[%s117 + $0x4c8] sm:$0xff]
        %v292 = vld [vmem:[%s117 + $0x4d0] sm:$0xff]
        %v293 = vld [vmem:[%s117 + $0x4d8] sm:$0xff]
        %v294 = vld [vmem:[%s117 + $0x4e0] sm:$0xff]
        %v295 = vld [vmem:[%s117 + $0x4e8] sm:$0xff]
        %v296 = vld [vmem:[%s117 + $0x4f0] sm:$0xff]
        %v297 = vld [vmem:[%s117 + $0x4f8] sm:$0xff]
        %v298 = vld [vmem:[%s117 + $0x500] sm:$0xff]
        %v299 = vld [vmem:[%s117 + $0x508] sm:$0xff]
        %v300 = vld [vmem:[%s117 + $0x510] sm:$0xff]
        %v301 = vld [vmem:[%s117 + $0x518] sm:$0xff]
        %v302 = vld [vmem:[%s117 + $0x520] sm:$0xff]
        %v303 = vld [vmem:[%s117 + $0x528] sm:$0xff]
        %v304 = vld [vmem:[%s117 + $0x530] sm:$0xff]
        %v305 = vld [vmem:[%s117 + $0x538] sm:$0xff]
        %v306 = vld [vmem:[%s117 + $0x540] sm:$0xff]
        %v307 = vld [vmem:[%s117 + $0x548] sm:$0xff]
        %v308 = vld [vmem:[%s117 + $0x550] sm:$0xff]
        %v309 = vld [vmem:[%s117 + $0x558] sm:$0xff]
        %v310 = vld [vmem:[%s117 + $0x560] sm:$0xff]
        %v311 = vld [vmem:[%s117 + $0x568] sm:$0xff]
        %v312 = vld [vmem:[%s117 + $0x570] sm:$0xff]
        %v313 = vld [vmem:[%s117 + $0x578] sm:$0xff]
        %v314 = vld [vmem:[%s117 + $0x580] sm:$0xff]
        %v315 = vld [vmem:[%s117 + $0x588] sm:$0xff]
        %v316 = vld [vmem:[%s117 + $0x590] sm:$0xff]
        %v317 = vld [vmem:[%s117 + $0x598] sm:$0xff]
        %v318 = vld [vmem:[%s117 + $0x5a0] sm:$0xff]
        %v319 = vld [vmem:[%s117 + $0x5a8] sm:$0xff]
        %v320 = vld [vmem:[%s117 + $0x5b0] sm:$0xff]
        %v321 = vld [vmem:[%s117 + $0x5b8] sm:$0xff]
        %v322 = vld [vmem:[%s117 + $0x5c0] sm:$0xff]
        %v323 = vld [vmem:[%s117 + $0x5c8] sm:$0xff]
        %v324 = vld [vmem:[%s117 + $0x5d0] sm:$0xff]
        %v325 = vld [vmem:[%s117 + $0x5d8] sm:$0xff]
        %v326 = vld [vmem:[%s117 + $0x5e0] sm:$0xff]
        %v327 = vld [vmem:[%s117 + $0x5e8] sm:$0xff]
        %v328 = vld [vmem:[%s117 + $0x5f0] sm:$0xff]
        %v329 = vld [vmem:[%s117 + $0x5f8] sm:$0xff]
        %v330 = vld [vmem:[%s117 + $0x600] sm:$0xff]
        %v331 = vld [vmem:[%s117 + $0x608] sm:$0xff]
        %v332 = vld [vmem:[%s117 + $0x610] sm:$0xff]
        %v333 = vld [vmem:[%s117 + $0x618] sm:$0xff]
        %v334 = vld [vmem:[%s117 + $0x620] sm:$0xff]
        %v335 = vld [vmem:[%s117 + $0x628] sm:$0xff]
        %v336 = vld [vmem:[%s117 + $0x630] sm:$0xff]
        %v337 = vld [vmem:[%s117 + $0x638] sm:$0xff]
        %v338 = vld [vmem:[%s117 + $0x640] sm:$0xff]
        %v339 = vld [vmem:[%s117 + $0x648] sm:$0xff]
        %v340 = vld [vmem:[%s117 + $0x650] sm:$0xff]
        %v341 = vld [vmem:[%s117 + $0x658] sm:$0xff]
        %v342 = vld [vmem:[%s117 + $0x660] sm:$0xff]
        %v343 = vld [vmem:[%s117 + $0x668] sm:$0xff]
        %v344 = vld [vmem:[%s117 + $0x670] sm:$0xff]
        %v345 = vld [vmem:[%s117 + $0x678] sm:$0xff]
        %v346 = vld [vmem:[%s117 + $0x680] sm:$0xff]
        %v347 = vld [vmem:[%s117 + $0x688] sm:$0xff]
        %v348 = vld [vmem:[%s117 + $0x690] sm:$0xff]
        %v349 = vld [vmem:[%s117 + $0x698] sm:$0xff]
        %v350 = vld [vmem:[%s117 + $0x6a0] sm:$0xff]
        %v351 = vld [vmem:[%s117 + $0x6a8] sm:$0xff]
        %v352 = vld [vmem:[%s117 + $0x6b0] sm:$0xff]
        %v353 = vld [vmem:[%s117 + $0x6b8] sm:$0xff]
        %v354 = vld [vmem:[%s117 + $0x6c0] sm:$0xff]
        %v355 = vld [vmem:[%s117 + $0x6c8] sm:$0xff]
        %v356 = vld [vmem:[%s117 + $0x6d0] sm:$0xff]
        %v357 = vld [vmem:[%s117 + $0x6d8] sm:$0xff]
        %v358 = vld [vmem:[%s117 + $0x6e0] sm:$0xff]
        %v359 = vld [vmem:[%s117 + $0x6e8] sm:$0xff]
        %v360 = vld [vmem:[%s117 + $0x6f0] sm:$0xff]
        %v361 = vld [vmem:[%s117 + $0x6f8] sm:$0xff]
        %v362 = vld [vmem:[%s117 + $0x700] sm:$0xff]
        %v363 = vld [vmem:[%s117 + $0x708] sm:$0xff]
        %v364 = vld [vmem:[%s117 + $0x710] sm:$0xff]
        %v365 = vld [vmem:[%s117 + $0x718] sm:$0xff]
        %v366 = vld [vmem:[%s117 + $0x720] sm:$0xff]
        %v367 = vld [vmem:[%s117 + $0x728] sm:$0xff]
        %v368 = vld [vmem:[%s117 + $0x730] sm:$0xff]
        %v369 = vld [vmem:[%s117 + $0x738] sm:$0xff]
        %v370 = vld [vmem:[%s117 + $0x740] sm:$0xff]
        %v371 = vld [vmem:[%s117 + $0x748] sm:$0xff]
        %v372 = vld [vmem:[%s117 + $0x750] sm:$0xff]
        %v373 = vld [vmem:[%s117 + $0x758] sm:$0xff]
        %v374 = vld [vmem:[%s117 + $0x760] sm:$0xff]
        %v375 = vld [vmem:[%s117 + $0x768] sm:$0xff]
        %v376 = vld [vmem:[%s117 + $0x770] sm:$0xff]
        %v377 = vld [vmem:[%s117 + $0x778] sm:$0xff]
        %v378 = vld [vmem:[%s117 + $0x780] sm:$0xff]
        %v379 = vld [vmem:[%s117 + $0x788] sm:$0xff]
        %v380 = vld [vmem:[%s117 + $0x790] sm:$0xff]
        %v381 = vld [vmem:[%s117 + $0x798] sm:$0xff]
        %v382 = vld [vmem:[%s117 + $0x7a0] sm:$0xff]
        %v383 = vld [vmem:[%s117 + $0x7a8] sm:$0xff]
        %v384 = vld [vmem:[%s117 + $0x7b0] sm:$0xff]
        %v385 = vld [vmem:[%s117 + $0x7b8] sm:$0xff]
        %v386 = vld [vmem:[%s117 + $0x7c0] sm:$0xff]
        %v387 = vld [vmem:[%s117 + $0x7c8] sm:$0xff]
        %v388 = vld [vmem:[%s117 + $0x7d0] sm:$0xff]
        %v389 = vld [vmem:[%s117 + $0x7d8] sm:$0xff]
        %v390 = vld [vmem:[%s117 + $0x7e0] sm:$0xff]
        %v391 = vld [vmem:[%s117 + $0x7e8] sm:$0xff]
        %v392 = vld [vmem:[%s117 + $0x7f0] sm:$0xff]
        %v393 = vld [vmem:[%s117 + $0x7f8] sm:$0xff]
        %v394 = vld [vmem:[%s117 + $0x800] sm:$0xff]
        %v395 = vld [vmem:[%s117 + $0x808] sm:$0xff]
        %v396 = vld [vmem:[%s117 + $0x810] sm:$0xff]
        %v397 = vld [vmem:[%s117 + $0x818] sm:$0xff]
        %v398 = vld [vmem:[%s117 + $0x820] sm:$0xff]
        %v399 = vld [vmem:[%s117 + $0x828] sm:$0xff]
        %v400 = vld [vmem:[%s117 + $0x830] sm:$0xff]
        %v401 = vld [vmem:[%s117 + $0x838] sm:$0xff]
        %v402 = vld [vmem:[%s117 + $0x840] sm:$0xff]
        %v403 = vld [vmem:[%s117 + $0x848] sm:$0xff]
        %v404 = vld [vmem:[%s117 + $0x850] sm:$0xff]
        %v405 = vld [vmem:[%s117 + $0x858] sm:$0xff]
        %v406 = vld [vmem:[%s117 + $0x860] sm:$0xff]
        %v407 = vld [vmem:[%s117 + $0x868] sm:$0xff]
        %v408 = vld [vmem:[%s117 + $0x870] sm:$0xff]
        %v409 = vld [vmem:[%s117 + $0x878] sm:$0xff]
        %v410 = vld [vmem:[%s117 + $0x880] sm:$0xff]
        %v411 = vld [vmem:[%s117 + $0x888] sm:$0xff]
        %v412 = vld [vmem:[%s117 + $0x890] sm:$0xff]
        %v413 = vld [vmem:[%s117 + $0x898] sm:$0xff]
        %v414 = vld [vmem:[%s117 + $0x8a0] sm:$0xff]
        %v415 = vld [vmem:[%s117 + $0x8a8] sm:$0xff]
        %v416 = vld [vmem:[%s117 + $0x8b0] sm:$0xff]
        %v417 = vld [vmem:[%s117 + $0x8b8] sm:$0xff]
        %v418 = vld [vmem:[%s117 + $0x8c0] sm:$0xff]
        %v419 = vld [vmem:[%s117 + $0x8c8] sm:$0xff]
        %v420 = vld [vmem:[%s117 + $0x8d0] sm:$0xff]
        %v421 = vld [vmem:[%s117 + $0x8d8] sm:$0xff]
        %v422 = vld [vmem:[%s117 + $0x8e0] sm:$0xff]
        %v423 = vld [vmem:[%s117 + $0x8e8] sm:$0xff]
        %v424 = vld [vmem:[%s117 + $0x8f0] sm:$0xff]
        %v425 = vld [vmem:[%s117 + $0x8f8] sm:$0xff]
        %v426 = vld [vmem:[%s117 + $0x900] sm:$0xff]
        %v427 = vld [vmem:[%s117 + $0x908] sm:$0xff]
        %v428 = vld [vmem:[%s117 + $0x910] sm:$0xff]
        %v429 = vld [vmem:[%s117 + $0x918] sm:$0xff]
        %v430 = vld [vmem:[%s117 + $0x920] sm:$0xff]
        %v431 = vld [vmem:[%s117 + $0x928] sm:$0xff]
        %v432 = vld [vmem:[%s117 + $0x930] sm:$0xff]
        %v433 = vld [vmem:[%s117 + $0x938] sm:$0xff]
        %v434 = vld [vmem:[%s117 + $0x940] sm:$0xff]
        %v435 = vld [vmem:[%s117 + $0x948] sm:$0xff]
        %v436 = vld [vmem:[%s117 + $0x950] sm:$0xff]
        %v437 = vld [vmem:[%s117 + $0x958] sm:$0xff]
        %v438 = vld [vmem:[%s117 + $0x960] sm:$0xff]
        %v439 = vld [vmem:[%s117 + $0x968] sm:$0xff]
        %v440 = vld [vmem:[%s117 + $0x970] sm:$0xff]
        %v441 = vld [vmem:[%s117 + $0x978] sm:$0xff]
        %v442 = vld [vmem:[%s117 + $0x980] sm:$0xff]
        %v443 = vld [vmem:[%s117 + $0x988] sm:$0xff]
        %v444 = vld [vmem:[%s117 + $0x990] sm:$0xff]
        %v445 = vld [vmem:[%s117 + $0x998] sm:$0xff]
        %v446 = vld [vmem:[%s117 + $0x9a0] sm:$0xff]
        %v447 = vld [vmem:[%s117 + $0x9a8] sm:$0xff]
        %v448 = vld [vmem:[%s117 + $0x9b0] sm:$0xff]
        %v449 = vld [vmem:[%s117 + $0x9b8] sm:$0xff]
        %v450 = vld [vmem:[%s117 + $0x9c0] sm:$0xff]
        %v451 = vld [vmem:[%s117 + $0x9c8] sm:$0xff]
        %v452 = vld [vmem:[%s117 + $0x9d0] sm:$0xff]
        %v453 = vld [vmem:[%s117 + $0x9d8] sm:$0xff]
        %v454 = vld [vmem:[%s117 + $0x9e0] sm:$0xff]
        %v455 = vld [vmem:[%s117 + $0x9e8] sm:$0xff]
        %v456 = vld [vmem:[%s117 + $0x9f0] sm:$0xff]
        %v457 = vld [vmem:[%s117 + $0x9f8] sm:$0xff]
        %v458 = vld [vmem:[%s117 + $0xa00] sm:$0xff]
        %v459 = vld [vmem:[%s117 + $0xa08] sm:$0xff]
        %v460 = vld [vmem:[%s117 + $0xa10] sm:$0xff]
        %v461 = vld [vmem:[%s117 + $0xa18] sm:$0xff]
        %v462 = vld [vmem:[%s117 + $0xa20] sm:$0xff]
        %v463 = vld [vmem:[%s117 + $0xa28] sm:$0xff]
        %v464 = vld [vmem:[%s117 + $0xa30] sm:$0xff]
        %v465 = vld [vmem:[%s117 + $0xa38] sm:$0xff]
        %v466 = vld [vmem:[%s117 + $0xa40] sm:$0xff]
        %v467 = vld [vmem:[%s117 + $0xa48] sm:$0xff]
        %v468 = vld [vmem:[%s117 + $0xa50] sm:$0xff]
        %v469 = vld [vmem:[%s117 + $0xa58] sm:$0xff]
        %v470 = vld [vmem:[%s117 + $0xa60] sm:$0xff]
        %v471 = vld [vmem:[%s117 + $0xa68] sm:$0xff]
        %v472 = vld [vmem:[%s117 + $0xa70] sm:$0xff]
        %v473 = vld [vmem:[%s117 + $0xa78] sm:$0xff]
        %v474 = vld [vmem:[%s117 + $0xa80] sm:$0xff]
        %v475 = vld [vmem:[%s117 + $0xa88] sm:$0xff]
        %v476 = vld [vmem:[%s117 + $0xa90] sm:$0xff]
        %v477 = vld [vmem:[%s117 + $0xa98] sm:$0xff]
        %v478 = vld [vmem:[%s117 + $0xaa0] sm:$0xff]
        %v479 = vld [vmem:[%s117 + $0xaa8] sm:$0xff]
        %v480 = vld [vmem:[%s117 + $0xab0] sm:$0xff]
        %v481 = vld [vmem:[%s117 + $0xab8] sm:$0xff]
        %v482 = vld [vmem:[%s117 + $0xac0] sm:$0xff]
        %v483 = vld [vmem:[%s117 + $0xac8] sm:$0xff]
        %v484 = vld [vmem:[%s117 + $0xad0] sm:$0xff]
        %v485 = vld [vmem:[%s117 + $0xad8] sm:$0xff]
        %v486 = vld [vmem:[%s117 + $0xae0] sm:$0xff]
        %v487 = vld [vmem:[%s117 + $0xae8] sm:$0xff]
        %v488 = vld [vmem:[%s117 + $0xaf0] sm:$0xff]
        %v489 = vld [vmem:[%s117 + $0xaf8] sm:$0xff]
        %v490 = vld [vmem:[%s117 + $0xb00] sm:$0xff]
        %v491 = vld [vmem:[%s117 + $0xb08] sm:$0xff]
        %v492 = vld [vmem:[%s117 + $0xb10] sm:$0xff]
        %v493 = vld [vmem:[%s117 + $0xb18] sm:$0xff]
        %v494 = vld [vmem:[%s117 + $0xb20] sm:$0xff]
        %v495 = vld [vmem:[%s117 + $0xb28] sm:$0xff]
        %v496 = vld [vmem:[%s117 + $0xb30] sm:$0xff]
        %v497 = vld [vmem:[%s117 + $0xb38] sm:$0xff]
        %v498 = vld [vmem:[%s117 + $0xb40] sm:$0xff]
        %v499 = vld [vmem:[%s117 + $0xb48] sm:$0xff]
        %v500 = vld [vmem:[%s117 + $0xb50] sm:$0xff]
        %v501 = vld [vmem:[%s117 + $0xb58] sm:$0xff]
        %v502 = vld [vmem:[%s117 + $0xb60] sm:$0xff]
        %v503 = vld [vmem:[%s117 + $0xb68] sm:$0xff]
        %v504 = vld [vmem:[%s117 + $0xb70] sm:$0xff]
        %v505 = vld [vmem:[%s117 + $0xb78] sm:$0xff]
        %v506 = vld [vmem:[%s117 + $0xb80] sm:$0xff]
        %v507 = vld [vmem:[%s117 + $0xb88] sm:$0xff]
        %v508 = vld [vmem:[%s117 + $0xb90] sm:$0xff]
        %v509 = vld [vmem:[%s117 + $0xb98] sm:$0xff]
        %v510 = vld [vmem:[%s117 + $0xba0] sm:$0xff]
        %v511 = vld [vmem:[%s117 + $0xba8] sm:$0xff]
        %v512 = vld [vmem:[%s117 + $0xbb0] sm:$0xff]
        %v513 = vld [vmem:[%s117 + $0xbb8] sm:$0xff]
        %v514 = vld [vmem:[%s117 + $0xbc0] sm:$0xff]
        %v515 = vld [vmem:[%s117 + $0xbc8] sm:$0xff]
        %v516 = vld [vmem:[%s117 + $0xbd0] sm:$0xff]
        %v517 = vld [vmem:[%s117 + $0xbd8] sm:$0xff]
        %v518 = vld [vmem:[%s117 + $0xbe0] sm:$0xff]
        %v519 = vld [vmem:[%s117 + $0xbe8] sm:$0xff]
        %v520 = vld [vmem:[%s117 + $0xbf0] sm:$0xff]
        %v521 = vld [vmem:[%s117 + $0xbf8] sm:$0xff]
        %v522 = vld [vmem:[%s117 + $0xc00] sm:$0xff]
        %v523 = vld [vmem:[%s117 + $0xc08] sm:$0xff]
        %v524 = vld [vmem:[%s117 + $0xc10] sm:$0xff]
        %v525 = vld [vmem:[%s117 + $0xc18] sm:$0xff]
        %v526 = vld [vmem:[%s117 + $0xc20] sm:$0xff]
        %v527 = vld [vmem:[%s117 + $0xc28] sm:$0xff]
        %v528 = vld [vmem:[%s117 + $0xc30] sm:$0xff]
        %v529 = vld [vmem:[%s117 + $0xc38] sm:$0xff]
        %v530 = vld [vmem:[%s117 + $0xc40] sm:$0xff]
        %v531 = vld [vmem:[%s117 + $0xc48] sm:$0xff]
        %v532 = vld [vmem:[%s117 + $0xc50] sm:$0xff]
        %v533 = vld [vmem:[%s117 + $0xc58] sm:$0xff]
        %v534 = vld [vmem:[%s117 + $0xc60] sm:$0xff]
        %v535 = vld [vmem:[%s117 + $0xc68] sm:$0xff]
        %v536 = vld [vmem:[%s117 + $0xc70] sm:$0xff]
        %v537 = vld [vmem:[%s117 + $0xc78] sm:$0xff]
        %v538 = vld [vmem:[%s117 + $0xc80] sm:$0xff]
        %v539 = vld [vmem:[%s117 + $0xc88] sm:$0xff]
        %v540 = vld [vmem:[%s117 + $0xc90] sm:$0xff]
        %v541 = vld [vmem:[%s117 + $0xc98] sm:$0xff]
        %v542 = vld [vmem:[%s117 + $0xca0] sm:$0xff]
        %v543 = vld [vmem:[%s117 + $0xca8] sm:$0xff]
        %v544 = vld [vmem:[%s117 + $0xcb0] sm:$0xff]
        %v545 = vld [vmem:[%s117 + $0xcb8] sm:$0xff]
        %v546 = vld [vmem:[%s117 + $0xcc0] sm:$0xff]
        %v547 = vld [vmem:[%s117 + $0xcc8] sm:$0xff]
        %v548 = vld [vmem:[%s117 + $0xcd0] sm:$0xff]
        %v549 = vld [vmem:[%s117 + $0xcd8] sm:$0xff]
        %v550 = vld [vmem:[%s117 + $0xce0] sm:$0xff]
        %v551 = vld [vmem:[%s117 + $0xce8] sm:$0xff]
        %v552 = vld [vmem:[%s117 + $0xcf0] sm:$0xff]
        %v553 = vld [vmem:[%s117 + $0xcf8] sm:$0xff]
        %v554 = vld [vmem:[%s117 + $0xd00] sm:$0xff]
        %v555 = vld [vmem:[%s117 + $0xd08] sm:$0xff]
        %v556 = vld [vmem:[%s117 + $0xd10] sm:$0xff]
        %v557 = vld [vmem:[%s117 + $0xd18] sm:$0xff]
        %v558 = vld [vmem:[%s117 + $0xd20] sm:$0xff]
        %v559 = vld [vmem:[%s117 + $0xd28] sm:$0xff]
        %v560 = vld [vmem:[%s117 + $0xd30] sm:$0xff]
        %v561 = vld [vmem:[%s117 + $0xd38] sm:$0xff]
        %v562 = vld [vmem:[%s117 + $0xd40] sm:$0xff]
        %v563 = vld [vmem:[%s117 + $0xd48] sm:$0xff]
        %v564 = vld [vmem:[%s117 + $0xd50] sm:$0xff]
        %v565 = vld [vmem:[%s117 + $0xd58] sm:$0xff]
        %v566 = vld [vmem:[%s117 + $0xd60] sm:$0xff]
        %v567 = vld [vmem:[%s117 + $0xd68] sm:$0xff]
        %v568 = vld [vmem:[%s117 + $0xd70] sm:$0xff]
        %v569 = vld [vmem:[%s117 + $0xd78] sm:$0xff]
        %v570 = vld [vmem:[%s117 + $0xd80] sm:$0xff]
        %v571 = vld [vmem:[%s117 + $0xd88] sm:$0xff]
        %v572 = vld [vmem:[%s117 + $0xd90] sm:$0xff]
        %v573 = vld [vmem:[%s117 + $0xd98] sm:$0xff]
        %v574 = vld [vmem:[%s117 + $0xda0] sm:$0xff]
        %v575 = vld [vmem:[%s117 + $0xda8] sm:$0xff]
        %v576 = vld [vmem:[%s117 + $0xdb0] sm:$0xff]
        %v577 = vld [vmem:[%s117 + $0xdb8] sm:$0xff]
        %v578 = vld [vmem:[%s117 + $0xdc0] sm:$0xff]
        %v579 = vld [vmem:[%s117 + $0xdc8] sm:$0xff]
        %v580 = vld [vmem:[%s117 + $0xdd0] sm:$0xff]
        %v581 = vld [vmem:[%s117 + $0xdd8] sm:$0xff]
        %v582 = vld [vmem:[%s117 + $0xde0] sm:$0xff]
        %v583 = vld [vmem:[%s117 + $0xde8] sm:$0xff]
        %v584 = vld [vmem:[%s117 + $0xdf0] sm:$0xff]
        %v585 = vld [vmem:[%s117 + $0xdf8] sm:$0xff]
        %v586 = vld [vmem:[%s117 + $0xe00] sm:$0xff]
        %v587 = vld [vmem:[%s117 + $0xe08] sm:$0xff]
        %v588 = vld [vmem:[%s117 + $0xe10] sm:$0xff]
        %v589 = vld [vmem:[%s117 + $0xe18] sm:$0xff]
        %v590 = vld [vmem:[%s117 + $0xe20] sm:$0xff]
        %v591 = vld [vmem:[%s117 + $0xe28] sm:$0xff]
        %v592 = vld [vmem:[%s117 + $0xe30] sm:$0xff]
        %v593 = vld [vmem:[%s117 + $0xe38] sm:$0xff]
        %v594 = vld [vmem:[%s117 + $0xe40] sm:$0xff]
        %v595 = vld [vmem:[%s117 + $0xe48] sm:$0xff]
        %v596 = vld [vmem:[%s117 + $0xe50] sm:$0xff]
        %v597 = vld [vmem:[%s117 + $0xe58] sm:$0xff]
        %v598 = vld [vmem:[%s117 + $0xe60] sm:$0xff]
        %v599 = vld [vmem:[%s117 + $0xe68] sm:$0xff]
        %v600 = vld [vmem:[%s117 + $0xe70] sm:$0xff]
        %v601 = vld [vmem:[%s117 + $0xe78] sm:$0xff]
        %v602 = vld [vmem:[%s117 + $0xe80] sm:$0xff]
        %v603 = vld [vmem:[%s117 + $0xe88] sm:$0xff]
        %v604 = vld [vmem:[%s117 + $0xe90] sm:$0xff]
        %v605 = vld [vmem:[%s117 + $0xe98] sm:$0xff]
        %v606 = vld [vmem:[%s117 + $0xea0] sm:$0xff]
        %v607 = vld [vmem:[%s117 + $0xea8] sm:$0xff]
        %v608 = vld [vmem:[%s117 + $0xeb0] sm:$0xff]
        %v609 = vld [vmem:[%s117 + $0xeb8] sm:$0xff]
        %v610 = vld [vmem:[%s117 + $0xec0] sm:$0xff]
        %v611 = vld [vmem:[%s117 + $0xec8] sm:$0xff]
        %v612 = vld [vmem:[%s117 + $0xed0] sm:$0xff]
        %v613 = vld [vmem:[%s117 + $0xed8] sm:$0xff]
        %v614 = vld [vmem:[%s117 + $0xee0] sm:$0xff]
        %v615 = vld [vmem:[%s117 + $0xee8] sm:$0xff]
        %v616 = vld [vmem:[%s117 + $0xef0] sm:$0xff]
        %v617 = vld [vmem:[%s117 + $0xef8] sm:$0xff]
        %v618 = vld [vmem:[%s117 + $0xf00] sm:$0xff]
        %v619 = vld [vmem:[%s117 + $0xf08] sm:$0xff]
        %v620 = vld [vmem:[%s117 + $0xf10] sm:$0xff]
        %v621 = vld [vmem:[%s117 + $0xf18] sm:$0xff]
        %v622 = vld [vmem:[%s117 + $0xf20] sm:$0xff]
        %v623 = vld [vmem:[%s117 + $0xf28] sm:$0xff]
        %v624 = vld [vmem:[%s117 + $0xf30] sm:$0xff]
        %v625 = vld [vmem:[%s117 + $0xf38] sm:$0xff]
        %v626 = vld [vmem:[%s117 + $0xf40] sm:$0xff]
        %v627 = vld [vmem:[%s117 + $0xf48] sm:$0xff]
        %v628 = vld [vmem:[%s117 + $0xf50] sm:$0xff]
        %v629 = vld [vmem:[%s117 + $0xf58] sm:$0xff]
        %v630 = vld [vmem:[%s117 + $0xf60] sm:$0xff]
        %v631 = vld [vmem:[%s117 + $0xf68] sm:$0xff]
        %v632 = vld [vmem:[%s117 + $0xf70] sm:$0xff]
        %v633 = vld [vmem:[%s117 + $0xf78] sm:$0xff]
        %v634 = vld [vmem:[%s117 + $0xf80] sm:$0xff]
        %v635 = vld [vmem:[%s117 + $0xf88] sm:$0xff]
        %v636 = vld [vmem:[%s117 + $0xf90] sm:$0xff]
        %v637 = vld [vmem:[%s117 + $0xf98] sm:$0xff]
        %v638 = vld [vmem:[%s117 + $0xfa0] sm:$0xff]
        %v639 = vld [vmem:[%s117 + $0xfa8] sm:$0xff]
        %v640 = vld [vmem:[%s117 + $0xfb0] sm:$0xff]
        %v641 = vld [vmem:[%s117 + $0xfb8] sm:$0xff]
        %v642 = vld [vmem:[%s117 + $0xfc0] sm:$0xff]
        %v643 = vld [vmem:[%s117 + $0xfc8] sm:$0xff]
        %v644 = vld [vmem:[%s117 + $0xfd0] sm:$0xff]
        %v645 = vld [vmem:[%s117 + $0xfd8] sm:$0xff]
        %v646 = vld [vmem:[%s117 + $0xfe0] sm:$0xff]
        %v647 = vld [vmem:[%s117 + $0xfe8] sm:$0xff]
        %v648 = vld [vmem:[%s117 + $0xff0] sm:$0xff]
        %v649 = vld [vmem:[%s117 + $0xff8] sm:$0xff]
        %v650 = vld [vmem:[%s117 + $0x1000] sm:$0xff]
        %v651 = vld [vmem:[%s117 + $0x1008] sm:$0xff]
        %v652 = vld [vmem:[%s117 + $0x1010] sm:$0xff]
        %v653 = vld [vmem:[%s117 + $0x1018] sm:$0xff]
        %v654 = vld [vmem:[%s117 + $0x1020] sm:$0xff]
        %v655 = vld [vmem:[%s117 + $0x1028] sm:$0xff]
        %v656 = vld [vmem:[%s117 + $0x1030] sm:$0xff]
        %v657 = vld [vmem:[%s117 + $0x1038] sm:$0xff]
        %v658 = vld [vmem:[%s117 + $0x1040] sm:$0xff]
        %v659 = vld [vmem:[%s117 + $0x1048] sm:$0xff]
        %v660 = vld [vmem:[%s117 + $0x1050] sm:$0xff]
        %v661 = vld [vmem:[%s117 + $0x1058] sm:$0xff]
        %v662 = vld [vmem:[%s117 + $0x1060] sm:$0xff]
        %v663 = vld [vmem:[%s117 + $0x1068] sm:$0xff]
        %v664 = vld [vmem:[%s117 + $0x1070] sm:$0xff]
        %v665 = vld [vmem:[%s117 + $0x1078] sm:$0xff]
        %v666 = vld [vmem:[%s117 + $0x1080] sm:$0xff]
        %v667 = vld [vmem:[%s117 + $0x1088] sm:$0xff]
        %v668 = vld [vmem:[%s117 + $0x1090] sm:$0xff]
        %v669 = vld [vmem:[%s117 + $0x1098] sm:$0xff]
        %v670 = vld [vmem:[%s117 + $0x10a0] sm:$0xff]
        %v671 = vld [vmem:[%s117 + $0x10a8] sm:$0xff]
        %v672 = vld [vmem:[%s117 + $0x10b0] sm:$0xff]
        %v673 = vld [vmem:[%s117 + $0x10b8] sm:$0xff]
        %v674 = vld [vmem:[%s117 + $0x10c0] sm:$0xff]
        %v675 = vld [vmem:[%s117 + $0x10c8] sm:$0xff]
        %v676 = vld [vmem:[%s117 + $0x10d0] sm:$0xff]
        %v677 = vld [vmem:[%s117 + $0x10d8] sm:$0xff]
        %v678 = vld [vmem:[%s117 + $0x10e0] sm:$0xff]
        %v679 = vld [vmem:[%s117 + $0x10e8] sm:$0xff]
        %v680 = vld [vmem:[%s117 + $0x10f0] sm:$0xff]
        %v681 = vld [vmem:[%s117 + $0x10f8] sm:$0xff]
        %v682 = vld [vmem:[%s117 + $0x1100] sm:$0xff]
        %v683 = vld [vmem:[%s117 + $0x1108] sm:$0xff]
        %v684 = vld [vmem:[%s117 + $0x1110] sm:$0xff]
        %v685 = vld [vmem:[%s117 + $0x1118] sm:$0xff]
        %v686 = vld [vmem:[%s117 + $0x1120] sm:$0xff]
        %v687 = vld [vmem:[%s117 + $0x1128] sm:$0xff]
        %v688 = vld [vmem:[%s117 + $0x1130] sm:$0xff]
        %v689 = vld [vmem:[%s117 + $0x1138] sm:$0xff]
        %v690 = vld [vmem:[%s117 + $0x1140] sm:$0xff]
        %v691 = vld [vmem:[%s117 + $0x1148] sm:$0xff]
        %v692 = vld [vmem:[%s117 + $0x1150] sm:$0xff]
        %v693 = vld [vmem:[%s117 + $0x1158] sm:$0xff]
        %v694 = vld [vmem:[%s117 + $0x1160] sm:$0xff]
        %v695 = vld [vmem:[%s117 + $0x1168] sm:$0xff]
        %v696 = vld [vmem:[%s117 + $0x1170] sm:$0xff]
        %v697 = vld [vmem:[%s117 + $0x1178] sm:$0xff]
        %v698 = vld [vmem:[%s117 + $0x1180] sm:$0xff]
        %v699 = vld [vmem:[%s117 + $0x1188] sm:$0xff]
        %v700 = vld [vmem:[%s117 + $0x1190] sm:$0xff]
        %v701 = vld [vmem:[%s117 + $0x1198] sm:$0xff]
        %v702 = vld [vmem:[%s117 + $0x11a0] sm:$0xff]
        %v703 = vld [vmem:[%s117 + $0x11a8] sm:$0xff]
        %v704 = vld [vmem:[%s117 + $0x11b0] sm:$0xff]
        %v705 = vld [vmem:[%s117 + $0x11b8] sm:$0xff]
        %v706 = vld [vmem:[%s117 + $0x11c0] sm:$0xff]
        %v707 = vld [vmem:[%s117 + $0x11c8] sm:$0xff]
        %v708 = vld [vmem:[%s117 + $0x11d0] sm:$0xff]
        %v709 = vld [vmem:[%s117 + $0x11d8] sm:$0xff]
        %v710 = vld [vmem:[%s117 + $0x11e0] sm:$0xff]
        %v711 = vld [vmem:[%s117 + $0x11e8] sm:$0xff]
        %v712 = vld [vmem:[%s117 + $0x11f0] sm:$0xff]
        %v713 = vld [vmem:[%s117 + $0x11f8] sm:$0xff]
        %v714 = vld [vmem:[%s117 + $0x1200] sm:$0xff]
        %v715 = vld [vmem:[%s117 + $0x1208] sm:$0xff]
        %v716 = vld [vmem:[%s117 + $0x1210] sm:$0xff]
        %v717 = vld [vmem:[%s117 + $0x1218] sm:$0xff]
        %v718 = vld [vmem:[%s117 + $0x1220] sm:$0xff]
        %v719 = vld [vmem:[%s117 + $0x1228] sm:$0xff]
        %v720 = vld [vmem:[%s117 + $0x1230] sm:$0xff]
        %v721 = vld [vmem:[%s117 + $0x1238] sm:$0xff]
        %v722 = vld [vmem:[%s117 + $0x1240] sm:$0xff]
        %v723 = vld [vmem:[%s117 + $0x1248] sm:$0xff]
        %v724 = vld [vmem:[%s117 + $0x1250] sm:$0xff]
        %v725 = vld [vmem:[%s117 + $0x1258] sm:$0xff]
        %v726 = vld [vmem:[%s117 + $0x1260] sm:$0xff]
        %v727 = vld [vmem:[%s117 + $0x1268] sm:$0xff]
        %v728 = vld [vmem:[%s117 + $0x1270] sm:$0xff]
        %v729 = vld [vmem:[%s117 + $0x1278] sm:$0xff]
        %v730 = vld [vmem:[%s117 + $0x1280] sm:$0xff]
        %v731 = vld [vmem:[%s117 + $0x1288] sm:$0xff]
        %v732 = vld [vmem:[%s117 + $0x1290] sm:$0xff]
        %v733 = vld [vmem:[%s117 + $0x1298] sm:$0xff]
        %v734 = vld [vmem:[%s117 + $0x12a0] sm:$0xff]
        %v735 = vld [vmem:[%s117 + $0x12a8] sm:$0xff]
        %v736 = vld [vmem:[%s117 + $0x12b0] sm:$0xff]
        %v737 = vld [vmem:[%s117 + $0x12b8] sm:$0xff]
        %v738 = vld [vmem:[%s117 + $0x12c0] sm:$0xff]
        %v739 = vld [vmem:[%s117 + $0x12c8] sm:$0xff]
        %v740 = vld [vmem:[%s117 + $0x12d0] sm:$0xff]
        %v741 = vld [vmem:[%s117 + $0x12d8] sm:$0xff]
        %v742 = vld [vmem:[%s117 + $0x12e0] sm:$0xff]
        %v743 = vld [vmem:[%s117 + $0x12e8] sm:$0xff]
        %v744 = vld [vmem:[%s117 + $0x12f0] sm:$0xff]
        %v745 = vld [vmem:[%s117 + $0x12f8] sm:$0xff]
        %v746 = vld [vmem:[%s117 + $0x1300] sm:$0xff]
        %v747 = vld [vmem:[%s117 + $0x1308] sm:$0xff]
        %v748 = vld [vmem:[%s117 + $0x1310] sm:$0xff]
        %v749 = vld [vmem:[%s117 + $0x1318] sm:$0xff]
        %v750 = vld [vmem:[%s117 + $0x1320] sm:$0xff]
        %v751 = vld [vmem:[%s117 + $0x1328] sm:$0xff]
        %v752 = vld [vmem:[%s117 + $0x1330] sm:$0xff]
        %v753 = vld [vmem:[%s117 + $0x1338] sm:$0xff]
        %v754 = vld [vmem:[%s117 + $0x1340] sm:$0xff]
        %v755 = vld [vmem:[%s117 + $0x1348] sm:$0xff]
        %v756 = vld [vmem:[%s117 + $0x1350] sm:$0xff]
        %v757 = vld [vmem:[%s117 + $0x1358] sm:$0xff]
        %v758 = vld [vmem:[%s117 + $0x1360] sm:$0xff]
        %v759 = vld [vmem:[%s117 + $0x1368] sm:$0xff]
        %v760 = vld [vmem:[%s117 + $0x1370] sm:$0xff]
        %v761 = vld [vmem:[%s117 + $0x1378] sm:$0xff]
        %v762 = vld [vmem:[%s117 + $0x1380] sm:$0xff]
        %v763 = vld [vmem:[%s117 + $0x1388] sm:$0xff]
        %v764 = vld [vmem:[%s117 + $0x1390] sm:$0xff]
        %v765 = vld [vmem:[%s117 + $0x1398] sm:$0xff]
        %v766 = vld [vmem:[%s117 + $0x13a0] sm:$0xff]
        %v767 = vld [vmem:[%s117 + $0x13a8] sm:$0xff]
        %v768 = vld [vmem:[%s117 + $0x13b0] sm:$0xff]
        %v769 = vld [vmem:[%s117 + $0x13b8] sm:$0xff]
        %v770 = vld [vmem:[%s117 + $0x13c0] sm:$0xff]
        %v771 = vld [vmem:[%s117 + $0x13c8] sm:$0xff]
        %v772 = vld [vmem:[%s117 + $0x13d0] sm:$0xff]
        %v773 = vld [vmem:[%s117 + $0x13d8] sm:$0xff]
        %v774 = vld [vmem:[%s117 + $0x13e0] sm:$0xff]
        %v775 = vld [vmem:[%s117 + $0x13e8] sm:$0xff]
        %v776 = vld [vmem:[%s117 + $0x13f0] sm:$0xff]
        %v777 = vld [vmem:[%s117 + $0x13f8] sm:$0xff]
        %v778 = vld [vmem:[%s117 + $0x1400] sm:$0xff]
        %v779 = vld [vmem:[%s117 + $0x1408] sm:$0xff]
        %v780 = vld [vmem:[%s117 + $0x1410] sm:$0xff]
        %v781 = vld [vmem:[%s117 + $0x1418] sm:$0xff]
        %v782 = vld [vmem:[%s117 + $0x1420] sm:$0xff]
        %v783 = vld [vmem:[%s117 + $0x1428] sm:$0xff]
        %v784 = vld [vmem:[%s117 + $0x1430] sm:$0xff]
        %v785 = vld [vmem:[%s117 + $0x1438] sm:$0xff]
        %v786 = vld [vmem:[%s117 + $0x1440] sm:$0xff]
        %v787 = vld [vmem:[%s117 + $0x1448] sm:$0xff]
        %v788 = vld [vmem:[%s117 + $0x1450] sm:$0xff]
        %v789 = vld [vmem:[%s117 + $0x1458] sm:$0xff]
        %v790 = vld [vmem:[%s117 + $0x1460] sm:$0xff]
        %v791 = vld [vmem:[%s117 + $0x1468] sm:$0xff]
        %v792 = vld [vmem:[%s117 + $0x1470] sm:$0xff]
        %v793 = vld [vmem:[%s117 + $0x1478] sm:$0xff]
        %v794 = vld [vmem:[%s117 + $0x1480] sm:$0xff]
        %v795 = vld [vmem:[%s117 + $0x1488] sm:$0xff]
        %v796 = vld [vmem:[%s117 + $0x1490] sm:$0xff]
        %v797 = vld [vmem:[%s117 + $0x1498] sm:$0xff]
        %v798 = vld [vmem:[%s117 + $0x14a0] sm:$0xff]
        %v799 = vld [vmem:[%s117 + $0x14a8] sm:$0xff]
        %v800 = vld [vmem:[%s117 + $0x14b0] sm:$0xff]
        %v801 = vld [vmem:[%s117 + $0x14b8] sm:$0xff]
        %v802 = vld [vmem:[%s117 + $0x14c0] sm:$0xff]
        %v803 = vld [vmem:[%s117 + $0x14c8] sm:$0xff]
        %v804 = vld [vmem:[%s117 + $0x14d0] sm:$0xff]
        %v805 = vld [vmem:[%s117 + $0x14d8] sm:$0xff]
        %v806 = vld [vmem:[%s117 + $0x14e0] sm:$0xff]
        %v807 = vld [vmem:[%s117 + $0x14e8] sm:$0xff]
        %v808 = vld [vmem:[%s117 + $0x14f0] sm:$0xff]
        %v809 = vld [vmem:[%s117 + $0x14f8] sm:$0xff]
        %v810 = vld [vmem:[%s117 + $0x1500] sm:$0xff]
        %v811 = vld [vmem:[%s117 + $0x1508] sm:$0xff]
        %v812 = vld [vmem:[%s117 + $0x1510] sm:$0xff]
        %v813 = vld [vmem:[%s117 + $0x1518] sm:$0xff]
        %v814 = vld [vmem:[%s117 + $0x1520] sm:$0xff]
        %v815 = vld [vmem:[%s117 + $0x1528] sm:$0xff]
        %v816 = vld [vmem:[%s117 + $0x1530] sm:$0xff]
        %v817 = vld [vmem:[%s117 + $0x1538] sm:$0xff]
        %v818 = vld [vmem:[%s117 + $0x1540] sm:$0xff]
        %v819 = vld [vmem:[%s117 + $0x1548] sm:$0xff]
        %v820 = vld [vmem:[%s117 + $0x1550] sm:$0xff]
        %v821 = vld [vmem:[%s117 + $0x1558] sm:$0xff]
        %v822 = vld [vmem:[%s117 + $0x1560] sm:$0xff]
        %v823 = vld [vmem:[%s117 + $0x1568] sm:$0xff]
        %v824 = vld [vmem:[%s117 + $0x1570] sm:$0xff]
        %v825 = vld [vmem:[%s117 + $0x1578] sm:$0xff]
        %v826 = vld [vmem:[%s117 + $0x1580] sm:$0xff]
        %v827 = vld [vmem:[%s117 + $0x1588] sm:$0xff]
        %v828 = vld [vmem:[%s117 + $0x1590] sm:$0xff]
        %v829 = vld [vmem:[%s117 + $0x1598] sm:$0xff]
        %v830 = vld [vmem:[%s117 + $0x15a0] sm:$0xff]
        %v831 = vld [vmem:[%s117 + $0x15a8] sm:$0xff]
        %v832 = vld [vmem:[%s117 + $0x15b0] sm:$0xff]
        %v833 = vld [vmem:[%s117 + $0x15b8] sm:$0xff]
        %v834 = vld [vmem:[%s117 + $0x15c0] sm:$0xff]
        %v835 = vld [vmem:[%s117 + $0x15c8] sm:$0xff]
        %v836 = vld [vmem:[%s117 + $0x15d0] sm:$0xff]
        %v837 = vld [vmem:[%s117 + $0x15d8] sm:$0xff]
        %v838 = vld [vmem:[%s117 + $0x15e0] sm:$0xff]
        %v839 = vld [vmem:[%s117 + $0x15e8] sm:$0xff]
        %v840 = vld [vmem:[%s117 + $0x15f0] sm:$0xff]
        %v841 = vld [vmem:[%s117 + $0x15f8] sm:$0xff]
        %v842 = vld [vmem:[%s117 + $0x1600] sm:$0xff]
        %v843 = vld [vmem:[%s117 + $0x1608] sm:$0xff]
        %v844 = vld [vmem:[%s117 + $0x1610] sm:$0xff]
        %v845 = vld [vmem:[%s117 + $0x1618] sm:$0xff]
        %v846 = vld [vmem:[%s117 + $0x1620] sm:$0xff]
        %v847 = vld [vmem:[%s117 + $0x1628] sm:$0xff]
        %v848 = vld [vmem:[%s117 + $0x1630] sm:$0xff]
        %v849 = vld [vmem:[%s117 + $0x1638] sm:$0xff]
        %v850 = vld [vmem:[%s117 + $0x1640] sm:$0xff]
        %v851 = vld [vmem:[%s117 + $0x1648] sm:$0xff]
        %v852 = vld [vmem:[%s117 + $0x1650] sm:$0xff]
        %v853 = vld [vmem:[%s117 + $0x1658] sm:$0xff]
        %v854 = vld [vmem:[%s117 + $0x1660] sm:$0xff]
        %v855 = vld [vmem:[%s117 + $0x1668] sm:$0xff]
        %v856 = vld [vmem:[%s117 + $0x1670] sm:$0xff]
        %v857 = vld [vmem:[%s117 + $0x1678] sm:$0xff]
        %v858 = vld [vmem:[%s117 + $0x1680] sm:$0xff]
        %v859 = vld [vmem:[%s117 + $0x1688] sm:$0xff]
        %v860 = vld [vmem:[%s117 + $0x1690] sm:$0xff]
        %v861 = vld [vmem:[%s117 + $0x1698] sm:$0xff]
        %v862 = vld [vmem:[%s117 + $0x16a0] sm:$0xff]
        %v863 = vld [vmem:[%s117 + $0x16a8] sm:$0xff]
        %v864 = vld [vmem:[%s117 + $0x16b0] sm:$0xff]
        %v865 = vld [vmem:[%s117 + $0x16b8] sm:$0xff]
        %v866 = vld [vmem:[%s117 + $0x16c0] sm:$0xff]
        %v867 = vld [vmem:[%s117 + $0x16c8] sm:$0xff]
        %v868 = vld [vmem:[%s117 + $0x16d0] sm:$0xff]
        %v869 = vld [vmem:[%s117 + $0x16d8] sm:$0xff]
        %v870 = vld [vmem:[%s117 + $0x16e0] sm:$0xff]
        %v871 = vld [vmem:[%s117 + $0x16e8] sm:$0xff]
        %v872 = vld [vmem:[%s117 + $0x16f0] sm:$0xff]
        %v873 = vld [vmem:[%s117 + $0x16f8] sm:$0xff]
        %v874 = vld [vmem:[%s117 + $0x1700] sm:$0xff]
        %v875 = vld [vmem:[%s117 + $0x1708] sm:$0xff]
        %v876 = vld [vmem:[%s117 + $0x1710] sm:$0xff]
        %v877 = vld [vmem:[%s117 + $0x1718] sm:$0xff]
        %v878 = vld [vmem:[%s117 + $0x1720] sm:$0xff]
        %v879 = vld [vmem:[%s117 + $0x1728] sm:$0xff]
        %v880 = vld [vmem:[%s117 + $0x1730] sm:$0xff]
        %v881 = vld [vmem:[%s117 + $0x1738] sm:$0xff]
        %v882 = vld [vmem:[%s117 + $0x1740] sm:$0xff]
        %v883 = vld [vmem:[%s117 + $0x1748] sm:$0xff]
        %v884 = vld [vmem:[%s117 + $0x1750] sm:$0xff]
        %v885 = vld [vmem:[%s117 + $0x1758] sm:$0xff]
        %v886 = vld [vmem:[%s117 + $0x1760] sm:$0xff]
        %v887 = vld [vmem:[%s117 + $0x1768] sm:$0xff]
        %v888 = vld [vmem:[%s117 + $0x1770] sm:$0xff]
        %v889 = vld [vmem:[%s117 + $0x1778] sm:$0xff]
        %v890 = vld [vmem:[%s117 + $0x1780] sm:$0xff]
        %v891 = vld [vmem:[%s117 + $0x1788] sm:$0xff]
        %v892 = vld [vmem:[%s117 + $0x1790] sm:$0xff]
        %v893 = vld [vmem:[%s117 + $0x1798] sm:$0xff]
        %v894 = vld [vmem:[%s117 + $0x17a0] sm:$0xff]
        %v895 = vld [vmem:[%s117 + $0x17a8] sm:$0xff]
        %v896 = vld [vmem:[%s117 + $0x17b0] sm:$0xff]
        %v897 = vld [vmem:[%s117 + $0x17b8] sm:$0xff]
        %v898 = vld [vmem:[%s117 + $0x17c0] sm:$0xff]
        %v899 = vld [vmem:[%s117 + $0x17c8] sm:$0xff]
        %v900 = vld [vmem:[%s117 + $0x17d0] sm:$0xff]
        %v901 = vld [vmem:[%s117 + $0x17d8] sm:$0xff]
        %v902 = vld [vmem:[%s117 + $0x17e0] sm:$0xff]
        %v903 = vld [vmem:[%s117 + $0x17e8] sm:$0xff]
        %v904 = vld [vmem:[%s117 + $0x17f0] sm:$0xff]
        %v905 = vld [vmem:[%s117 + $0x17f8] sm:$0xff]
        %v906 = vld [vmem:[%s117 + $0x1800] sm:$0xff]
        %v907 = vld [vmem:[%s117 + $0x1808] sm:$0xff]
        %v908 = vld [vmem:[%s117 + $0x1810] sm:$0xff]
        %v909 = vld [vmem:[%s117 + $0x1818] sm:$0xff]
        %v910 = vld [vmem:[%s117 + $0x1820] sm:$0xff]
        %v911 = vld [vmem:[%s117 + $0x1828] sm:$0xff]
        %v912 = vld [vmem:[%s117 + $0x1830] sm:$0xff]
        %v913 = vld [vmem:[%s117 + $0x1838] sm:$0xff]
        %v914 = vld [vmem:[%s117 + $0x1840] sm:$0xff]
        %v915 = vld [vmem:[%s117 + $0x1848] sm:$0xff]
        %v916 = vld [vmem:[%s117 + $0x1850] sm:$0xff]
        %v917 = vld [vmem:[%s117 + $0x1858] sm:$0xff]
        %v918 = vld [vmem:[%s117 + $0x1860] sm:$0xff]
        %v919 = vld [vmem:[%s117 + $0x1868] sm:$0xff]
        %v920 = vld [vmem:[%s117 + $0x1870] sm:$0xff]
        %v921 = vld [vmem:[%s117 + $0x1878] sm:$0xff]
        %v922 = vld [vmem:[%s117 + $0x1880] sm:$0xff]
        %v923 = vld [vmem:[%s117 + $0x1888] sm:$0xff]
        %v924 = vld [vmem:[%s117 + $0x1890] sm:$0xff]
        %v925 = vld [vmem:[%s117 + $0x1898] sm:$0xff]
        %v926 = vld [vmem:[%s117 + $0x18a0] sm:$0xff]
        %v927 = vld [vmem:[%s117 + $0x18a8] sm:$0xff]
        %v928 = vld [vmem:[%s117 + $0x18b0] sm:$0xff]
        %v929 = vld [vmem:[%s117 + $0x18b8] sm:$0xff]
        %v930 = vld [vmem:[%s117 + $0x18c0] sm:$0xff]
        %v931 = vld [vmem:[%s117 + $0x18c8] sm:$0xff]
        %v932 = vld [vmem:[%s117 + $0x18d0] sm:$0xff]
        %v933 = vld [vmem:[%s117 + $0x18d8] sm:$0xff]
        %v934 = vld [vmem:[%s117 + $0x18e0] sm:$0xff]
        %v935 = vld [vmem:[%s117 + $0x18e8] sm:$0xff]
        %v936 = vld [vmem:[%s117 + $0x18f0] sm:$0xff]
        %v937 = vld [vmem:[%s117 + $0x18f8] sm:$0xff]
        %v938 = vld [vmem:[%s117 + $0x1900] sm:$0xff]
        %v939 = vld [vmem:[%s117 + $0x1908] sm:$0xff]
        %v940 = vld [vmem:[%s117 + $0x1910] sm:$0xff]
        %v941 = vld [vmem:[%s117 + $0x1918] sm:$0xff]
        %v942 = vld [vmem:[%s117 + $0x1920] sm:$0xff]
        %v943 = vld [vmem:[%s117 + $0x1928] sm:$0xff]
        %v944 = vld [vmem:[%s117 + $0x1930] sm:$0xff]
        %v945 = vld [vmem:[%s117 + $0x1938] sm:$0xff]
        %v946 = vld [vmem:[%s117 + $0x1940] sm:$0xff]
        %v947 = vld [vmem:[%s117 + $0x1948] sm:$0xff]
        %v948 = vld [vmem:[%s117 + $0x1950] sm:$0xff]
        %v949 = vld [vmem:[%s117 + $0x1958] sm:$0xff]
        %v950 = vld [vmem:[%s117 + $0x1960] sm:$0xff]
        %v951 = vld [vmem:[%s117 + $0x1968] sm:$0xff]
        %v952 = vld [vmem:[%s117 + $0x1970] sm:$0xff]
        %v953 = vld [vmem:[%s117 + $0x1978] sm:$0xff]
        %v954 = vld [vmem:[%s117 + $0x1980] sm:$0xff]
        %v955 = vld [vmem:[%s117 + $0x1988] sm:$0xff]
        %v956 = vld [vmem:[%s117 + $0x1990] sm:$0xff]
        %v957 = vld [vmem:[%s117 + $0x1998] sm:$0xff]
        %v958 = vld [vmem:[%s117 + $0x19a0] sm:$0xff]
        %v959 = vld [vmem:[%s117 + $0x19a8] sm:$0xff]
        %v960 = vld [vmem:[%s117 + $0x19b0] sm:$0xff]
        %v961 = vld [vmem:[%s117 + $0x19b8] sm:$0xff]
        %v962 = vld [vmem:[%s117 + $0x19c0] sm:$0xff]
        %v963 = vld [vmem:[%s117 + $0x19c8] sm:$0xff]
        %v964 = vld [vmem:[%s117 + $0x19d0] sm:$0xff]
        %v965 = vld [vmem:[%s117 + $0x19d8] sm:$0xff]
        %v966 = vld [vmem:[%s117 + $0x19e0] sm:$0xff]
        %v967 = vld [vmem:[%s117 + $0x19e8] sm:$0xff]
        %v968 = vld [vmem:[%s117 + $0x19f0] sm:$0xff]
        %v969 = vld [vmem:[%s117 + $0x19f8] sm:$0xff]
        %v970 = vld [vmem:[%s117 + $0x1a00] sm:$0xff]
        %v971 = vld [vmem:[%s117 + $0x1a08] sm:$0xff]
        %v972 = vld [vmem:[%s117 + $0x1a10] sm:$0xff]
        %v973 = vld [vmem:[%s117 + $0x1a18] sm:$0xff]
        %v974 = vld [vmem:[%s117 + $0x1a20] sm:$0xff]
        %v975 = vld [vmem:[%s117 + $0x1a28] sm:$0xff]
        %v976 = vld [vmem:[%s117 + $0x1a30] sm:$0xff]
        %v977 = vld [vmem:[%s117 + $0x1a38] sm:$0xff]
        %v978 = vld [vmem:[%s117 + $0x1a40] sm:$0xff]
        %v979 = vld [vmem:[%s117 + $0x1a48] sm:$0xff]
        %v980 = vld [vmem:[%s117 + $0x1a50] sm:$0xff]
        %v981 = vld [vmem:[%s117 + $0x1a58] sm:$0xff]
        %v982 = vld [vmem:[%s117 + $0x1a60] sm:$0xff]
        %v983 = vld [vmem:[%s117 + $0x1a68] sm:$0xff]
        %v984 = vld [vmem:[%s117 + $0x1a70] sm:$0xff]
        %v985 = vld [vmem:[%s117 + $0x1a78] sm:$0xff]
        %v986 = vld [vmem:[%s117 + $0x1a80] sm:$0xff]
        %v987 = vld [vmem:[%s117 + $0x1a88] sm:$0xff]
        %v988 = vld [vmem:[%s117 + $0x1a90] sm:$0xff]
        %v989 = vld [vmem:[%s117 + $0x1a98] sm:$0xff]
        %v990 = vld [vmem:[%s117 + $0x1aa0] sm:$0xff]
        %v991 = vld [vmem:[%s117 + $0x1aa8] sm:$0xff]
        %v992 = vld [vmem:[%s117 + $0x1ab0] sm:$0xff]
        %v993 = vld [vmem:[%s117 + $0x1ab8] sm:$0xff]
        %v994 = vld [vmem:[%s117 + $0x1ac0] sm:$0xff]
        %v995 = vld [vmem:[%s117 + $0x1ac8] sm:$0xff]
        %v996 = vld [vmem:[%s117 + $0x1ad0] sm:$0xff]
        %v997 = vld [vmem:[%s117 + $0x1ad8] sm:$0xff]
        %v998 = vld [vmem:[%s117 + $0x1ae0] sm:$0xff]
        %v999 = vld [vmem:[%s117 + $0x1ae8] sm:$0xff]
        %v1000 = vld [vmem:[%s117 + $0x1af0] sm:$0xff]
        %v1001 = vld [vmem:[%s117 + $0x1af8] sm:$0xff]
        %v1002 = vld [vmem:[%s117 + $0x1b00] sm:$0xff]
        %v1003 = vld [vmem:[%s117 + $0x1b08] sm:$0xff]
        %v1004 = vld [vmem:[%s117 + $0x1b10] sm:$0xff]
        %v1005 = vld [vmem:[%s117 + $0x1b18] sm:$0xff]
        %v1006 = vld [vmem:[%s117 + $0x1b20] sm:$0xff]
        %v1007 = vld [vmem:[%s117 + $0x1b28] sm:$0xff]
        %v1008 = vld [vmem:[%s117 + $0x1b30] sm:$0xff]
        %v1009 = vld [vmem:[%s117 + $0x1b38] sm:$0xff]
        %v1010 = vld [vmem:[%s117 + $0x1b40] sm:$0xff]
        %v1011 = vld [vmem:[%s117 + $0x1b48] sm:$0xff]
        %v1012 = vld [vmem:[%s117 + $0x1b50] sm:$0xff]
        %v1013 = vld [vmem:[%s117 + $0x1b58] sm:$0xff]
        %v1014 = vld [vmem:[%s117 + $0x1b60] sm:$0xff]
        %v1015 = vld [vmem:[%s117 + $0x1b68] sm:$0xff]
        %v1016 = vld [vmem:[%s117 + $0x1b70] sm:$0xff]
        %v1017 = vld [vmem:[%s117 + $0x1b78] sm:$0xff]
        %v1018 = vld [vmem:[%s117 + $0x1b80] sm:$0xff]
        %v1019 = vld [vmem:[%s117 + $0x1b88] sm:$0xff]
        %v1020 = vld [vmem:[%s117 + $0x1b90] sm:$0xff]
        %v1021 = vld [vmem:[%s117 + $0x1b98] sm:$0xff]
        %v1022 = vld [vmem:[%s117 + $0x1ba0] sm:$0xff]
        %v1023 = vld [vmem:[%s117 + $0x1ba8] sm:$0xff]
        %v1024 = vld [vmem:[%s117 + $0x1bb0] sm:$0xff]
        %v1025 = vld [vmem:[%s117 + $0x1bb8] sm:$0xff]
        %v1026 = vld [vmem:[%s117 + $0x1bc0] sm:$0xff]
        %v1027 = vld [vmem:[%s117 + $0x1bc8] sm:$0xff]
        %v1028 = vld [vmem:[%s117 + $0x1bd0] sm:$0xff]
        %v1029 = vld [vmem:[%s117 + $0x1bd8] sm:$0xff]
        %v1030 = vld [vmem:[%s117 + $0x1be0] sm:$0xff]
        %v1031 = vld [vmem:[%s117 + $0x1be8] sm:$0xff]
        %v1032 = vld [vmem:[%s117 + $0x1bf0] sm:$0xff]
        %v1033 = vld [vmem:[%s117 + $0x1bf8] sm:$0xff]
        %v1034 = vld [vmem:[%s117 + $0x1c00] sm:$0xff]
        %v1035 = vld [vmem:[%s117 + $0x1c08] sm:$0xff]
        %v1036 = vld [vmem:[%s117 + $0x1c10] sm:$0xff]
        %v1037 = vld [vmem:[%s117 + $0x1c18] sm:$0xff]
        %v1038 = vld [vmem:[%s117 + $0x1c20] sm:$0xff]
        %v1039 = vld [vmem:[%s117 + $0x1c28] sm:$0xff]
        %v1040 = vld [vmem:[%s117 + $0x1c30] sm:$0xff]
        %v1041 = vld [vmem:[%s117 + $0x1c38] sm:$0xff]
        %v1042 = vld [vmem:[%s117 + $0x1c40] sm:$0xff]
        %v1043 = vld [vmem:[%s117 + $0x1c48] sm:$0xff]
        %v1044 = vld [vmem:[%s117 + $0x1c50] sm:$0xff]
        %v1045 = vld [vmem:[%s117 + $0x1c58] sm:$0xff]
        %v1046 = vld [vmem:[%s117 + $0x1c60] sm:$0xff]
        %v1047 = vld [vmem:[%s117 + $0x1c68] sm:$0xff]
        %v1048 = vld [vmem:[%s117 + $0x1c70] sm:$0xff]
        %v1049 = vld [vmem:[%s117 + $0x1c78] sm:$0xff]
        %v1050 = vld [vmem:[%s117 + $0x1c80] sm:$0xff]
        %v1051 = vld [vmem:[%s117 + $0x1c88] sm:$0xff]
        %v1052 = vld [vmem:[%s117 + $0x1c90] sm:$0xff]
        %v1053 = vld [vmem:[%s117 + $0x1c98] sm:$0xff]
        %v1054 = vld [vmem:[%s117 + $0x1ca0] sm:$0xff]
        %v1055 = vld [vmem:[%s117 + $0x1ca8] sm:$0xff]
        %v1056 = vld [vmem:[%s117 + $0x1cb0] sm:$0xff]
        %v1057 = vld [vmem:[%s117 + $0x1cb8] sm:$0xff]
        %v1058 = vld [vmem:[%s117 + $0x1cc0] sm:$0xff]
        %v1059 = vld [vmem:[%s117 + $0x1cc8] sm:$0xff]
        %v1060 = vld [vmem:[%s117 + $0x1cd0] sm:$0xff]
        %v1061 = vld [vmem:[%s117 + $0x1cd8] sm:$0xff]
        %v1062 = vld [vmem:[%s117 + $0x1ce0] sm:$0xff]
        %v1063 = vld [vmem:[%s117 + $0x1ce8] sm:$0xff]
        %v1064 = vld [vmem:[%s117 + $0x1cf0] sm:$0xff]
        %v1065 = vld [vmem:[%s117 + $0x1cf8] sm:$0xff]
        %v1066 = vld [vmem:[%s117 + $0x1d00] sm:$0xff]
        %v1067 = vld [vmem:[%s117 + $0x1d08] sm:$0xff]
        %v1068 = vld [vmem:[%s117 + $0x1d10] sm:$0xff]
        %v1069 = vld [vmem:[%s117 + $0x1d18] sm:$0xff]
        %v1070 = vld [vmem:[%s117 + $0x1d20] sm:$0xff]
        %v1071 = vld [vmem:[%s117 + $0x1d28] sm:$0xff]
        %v1072 = vld [vmem:[%s117 + $0x1d30] sm:$0xff]
        %v1073 = vld [vmem:[%s117 + $0x1d38] sm:$0xff]
        %v1074 = vld [vmem:[%s117 + $0x1d40] sm:$0xff]
        %v1075 = vld [vmem:[%s117 + $0x1d48] sm:$0xff]
        %v1076 = vld [vmem:[%s117 + $0x1d50] sm:$0xff]
        %v1077 = vld [vmem:[%s117 + $0x1d58] sm:$0xff]
        %v1078 = vld [vmem:[%s117 + $0x1d60] sm:$0xff]
        %v1079 = vld [vmem:[%s117 + $0x1d68] sm:$0xff]
        %v1080 = vld [vmem:[%s117 + $0x1d70] sm:$0xff]
        %v1081 = vld [vmem:[%s117 + $0x1d78] sm:$0xff]
        %v1082 = vld [vmem:[%s117 + $0x1d80] sm:$0xff]
        %v1083 = vld [vmem:[%s117 + $0x1d88] sm:$0xff]
        %v1084 = vld [vmem:[%s117 + $0x1d90] sm:$0xff]
        %v1085 = vld [vmem:[%s117 + $0x1d98] sm:$0xff]
        %v1086 = vld [vmem:[%s117 + $0x1da0] sm:$0xff]
        %v1087 = vld [vmem:[%s117 + $0x1da8] sm:$0xff]
        %v1088 = vld [vmem:[%s117 + $0x1db0] sm:$0xff]
        %v1089 = vld [vmem:[%s117 + $0x1db8] sm:$0xff]
        %v1090 = vld [vmem:[%s117 + $0x1dc0] sm:$0xff]
        %v1091 = vld [vmem:[%s117 + $0x1dc8] sm:$0xff]
        %v1092 = vld [vmem:[%s117 + $0x1dd0] sm:$0xff]
        %v1093 = vld [vmem:[%s117 + $0x1dd8] sm:$0xff]
        %v1094 = vld [vmem:[%s117 + $0x1de0] sm:$0xff]
        %v1095 = vld [vmem:[%s117 + $0x1de8] sm:$0xff]
        %v1096 = vld [vmem:[%s117 + $0x1df0] sm:$0xff]
        %v1097 = vld [vmem:[%s117 + $0x1df8] sm:$0xff]
        %v1098 = vld [vmem:[%s117 + $0x1e00] sm:$0xff]
        %v1099 = vld [vmem:[%s117 + $0x1e08] sm:$0xff]
        %v1100 = vld [vmem:[%s117 + $0x1e10] sm:$0xff]
        %v1101 = vld [vmem:[%s117 + $0x1e18] sm:$0xff]
        %v1102 = vld [vmem:[%s117 + $0x1e20] sm:$0xff]
        %v1103 = vld [vmem:[%s117 + $0x1e28] sm:$0xff]
        %v1104 = vld [vmem:[%s117 + $0x1e30] sm:$0xff]
        %v1105 = vld [vmem:[%s117 + $0x1e38] sm:$0xff]
        %v1106 = vld [vmem:[%s117 + $0x1e40] sm:$0xff]
        %v1107 = vld [vmem:[%s117 + $0x1e48] sm:$0xff]
        %v1108 = vld [vmem:[%s117 + $0x1e50] sm:$0xff]
        %v1109 = vld [vmem:[%s117 + $0x1e58] sm:$0xff]
        %v1110 = vld [vmem:[%s117 + $0x1e60] sm:$0xff]
        %v1111 = vld [vmem:[%s117 + $0x1e68] sm:$0xff]
        %v1112 = vld [vmem:[%s117 + $0x1e70] sm:$0xff]
        %v1113 = vld [vmem:[%s117 + $0x1e78] sm:$0xff]
        %v1114 = vld [vmem:[%s117 + $0x1e80] sm:$0xff]
        %v1115 = vld [vmem:[%s117 + $0x1e88] sm:$0xff]
        %v1116 = vld [vmem:[%s117 + $0x1e90] sm:$0xff]
        %v1117 = vld [vmem:[%s117 + $0x1e98] sm:$0xff]
        %v1118 = vld [vmem:[%s117 + $0x1ea0] sm:$0xff]
        %v1119 = vld [vmem:[%s117 + $0x1ea8] sm:$0xff]
        %v1120 = vld [vmem:[%s117 + $0x1eb0] sm:$0xff]
        %v1121 = vld [vmem:[%s117 + $0x1eb8] sm:$0xff]
        %v1122 = vld [vmem:[%s117 + $0x1ec0] sm:$0xff]
        %v1123 = vld [vmem:[%s117 + $0x1ec8] sm:$0xff]
        %v1124 = vld [vmem:[%s117 + $0x1ed0] sm:$0xff]
        %v1125 = vld [vmem:[%s117 + $0x1ed8] sm:$0xff]
        %v1126 = vld [vmem:[%s117 + $0x1ee0] sm:$0xff]
        %v1127 = vld [vmem:[%s117 + $0x1ee8] sm:$0xff]
        %v1128 = vld [vmem:[%s117 + $0x1ef0] sm:$0xff]
        %v1129 = vld [vmem:[%s117 + $0x1ef8] sm:$0xff]
        %v1130 = vld [vmem:[%s117 + $0x1f00] sm:$0xff]
        %v1131 = vld [vmem:[%s117 + $0x1f08] sm:$0xff]
        %v1132 = vld [vmem:[%s117 + $0x1f10] sm:$0xff]
        %v1133 = vld [vmem:[%s117 + $0x1f18] sm:$0xff]
        %v1134 = vld [vmem:[%s117 + $0x1f20] sm:$0xff]
        %v1135 = vld [vmem:[%s117 + $0x1f28] sm:$0xff]
        %v1136 = vld [vmem:[%s117 + $0x1f30] sm:$0xff]
        %v1137 = vld [vmem:[%s117 + $0x1f38] sm:$0xff]
        %v1138 = vld [vmem:[%s117 + $0x1f40] sm:$0xff]
        %v1139 = vld [vmem:[%s117 + $0x1f48] sm:$0xff]
        %v1140 = vld [vmem:[%s117 + $0x1f50] sm:$0xff]
        %v1141 = vld [vmem:[%s117 + $0x1f58] sm:$0xff]
        %v1142 = vld [vmem:[%s117 + $0x1f60] sm:$0xff]
        %v1143 = vld [vmem:[%s117 + $0x1f68] sm:$0xff]
        %v1144 = vld [vmem:[%s117 + $0x1f70] sm:$0xff]
        %v1145 = vld [vmem:[%s117 + $0x1f78] sm:$0xff]
        %v1146 = vld [vmem:[%s117 + $0x1f80] sm:$0xff]
        %v1147 = vld [vmem:[%s117 + $0x1f88] sm:$0xff]
        %v1148 = vld [vmem:[%s117 + $0x1f90] sm:$0xff]
        %v1149 = vld [vmem:[%s117 + $0x1f98] sm:$0xff]
        %v1150 = vld [vmem:[%s117 + $0x1fa0] sm:$0xff]
        %v1151 = vld [vmem:[%s117 + $0x1fa8] sm:$0xff]
        %v1152 = vld [vmem:[%s117 + $0x1fb0] sm:$0xff]
        %v1153 = vld [vmem:[%s117 + $0x1fb8] sm:$0xff]
        %v1154 = vld [vmem:[%s117 + $0x1fc0] sm:$0xff]
        %v1155 = vld [vmem:[%s117 + $0x1fc8] sm:$0xff]
        %v1156 = vld [vmem:[%s117 + $0x1fd0] sm:$0xff]
        %v1157 = vld [vmem:[%s117 + $0x1fd8] sm:$0xff]
        %v1158 = vld [vmem:[%s117 + $0x1fe0] sm:$0xff]
        %v1159 = vld [vmem:[%s117 + $0x1fe8] sm:$0xff]
        %v1160 = vld [vmem:[%s117 + $0x1ff0] sm:$0xff]
        %v1161 = vld [vmem:[%s117 + $0x1ff8] sm:$0xff]
        %v1162 = vmul.f32 %v138, %v138
        %v1163 = vmul.f32 %v139, %v139
        %v1164 = vmul.f32 %v140, %v140
        %v1165 = vmul.f32 %v141, %v141
        %v1166 = vmul.f32 %v142, %v142
        %v1167 = vmul.f32 %v143, %v143
        %v1168 = vmul.f32 %v144, %v144
        %v1169 = vmul.f32 %v145, %v145
        %v1170 = vmul.f32 %v146, %v146
        %v1171 = vmul.f32 %v147, %v147
        %v1172 = vmul.f32 %v148, %v148
        %v1173 = vmul.f32 %v149, %v149
        %v1174 = vmul.f32 %v150, %v150
        %v1175 = vmul.f32 %v151, %v151
        %v1176 = vmul.f32 %v152, %v152
        %v1177 = vmul.f32 %v153, %v153
        %v1178 = vmul.f32 %v154, %v154
        %v1179 = vmul.f32 %v155, %v155
        %v1180 = vmul.f32 %v156, %v156
        %v1181 = vmul.f32 %v157, %v157
        %v1182 = vmul.f32 %v158, %v158
        %v1183 = vmul.f32 %v159, %v159
        %v1184 = vmul.f32 %v160, %v160
        %v1185 = vmul.f32 %v161, %v161
        %v1186 = vmul.f32 %v162, %v162
        %v1187 = vmul.f32 %v163, %v163
        %v1188 = vmul.f32 %v164, %v164
        %v1189 = vmul.f32 %v165, %v165
        %v1190 = vmul.f32 %v166, %v166
        %v1191 = vmul.f32 %v167, %v167
        %v1192 = vmul.f32 %v168, %v168
        %v1193 = vmul.f32 %v169, %v169
        %v1194 = vmul.f32 %v170, %v170
        %v1195 = vmul.f32 %v171, %v171
        %v1196 = vmul.f32 %v172, %v172
        %v1197 = vmul.f32 %v173, %v173
        %v1198 = vmul.f32 %v174, %v174
        %v1199 = vmul.f32 %v175, %v175
        %v1200 = vmul.f32 %v176, %v176
        %v1201 = vmul.f32 %v177, %v177
        %v1202 = vmul.f32 %v178, %v178
        %v1203 = vmul.f32 %v179, %v179
        %v1204 = vmul.f32 %v180, %v180
        %v1205 = vmul.f32 %v181, %v181
        %v1206 = vmul.f32 %v182, %v182
        %v1207 = vmul.f32 %v183, %v183
        %v1208 = vmul.f32 %v184, %v184
        %v1209 = vmul.f32 %v185, %v185
        %v1210 = vmul.f32 %v186, %v186
        %v1211 = vmul.f32 %v187, %v187
        %v1212 = vmul.f32 %v188, %v188
        %v1213 = vmul.f32 %v189, %v189
        %v1214 = vmul.f32 %v190, %v190
        %v1215 = vmul.f32 %v191, %v191
        %v1216 = vmul.f32 %v192, %v192
        %v1217 = vmul.f32 %v193, %v193
        %v1218 = vmul.f32 %v194, %v194
        %v1219 = vmul.f32 %v195, %v195
        %v1220 = vmul.f32 %v196, %v196
        %v1221 = vmul.f32 %v197, %v197
        %v1222 = vmul.f32 %v198, %v198
        %v1223 = vmul.f32 %v199, %v199
        %v1224 = vmul.f32 %v200, %v200
        %v1225 = vmul.f32 %v201, %v201
        %v1226 = vmul.f32 %v202, %v202
        %v1227 = vmul.f32 %v203, %v203
        %v1228 = vmul.f32 %v204, %v204
        %v1229 = vmul.f32 %v205, %v205
        %v1230 = vmul.f32 %v206, %v206
        %v1231 = vmul.f32 %v207, %v207
        %v1232 = vmul.f32 %v208, %v208
        %v1233 = vmul.f32 %v209, %v209
        %v1234 = vmul.f32 %v210, %v210
        %v1235 = vmul.f32 %v211, %v211
        %v1236 = vmul.f32 %v212, %v212
        %v1237 = vmul.f32 %v213, %v213
        %v1238 = vmul.f32 %v214, %v214
        %v1239 = vmul.f32 %v215, %v215
        %v1240 = vmul.f32 %v216, %v216
        %v1241 = vmul.f32 %v217, %v217
        %v1242 = vmul.f32 %v218, %v218
        %v1243 = vmul.f32 %v219, %v219
        %v1244 = vmul.f32 %v220, %v220
        %v1245 = vmul.f32 %v221, %v221
        %v1246 = vmul.f32 %v222, %v222
        %v1247 = vmul.f32 %v223, %v223
        %v1248 = vmul.f32 %v224, %v224
        %v1249 = vmul.f32 %v225, %v225
        %v1250 = vmul.f32 %v226, %v226
        %v1251 = vmul.f32 %v227, %v227
        %v1252 = vmul.f32 %v228, %v228
        %v1253 = vmul.f32 %v229, %v229
        %v1254 = vmul.f32 %v230, %v230
        %v1255 = vmul.f32 %v231, %v231
        %v1256 = vmul.f32 %v232, %v232
        %v1257 = vmul.f32 %v233, %v233
        %v1258 = vmul.f32 %v234, %v234
        %v1259 = vmul.f32 %v235, %v235
        %v1260 = vmul.f32 %v236, %v236
        %v1261 = vmul.f32 %v237, %v237
        %v1262 = vmul.f32 %v238, %v238
        %v1263 = vmul.f32 %v239, %v239
        %v1264 = vmul.f32 %v240, %v240
        %v1265 = vmul.f32 %v241, %v241
        %v1266 = vmul.f32 %v242, %v242
        %v1267 = vmul.f32 %v243, %v243
        %v1268 = vmul.f32 %v244, %v244
        %v1269 = vmul.f32 %v245, %v245
        %v1270 = vmul.f32 %v246, %v246
        %v1271 = vmul.f32 %v247, %v247
        %v1272 = vmul.f32 %v248, %v248
        %v1273 = vmul.f32 %v249, %v249
        %v1274 = vmul.f32 %v250, %v250
        %v1275 = vmul.f32 %v251, %v251
        %v1276 = vmul.f32 %v252, %v252
        %v1277 = vmul.f32 %v253, %v253
        %v1278 = vmul.f32 %v254, %v254
        %v1279 = vmul.f32 %v255, %v255
        %v1280 = vmul.f32 %v256, %v256
        %v1281 = vmul.f32 %v257, %v257
        %v1282 = vmul.f32 %v258, %v258
        %v1283 = vmul.f32 %v259, %v259
        %v1284 = vmul.f32 %v260, %v260
        %v1285 = vmul.f32 %v261, %v261
        %v1286 = vmul.f32 %v262, %v262
        %v1287 = vmul.f32 %v263, %v263
        %v1288 = vmul.f32 %v264, %v264
        %v1289 = vmul.f32 %v265, %v265
        %v1290 = vmul.f32 %v266, %v266
        %v1291 = vmul.f32 %v267, %v267
        %v1292 = vmul.f32 %v268, %v268
        %v1293 = vmul.f32 %v269, %v269
        %v1294 = vmul.f32 %v270, %v270
        %v1295 = vmul.f32 %v271, %v271
        %v1296 = vmul.f32 %v272, %v272
        %v1297 = vmul.f32 %v273, %v273
        %v1298 = vmul.f32 %v274, %v274
        %v1299 = vmul.f32 %v275, %v275
        %v1300 = vmul.f32 %v276, %v276
        %v1301 = vmul.f32 %v277, %v277
        %v1302 = vmul.f32 %v278, %v278
        %v1303 = vmul.f32 %v279, %v279
        %v1304 = vmul.f32 %v280, %v280
        %v1305 = vmul.f32 %v281, %v281
        %v1306 = vmul.f32 %v282, %v282
        %v1307 = vmul.f32 %v283, %v283
        %v1308 = vmul.f32 %v284, %v284
        %v1309 = vmul.f32 %v285, %v285
        %v1310 = vmul.f32 %v286, %v286
        %v1311 = vmul.f32 %v287, %v287
        %v1312 = vmul.f32 %v288, %v288
        %v1313 = vmul.f32 %v289, %v289
        %v1314 = vmul.f32 %v290, %v290
        %v1315 = vmul.f32 %v291, %v291
        %v1316 = vmul.f32 %v292, %v292
        %v1317 = vmul.f32 %v293, %v293
        %v1318 = vmul.f32 %v294, %v294
        %v1319 = vmul.f32 %v295, %v295
        %v1320 = vmul.f32 %v296, %v296
        %v1321 = vmul.f32 %v297, %v297
        %v1322 = vmul.f32 %v298, %v298
        %v1323 = vmul.f32 %v299, %v299
        %v1324 = vmul.f32 %v300, %v300
        %v1325 = vmul.f32 %v301, %v301
        %v1326 = vmul.f32 %v302, %v302
        %v1327 = vmul.f32 %v303, %v303
        %v1328 = vmul.f32 %v304, %v304
        %v1329 = vmul.f32 %v305, %v305
        %v1330 = vmul.f32 %v306, %v306
        %v1331 = vmul.f32 %v307, %v307
        %v1332 = vmul.f32 %v308, %v308
        %v1333 = vmul.f32 %v309, %v309
        %v1334 = vmul.f32 %v310, %v310
        %v1335 = vmul.f32 %v311, %v311
        %v1336 = vmul.f32 %v312, %v312
        %v1337 = vmul.f32 %v313, %v313
        %v1338 = vmul.f32 %v314, %v314
        %v1339 = vmul.f32 %v315, %v315
        %v1340 = vmul.f32 %v316, %v316
        %v1341 = vmul.f32 %v317, %v317
        %v1342 = vmul.f32 %v318, %v318
        %v1343 = vmul.f32 %v319, %v319
        %v1344 = vmul.f32 %v320, %v320
        %v1345 = vmul.f32 %v321, %v321
        %v1346 = vmul.f32 %v322, %v322
        %v1347 = vmul.f32 %v323, %v323
        %v1348 = vmul.f32 %v324, %v324
        %v1349 = vmul.f32 %v325, %v325
        %v1350 = vmul.f32 %v326, %v326
        %v1351 = vmul.f32 %v327, %v327
        %v1352 = vmul.f32 %v328, %v328
        %v1353 = vmul.f32 %v329, %v329
        %v1354 = vmul.f32 %v330, %v330
        %v1355 = vmul.f32 %v331, %v331
        %v1356 = vmul.f32 %v332, %v332
        %v1357 = vmul.f32 %v333, %v333
        %v1358 = vmul.f32 %v334, %v334
        %v1359 = vmul.f32 %v335, %v335
        %v1360 = vmul.f32 %v336, %v336
        %v1361 = vmul.f32 %v337, %v337
        %v1362 = vmul.f32 %v338, %v338
        %v1363 = vmul.f32 %v339, %v339
        %v1364 = vmul.f32 %v340, %v340
        %v1365 = vmul.f32 %v341, %v341
        %v1366 = vmul.f32 %v342, %v342
        %v1367 = vmul.f32 %v343, %v343
        %v1368 = vmul.f32 %v344, %v344
        %v1369 = vmul.f32 %v345, %v345
        %v1370 = vmul.f32 %v346, %v346
        %v1371 = vmul.f32 %v347, %v347
        %v1372 = vmul.f32 %v348, %v348
        %v1373 = vmul.f32 %v349, %v349
        %v1374 = vmul.f32 %v350, %v350
        %v1375 = vmul.f32 %v351, %v351
        %v1376 = vmul.f32 %v352, %v352
        %v1377 = vmul.f32 %v353, %v353
        %v1378 = vmul.f32 %v354, %v354
        %v1379 = vmul.f32 %v355, %v355
        %v1380 = vmul.f32 %v356, %v356
        %v1381 = vmul.f32 %v357, %v357
        %v1382 = vmul.f32 %v358, %v358
        %v1383 = vmul.f32 %v359, %v359
        %v1384 = vmul.f32 %v360, %v360
        %v1385 = vmul.f32 %v361, %v361
        %v1386 = vmul.f32 %v362, %v362
        %v1387 = vmul.f32 %v363, %v363
        %v1388 = vmul.f32 %v364, %v364
        %v1389 = vmul.f32 %v365, %v365
        %v1390 = vmul.f32 %v366, %v366
        %v1391 = vmul.f32 %v367, %v367
        %v1392 = vmul.f32 %v368, %v368
        %v1393 = vmul.f32 %v369, %v369
        %v1394 = vmul.f32 %v370, %v370
        %v1395 = vmul.f32 %v371, %v371
        %v1396 = vmul.f32 %v372, %v372
        %v1397 = vmul.f32 %v373, %v373
        %v1398 = vmul.f32 %v374, %v374
        %v1399 = vmul.f32 %v375, %v375
        %v1400 = vmul.f32 %v376, %v376
        %v1401 = vmul.f32 %v377, %v377
        %v1402 = vmul.f32 %v378, %v378
        %v1403 = vmul.f32 %v379, %v379
        %v1404 = vmul.f32 %v380, %v380
        %v1405 = vmul.f32 %v381, %v381
        %v1406 = vmul.f32 %v382, %v382
        %v1407 = vmul.f32 %v383, %v383
        %v1408 = vmul.f32 %v384, %v384
        %v1409 = vmul.f32 %v385, %v385
        %v1410 = vmul.f32 %v386, %v386
        %v1411 = vmul.f32 %v387, %v387
        %v1412 = vmul.f32 %v388, %v388
        %v1413 = vmul.f32 %v389, %v389
        %v1414 = vmul.f32 %v390, %v390
        %v1415 = vmul.f32 %v391, %v391
        %v1416 = vmul.f32 %v392, %v392
        %v1417 = vmul.f32 %v393, %v393
        %v1418 = vmul.f32 %v394, %v394
        %v1419 = vmul.f32 %v395, %v395
        %v1420 = vmul.f32 %v396, %v396
        %v1421 = vmul.f32 %v397, %v397
        %v1422 = vmul.f32 %v398, %v398
        %v1423 = vmul.f32 %v399, %v399
        %v1424 = vmul.f32 %v400, %v400
        %v1425 = vmul.f32 %v401, %v401
        %v1426 = vmul.f32 %v402, %v402
        %v1427 = vmul.f32 %v403, %v403
        %v1428 = vmul.f32 %v404, %v404
        %v1429 = vmul.f32 %v405, %v405
        %v1430 = vmul.f32 %v406, %v406
        %v1431 = vmul.f32 %v407, %v407
        %v1432 = vmul.f32 %v408, %v408
        %v1433 = vmul.f32 %v409, %v409
        %v1434 = vmul.f32 %v410, %v410
        %v1435 = vmul.f32 %v411, %v411
        %v1436 = vmul.f32 %v412, %v412
        %v1437 = vmul.f32 %v413, %v413
        %v1438 = vmul.f32 %v414, %v414
        %v1439 = vmul.f32 %v415, %v415
        %v1440 = vmul.f32 %v416, %v416
        %v1441 = vmul.f32 %v417, %v417
        %v1442 = vmul.f32 %v418, %v418
        %v1443 = vmul.f32 %v419, %v419
        %v1444 = vmul.f32 %v420, %v420
        %v1445 = vmul.f32 %v421, %v421
        %v1446 = vmul.f32 %v422, %v422
        %v1447 = vmul.f32 %v423, %v423
        %v1448 = vmul.f32 %v424, %v424
        %v1449 = vmul.f32 %v425, %v425
        %v1450 = vmul.f32 %v426, %v426
        %v1451 = vmul.f32 %v427, %v427
        %v1452 = vmul.f32 %v428, %v428
        %v1453 = vmul.f32 %v429, %v429
        %v1454 = vmul.f32 %v430, %v430
        %v1455 = vmul.f32 %v431, %v431
        %v1456 = vmul.f32 %v432, %v432
        %v1457 = vmul.f32 %v433, %v433
        %v1458 = vmul.f32 %v434, %v434
        %v1459 = vmul.f32 %v435, %v435
        %v1460 = vmul.f32 %v436, %v436
        %v1461 = vmul.f32 %v437, %v437
        %v1462 = vmul.f32 %v438, %v438
        %v1463 = vmul.f32 %v439, %v439
        %v1464 = vmul.f32 %v440, %v440
        %v1465 = vmul.f32 %v441, %v441
        %v1466 = vmul.f32 %v442, %v442
        %v1467 = vmul.f32 %v443, %v443
        %v1468 = vmul.f32 %v444, %v444
        %v1469 = vmul.f32 %v445, %v445
        %v1470 = vmul.f32 %v446, %v446
        %v1471 = vmul.f32 %v447, %v447
        %v1472 = vmul.f32 %v448, %v448
        %v1473 = vmul.f32 %v449, %v449
        %v1474 = vmul.f32 %v450, %v450
        %v1475 = vmul.f32 %v451, %v451
        %v1476 = vmul.f32 %v452, %v452
        %v1477 = vmul.f32 %v453, %v453
        %v1478 = vmul.f32 %v454, %v454
        %v1479 = vmul.f32 %v455, %v455
        %v1480 = vmul.f32 %v456, %v456
        %v1481 = vmul.f32 %v457, %v457
        %v1482 = vmul.f32 %v458, %v458
        %v1483 = vmul.f32 %v459, %v459
        %v1484 = vmul.f32 %v460, %v460
        %v1485 = vmul.f32 %v461, %v461
        %v1486 = vmul.f32 %v462, %v462
        %v1487 = vmul.f32 %v463, %v463
        %v1488 = vmul.f32 %v464, %v464
        %v1489 = vmul.f32 %v465, %v465
        %v1490 = vmul.f32 %v466, %v466
        %v1491 = vmul.f32 %v467, %v467
        %v1492 = vmul.f32 %v468, %v468
        %v1493 = vmul.f32 %v469, %v469
        %v1494 = vmul.f32 %v470, %v470
        %v1495 = vmul.f32 %v471, %v471
        %v1496 = vmul.f32 %v472, %v472
        %v1497 = vmul.f32 %v473, %v473
        %v1498 = vmul.f32 %v474, %v474
        %v1499 = vmul.f32 %v475, %v475
        %v1500 = vmul.f32 %v476, %v476
        %v1501 = vmul.f32 %v477, %v477
        %v1502 = vmul.f32 %v478, %v478
        %v1503 = vmul.f32 %v479, %v479
        %v1504 = vmul.f32 %v480, %v480
        %v1505 = vmul.f32 %v481, %v481
        %v1506 = vmul.f32 %v482, %v482
        %v1507 = vmul.f32 %v483, %v483
        %v1508 = vmul.f32 %v484, %v484
        %v1509 = vmul.f32 %v485, %v485
        %v1510 = vmul.f32 %v486, %v486
        %v1511 = vmul.f32 %v487, %v487
        %v1512 = vmul.f32 %v488, %v488
        %v1513 = vmul.f32 %v489, %v489
        %v1514 = vmul.f32 %v490, %v490
        %v1515 = vmul.f32 %v491, %v491
        %v1516 = vmul.f32 %v492, %v492
        %v1517 = vmul.f32 %v493, %v493
        %v1518 = vmul.f32 %v494, %v494
        %v1519 = vmul.f32 %v495, %v495
        %v1520 = vmul.f32 %v496, %v496
        %v1521 = vmul.f32 %v497, %v497
        %v1522 = vmul.f32 %v498, %v498
        %v1523 = vmul.f32 %v499, %v499
        %v1524 = vmul.f32 %v500, %v500
        %v1525 = vmul.f32 %v501, %v501
        %v1526 = vmul.f32 %v502, %v502
        %v1527 = vmul.f32 %v503, %v503
        %v1528 = vmul.f32 %v504, %v504
        %v1529 = vmul.f32 %v505, %v505
        %v1530 = vmul.f32 %v506, %v506
        %v1531 = vmul.f32 %v507, %v507
        %v1532 = vmul.f32 %v508, %v508
        %v1533 = vmul.f32 %v509, %v509
        %v1534 = vmul.f32 %v510, %v510
        %v1535 = vmul.f32 %v511, %v511
        %v1536 = vmul.f32 %v512, %v512
        %v1537 = vmul.f32 %v513, %v513
        %v1538 = vmul.f32 %v514, %v514
        %v1539 = vmul.f32 %v515, %v515
        %v1540 = vmul.f32 %v516, %v516
        %v1541 = vmul.f32 %v517, %v517
        %v1542 = vmul.f32 %v518, %v518
        %v1543 = vmul.f32 %v519, %v519
        %v1544 = vmul.f32 %v520, %v520
        %v1545 = vmul.f32 %v521, %v521
        %v1546 = vmul.f32 %v522, %v522
        %v1547 = vmul.f32 %v523, %v523
        %v1548 = vmul.f32 %v524, %v524
        %v1549 = vmul.f32 %v525, %v525
        %v1550 = vmul.f32 %v526, %v526
        %v1551 = vmul.f32 %v527, %v527
        %v1552 = vmul.f32 %v528, %v528
        %v1553 = vmul.f32 %v529, %v529
        %v1554 = vmul.f32 %v530, %v530
        %v1555 = vmul.f32 %v531, %v531
        %v1556 = vmul.f32 %v532, %v532
        %v1557 = vmul.f32 %v533, %v533
        %v1558 = vmul.f32 %v534, %v534
        %v1559 = vmul.f32 %v535, %v535
        %v1560 = vmul.f32 %v536, %v536
        %v1561 = vmul.f32 %v537, %v537
        %v1562 = vmul.f32 %v538, %v538
        %v1563 = vmul.f32 %v539, %v539
        %v1564 = vmul.f32 %v540, %v540
        %v1565 = vmul.f32 %v541, %v541
        %v1566 = vmul.f32 %v542, %v542
        %v1567 = vmul.f32 %v543, %v543
        %v1568 = vmul.f32 %v544, %v544
        %v1569 = vmul.f32 %v545, %v545
        %v1570 = vmul.f32 %v546, %v546
        %v1571 = vmul.f32 %v547, %v547
        %v1572 = vmul.f32 %v548, %v548
        %v1573 = vmul.f32 %v549, %v549
        %v1574 = vmul.f32 %v550, %v550
        %v1575 = vmul.f32 %v551, %v551
        %v1576 = vmul.f32 %v552, %v552
        %v1577 = vmul.f32 %v553, %v553
        %v1578 = vmul.f32 %v554, %v554
        %v1579 = vmul.f32 %v555, %v555
        %v1580 = vmul.f32 %v556, %v556
        %v1581 = vmul.f32 %v557, %v557
        %v1582 = vmul.f32 %v558, %v558
        %v1583 = vmul.f32 %v559, %v559
        %v1584 = vmul.f32 %v560, %v560
        %v1585 = vmul.f32 %v561, %v561
        %v1586 = vmul.f32 %v562, %v562
        %v1587 = vmul.f32 %v563, %v563
        %v1588 = vmul.f32 %v564, %v564
        %v1589 = vmul.f32 %v565, %v565
        %v1590 = vmul.f32 %v566, %v566
        %v1591 = vmul.f32 %v567, %v567
        %v1592 = vmul.f32 %v568, %v568
        %v1593 = vmul.f32 %v569, %v569
        %v1594 = vmul.f32 %v570, %v570
        %v1595 = vmul.f32 %v571, %v571
        %v1596 = vmul.f32 %v572, %v572
        %v1597 = vmul.f32 %v573, %v573
        %v1598 = vmul.f32 %v574, %v574
        %v1599 = vmul.f32 %v575, %v575
        %v1600 = vmul.f32 %v576, %v576
        %v1601 = vmul.f32 %v577, %v577
        %v1602 = vmul.f32 %v578, %v578
        %v1603 = vmul.f32 %v579, %v579
        %v1604 = vmul.f32 %v580, %v580
        %v1605 = vmul.f32 %v581, %v581
        %v1606 = vmul.f32 %v582, %v582
        %v1607 = vmul.f32 %v583, %v583
        %v1608 = vmul.f32 %v584, %v584
        %v1609 = vmul.f32 %v585, %v585
        %v1610 = vmul.f32 %v586, %v586
        %v1611 = vmul.f32 %v587, %v587
        %v1612 = vmul.f32 %v588, %v588
        %v1613 = vmul.f32 %v589, %v589
        %v1614 = vmul.f32 %v590, %v590
        %v1615 = vmul.f32 %v591, %v591
        %v1616 = vmul.f32 %v592, %v592
        %v1617 = vmul.f32 %v593, %v593
        %v1618 = vmul.f32 %v594, %v594
        %v1619 = vmul.f32 %v595, %v595
        %v1620 = vmul.f32 %v596, %v596
        %v1621 = vmul.f32 %v597, %v597
        %v1622 = vmul.f32 %v598, %v598
        %v1623 = vmul.f32 %v599, %v599
        %v1624 = vmul.f32 %v600, %v600
        %v1625 = vmul.f32 %v601, %v601
        %v1626 = vmul.f32 %v602, %v602
        %v1627 = vmul.f32 %v603, %v603
        %v1628 = vmul.f32 %v604, %v604
        %v1629 = vmul.f32 %v605, %v605
        %v1630 = vmul.f32 %v606, %v606
        %v1631 = vmul.f32 %v607, %v607
        %v1632 = vmul.f32 %v608, %v608
        %v1633 = vmul.f32 %v609, %v609
        %v1634 = vmul.f32 %v610, %v610
        %v1635 = vmul.f32 %v611, %v611
        %v1636 = vmul.f32 %v612, %v612
        %v1637 = vmul.f32 %v613, %v613
        %v1638 = vmul.f32 %v614, %v614
        %v1639 = vmul.f32 %v615, %v615
        %v1640 = vmul.f32 %v616, %v616
        %v1641 = vmul.f32 %v617, %v617
        %v1642 = vmul.f32 %v618, %v618
        %v1643 = vmul.f32 %v619, %v619
        %v1644 = vmul.f32 %v620, %v620
        %v1645 = vmul.f32 %v621, %v621
        %v1646 = vmul.f32 %v622, %v622
        %v1647 = vmul.f32 %v623, %v623
        %v1648 = vmul.f32 %v624, %v624
        %v1649 = vmul.f32 %v625, %v625
        %v1650 = vmul.f32 %v626, %v626
        %v1651 = vmul.f32 %v627, %v627
        %v1652 = vmul.f32 %v628, %v628
        %v1653 = vmul.f32 %v629, %v629
        %v1654 = vmul.f32 %v630, %v630
        %v1655 = vmul.f32 %v631, %v631
        %v1656 = vmul.f32 %v632, %v632
        %v1657 = vmul.f32 %v633, %v633
        %v1658 = vmul.f32 %v634, %v634
        %v1659 = vmul.f32 %v635, %v635
        %v1660 = vmul.f32 %v636, %v636
        %v1661 = vmul.f32 %v637, %v637
        %v1662 = vmul.f32 %v638, %v638
        %v1663 = vmul.f32 %v639, %v639
        %v1664 = vmul.f32 %v640, %v640
        %v1665 = vmul.f32 %v641, %v641
        %v1666 = vmul.f32 %v642, %v642
        %v1667 = vmul.f32 %v643, %v643
        %v1668 = vmul.f32 %v644, %v644
        %v1669 = vmul.f32 %v645, %v645
        %v1670 = vmul.f32 %v646, %v646
        %v1671 = vmul.f32 %v647, %v647
        %v1672 = vmul.f32 %v648, %v648
        %v1673 = vmul.f32 %v649, %v649
        %v1674 = vmul.f32 %v650, %v650
        %v1675 = vmul.f32 %v651, %v651
        %v1676 = vmul.f32 %v652, %v652
        %v1677 = vmul.f32 %v653, %v653
        %v1678 = vmul.f32 %v654, %v654
        %v1679 = vmul.f32 %v655, %v655
        %v1680 = vmul.f32 %v656, %v656
        %v1681 = vmul.f32 %v657, %v657
        %v1682 = vmul.f32 %v658, %v658
        %v1683 = vmul.f32 %v659, %v659
        %v1684 = vmul.f32 %v660, %v660
        %v1685 = vmul.f32 %v661, %v661
        %v1686 = vmul.f32 %v662, %v662
        %v1687 = vmul.f32 %v663, %v663
        %v1688 = vmul.f32 %v664, %v664
        %v1689 = vmul.f32 %v665, %v665
        %v1690 = vmul.f32 %v666, %v666
        %v1691 = vmul.f32 %v667, %v667
        %v1692 = vmul.f32 %v668, %v668
        %v1693 = vmul.f32 %v669, %v669
        %v1694 = vmul.f32 %v670, %v670
        %v1695 = vmul.f32 %v671, %v671
        %v1696 = vmul.f32 %v672, %v672
        %v1697 = vmul.f32 %v673, %v673
        %v1698 = vmul.f32 %v674, %v674
        %v1699 = vmul.f32 %v675, %v675
        %v1700 = vmul.f32 %v676, %v676
        %v1701 = vmul.f32 %v677, %v677
        %v1702 = vmul.f32 %v678, %v678
        %v1703 = vmul.f32 %v679, %v679
        %v1704 = vmul.f32 %v680, %v680
        %v1705 = vmul.f32 %v681, %v681
        %v1706 = vmul.f32 %v682, %v682
        %v1707 = vmul.f32 %v683, %v683
        %v1708 = vmul.f32 %v684, %v684
        %v1709 = vmul.f32 %v685, %v685
        %v1710 = vmul.f32 %v686, %v686
        %v1711 = vmul.f32 %v687, %v687
        %v1712 = vmul.f32 %v688, %v688
        %v1713 = vmul.f32 %v689, %v689
        %v1714 = vmul.f32 %v690, %v690
        %v1715 = vmul.f32 %v691, %v691
        %v1716 = vmul.f32 %v692, %v692
        %v1717 = vmul.f32 %v693, %v693
        %v1718 = vmul.f32 %v694, %v694
        %v1719 = vmul.f32 %v695, %v695
        %v1720 = vmul.f32 %v696, %v696
        %v1721 = vmul.f32 %v697, %v697
        %v1722 = vmul.f32 %v698, %v698
        %v1723 = vmul.f32 %v699, %v699
        %v1724 = vmul.f32 %v700, %v700
        %v1725 = vmul.f32 %v701, %v701
        %v1726 = vmul.f32 %v702, %v702
        %v1727 = vmul.f32 %v703, %v703
        %v1728 = vmul.f32 %v704, %v704
        %v1729 = vmul.f32 %v705, %v705
        %v1730 = vmul.f32 %v706, %v706
        %v1731 = vmul.f32 %v707, %v707
        %v1732 = vmul.f32 %v708, %v708
        %v1733 = vmul.f32 %v709, %v709
        %v1734 = vmul.f32 %v710, %v710
        %v1735 = vmul.f32 %v711, %v711
        %v1736 = vmul.f32 %v712, %v712
        %v1737 = vmul.f32 %v713, %v713
        %v1738 = vmul.f32 %v714, %v714
        %v1739 = vmul.f32 %v715, %v715
        %v1740 = vmul.f32 %v716, %v716
        %v1741 = vmul.f32 %v717, %v717
        %v1742 = vmul.f32 %v718, %v718
        %v1743 = vmul.f32 %v719, %v719
        %v1744 = vmul.f32 %v720, %v720
        %v1745 = vmul.f32 %v721, %v721
        %v1746 = vmul.f32 %v722, %v722
        %v1747 = vmul.f32 %v723, %v723
        %v1748 = vmul.f32 %v724, %v724
        %v1749 = vmul.f32 %v725, %v725
        %v1750 = vmul.f32 %v726, %v726
        %v1751 = vmul.f32 %v727, %v727
        %v1752 = vmul.f32 %v728, %v728
        %v1753 = vmul.f32 %v729, %v729
        %v1754 = vmul.f32 %v730, %v730
        %v1755 = vmul.f32 %v731, %v731
        %v1756 = vmul.f32 %v732, %v732
        %v1757 = vmul.f32 %v733, %v733
        %v1758 = vmul.f32 %v734, %v734
        %v1759 = vmul.f32 %v735, %v735
        %v1760 = vmul.f32 %v736, %v736
        %v1761 = vmul.f32 %v737, %v737
        %v1762 = vmul.f32 %v738, %v738
        %v1763 = vmul.f32 %v739, %v739
        %v1764 = vmul.f32 %v740, %v740
        %v1765 = vmul.f32 %v741, %v741
        %v1766 = vmul.f32 %v742, %v742
        %v1767 = vmul.f32 %v743, %v743
        %v1768 = vmul.f32 %v744, %v744
        %v1769 = vmul.f32 %v745, %v745
        %v1770 = vmul.f32 %v746, %v746
        %v1771 = vmul.f32 %v747, %v747
        %v1772 = vmul.f32 %v748, %v748
        %v1773 = vmul.f32 %v749, %v749
        %v1774 = vmul.f32 %v750, %v750
        %v1775 = vmul.f32 %v751, %v751
        %v1776 = vmul.f32 %v752, %v752
        %v1777 = vmul.f32 %v753, %v753
        %v1778 = vmul.f32 %v754, %v754
        %v1779 = vmul.f32 %v755, %v755
        %v1780 = vmul.f32 %v756, %v756
        %v1781 = vmul.f32 %v757, %v757
        %v1782 = vmul.f32 %v758, %v758
        %v1783 = vmul.f32 %v759, %v759
        %v1784 = vmul.f32 %v760, %v760
        %v1785 = vmul.f32 %v761, %v761
        %v1786 = vmul.f32 %v762, %v762
        %v1787 = vmul.f32 %v763, %v763
        %v1788 = vmul.f32 %v764, %v764
        %v1789 = vmul.f32 %v765, %v765
        %v1790 = vmul.f32 %v766, %v766
        %v1791 = vmul.f32 %v767, %v767
        %v1792 = vmul.f32 %v768, %v768
        %v1793 = vmul.f32 %v769, %v769
        %v1794 = vmul.f32 %v770, %v770
        %v1795 = vmul.f32 %v771, %v771
        %v1796 = vmul.f32 %v772, %v772
        %v1797 = vmul.f32 %v773, %v773
        %v1798 = vmul.f32 %v774, %v774
        %v1799 = vmul.f32 %v775, %v775
        %v1800 = vmul.f32 %v776, %v776
        %v1801 = vmul.f32 %v777, %v777
        %v1802 = vmul.f32 %v778, %v778
        %v1803 = vmul.f32 %v779, %v779
        %v1804 = vmul.f32 %v780, %v780
        %v1805 = vmul.f32 %v781, %v781
        %v1806 = vmul.f32 %v782, %v782
        %v1807 = vmul.f32 %v783, %v783
        %v1808 = vmul.f32 %v784, %v784
        %v1809 = vmul.f32 %v785, %v785
        %v1810 = vmul.f32 %v786, %v786
        %v1811 = vmul.f32 %v787, %v787
        %v1812 = vmul.f32 %v788, %v788
        %v1813 = vmul.f32 %v789, %v789
        %v1814 = vmul.f32 %v790, %v790
        %v1815 = vmul.f32 %v791, %v791
        %v1816 = vmul.f32 %v792, %v792
        %v1817 = vmul.f32 %v793, %v793
        %v1818 = vmul.f32 %v794, %v794
        %v1819 = vmul.f32 %v795, %v795
        %v1820 = vmul.f32 %v796, %v796
        %v1821 = vmul.f32 %v797, %v797
        %v1822 = vmul.f32 %v798, %v798
        %v1823 = vmul.f32 %v799, %v799
        %v1824 = vmul.f32 %v800, %v800
        %v1825 = vmul.f32 %v801, %v801
        %v1826 = vmul.f32 %v802, %v802
        %v1827 = vmul.f32 %v803, %v803
        %v1828 = vmul.f32 %v804, %v804
        %v1829 = vmul.f32 %v805, %v805
        %v1830 = vmul.f32 %v806, %v806
        %v1831 = vmul.f32 %v807, %v807
        %v1832 = vmul.f32 %v808, %v808
        %v1833 = vmul.f32 %v809, %v809
        %v1834 = vmul.f32 %v810, %v810
        %v1835 = vmul.f32 %v811, %v811
        %v1836 = vmul.f32 %v812, %v812
        %v1837 = vmul.f32 %v813, %v813
        %v1838 = vmul.f32 %v814, %v814
        %v1839 = vmul.f32 %v815, %v815
        %v1840 = vmul.f32 %v816, %v816
        %v1841 = vmul.f32 %v817, %v817
        %v1842 = vmul.f32 %v818, %v818
        %v1843 = vmul.f32 %v819, %v819
        %v1844 = vmul.f32 %v820, %v820
        %v1845 = vmul.f32 %v821, %v821
        %v1846 = vmul.f32 %v822, %v822
        %v1847 = vmul.f32 %v823, %v823
        %v1848 = vmul.f32 %v824, %v824
        %v1849 = vmul.f32 %v825, %v825
        %v1850 = vmul.f32 %v826, %v826
        %v1851 = vmul.f32 %v827, %v827
        %v1852 = vmul.f32 %v828, %v828
        %v1853 = vmul.f32 %v829, %v829
        %v1854 = vmul.f32 %v830, %v830
        %v1855 = vmul.f32 %v831, %v831
        %v1856 = vmul.f32 %v832, %v832
        %v1857 = vmul.f32 %v833, %v833
        %v1858 = vmul.f32 %v834, %v834
        %v1859 = vmul.f32 %v835, %v835
        %v1860 = vmul.f32 %v836, %v836
        %v1861 = vmul.f32 %v837, %v837
        %v1862 = vmul.f32 %v838, %v838
        %v1863 = vmul.f32 %v839, %v839
        %v1864 = vmul.f32 %v840, %v840
        %v1865 = vmul.f32 %v841, %v841
        %v1866 = vmul.f32 %v842, %v842
        %v1867 = vmul.f32 %v843, %v843
        %v1868 = vmul.f32 %v844, %v844
        %v1869 = vmul.f32 %v845, %v845
        %v1870 = vmul.f32 %v846, %v846
        %v1871 = vmul.f32 %v847, %v847
        %v1872 = vmul.f32 %v848, %v848
        %v1873 = vmul.f32 %v849, %v849
        %v1874 = vmul.f32 %v850, %v850
        %v1875 = vmul.f32 %v851, %v851
        %v1876 = vmul.f32 %v852, %v852
        %v1877 = vmul.f32 %v853, %v853
        %v1878 = vmul.f32 %v854, %v854
        %v1879 = vmul.f32 %v855, %v855
        %v1880 = vmul.f32 %v856, %v856
        %v1881 = vmul.f32 %v857, %v857
        %v1882 = vmul.f32 %v858, %v858
        %v1883 = vmul.f32 %v859, %v859
        %v1884 = vmul.f32 %v860, %v860
        %v1885 = vmul.f32 %v861, %v861
        %v1886 = vmul.f32 %v862, %v862
        %v1887 = vmul.f32 %v863, %v863
        %v1888 = vmul.f32 %v864, %v864
        %v1889 = vmul.f32 %v865, %v865
        %v1890 = vmul.f32 %v866, %v866
        %v1891 = vmul.f32 %v867, %v867
        %v1892 = vmul.f32 %v868, %v868
        %v1893 = vmul.f32 %v869, %v869
        %v1894 = vmul.f32 %v870, %v870
        %v1895 = vmul.f32 %v871, %v871
        %v1896 = vmul.f32 %v872, %v872
        %v1897 = vmul.f32 %v873, %v873
        %v1898 = vmul.f32 %v874, %v874
        %v1899 = vmul.f32 %v875, %v875
        %v1900 = vmul.f32 %v876, %v876
        %v1901 = vmul.f32 %v877, %v877
        %v1902 = vmul.f32 %v878, %v878
        %v1903 = vmul.f32 %v879, %v879
        %v1904 = vmul.f32 %v880, %v880
        %v1905 = vmul.f32 %v881, %v881
        %v1906 = vmul.f32 %v882, %v882
        %v1907 = vmul.f32 %v883, %v883
        %v1908 = vmul.f32 %v884, %v884
        %v1909 = vmul.f32 %v885, %v885
        %v1910 = vmul.f32 %v886, %v886
        %v1911 = vmul.f32 %v887, %v887
        %v1912 = vmul.f32 %v888, %v888
        %v1913 = vmul.f32 %v889, %v889
        %v1914 = vmul.f32 %v890, %v890
        %v1915 = vmul.f32 %v891, %v891
        %v1916 = vmul.f32 %v892, %v892
        %v1917 = vmul.f32 %v893, %v893
        %v1918 = vmul.f32 %v894, %v894
        %v1919 = vmul.f32 %v895, %v895
        %v1920 = vmul.f32 %v896, %v896
        %v1921 = vmul.f32 %v897, %v897
        %v1922 = vmul.f32 %v898, %v898
        %v1923 = vmul.f32 %v899, %v899
        %v1924 = vmul.f32 %v900, %v900
        %v1925 = vmul.f32 %v901, %v901
        %v1926 = vmul.f32 %v902, %v902
        %v1927 = vmul.f32 %v903, %v903
        %v1928 = vmul.f32 %v904, %v904
        %v1929 = vmul.f32 %v905, %v905
        %v1930 = vmul.f32 %v906, %v906
        %v1931 = vmul.f32 %v907, %v907
        %v1932 = vmul.f32 %v908, %v908
        %v1933 = vmul.f32 %v909, %v909
        %v1934 = vmul.f32 %v910, %v910
        %v1935 = vmul.f32 %v911, %v911
        %v1936 = vmul.f32 %v912, %v912
        %v1937 = vmul.f32 %v913, %v913
        %v1938 = vmul.f32 %v914, %v914
        %v1939 = vmul.f32 %v915, %v915
        %v1940 = vmul.f32 %v916, %v916
        %v1941 = vmul.f32 %v917, %v917
        %v1942 = vmul.f32 %v918, %v918
        %v1943 = vmul.f32 %v919, %v919
        %v1944 = vmul.f32 %v920, %v920
        %v1945 = vmul.f32 %v921, %v921
        %v1946 = vmul.f32 %v922, %v922
        %v1947 = vmul.f32 %v923, %v923
        %v1948 = vmul.f32 %v924, %v924
        %v1949 = vmul.f32 %v925, %v925
        %v1950 = vmul.f32 %v926, %v926
        %v1951 = vmul.f32 %v927, %v927
        %v1952 = vmul.f32 %v928, %v928
        %v1953 = vmul.f32 %v929, %v929
        %v1954 = vmul.f32 %v930, %v930
        %v1955 = vmul.f32 %v931, %v931
        %v1956 = vmul.f32 %v932, %v932
        %v1957 = vmul.f32 %v933, %v933
        %v1958 = vmul.f32 %v934, %v934
        %v1959 = vmul.f32 %v935, %v935
        %v1960 = vmul.f32 %v936, %v936
        %v1961 = vmul.f32 %v937, %v937
        %v1962 = vmul.f32 %v938, %v938
        %v1963 = vmul.f32 %v939, %v939
        %v1964 = vmul.f32 %v940, %v940
        %v1965 = vmul.f32 %v941, %v941
        %v1966 = vmul.f32 %v942, %v942
        %v1967 = vmul.f32 %v943, %v943
        %v1968 = vmul.f32 %v944, %v944
        %v1969 = vmul.f32 %v945, %v945
        %v1970 = vmul.f32 %v946, %v946
        %v1971 = vmul.f32 %v947, %v947
        %v1972 = vmul.f32 %v948, %v948
        %v1973 = vmul.f32 %v949, %v949
        %v1974 = vmul.f32 %v950, %v950
        %v1975 = vmul.f32 %v951, %v951
        %v1976 = vmul.f32 %v952, %v952
        %v1977 = vmul.f32 %v953, %v953
        %v1978 = vmul.f32 %v954, %v954
        %v1979 = vmul.f32 %v955, %v955
        %v1980 = vmul.f32 %v956, %v956
        %v1981 = vmul.f32 %v957, %v957
        %v1982 = vmul.f32 %v958, %v958
        %v1983 = vmul.f32 %v959, %v959
        %v1984 = vmul.f32 %v960, %v960
        %v1985 = vmul.f32 %v961, %v961
        %v1986 = vmul.f32 %v962, %v962
        %v1987 = vmul.f32 %v963, %v963
        %v1988 = vmul.f32 %v964, %v964
        %v1989 = vmul.f32 %v965, %v965
        %v1990 = vmul.f32 %v966, %v966
        %v1991 = vmul.f32 %v967, %v967
        %v1992 = vmul.f32 %v968, %v968
        %v1993 = vmul.f32 %v969, %v969
        %v1994 = vmul.f32 %v970, %v970
        %v1995 = vmul.f32 %v971, %v971
        %v1996 = vmul.f32 %v972, %v972
        %v1997 = vmul.f32 %v973, %v973
        %v1998 = vmul.f32 %v974, %v974
        %v1999 = vmul.f32 %v975, %v975
        %v2000 = vmul.f32 %v976, %v976
        %v2001 = vmul.f32 %v977, %v977
        %v2002 = vmul.f32 %v978, %v978
        %v2003 = vmul.f32 %v979, %v979
        %v2004 = vmul.f32 %v980, %v980
        %v2005 = vmul.f32 %v981, %v981
        %v2006 = vmul.f32 %v982, %v982
        %v2007 = vmul.f32 %v983, %v983
        %v2008 = vmul.f32 %v984, %v984
        %v2009 = vmul.f32 %v985, %v985
        %v2010 = vmul.f32 %v986, %v986
        %v2011 = vmul.f32 %v987, %v987
        %v2012 = vmul.f32 %v988, %v988
        %v2013 = vmul.f32 %v989, %v989
        %v2014 = vmul.f32 %v990, %v990
        %v2015 = vmul.f32 %v991, %v991
        %v2016 = vmul.f32 %v992, %v992
        %v2017 = vmul.f32 %v993, %v993
        %v2018 = vmul.f32 %v994, %v994
        %v2019 = vmul.f32 %v995, %v995
        %v2020 = vmul.f32 %v996, %v996
        %v2021 = vmul.f32 %v997, %v997
        %v2022 = vmul.f32 %v998, %v998
        %v2023 = vmul.f32 %v999, %v999
        %v2024 = vmul.f32 %v1000, %v1000
        %v2025 = vmul.f32 %v1001, %v1001
        %v2026 = vmul.f32 %v1002, %v1002
        %v2027 = vmul.f32 %v1003, %v1003
        %v2028 = vmul.f32 %v1004, %v1004
        %v2029 = vmul.f32 %v1005, %v1005
        %v2030 = vmul.f32 %v1006, %v1006
        %v2031 = vmul.f32 %v1007, %v1007
        %v2032 = vmul.f32 %v1008, %v1008
        %v2033 = vmul.f32 %v1009, %v1009
        %v2034 = vmul.f32 %v1010, %v1010
        %v2035 = vmul.f32 %v1011, %v1011
        %v2036 = vmul.f32 %v1012, %v1012
        %v2037 = vmul.f32 %v1013, %v1013
        %v2038 = vmul.f32 %v1014, %v1014
        %v2039 = vmul.f32 %v1015, %v1015
        %v2040 = vmul.f32 %v1016, %v1016
        %v2041 = vmul.f32 %v1017, %v1017
        %v2042 = vmul.f32 %v1018, %v1018
        %v2043 = vmul.f32 %v1019, %v1019
        %v2044 = vmul.f32 %v1020, %v1020
        %v2045 = vmul.f32 %v1021, %v1021
        %v2046 = vmul.f32 %v1022, %v1022
        %v2047 = vmul.f32 %v1023, %v1023
        %v2048 = vmul.f32 %v1024, %v1024
        %v2049 = vmul.f32 %v1025, %v1025
        %v2050 = vmul.f32 %v1026, %v1026
        %v2051 = vmul.f32 %v1027, %v1027
        %v2052 = vmul.f32 %v1028, %v1028
        %v2053 = vmul.f32 %v1029, %v1029
        %v2054 = vmul.f32 %v1030, %v1030
        %v2055 = vmul.f32 %v1031, %v1031
        %v2056 = vmul.f32 %v1032, %v1032
        %v2057 = vmul.f32 %v1033, %v1033
        %v2058 = vmul.f32 %v1034, %v1034
        %v2059 = vmul.f32 %v1035, %v1035
        %v2060 = vmul.f32 %v1036, %v1036
        %v2061 = vmul.f32 %v1037, %v1037
        %v2062 = vmul.f32 %v1038, %v1038
        %v2063 = vmul.f32 %v1039, %v1039
        %v2064 = vmul.f32 %v1040, %v1040
        %v2065 = vmul.f32 %v1041, %v1041
        %v2066 = vmul.f32 %v1042, %v1042
        %v2067 = vmul.f32 %v1043, %v1043
        %v2068 = vmul.f32 %v1044, %v1044
        %v2069 = vmul.f32 %v1045, %v1045
        %v2070 = vmul.f32 %v1046, %v1046
        %v2071 = vmul.f32 %v1047, %v1047
        %v2072 = vmul.f32 %v1048, %v1048
        %v2073 = vmul.f32 %v1049, %v1049
        %v2074 = vmul.f32 %v1050, %v1050
        %v2075 = vmul.f32 %v1051, %v1051
        %v2076 = vmul.f32 %v1052, %v1052
        %v2077 = vmul.f32 %v1053, %v1053
        %v2078 = vmul.f32 %v1054, %v1054
        %v2079 = vmul.f32 %v1055, %v1055
        %v2080 = vmul.f32 %v1056, %v1056
        %v2081 = vmul.f32 %v1057, %v1057
        %v2082 = vmul.f32 %v1058, %v1058
        %v2083 = vmul.f32 %v1059, %v1059
        %v2084 = vmul.f32 %v1060, %v1060
        %v2085 = vmul.f32 %v1061, %v1061
        %v2086 = vmul.f32 %v1062, %v1062
        %v2087 = vmul.f32 %v1063, %v1063
        %v2088 = vmul.f32 %v1064, %v1064
        %v2089 = vmul.f32 %v1065, %v1065
        %v2090 = vmul.f32 %v1066, %v1066
        %v2091 = vmul.f32 %v1067, %v1067
        %v2092 = vmul.f32 %v1068, %v1068
        %v2093 = vmul.f32 %v1069, %v1069
        %v2094 = vmul.f32 %v1070, %v1070
        %v2095 = vmul.f32 %v1071, %v1071
        %v2096 = vmul.f32 %v1072, %v1072
        %v2097 = vmul.f32 %v1073, %v1073
        %v2098 = vmul.f32 %v1074, %v1074
        %v2099 = vmul.f32 %v1075, %v1075
        %v2100 = vmul.f32 %v1076, %v1076
        %v2101 = vmul.f32 %v1077, %v1077
        %v2102 = vmul.f32 %v1078, %v1078
        %v2103 = vmul.f32 %v1079, %v1079
        %v2104 = vmul.f32 %v1080, %v1080
        %v2105 = vmul.f32 %v1081, %v1081
        %v2106 = vmul.f32 %v1082, %v1082
        %v2107 = vmul.f32 %v1083, %v1083
        %v2108 = vmul.f32 %v1084, %v1084
        %v2109 = vmul.f32 %v1085, %v1085
        %v2110 = vmul.f32 %v1086, %v1086
        %v2111 = vmul.f32 %v1087, %v1087
        %v2112 = vmul.f32 %v1088, %v1088
        %v2113 = vmul.f32 %v1089, %v1089
        %v2114 = vmul.f32 %v1090, %v1090
        %v2115 = vmul.f32 %v1091, %v1091
        %v2116 = vmul.f32 %v1092, %v1092
        %v2117 = vmul.f32 %v1093, %v1093
        %v2118 = vmul.f32 %v1094, %v1094
        %v2119 = vmul.f32 %v1095, %v1095
        %v2120 = vmul.f32 %v1096, %v1096
        %v2121 = vmul.f32 %v1097, %v1097
        %v2122 = vmul.f32 %v1098, %v1098
        %v2123 = vmul.f32 %v1099, %v1099
        %v2124 = vmul.f32 %v1100, %v1100
        %v2125 = vmul.f32 %v1101, %v1101
        %v2126 = vmul.f32 %v1102, %v1102
        %v2127 = vmul.f32 %v1103, %v1103
        %v2128 = vmul.f32 %v1104, %v1104
        %v2129 = vmul.f32 %v1105, %v1105
        %v2130 = vmul.f32 %v1106, %v1106
        %v2131 = vmul.f32 %v1107, %v1107
        %v2132 = vmul.f32 %v1108, %v1108
        %v2133 = vmul.f32 %v1109, %v1109
        %v2134 = vmul.f32 %v1110, %v1110
        %v2135 = vmul.f32 %v1111, %v1111
        %v2136 = vmul.f32 %v1112, %v1112
        %v2137 = vmul.f32 %v1113, %v1113
        %v2138 = vmul.f32 %v1114, %v1114
        %v2139 = vmul.f32 %v1115, %v1115
        %v2140 = vmul.f32 %v1116, %v1116
        %v2141 = vmul.f32 %v1117, %v1117
        %v2142 = vmul.f32 %v1118, %v1118
        %v2143 = vmul.f32 %v1119, %v1119
        %v2144 = vmul.f32 %v1120, %v1120
        %v2145 = vmul.f32 %v1121, %v1121
        %v2146 = vmul.f32 %v1122, %v1122
        %v2147 = vmul.f32 %v1123, %v1123
        %v2148 = vmul.f32 %v1124, %v1124
        %v2149 = vmul.f32 %v1125, %v1125
        %v2150 = vmul.f32 %v1126, %v1126
        %v2151 = vmul.f32 %v1127, %v1127
        %v2152 = vmul.f32 %v1128, %v1128
        %v2153 = vmul.f32 %v1129, %v1129
        %v2154 = vmul.f32 %v1130, %v1130
        %v2155 = vmul.f32 %v1131, %v1131
        %v2156 = vmul.f32 %v1132, %v1132
        %v2157 = vmul.f32 %v1133, %v1133
        %v2158 = vmul.f32 %v1134, %v1134
        %v2159 = vmul.f32 %v1135, %v1135
        %v2160 = vmul.f32 %v1136, %v1136
        %v2161 = vmul.f32 %v1137, %v1137
        %v2162 = vmul.f32 %v1138, %v1138
        %v2163 = vmul.f32 %v1139, %v1139
        %v2164 = vmul.f32 %v1140, %v1140
        %v2165 = vmul.f32 %v1141, %v1141
        %v2166 = vmul.f32 %v1142, %v1142
        %v2167 = vmul.f32 %v1143, %v1143
        %v2168 = vmul.f32 %v1144, %v1144
        %v2169 = vmul.f32 %v1145, %v1145
        %v2170 = vmul.f32 %v1146, %v1146
        %v2171 = vmul.f32 %v1147, %v1147
        %v2172 = vmul.f32 %v1148, %v1148
        %v2173 = vmul.f32 %v1149, %v1149
        %v2174 = vmul.f32 %v1150, %v1150
        %v2175 = vmul.f32 %v1151, %v1151
        %v2176 = vmul.f32 %v1152, %v1152
        %v2177 = vmul.f32 %v1153, %v1153
        %v2178 = vmul.f32 %v1154, %v1154
        %v2179 = vmul.f32 %v1155, %v1155
        %v2180 = vmul.f32 %v1156, %v1156
        %v2181 = vmul.f32 %v1157, %v1157
        %v2182 = vmul.f32 %v1158, %v1158
        %v2183 = vmul.f32 %v1159, %v1159
        %v2184 = vmul.f32 %v1160, %v1160
        %v2185 = vmul.f32 %v1161, %v1161
        %v2186 = vadd.f32 %v1162, %v1163
        %2187 = vadd.xlane.f32.xlu0 %v2186
        %v2188 = vpop.xlane.xlu0 %2187
        %v2189 = vadd.f32 %v1164, %v1165
        %2190 = vadd.xlane.f32.xlu0 %v2189
        %v2191 = vpop.xlane.xlu0 %2190
        %v2192 = vadd.f32 %v1166, %v1167
        %2193 = vadd.xlane.f32.xlu0 %v2192
        %v2194 = vpop.xlane.xlu0 %2193
        %v2195 = vadd.f32 %v1168, %v1169
        %2196 = vadd.xlane.f32.xlu0 %v2195
        %v2197 = vpop.xlane.xlu0 %2196
        %v2198 = vadd.f32 %v1170, %v1171
        %2199 = vadd.xlane.f32.xlu0 %v2198
        %v2200 = vpop.xlane.xlu0 %2199
        %v2201 = vadd.f32 %v1172, %v1173
        %2202 = vadd.xlane.f32.xlu0 %v2201
        %v2203 = vpop.xlane.xlu0 %2202
        %v2204 = vadd.f32 %v1174, %v1175
        %2205 = vadd.xlane.f32.xlu0 %v2204
        %v2206 = vpop.xlane.xlu0 %2205
        %v2207 = vadd.f32 %v1176, %v1177
        %2208 = vadd.xlane.f32.xlu0 %v2207
        %v2209 = vpop.xlane.xlu0 %2208
        %v2210 = vadd.f32 %v1178, %v1179
        %2211 = vadd.xlane.f32.xlu0 %v2210
        %v2212 = vpop.xlane.xlu0 %2211
        %v2213 = vadd.f32 %v1180, %v1181
        %2214 = vadd.xlane.f32.xlu0 %v2213
        %v2215 = vpop.xlane.xlu0 %2214
        %v2216 = vadd.f32 %v1182, %v1183
        %2217 = vadd.xlane.f32.xlu0 %v2216
        %v2218 = vpop.xlane.xlu0 %2217
        %v2219 = vadd.f32 %v1184, %v1185
        %2220 = vadd.xlane.f32.xlu0 %v2219
        %v2221 = vpop.xlane.xlu0 %2220
        %v2222 = vadd.f32 %v1186, %v1187
        %2223 = vadd.xlane.f32.xlu0 %v2222
        %v2224 = vpop.xlane.xlu0 %2223
        %v2225 = vadd.f32 %v1188, %v1189
        %2226 = vadd.xlane.f32.xlu0 %v2225
        %v2227 = vpop.xlane.xlu0 %2226
        %v2228 = vadd.f32 %v1190, %v1191
        %2229 = vadd.xlane.f32.xlu0 %v2228
        %v2230 = vpop.xlane.xlu0 %2229
        %v2231 = vadd.f32 %v1192, %v1193
        %2232 = vadd.xlane.f32.xlu0 %v2231
        %v2233 = vpop.xlane.xlu0 %2232
        %v2234 = vadd.f32 %v1194, %v1195
        %2235 = vadd.xlane.f32.xlu0 %v2234
        %v2236 = vpop.xlane.xlu0 %2235
        %v2237 = vadd.f32 %v1196, %v1197
        %2238 = vadd.xlane.f32.xlu0 %v2237
        %v2239 = vpop.xlane.xlu0 %2238
        %v2240 = vadd.f32 %v1198, %v1199
        %2241 = vadd.xlane.f32.xlu0 %v2240
        %v2242 = vpop.xlane.xlu0 %2241
        %v2243 = vadd.f32 %v1200, %v1201
        %2244 = vadd.xlane.f32.xlu0 %v2243
        %v2245 = vpop.xlane.xlu0 %2244
        %v2246 = vadd.f32 %v1202, %v1203
        %2247 = vadd.xlane.f32.xlu0 %v2246
        %v2248 = vpop.xlane.xlu0 %2247
        %v2249 = vadd.f32 %v1204, %v1205
        %2250 = vadd.xlane.f32.xlu0 %v2249
        %v2251 = vpop.xlane.xlu0 %2250
        %v2252 = vadd.f32 %v1206, %v1207
        %2253 = vadd.xlane.f32.xlu0 %v2252
        %v2254 = vpop.xlane.xlu0 %2253
        %v2255 = vadd.f32 %v1208, %v1209
        %2256 = vadd.xlane.f32.xlu0 %v2255
        %v2257 = vpop.xlane.xlu0 %2256
        %v2258 = vadd.f32 %v1210, %v1211
        %2259 = vadd.xlane.f32.xlu0 %v2258
        %v2260 = vpop.xlane.xlu0 %2259
        %v2261 = vadd.f32 %v1212, %v1213
        %2262 = vadd.xlane.f32.xlu0 %v2261
        %v2263 = vpop.xlane.xlu0 %2262
        %v2264 = vadd.f32 %v1214, %v1215
        %2265 = vadd.xlane.f32.xlu0 %v2264
        %v2266 = vpop.xlane.xlu0 %2265
        %v2267 = vadd.f32 %v1216, %v1217
        %2268 = vadd.xlane.f32.xlu0 %v2267
        %v2269 = vpop.xlane.xlu0 %2268
        %v2270 = vadd.f32 %v1218, %v1219
        %2271 = vadd.xlane.f32.xlu0 %v2270
        %v2272 = vpop.xlane.xlu0 %2271
        %v2273 = vadd.f32 %v1220, %v1221
        %2274 = vadd.xlane.f32.xlu0 %v2273
        %v2275 = vpop.xlane.xlu0 %2274
        %v2276 = vadd.f32 %v1222, %v1223
        %2277 = vadd.xlane.f32.xlu0 %v2276
        %v2278 = vpop.xlane.xlu0 %2277
        %v2279 = vadd.f32 %v1224, %v1225
        %2280 = vadd.xlane.f32.xlu0 %v2279
        %v2281 = vpop.xlane.xlu0 %2280
        %v2282 = vadd.f32 %v1226, %v1227
        %2283 = vadd.xlane.f32.xlu0 %v2282
        %v2284 = vpop.xlane.xlu0 %2283
        %v2285 = vadd.f32 %v1228, %v1229
        %2286 = vadd.xlane.f32.xlu0 %v2285
        %v2287 = vpop.xlane.xlu0 %2286
        %v2288 = vadd.f32 %v1230, %v1231
        %2289 = vadd.xlane.f32.xlu0 %v2288
        %v2290 = vpop.xlane.xlu0 %2289
        %v2291 = vadd.f32 %v1232, %v1233
        %2292 = vadd.xlane.f32.xlu0 %v2291
        %v2293 = vpop.xlane.xlu0 %2292
        %v2294 = vadd.f32 %v1234, %v1235
        %2295 = vadd.xlane.f32.xlu0 %v2294
        %v2296 = vpop.xlane.xlu0 %2295
        %v2297 = vadd.f32 %v1236, %v1237
        %2298 = vadd.xlane.f32.xlu0 %v2297
        %v2299 = vpop.xlane.xlu0 %2298
        %v2300 = vadd.f32 %v1238, %v1239
        %2301 = vadd.xlane.f32.xlu0 %v2300
        %v2302 = vpop.xlane.xlu0 %2301
        %v2303 = vadd.f32 %v1240, %v1241
        %2304 = vadd.xlane.f32.xlu0 %v2303
        %v2305 = vpop.xlane.xlu0 %2304
        %v2306 = vadd.f32 %v1242, %v1243
        %2307 = vadd.xlane.f32.xlu0 %v2306
        %v2308 = vpop.xlane.xlu0 %2307
        %v2309 = vadd.f32 %v1244, %v1245
        %2310 = vadd.xlane.f32.xlu0 %v2309
        %v2311 = vpop.xlane.xlu0 %2310
        %v2312 = vadd.f32 %v1246, %v1247
        %2313 = vadd.xlane.f32.xlu0 %v2312
        %v2314 = vpop.xlane.xlu0 %2313
        %v2315 = vadd.f32 %v1248, %v1249
        %2316 = vadd.xlane.f32.xlu0 %v2315
        %v2317 = vpop.xlane.xlu0 %2316
        %v2318 = vadd.f32 %v1250, %v1251
        %2319 = vadd.xlane.f32.xlu0 %v2318
        %v2320 = vpop.xlane.xlu0 %2319
        %v2321 = vadd.f32 %v1252, %v1253
        %2322 = vadd.xlane.f32.xlu0 %v2321
        %v2323 = vpop.xlane.xlu0 %2322
        %v2324 = vadd.f32 %v1254, %v1255
        %2325 = vadd.xlane.f32.xlu0 %v2324
        %v2326 = vpop.xlane.xlu0 %2325
        %v2327 = vadd.f32 %v1256, %v1257
        %2328 = vadd.xlane.f32.xlu0 %v2327
        %v2329 = vpop.xlane.xlu0 %2328
        %v2330 = vadd.f32 %v1258, %v1259
        %2331 = vadd.xlane.f32.xlu0 %v2330
        %v2332 = vpop.xlane.xlu0 %2331
        %v2333 = vadd.f32 %v1260, %v1261
        %2334 = vadd.xlane.f32.xlu0 %v2333
        %v2335 = vpop.xlane.xlu0 %2334
        %v2336 = vadd.f32 %v1262, %v1263
        %2337 = vadd.xlane.f32.xlu0 %v2336
        %v2338 = vpop.xlane.xlu0 %2337
        %v2339 = vadd.f32 %v1264, %v1265
        %2340 = vadd.xlane.f32.xlu0 %v2339
        %v2341 = vpop.xlane.xlu0 %2340
        %v2342 = vadd.f32 %v1266, %v1267
        %2343 = vadd.xlane.f32.xlu0 %v2342
        %v2344 = vpop.xlane.xlu0 %2343
        %v2345 = vadd.f32 %v1268, %v1269
        %2346 = vadd.xlane.f32.xlu0 %v2345
        %v2347 = vpop.xlane.xlu0 %2346
        %v2348 = vadd.f32 %v1270, %v1271
        %2349 = vadd.xlane.f32.xlu0 %v2348
        %v2350 = vpop.xlane.xlu0 %2349
        %v2351 = vadd.f32 %v1272, %v1273
        %2352 = vadd.xlane.f32.xlu0 %v2351
        %v2353 = vpop.xlane.xlu0 %2352
        %v2354 = vadd.f32 %v1274, %v1275
        %2355 = vadd.xlane.f32.xlu0 %v2354
        %v2356 = vpop.xlane.xlu0 %2355
        %v2357 = vadd.f32 %v1276, %v1277
        %2358 = vadd.xlane.f32.xlu0 %v2357
        %v2359 = vpop.xlane.xlu0 %2358
        %v2360 = vadd.f32 %v1278, %v1279
        %2361 = vadd.xlane.f32.xlu0 %v2360
        %v2362 = vpop.xlane.xlu0 %2361
        %v2363 = vadd.f32 %v1280, %v1281
        %2364 = vadd.xlane.f32.xlu0 %v2363
        %v2365 = vpop.xlane.xlu0 %2364
        %v2366 = vadd.f32 %v1282, %v1283
        %2367 = vadd.xlane.f32.xlu0 %v2366
        %v2368 = vpop.xlane.xlu0 %2367
        %v2369 = vadd.f32 %v1284, %v1285
        %2370 = vadd.xlane.f32.xlu0 %v2369
        %v2371 = vpop.xlane.xlu0 %2370
        %v2372 = vadd.f32 %v1286, %v1287
        %2373 = vadd.xlane.f32.xlu0 %v2372
        %v2374 = vpop.xlane.xlu0 %2373
        %v2375 = vadd.f32 %v1288, %v1289
        %2376 = vadd.xlane.f32.xlu0 %v2375
        %v2377 = vpop.xlane.xlu0 %2376
        %v2378 = vadd.f32 %v1290, %v1291
        %2379 = vadd.xlane.f32.xlu0 %v2378
        %v2380 = vpop.xlane.xlu0 %2379
        %v2381 = vadd.f32 %v1292, %v1293
        %2382 = vadd.xlane.f32.xlu0 %v2381
        %v2383 = vpop.xlane.xlu0 %2382
        %v2384 = vadd.f32 %v1294, %v1295
        %2385 = vadd.xlane.f32.xlu0 %v2384
        %v2386 = vpop.xlane.xlu0 %2385
        %v2387 = vadd.f32 %v1296, %v1297
        %2388 = vadd.xlane.f32.xlu0 %v2387
        %v2389 = vpop.xlane.xlu0 %2388
        %v2390 = vadd.f32 %v1298, %v1299
        %2391 = vadd.xlane.f32.xlu0 %v2390
        %v2392 = vpop.xlane.xlu0 %2391
        %v2393 = vadd.f32 %v1300, %v1301
        %2394 = vadd.xlane.f32.xlu0 %v2393
        %v2395 = vpop.xlane.xlu0 %2394
        %v2396 = vadd.f32 %v1302, %v1303
        %2397 = vadd.xlane.f32.xlu0 %v2396
        %v2398 = vpop.xlane.xlu0 %2397
        %v2399 = vadd.f32 %v1304, %v1305
        %2400 = vadd.xlane.f32.xlu0 %v2399
        %v2401 = vpop.xlane.xlu0 %2400
        %v2402 = vadd.f32 %v1306, %v1307
        %2403 = vadd.xlane.f32.xlu0 %v2402
        %v2404 = vpop.xlane.xlu0 %2403
        %v2405 = vadd.f32 %v1308, %v1309
        %2406 = vadd.xlane.f32.xlu0 %v2405
        %v2407 = vpop.xlane.xlu0 %2406
        %v2408 = vadd.f32 %v1310, %v1311
        %2409 = vadd.xlane.f32.xlu0 %v2408
        %v2410 = vpop.xlane.xlu0 %2409
        %v2411 = vadd.f32 %v1312, %v1313
        %2412 = vadd.xlane.f32.xlu0 %v2411
        %v2413 = vpop.xlane.xlu0 %2412
        %v2414 = vadd.f32 %v1314, %v1315
        %2415 = vadd.xlane.f32.xlu0 %v2414
        %v2416 = vpop.xlane.xlu0 %2415
        %v2417 = vadd.f32 %v1316, %v1317
        %2418 = vadd.xlane.f32.xlu0 %v2417
        %v2419 = vpop.xlane.xlu0 %2418
        %v2420 = vadd.f32 %v1318, %v1319
        %2421 = vadd.xlane.f32.xlu0 %v2420
        %v2422 = vpop.xlane.xlu0 %2421
        %v2423 = vadd.f32 %v1320, %v1321
        %2424 = vadd.xlane.f32.xlu0 %v2423
        %v2425 = vpop.xlane.xlu0 %2424
        %v2426 = vadd.f32 %v1322, %v1323
        %2427 = vadd.xlane.f32.xlu0 %v2426
        %v2428 = vpop.xlane.xlu0 %2427
        %v2429 = vadd.f32 %v1324, %v1325
        %2430 = vadd.xlane.f32.xlu0 %v2429
        %v2431 = vpop.xlane.xlu0 %2430
        %v2432 = vadd.f32 %v1326, %v1327
        %2433 = vadd.xlane.f32.xlu0 %v2432
        %v2434 = vpop.xlane.xlu0 %2433
        %v2435 = vadd.f32 %v1328, %v1329
        %2436 = vadd.xlane.f32.xlu0 %v2435
        %v2437 = vpop.xlane.xlu0 %2436
        %v2438 = vadd.f32 %v1330, %v1331
        %2439 = vadd.xlane.f32.xlu0 %v2438
        %v2440 = vpop.xlane.xlu0 %2439
        %v2441 = vadd.f32 %v1332, %v1333
        %2442 = vadd.xlane.f32.xlu0 %v2441
        %v2443 = vpop.xlane.xlu0 %2442
        %v2444 = vadd.f32 %v1334, %v1335
        %2445 = vadd.xlane.f32.xlu0 %v2444
        %v2446 = vpop.xlane.xlu0 %2445
        %v2447 = vadd.f32 %v1336, %v1337
        %2448 = vadd.xlane.f32.xlu0 %v2447
        %v2449 = vpop.xlane.xlu0 %2448
        %v2450 = vadd.f32 %v1338, %v1339
        %2451 = vadd.xlane.f32.xlu0 %v2450
        %v2452 = vpop.xlane.xlu0 %2451
        %v2453 = vadd.f32 %v1340, %v1341
        %2454 = vadd.xlane.f32.xlu0 %v2453
        %v2455 = vpop.xlane.xlu0 %2454
        %v2456 = vadd.f32 %v1342, %v1343
        %2457 = vadd.xlane.f32.xlu0 %v2456
        %v2458 = vpop.xlane.xlu0 %2457
        %v2459 = vadd.f32 %v1344, %v1345
        %2460 = vadd.xlane.f32.xlu0 %v2459
        %v2461 = vpop.xlane.xlu0 %2460
        %v2462 = vadd.f32 %v1346, %v1347
        %2463 = vadd.xlane.f32.xlu0 %v2462
        %v2464 = vpop.xlane.xlu0 %2463
        %v2465 = vadd.f32 %v1348, %v1349
        %2466 = vadd.xlane.f32.xlu0 %v2465
        %v2467 = vpop.xlane.xlu0 %2466
        %v2468 = vadd.f32 %v1350, %v1351
        %2469 = vadd.xlane.f32.xlu0 %v2468
        %v2470 = vpop.xlane.xlu0 %2469
        %v2471 = vadd.f32 %v1352, %v1353
        %2472 = vadd.xlane.f32.xlu0 %v2471
        %v2473 = vpop.xlane.xlu0 %2472
        %v2474 = vadd.f32 %v1354, %v1355
        %2475 = vadd.xlane.f32.xlu0 %v2474
        %v2476 = vpop.xlane.xlu0 %2475
        %v2477 = vadd.f32 %v1356, %v1357
        %2478 = vadd.xlane.f32.xlu0 %v2477
        %v2479 = vpop.xlane.xlu0 %2478
        %v2480 = vadd.f32 %v1358, %v1359
        %2481 = vadd.xlane.f32.xlu0 %v2480
        %v2482 = vpop.xlane.xlu0 %2481
        %v2483 = vadd.f32 %v1360, %v1361
        %2484 = vadd.xlane.f32.xlu0 %v2483
        %v2485 = vpop.xlane.xlu0 %2484
        %v2486 = vadd.f32 %v1362, %v1363
        %2487 = vadd.xlane.f32.xlu0 %v2486
        %v2488 = vpop.xlane.xlu0 %2487
        %v2489 = vadd.f32 %v1364, %v1365
        %2490 = vadd.xlane.f32.xlu0 %v2489
        %v2491 = vpop.xlane.xlu0 %2490
        %v2492 = vadd.f32 %v1366, %v1367
        %2493 = vadd.xlane.f32.xlu0 %v2492
        %v2494 = vpop.xlane.xlu0 %2493
        %v2495 = vadd.f32 %v1368, %v1369
        %2496 = vadd.xlane.f32.xlu0 %v2495
        %v2497 = vpop.xlane.xlu0 %2496
        %v2498 = vadd.f32 %v1370, %v1371
        %2499 = vadd.xlane.f32.xlu0 %v2498
        %v2500 = vpop.xlane.xlu0 %2499
        %v2501 = vadd.f32 %v1372, %v1373
        %2502 = vadd.xlane.f32.xlu0 %v2501
        %v2503 = vpop.xlane.xlu0 %2502
        %v2504 = vadd.f32 %v1374, %v1375
        %2505 = vadd.xlane.f32.xlu0 %v2504
        %v2506 = vpop.xlane.xlu0 %2505
        %v2507 = vadd.f32 %v1376, %v1377
        %2508 = vadd.xlane.f32.xlu0 %v2507
        %v2509 = vpop.xlane.xlu0 %2508
        %v2510 = vadd.f32 %v1378, %v1379
        %2511 = vadd.xlane.f32.xlu0 %v2510
        %v2512 = vpop.xlane.xlu0 %2511
        %v2513 = vadd.f32 %v1380, %v1381
        %2514 = vadd.xlane.f32.xlu0 %v2513
        %v2515 = vpop.xlane.xlu0 %2514
        %v2516 = vadd.f32 %v1382, %v1383
        %2517 = vadd.xlane.f32.xlu0 %v2516
        %v2518 = vpop.xlane.xlu0 %2517
        %v2519 = vadd.f32 %v1384, %v1385
        %2520 = vadd.xlane.f32.xlu0 %v2519
        %v2521 = vpop.xlane.xlu0 %2520
        %v2522 = vadd.f32 %v1386, %v1387
        %2523 = vadd.xlane.f32.xlu0 %v2522
        %v2524 = vpop.xlane.xlu0 %2523
        %v2525 = vadd.f32 %v1388, %v1389
        %2526 = vadd.xlane.f32.xlu0 %v2525
        %v2527 = vpop.xlane.xlu0 %2526
        %v2528 = vadd.f32 %v1390, %v1391
        %2529 = vadd.xlane.f32.xlu0 %v2528
        %v2530 = vpop.xlane.xlu0 %2529
        %v2531 = vadd.f32 %v1392, %v1393
        %2532 = vadd.xlane.f32.xlu0 %v2531
        %v2533 = vpop.xlane.xlu0 %2532
        %v2534 = vadd.f32 %v1394, %v1395
        %2535 = vadd.xlane.f32.xlu0 %v2534
        %v2536 = vpop.xlane.xlu0 %2535
        %v2537 = vadd.f32 %v1396, %v1397
        %2538 = vadd.xlane.f32.xlu0 %v2537
        %v2539 = vpop.xlane.xlu0 %2538
        %v2540 = vadd.f32 %v1398, %v1399
        %2541 = vadd.xlane.f32.xlu0 %v2540
        %v2542 = vpop.xlane.xlu0 %2541
        %v2543 = vadd.f32 %v1400, %v1401
        %2544 = vadd.xlane.f32.xlu0 %v2543
        %v2545 = vpop.xlane.xlu0 %2544
        %v2546 = vadd.f32 %v1402, %v1403
        %2547 = vadd.xlane.f32.xlu0 %v2546
        %v2548 = vpop.xlane.xlu0 %2547
        %v2549 = vadd.f32 %v1404, %v1405
        %2550 = vadd.xlane.f32.xlu0 %v2549
        %v2551 = vpop.xlane.xlu0 %2550
        %v2552 = vadd.f32 %v1406, %v1407
        %2553 = vadd.xlane.f32.xlu0 %v2552
        %v2554 = vpop.xlane.xlu0 %2553
        %v2555 = vadd.f32 %v1408, %v1409
        %2556 = vadd.xlane.f32.xlu0 %v2555
        %v2557 = vpop.xlane.xlu0 %2556
        %v2558 = vadd.f32 %v1410, %v1411
        %2559 = vadd.xlane.f32.xlu0 %v2558
        %v2560 = vpop.xlane.xlu0 %2559
        %v2561 = vadd.f32 %v1412, %v1413
        %2562 = vadd.xlane.f32.xlu0 %v2561
        %v2563 = vpop.xlane.xlu0 %2562
        %v2564 = vadd.f32 %v1414, %v1415
        %2565 = vadd.xlane.f32.xlu0 %v2564
        %v2566 = vpop.xlane.xlu0 %2565
        %v2567 = vadd.f32 %v1416, %v1417
        %2568 = vadd.xlane.f32.xlu0 %v2567
        %v2569 = vpop.xlane.xlu0 %2568
        %v2570 = vadd.f32 %v1418, %v1419
        %2571 = vadd.xlane.f32.xlu0 %v2570
        %v2572 = vpop.xlane.xlu0 %2571
        %v2573 = vadd.f32 %v1420, %v1421
        %2574 = vadd.xlane.f32.xlu0 %v2573
        %v2575 = vpop.xlane.xlu0 %2574
        %v2576 = vadd.f32 %v1422, %v1423
        %2577 = vadd.xlane.f32.xlu0 %v2576
        %v2578 = vpop.xlane.xlu0 %2577
        %v2579 = vadd.f32 %v1424, %v1425
        %2580 = vadd.xlane.f32.xlu0 %v2579
        %v2581 = vpop.xlane.xlu0 %2580
        %v2582 = vadd.f32 %v1426, %v1427
        %2583 = vadd.xlane.f32.xlu0 %v2582
        %v2584 = vpop.xlane.xlu0 %2583
        %v2585 = vadd.f32 %v1428, %v1429
        %2586 = vadd.xlane.f32.xlu0 %v2585
        %v2587 = vpop.xlane.xlu0 %2586
        %v2588 = vadd.f32 %v1430, %v1431
        %2589 = vadd.xlane.f32.xlu0 %v2588
        %v2590 = vpop.xlane.xlu0 %2589
        %v2591 = vadd.f32 %v1432, %v1433
        %2592 = vadd.xlane.f32.xlu0 %v2591
        %v2593 = vpop.xlane.xlu0 %2592
        %v2594 = vadd.f32 %v1434, %v1435
        %2595 = vadd.xlane.f32.xlu0 %v2594
        %v2596 = vpop.xlane.xlu0 %2595
        %v2597 = vadd.f32 %v1436, %v1437
        %2598 = vadd.xlane.f32.xlu0 %v2597
        %v2599 = vpop.xlane.xlu0 %2598
        %v2600 = vadd.f32 %v1438, %v1439
        %2601 = vadd.xlane.f32.xlu0 %v2600
        %v2602 = vpop.xlane.xlu0 %2601
        %v2603 = vadd.f32 %v1440, %v1441
        %2604 = vadd.xlane.f32.xlu0 %v2603
        %v2605 = vpop.xlane.xlu0 %2604
        %v2606 = vadd.f32 %v1442, %v1443
        %2607 = vadd.xlane.f32.xlu0 %v2606
        %v2608 = vpop.xlane.xlu0 %2607
        %v2609 = vadd.f32 %v1444, %v1445
        %2610 = vadd.xlane.f32.xlu0 %v2609
        %v2611 = vpop.xlane.xlu0 %2610
        %v2612 = vadd.f32 %v1446, %v1447
        %2613 = vadd.xlane.f32.xlu0 %v2612
        %v2614 = vpop.xlane.xlu0 %2613
        %v2615 = vadd.f32 %v1448, %v1449
        %2616 = vadd.xlane.f32.xlu0 %v2615
        %v2617 = vpop.xlane.xlu0 %2616
        %v2618 = vadd.f32 %v1450, %v1451
        %2619 = vadd.xlane.f32.xlu0 %v2618
        %v2620 = vpop.xlane.xlu0 %2619
        %v2621 = vadd.f32 %v1452, %v1453
        %2622 = vadd.xlane.f32.xlu0 %v2621
        %v2623 = vpop.xlane.xlu0 %2622
        %v2624 = vadd.f32 %v1454, %v1455
        %2625 = vadd.xlane.f32.xlu0 %v2624
        %v2626 = vpop.xlane.xlu0 %2625
        %v2627 = vadd.f32 %v1456, %v1457
        %2628 = vadd.xlane.f32.xlu0 %v2627
        %v2629 = vpop.xlane.xlu0 %2628
        %v2630 = vadd.f32 %v1458, %v1459
        %2631 = vadd.xlane.f32.xlu0 %v2630
        %v2632 = vpop.xlane.xlu0 %2631
        %v2633 = vadd.f32 %v1460, %v1461
        %2634 = vadd.xlane.f32.xlu0 %v2633
        %v2635 = vpop.xlane.xlu0 %2634
        %v2636 = vadd.f32 %v1462, %v1463
        %2637 = vadd.xlane.f32.xlu0 %v2636
        %v2638 = vpop.xlane.xlu0 %2637
        %v2639 = vadd.f32 %v1464, %v1465
        %2640 = vadd.xlane.f32.xlu0 %v2639
        %v2641 = vpop.xlane.xlu0 %2640
        %v2642 = vadd.f32 %v1466, %v1467
        %2643 = vadd.xlane.f32.xlu0 %v2642
        %v2644 = vpop.xlane.xlu0 %2643
        %v2645 = vadd.f32 %v1468, %v1469
        %2646 = vadd.xlane.f32.xlu0 %v2645
        %v2647 = vpop.xlane.xlu0 %2646
        %v2648 = vadd.f32 %v1470, %v1471
        %2649 = vadd.xlane.f32.xlu0 %v2648
        %v2650 = vpop.xlane.xlu0 %2649
        %v2651 = vadd.f32 %v1472, %v1473
        %2652 = vadd.xlane.f32.xlu0 %v2651
        %v2653 = vpop.xlane.xlu0 %2652
        %v2654 = vadd.f32 %v1474, %v1475
        %2655 = vadd.xlane.f32.xlu0 %v2654
        %v2656 = vpop.xlane.xlu0 %2655
        %v2657 = vadd.f32 %v1476, %v1477
        %2658 = vadd.xlane.f32.xlu0 %v2657
        %v2659 = vpop.xlane.xlu0 %2658
        %v2660 = vadd.f32 %v1478, %v1479
        %2661 = vadd.xlane.f32.xlu0 %v2660
        %v2662 = vpop.xlane.xlu0 %2661
        %v2663 = vadd.f32 %v1480, %v1481
        %2664 = vadd.xlane.f32.xlu0 %v2663
        %v2665 = vpop.xlane.xlu0 %2664
        %v2666 = vadd.f32 %v1482, %v1483
        %2667 = vadd.xlane.f32.xlu0 %v2666
        %v2668 = vpop.xlane.xlu0 %2667
        %v2669 = vadd.f32 %v1484, %v1485
        %2670 = vadd.xlane.f32.xlu0 %v2669
        %v2671 = vpop.xlane.xlu0 %2670
        %v2672 = vadd.f32 %v1486, %v1487
        %2673 = vadd.xlane.f32.xlu0 %v2672
        %v2674 = vpop.xlane.xlu0 %2673
        %v2675 = vadd.f32 %v1488, %v1489
        %2676 = vadd.xlane.f32.xlu0 %v2675
        %v2677 = vpop.xlane.xlu0 %2676
        %v2678 = vadd.f32 %v1490, %v1491
        %2679 = vadd.xlane.f32.xlu0 %v2678
        %v2680 = vpop.xlane.xlu0 %2679
        %v2681 = vadd.f32 %v1492, %v1493
        %2682 = vadd.xlane.f32.xlu0 %v2681
        %v2683 = vpop.xlane.xlu0 %2682
        %v2684 = vadd.f32 %v1494, %v1495
        %2685 = vadd.xlane.f32.xlu0 %v2684
        %v2686 = vpop.xlane.xlu0 %2685
        %v2687 = vadd.f32 %v1496, %v1497
        %2688 = vadd.xlane.f32.xlu0 %v2687
        %v2689 = vpop.xlane.xlu0 %2688
        %v2690 = vadd.f32 %v1498, %v1499
        %2691 = vadd.xlane.f32.xlu0 %v2690
        %v2692 = vpop.xlane.xlu0 %2691
        %v2693 = vadd.f32 %v1500, %v1501
        %2694 = vadd.xlane.f32.xlu0 %v2693
        %v2695 = vpop.xlane.xlu0 %2694
        %v2696 = vadd.f32 %v1502, %v1503
        %2697 = vadd.xlane.f32.xlu0 %v2696
        %v2698 = vpop.xlane.xlu0 %2697
        %v2699 = vadd.f32 %v1504, %v1505
        %2700 = vadd.xlane.f32.xlu0 %v2699
        %v2701 = vpop.xlane.xlu0 %2700
        %v2702 = vadd.f32 %v1506, %v1507
        %2703 = vadd.xlane.f32.xlu0 %v2702
        %v2704 = vpop.xlane.xlu0 %2703
        %v2705 = vadd.f32 %v1508, %v1509
        %2706 = vadd.xlane.f32.xlu0 %v2705
        %v2707 = vpop.xlane.xlu0 %2706
        %v2708 = vadd.f32 %v1510, %v1511
        %2709 = vadd.xlane.f32.xlu0 %v2708
        %v2710 = vpop.xlane.xlu0 %2709
        %v2711 = vadd.f32 %v1512, %v1513
        %2712 = vadd.xlane.f32.xlu0 %v2711
        %v2713 = vpop.xlane.xlu0 %2712
        %v2714 = vadd.f32 %v1514, %v1515
        %2715 = vadd.xlane.f32.xlu0 %v2714
        %v2716 = vpop.xlane.xlu0 %2715
        %v2717 = vadd.f32 %v1516, %v1517
        %2718 = vadd.xlane.f32.xlu0 %v2717
        %v2719 = vpop.xlane.xlu0 %2718
        %v2720 = vadd.f32 %v1518, %v1519
        %2721 = vadd.xlane.f32.xlu0 %v2720
        %v2722 = vpop.xlane.xlu0 %2721
        %v2723 = vadd.f32 %v1520, %v1521
        %2724 = vadd.xlane.f32.xlu0 %v2723
        %v2725 = vpop.xlane.xlu0 %2724
        %v2726 = vadd.f32 %v1522, %v1523
        %2727 = vadd.xlane.f32.xlu0 %v2726
        %v2728 = vpop.xlane.xlu0 %2727
        %v2729 = vadd.f32 %v1524, %v1525
        %2730 = vadd.xlane.f32.xlu0 %v2729
        %v2731 = vpop.xlane.xlu0 %2730
        %v2732 = vadd.f32 %v1526, %v1527
        %2733 = vadd.xlane.f32.xlu0 %v2732
        %v2734 = vpop.xlane.xlu0 %2733
        %v2735 = vadd.f32 %v1528, %v1529
        %2736 = vadd.xlane.f32.xlu0 %v2735
        %v2737 = vpop.xlane.xlu0 %2736
        %v2738 = vadd.f32 %v1530, %v1531
        %2739 = vadd.xlane.f32.xlu0 %v2738
        %v2740 = vpop.xlane.xlu0 %2739
        %v2741 = vadd.f32 %v1532, %v1533
        %2742 = vadd.xlane.f32.xlu0 %v2741
        %v2743 = vpop.xlane.xlu0 %2742
        %v2744 = vadd.f32 %v1534, %v1535
        %2745 = vadd.xlane.f32.xlu0 %v2744
        %v2746 = vpop.xlane.xlu0 %2745
        %v2747 = vadd.f32 %v1536, %v1537
        %2748 = vadd.xlane.f32.xlu0 %v2747
        %v2749 = vpop.xlane.xlu0 %2748
        %v2750 = vadd.f32 %v1538, %v1539
        %2751 = vadd.xlane.f32.xlu0 %v2750
        %v2752 = vpop.xlane.xlu0 %2751
        %v2753 = vadd.f32 %v1540, %v1541
        %2754 = vadd.xlane.f32.xlu0 %v2753
        %v2755 = vpop.xlane.xlu0 %2754
        %v2756 = vadd.f32 %v1542, %v1543
        %2757 = vadd.xlane.f32.xlu0 %v2756
        %v2758 = vpop.xlane.xlu0 %2757
        %v2759 = vadd.f32 %v1544, %v1545
        %2760 = vadd.xlane.f32.xlu0 %v2759
        %v2761 = vpop.xlane.xlu0 %2760
        %v2762 = vadd.f32 %v1546, %v1547
        %2763 = vadd.xlane.f32.xlu0 %v2762
        %v2764 = vpop.xlane.xlu0 %2763
        %v2765 = vadd.f32 %v1548, %v1549
        %2766 = vadd.xlane.f32.xlu0 %v2765
        %v2767 = vpop.xlane.xlu0 %2766
        %v2768 = vadd.f32 %v1550, %v1551
        %2769 = vadd.xlane.f32.xlu0 %v2768
        %v2770 = vpop.xlane.xlu0 %2769
        %v2771 = vadd.f32 %v1552, %v1553
        %2772 = vadd.xlane.f32.xlu0 %v2771
        %v2773 = vpop.xlane.xlu0 %2772
        %v2774 = vadd.f32 %v1554, %v1555
        %2775 = vadd.xlane.f32.xlu0 %v2774
        %v2776 = vpop.xlane.xlu0 %2775
        %v2777 = vadd.f32 %v1556, %v1557
        %2778 = vadd.xlane.f32.xlu0 %v2777
        %v2779 = vpop.xlane.xlu0 %2778
        %v2780 = vadd.f32 %v1558, %v1559
        %2781 = vadd.xlane.f32.xlu0 %v2780
        %v2782 = vpop.xlane.xlu0 %2781
        %v2783 = vadd.f32 %v1560, %v1561
        %2784 = vadd.xlane.f32.xlu0 %v2783
        %v2785 = vpop.xlane.xlu0 %2784
        %v2786 = vadd.f32 %v1562, %v1563
        %2787 = vadd.xlane.f32.xlu0 %v2786
        %v2788 = vpop.xlane.xlu0 %2787
        %v2789 = vadd.f32 %v1564, %v1565
        %2790 = vadd.xlane.f32.xlu0 %v2789
        %v2791 = vpop.xlane.xlu0 %2790
        %v2792 = vadd.f32 %v1566, %v1567
        %2793 = vadd.xlane.f32.xlu0 %v2792
        %v2794 = vpop.xlane.xlu0 %2793
        %v2795 = vadd.f32 %v1568, %v1569
        %2796 = vadd.xlane.f32.xlu0 %v2795
        %v2797 = vpop.xlane.xlu0 %2796
        %v2798 = vadd.f32 %v1570, %v1571
        %2799 = vadd.xlane.f32.xlu0 %v2798
        %v2800 = vpop.xlane.xlu0 %2799
        %v2801 = vadd.f32 %v1572, %v1573
        %2802 = vadd.xlane.f32.xlu0 %v2801
        %v2803 = vpop.xlane.xlu0 %2802
        %v2804 = vadd.f32 %v1574, %v1575
        %2805 = vadd.xlane.f32.xlu0 %v2804
        %v2806 = vpop.xlane.xlu0 %2805
        %v2807 = vadd.f32 %v1576, %v1577
        %2808 = vadd.xlane.f32.xlu0 %v2807
        %v2809 = vpop.xlane.xlu0 %2808
        %v2810 = vadd.f32 %v1578, %v1579
        %2811 = vadd.xlane.f32.xlu0 %v2810
        %v2812 = vpop.xlane.xlu0 %2811
        %v2813 = vadd.f32 %v1580, %v1581
        %2814 = vadd.xlane.f32.xlu0 %v2813
        %v2815 = vpop.xlane.xlu0 %2814
        %v2816 = vadd.f32 %v1582, %v1583
        %2817 = vadd.xlane.f32.xlu0 %v2816
        %v2818 = vpop.xlane.xlu0 %2817
        %v2819 = vadd.f32 %v1584, %v1585
        %2820 = vadd.xlane.f32.xlu0 %v2819
        %v2821 = vpop.xlane.xlu0 %2820
        %v2822 = vadd.f32 %v1586, %v1587
        %2823 = vadd.xlane.f32.xlu0 %v2822
        %v2824 = vpop.xlane.xlu0 %2823
        %v2825 = vadd.f32 %v1588, %v1589
        %2826 = vadd.xlane.f32.xlu0 %v2825
        %v2827 = vpop.xlane.xlu0 %2826
        %v2828 = vadd.f32 %v1590, %v1591
        %2829 = vadd.xlane.f32.xlu0 %v2828
        %v2830 = vpop.xlane.xlu0 %2829
        %v2831 = vadd.f32 %v1592, %v1593
        %2832 = vadd.xlane.f32.xlu0 %v2831
        %v2833 = vpop.xlane.xlu0 %2832
        %v2834 = vadd.f32 %v1594, %v1595
        %2835 = vadd.xlane.f32.xlu0 %v2834
        %v2836 = vpop.xlane.xlu0 %2835
        %v2837 = vadd.f32 %v1596, %v1597
        %2838 = vadd.xlane.f32.xlu0 %v2837
        %v2839 = vpop.xlane.xlu0 %2838
        %v2840 = vadd.f32 %v1598, %v1599
        %2841 = vadd.xlane.f32.xlu0 %v2840
        %v2842 = vpop.xlane.xlu0 %2841
        %v2843 = vadd.f32 %v1600, %v1601
        %2844 = vadd.xlane.f32.xlu0 %v2843
        %v2845 = vpop.xlane.xlu0 %2844
        %v2846 = vadd.f32 %v1602, %v1603
        %2847 = vadd.xlane.f32.xlu0 %v2846
        %v2848 = vpop.xlane.xlu0 %2847
        %v2849 = vadd.f32 %v1604, %v1605
        %2850 = vadd.xlane.f32.xlu0 %v2849
        %v2851 = vpop.xlane.xlu0 %2850
        %v2852 = vadd.f32 %v1606, %v1607
        %2853 = vadd.xlane.f32.xlu0 %v2852
        %v2854 = vpop.xlane.xlu0 %2853
        %v2855 = vadd.f32 %v1608, %v1609
        %2856 = vadd.xlane.f32.xlu0 %v2855
        %v2857 = vpop.xlane.xlu0 %2856
        %v2858 = vadd.f32 %v1610, %v1611
        %2859 = vadd.xlane.f32.xlu0 %v2858
        %v2860 = vpop.xlane.xlu0 %2859
        %v2861 = vadd.f32 %v1612, %v1613
        %2862 = vadd.xlane.f32.xlu0 %v2861
        %v2863 = vpop.xlane.xlu0 %2862
        %v2864 = vadd.f32 %v1614, %v1615
        %2865 = vadd.xlane.f32.xlu0 %v2864
        %v2866 = vpop.xlane.xlu0 %2865
        %v2867 = vadd.f32 %v1616, %v1617
        %2868 = vadd.xlane.f32.xlu0 %v2867
        %v2869 = vpop.xlane.xlu0 %2868
        %v2870 = vadd.f32 %v1618, %v1619
        %2871 = vadd.xlane.f32.xlu0 %v2870
        %v2872 = vpop.xlane.xlu0 %2871
        %v2873 = vadd.f32 %v1620, %v1621
        %2874 = vadd.xlane.f32.xlu0 %v2873
        %v2875 = vpop.xlane.xlu0 %2874
        %v2876 = vadd.f32 %v1622, %v1623
        %2877 = vadd.xlane.f32.xlu0 %v2876
        %v2878 = vpop.xlane.xlu0 %2877
        %v2879 = vadd.f32 %v1624, %v1625
        %2880 = vadd.xlane.f32.xlu0 %v2879
        %v2881 = vpop.xlane.xlu0 %2880
        %v2882 = vadd.f32 %v1626, %v1627
        %2883 = vadd.xlane.f32.xlu0 %v2882
        %v2884 = vpop.xlane.xlu0 %2883
        %v2885 = vadd.f32 %v1628, %v1629
        %2886 = vadd.xlane.f32.xlu0 %v2885
        %v2887 = vpop.xlane.xlu0 %2886
        %v2888 = vadd.f32 %v1630, %v1631
        %2889 = vadd.xlane.f32.xlu0 %v2888
        %v2890 = vpop.xlane.xlu0 %2889
        %v2891 = vadd.f32 %v1632, %v1633
        %2892 = vadd.xlane.f32.xlu0 %v2891
        %v2893 = vpop.xlane.xlu0 %2892
        %v2894 = vadd.f32 %v1634, %v1635
        %2895 = vadd.xlane.f32.xlu0 %v2894
        %v2896 = vpop.xlane.xlu0 %2895
        %v2897 = vadd.f32 %v1636, %v1637
        %2898 = vadd.xlane.f32.xlu0 %v2897
        %v2899 = vpop.xlane.xlu0 %2898
        %v2900 = vadd.f32 %v1638, %v1639
        %2901 = vadd.xlane.f32.xlu0 %v2900
        %v2902 = vpop.xlane.xlu0 %2901
        %v2903 = vadd.f32 %v1640, %v1641
        %2904 = vadd.xlane.f32.xlu0 %v2903
        %v2905 = vpop.xlane.xlu0 %2904
        %v2906 = vadd.f32 %v1642, %v1643
        %2907 = vadd.xlane.f32.xlu0 %v2906
        %v2908 = vpop.xlane.xlu0 %2907
        %v2909 = vadd.f32 %v1644, %v1645
        %2910 = vadd.xlane.f32.xlu0 %v2909
        %v2911 = vpop.xlane.xlu0 %2910
        %v2912 = vadd.f32 %v1646, %v1647
        %2913 = vadd.xlane.f32.xlu0 %v2912
        %v2914 = vpop.xlane.xlu0 %2913
        %v2915 = vadd.f32 %v1648, %v1649
        %2916 = vadd.xlane.f32.xlu0 %v2915
        %v2917 = vpop.xlane.xlu0 %2916
        %v2918 = vadd.f32 %v1650, %v1651
        %2919 = vadd.xlane.f32.xlu0 %v2918
        %v2920 = vpop.xlane.xlu0 %2919
        %v2921 = vadd.f32 %v1652, %v1653
        %2922 = vadd.xlane.f32.xlu0 %v2921
        %v2923 = vpop.xlane.xlu0 %2922
        %v2924 = vadd.f32 %v1654, %v1655
        %2925 = vadd.xlane.f32.xlu0 %v2924
        %v2926 = vpop.xlane.xlu0 %2925
        %v2927 = vadd.f32 %v1656, %v1657
        %2928 = vadd.xlane.f32.xlu0 %v2927
        %v2929 = vpop.xlane.xlu0 %2928
        %v2930 = vadd.f32 %v1658, %v1659
        %2931 = vadd.xlane.f32.xlu0 %v2930
        %v2932 = vpop.xlane.xlu0 %2931
        %v2933 = vadd.f32 %v1660, %v1661
        %2934 = vadd.xlane.f32.xlu0 %v2933
        %v2935 = vpop.xlane.xlu0 %2934
        %v2936 = vadd.f32 %v1662, %v1663
        %2937 = vadd.xlane.f32.xlu0 %v2936
        %v2938 = vpop.xlane.xlu0 %2937
        %v2939 = vadd.f32 %v1664, %v1665
        %2940 = vadd.xlane.f32.xlu0 %v2939
        %v2941 = vpop.xlane.xlu0 %2940
        %v2942 = vadd.f32 %v1666, %v1667
        %2943 = vadd.xlane.f32.xlu0 %v2942
        %v2944 = vpop.xlane.xlu0 %2943
        %v2945 = vadd.f32 %v1668, %v1669
        %2946 = vadd.xlane.f32.xlu0 %v2945
        %v2947 = vpop.xlane.xlu0 %2946
        %v2948 = vadd.f32 %v1670, %v1671
        %2949 = vadd.xlane.f32.xlu0 %v2948
        %v2950 = vpop.xlane.xlu0 %2949
        %v2951 = vadd.f32 %v1672, %v1673
        %2952 = vadd.xlane.f32.xlu0 %v2951
        %v2953 = vpop.xlane.xlu0 %2952
        %v2954 = vadd.f32 %v1674, %v1675
        %2955 = vadd.xlane.f32.xlu0 %v2954
        %v2956 = vpop.xlane.xlu0 %2955
        %v2957 = vadd.f32 %v1676, %v1677
        %2958 = vadd.xlane.f32.xlu0 %v2957
        %v2959 = vpop.xlane.xlu0 %2958
        %v2960 = vadd.f32 %v1678, %v1679
        %2961 = vadd.xlane.f32.xlu0 %v2960
        %v2962 = vpop.xlane.xlu0 %2961
        %v2963 = vadd.f32 %v1680, %v1681
        %2964 = vadd.xlane.f32.xlu0 %v2963
        %v2965 = vpop.xlane.xlu0 %2964
        %v2966 = vadd.f32 %v1682, %v1683
        %2967 = vadd.xlane.f32.xlu0 %v2966
        %v2968 = vpop.xlane.xlu0 %2967
        %v2969 = vadd.f32 %v1684, %v1685
        %2970 = vadd.xlane.f32.xlu0 %v2969
        %v2971 = vpop.xlane.xlu0 %2970
        %v2972 = vadd.f32 %v1686, %v1687
        %2973 = vadd.xlane.f32.xlu0 %v2972
        %v2974 = vpop.xlane.xlu0 %2973
        %v2975 = vadd.f32 %v1688, %v1689
        %2976 = vadd.xlane.f32.xlu0 %v2975
        %v2977 = vpop.xlane.xlu0 %2976
        %v2978 = vadd.f32 %v1690, %v1691
        %2979 = vadd.xlane.f32.xlu0 %v2978
        %v2980 = vpop.xlane.xlu0 %2979
        %v2981 = vadd.f32 %v1692, %v1693
        %2982 = vadd.xlane.f32.xlu0 %v2981
        %v2983 = vpop.xlane.xlu0 %2982
        %v2984 = vadd.f32 %v1694, %v1695
        %2985 = vadd.xlane.f32.xlu0 %v2984
        %v2986 = vpop.xlane.xlu0 %2985
        %v2987 = vadd.f32 %v1696, %v1697
        %2988 = vadd.xlane.f32.xlu0 %v2987
        %v2989 = vpop.xlane.xlu0 %2988
        %v2990 = vadd.f32 %v1698, %v1699
        %2991 = vadd.xlane.f32.xlu0 %v2990
        %v2992 = vpop.xlane.xlu0 %2991
        %v2993 = vadd.f32 %v1700, %v1701
        %2994 = vadd.xlane.f32.xlu0 %v2993
        %v2995 = vpop.xlane.xlu0 %2994
        %v2996 = vadd.f32 %v1702, %v1703
        %2997 = vadd.xlane.f32.xlu0 %v2996
        %v2998 = vpop.xlane.xlu0 %2997
        %v2999 = vadd.f32 %v1704, %v1705
        %3000 = vadd.xlane.f32.xlu0 %v2999
        %v3001 = vpop.xlane.xlu0 %3000
        %v3002 = vadd.f32 %v1706, %v1707
        %3003 = vadd.xlane.f32.xlu0 %v3002
        %v3004 = vpop.xlane.xlu0 %3003
        %v3005 = vadd.f32 %v1708, %v1709
        %3006 = vadd.xlane.f32.xlu0 %v3005
        %v3007 = vpop.xlane.xlu0 %3006
        %v3008 = vadd.f32 %v1710, %v1711
        %3009 = vadd.xlane.f32.xlu0 %v3008
        %v3010 = vpop.xlane.xlu0 %3009
        %v3011 = vadd.f32 %v1712, %v1713
        %3012 = vadd.xlane.f32.xlu0 %v3011
        %v3013 = vpop.xlane.xlu0 %3012
        %v3014 = vadd.f32 %v1714, %v1715
        %3015 = vadd.xlane.f32.xlu0 %v3014
        %v3016 = vpop.xlane.xlu0 %3015
        %v3017 = vadd.f32 %v1716, %v1717
        %3018 = vadd.xlane.f32.xlu0 %v3017
        %v3019 = vpop.xlane.xlu0 %3018
        %v3020 = vadd.f32 %v1718, %v1719
        %3021 = vadd.xlane.f32.xlu0 %v3020
        %v3022 = vpop.xlane.xlu0 %3021
        %v3023 = vadd.f32 %v1720, %v1721
        %3024 = vadd.xlane.f32.xlu0 %v3023
        %v3025 = vpop.xlane.xlu0 %3024
        %v3026 = vadd.f32 %v1722, %v1723
        %3027 = vadd.xlane.f32.xlu0 %v3026
        %v3028 = vpop.xlane.xlu0 %3027
        %v3029 = vadd.f32 %v1724, %v1725
        %3030 = vadd.xlane.f32.xlu0 %v3029
        %v3031 = vpop.xlane.xlu0 %3030
        %v3032 = vadd.f32 %v1726, %v1727
        %3033 = vadd.xlane.f32.xlu0 %v3032
        %v3034 = vpop.xlane.xlu0 %3033
        %v3035 = vadd.f32 %v1728, %v1729
        %3036 = vadd.xlane.f32.xlu0 %v3035
        %v3037 = vpop.xlane.xlu0 %3036
        %v3038 = vadd.f32 %v1730, %v1731
        %3039 = vadd.xlane.f32.xlu0 %v3038
        %v3040 = vpop.xlane.xlu0 %3039
        %v3041 = vadd.f32 %v1732, %v1733
        %3042 = vadd.xlane.f32.xlu0 %v3041
        %v3043 = vpop.xlane.xlu0 %3042
        %v3044 = vadd.f32 %v1734, %v1735
        %3045 = vadd.xlane.f32.xlu0 %v3044
        %v3046 = vpop.xlane.xlu0 %3045
        %v3047 = vadd.f32 %v1736, %v1737
        %3048 = vadd.xlane.f32.xlu0 %v3047
        %v3049 = vpop.xlane.xlu0 %3048
        %v3050 = vadd.f32 %v1738, %v1739
        %3051 = vadd.xlane.f32.xlu0 %v3050
        %v3052 = vpop.xlane.xlu0 %3051
        %v3053 = vadd.f32 %v1740, %v1741
        %3054 = vadd.xlane.f32.xlu0 %v3053
        %v3055 = vpop.xlane.xlu0 %3054
        %v3056 = vadd.f32 %v1742, %v1743
        %3057 = vadd.xlane.f32.xlu0 %v3056
        %v3058 = vpop.xlane.xlu0 %3057
        %v3059 = vadd.f32 %v1744, %v1745
        %3060 = vadd.xlane.f32.xlu0 %v3059
        %v3061 = vpop.xlane.xlu0 %3060
        %v3062 = vadd.f32 %v1746, %v1747
        %3063 = vadd.xlane.f32.xlu0 %v3062
        %v3064 = vpop.xlane.xlu0 %3063
        %v3065 = vadd.f32 %v1748, %v1749
        %3066 = vadd.xlane.f32.xlu0 %v3065
        %v3067 = vpop.xlane.xlu0 %3066
        %v3068 = vadd.f32 %v1750, %v1751
        %3069 = vadd.xlane.f32.xlu0 %v3068
        %v3070 = vpop.xlane.xlu0 %3069
        %v3071 = vadd.f32 %v1752, %v1753
        %3072 = vadd.xlane.f32.xlu0 %v3071
        %v3073 = vpop.xlane.xlu0 %3072
        %v3074 = vadd.f32 %v1754, %v1755
        %3075 = vadd.xlane.f32.xlu0 %v3074
        %v3076 = vpop.xlane.xlu0 %3075
        %v3077 = vadd.f32 %v1756, %v1757
        %3078 = vadd.xlane.f32.xlu0 %v3077
        %v3079 = vpop.xlane.xlu0 %3078
        %v3080 = vadd.f32 %v1758, %v1759
        %3081 = vadd.xlane.f32.xlu0 %v3080
        %v3082 = vpop.xlane.xlu0 %3081
        %v3083 = vadd.f32 %v1760, %v1761
        %3084 = vadd.xlane.f32.xlu0 %v3083
        %v3085 = vpop.xlane.xlu0 %3084
        %v3086 = vadd.f32 %v1762, %v1763
        %3087 = vadd.xlane.f32.xlu0 %v3086
        %v3088 = vpop.xlane.xlu0 %3087
        %v3089 = vadd.f32 %v1764, %v1765
        %3090 = vadd.xlane.f32.xlu0 %v3089
        %v3091 = vpop.xlane.xlu0 %3090
        %v3092 = vadd.f32 %v1766, %v1767
        %3093 = vadd.xlane.f32.xlu0 %v3092
        %v3094 = vpop.xlane.xlu0 %3093
        %v3095 = vadd.f32 %v1768, %v1769
        %3096 = vadd.xlane.f32.xlu0 %v3095
        %v3097 = vpop.xlane.xlu0 %3096
        %v3098 = vadd.f32 %v1770, %v1771
        %3099 = vadd.xlane.f32.xlu0 %v3098
        %v3100 = vpop.xlane.xlu0 %3099
        %v3101 = vadd.f32 %v1772, %v1773
        %3102 = vadd.xlane.f32.xlu0 %v3101
        %v3103 = vpop.xlane.xlu0 %3102
        %v3104 = vadd.f32 %v1774, %v1775
        %3105 = vadd.xlane.f32.xlu0 %v3104
        %v3106 = vpop.xlane.xlu0 %3105
        %v3107 = vadd.f32 %v1776, %v1777
        %3108 = vadd.xlane.f32.xlu0 %v3107
        %v3109 = vpop.xlane.xlu0 %3108
        %v3110 = vadd.f32 %v1778, %v1779
        %3111 = vadd.xlane.f32.xlu0 %v3110
        %v3112 = vpop.xlane.xlu0 %3111
        %v3113 = vadd.f32 %v1780, %v1781
        %3114 = vadd.xlane.f32.xlu0 %v3113
        %v3115 = vpop.xlane.xlu0 %3114
        %v3116 = vadd.f32 %v1782, %v1783
        %3117 = vadd.xlane.f32.xlu0 %v3116
        %v3118 = vpop.xlane.xlu0 %3117
        %v3119 = vadd.f32 %v1784, %v1785
        %3120 = vadd.xlane.f32.xlu0 %v3119
        %v3121 = vpop.xlane.xlu0 %3120
        %v3122 = vadd.f32 %v1786, %v1787
        %3123 = vadd.xlane.f32.xlu0 %v3122
        %v3124 = vpop.xlane.xlu0 %3123
        %v3125 = vadd.f32 %v1788, %v1789
        %3126 = vadd.xlane.f32.xlu0 %v3125
        %v3127 = vpop.xlane.xlu0 %3126
        %v3128 = vadd.f32 %v1790, %v1791
        %3129 = vadd.xlane.f32.xlu0 %v3128
        %v3130 = vpop.xlane.xlu0 %3129
        %v3131 = vadd.f32 %v1792, %v1793
        %3132 = vadd.xlane.f32.xlu0 %v3131
        %v3133 = vpop.xlane.xlu0 %3132
        %v3134 = vadd.f32 %v1794, %v1795
        %3135 = vadd.xlane.f32.xlu0 %v3134
        %v3136 = vpop.xlane.xlu0 %3135
        %v3137 = vadd.f32 %v1796, %v1797
        %3138 = vadd.xlane.f32.xlu0 %v3137
        %v3139 = vpop.xlane.xlu0 %3138
        %v3140 = vadd.f32 %v1798, %v1799
        %3141 = vadd.xlane.f32.xlu0 %v3140
        %v3142 = vpop.xlane.xlu0 %3141
        %v3143 = vadd.f32 %v1800, %v1801
        %3144 = vadd.xlane.f32.xlu0 %v3143
        %v3145 = vpop.xlane.xlu0 %3144
        %v3146 = vadd.f32 %v1802, %v1803
        %3147 = vadd.xlane.f32.xlu0 %v3146
        %v3148 = vpop.xlane.xlu0 %3147
        %v3149 = vadd.f32 %v1804, %v1805
        %3150 = vadd.xlane.f32.xlu0 %v3149
        %v3151 = vpop.xlane.xlu0 %3150
        %v3152 = vadd.f32 %v1806, %v1807
        %3153 = vadd.xlane.f32.xlu0 %v3152
        %v3154 = vpop.xlane.xlu0 %3153
        %v3155 = vadd.f32 %v1808, %v1809
        %3156 = vadd.xlane.f32.xlu0 %v3155
        %v3157 = vpop.xlane.xlu0 %3156
        %v3158 = vadd.f32 %v1810, %v1811
        %3159 = vadd.xlane.f32.xlu0 %v3158
        %v3160 = vpop.xlane.xlu0 %3159
        %v3161 = vadd.f32 %v1812, %v1813
        %3162 = vadd.xlane.f32.xlu0 %v3161
        %v3163 = vpop.xlane.xlu0 %3162
        %v3164 = vadd.f32 %v1814, %v1815
        %3165 = vadd.xlane.f32.xlu0 %v3164
        %v3166 = vpop.xlane.xlu0 %3165
        %v3167 = vadd.f32 %v1816, %v1817
        %3168 = vadd.xlane.f32.xlu0 %v3167
        %v3169 = vpop.xlane.xlu0 %3168
        %v3170 = vadd.f32 %v1818, %v1819
        %3171 = vadd.xlane.f32.xlu0 %v3170
        %v3172 = vpop.xlane.xlu0 %3171
        %v3173 = vadd.f32 %v1820, %v1821
        %3174 = vadd.xlane.f32.xlu0 %v3173
        %v3175 = vpop.xlane.xlu0 %3174
        %v3176 = vadd.f32 %v1822, %v1823
        %3177 = vadd.xlane.f32.xlu0 %v3176
        %v3178 = vpop.xlane.xlu0 %3177
        %v3179 = vadd.f32 %v1824, %v1825
        %3180 = vadd.xlane.f32.xlu0 %v3179
        %v3181 = vpop.xlane.xlu0 %3180
        %v3182 = vadd.f32 %v1826, %v1827
        %3183 = vadd.xlane.f32.xlu0 %v3182
        %v3184 = vpop.xlane.xlu0 %3183
        %v3185 = vadd.f32 %v1828, %v1829
        %3186 = vadd.xlane.f32.xlu0 %v3185
        %v3187 = vpop.xlane.xlu0 %3186
        %v3188 = vadd.f32 %v1830, %v1831
        %3189 = vadd.xlane.f32.xlu0 %v3188
        %v3190 = vpop.xlane.xlu0 %3189
        %v3191 = vadd.f32 %v1832, %v1833
        %3192 = vadd.xlane.f32.xlu0 %v3191
        %v3193 = vpop.xlane.xlu0 %3192
        %v3194 = vadd.f32 %v1834, %v1835
        %3195 = vadd.xlane.f32.xlu0 %v3194
        %v3196 = vpop.xlane.xlu0 %3195
        %v3197 = vadd.f32 %v1836, %v1837
        %3198 = vadd.xlane.f32.xlu0 %v3197
        %v3199 = vpop.xlane.xlu0 %3198
        %v3200 = vadd.f32 %v1838, %v1839
        %3201 = vadd.xlane.f32.xlu0 %v3200
        %v3202 = vpop.xlane.xlu0 %3201
        %v3203 = vadd.f32 %v1840, %v1841
        %3204 = vadd.xlane.f32.xlu0 %v3203
        %v3205 = vpop.xlane.xlu0 %3204
        %v3206 = vadd.f32 %v1842, %v1843
        %3207 = vadd.xlane.f32.xlu0 %v3206
        %v3208 = vpop.xlane.xlu0 %3207
        %v3209 = vadd.f32 %v1844, %v1845
        %3210 = vadd.xlane.f32.xlu0 %v3209
        %v3211 = vpop.xlane.xlu0 %3210
        %v3212 = vadd.f32 %v1846, %v1847
        %3213 = vadd.xlane.f32.xlu0 %v3212
        %v3214 = vpop.xlane.xlu0 %3213
        %v3215 = vadd.f32 %v1848, %v1849
        %3216 = vadd.xlane.f32.xlu0 %v3215
        %v3217 = vpop.xlane.xlu0 %3216
        %v3218 = vadd.f32 %v1850, %v1851
        %3219 = vadd.xlane.f32.xlu0 %v3218
        %v3220 = vpop.xlane.xlu0 %3219
        %v3221 = vadd.f32 %v1852, %v1853
        %3222 = vadd.xlane.f32.xlu0 %v3221
        %v3223 = vpop.xlane.xlu0 %3222
        %v3224 = vadd.f32 %v1854, %v1855
        %3225 = vadd.xlane.f32.xlu0 %v3224
        %v3226 = vpop.xlane.xlu0 %3225
        %v3227 = vadd.f32 %v1856, %v1857
        %3228 = vadd.xlane.f32.xlu0 %v3227
        %v3229 = vpop.xlane.xlu0 %3228
        %v3230 = vadd.f32 %v1858, %v1859
        %3231 = vadd.xlane.f32.xlu0 %v3230
        %v3232 = vpop.xlane.xlu0 %3231
        %v3233 = vadd.f32 %v1860, %v1861
        %3234 = vadd.xlane.f32.xlu0 %v3233
        %v3235 = vpop.xlane.xlu0 %3234
        %v3236 = vadd.f32 %v1862, %v1863
        %3237 = vadd.xlane.f32.xlu0 %v3236
        %v3238 = vpop.xlane.xlu0 %3237
        %v3239 = vadd.f32 %v1864, %v1865
        %3240 = vadd.xlane.f32.xlu0 %v3239
        %v3241 = vpop.xlane.xlu0 %3240
        %v3242 = vadd.f32 %v1866, %v1867
        %3243 = vadd.xlane.f32.xlu0 %v3242
        %v3244 = vpop.xlane.xlu0 %3243
        %v3245 = vadd.f32 %v1868, %v1869
        %3246 = vadd.xlane.f32.xlu0 %v3245
        %v3247 = vpop.xlane.xlu0 %3246
        %v3248 = vadd.f32 %v1870, %v1871
        %3249 = vadd.xlane.f32.xlu0 %v3248
        %v3250 = vpop.xlane.xlu0 %3249
        %v3251 = vadd.f32 %v1872, %v1873
        %3252 = vadd.xlane.f32.xlu0 %v3251
        %v3253 = vpop.xlane.xlu0 %3252
        %v3254 = vadd.f32 %v1874, %v1875
        %3255 = vadd.xlane.f32.xlu0 %v3254
        %v3256 = vpop.xlane.xlu0 %3255
        %v3257 = vadd.f32 %v1876, %v1877
        %3258 = vadd.xlane.f32.xlu0 %v3257
        %v3259 = vpop.xlane.xlu0 %3258
        %v3260 = vadd.f32 %v1878, %v1879
        %3261 = vadd.xlane.f32.xlu0 %v3260
        %v3262 = vpop.xlane.xlu0 %3261
        %v3263 = vadd.f32 %v1880, %v1881
        %3264 = vadd.xlane.f32.xlu0 %v3263
        %v3265 = vpop.xlane.xlu0 %3264
        %v3266 = vadd.f32 %v1882, %v1883
        %3267 = vadd.xlane.f32.xlu0 %v3266
        %v3268 = vpop.xlane.xlu0 %3267
        %v3269 = vadd.f32 %v1884, %v1885
        %3270 = vadd.xlane.f32.xlu0 %v3269
        %v3271 = vpop.xlane.xlu0 %3270
        %v3272 = vadd.f32 %v1886, %v1887
        %3273 = vadd.xlane.f32.xlu0 %v3272
        %v3274 = vpop.xlane.xlu0 %3273
        %v3275 = vadd.f32 %v1888, %v1889
        %3276 = vadd.xlane.f32.xlu0 %v3275
        %v3277 = vpop.xlane.xlu0 %3276
        %v3278 = vadd.f32 %v1890, %v1891
        %3279 = vadd.xlane.f32.xlu0 %v3278
        %v3280 = vpop.xlane.xlu0 %3279
        %v3281 = vadd.f32 %v1892, %v1893
        %3282 = vadd.xlane.f32.xlu0 %v3281
        %v3283 = vpop.xlane.xlu0 %3282
        %v3284 = vadd.f32 %v1894, %v1895
        %3285 = vadd.xlane.f32.xlu0 %v3284
        %v3286 = vpop.xlane.xlu0 %3285
        %v3287 = vadd.f32 %v1896, %v1897
        %3288 = vadd.xlane.f32.xlu0 %v3287
        %v3289 = vpop.xlane.xlu0 %3288
        %v3290 = vadd.f32 %v1898, %v1899
        %3291 = vadd.xlane.f32.xlu0 %v3290
        %v3292 = vpop.xlane.xlu0 %3291
        %v3293 = vadd.f32 %v1900, %v1901
        %3294 = vadd.xlane.f32.xlu0 %v3293
        %v3295 = vpop.xlane.xlu0 %3294
        %v3296 = vadd.f32 %v1902, %v1903
        %3297 = vadd.xlane.f32.xlu0 %v3296
        %v3298 = vpop.xlane.xlu0 %3297
        %v3299 = vadd.f32 %v1904, %v1905
        %3300 = vadd.xlane.f32.xlu0 %v3299
        %v3301 = vpop.xlane.xlu0 %3300
        %v3302 = vadd.f32 %v1906, %v1907
        %3303 = vadd.xlane.f32.xlu0 %v3302
        %v3304 = vpop.xlane.xlu0 %3303
        %v3305 = vadd.f32 %v1908, %v1909
        %3306 = vadd.xlane.f32.xlu0 %v3305
        %v3307 = vpop.xlane.xlu0 %3306
        %v3308 = vadd.f32 %v1910, %v1911
        %3309 = vadd.xlane.f32.xlu0 %v3308
        %v3310 = vpop.xlane.xlu0 %3309
        %v3311 = vadd.f32 %v1912, %v1913
        %3312 = vadd.xlane.f32.xlu0 %v3311
        %v3313 = vpop.xlane.xlu0 %3312
        %v3314 = vadd.f32 %v1914, %v1915
        %3315 = vadd.xlane.f32.xlu0 %v3314
        %v3316 = vpop.xlane.xlu0 %3315
        %v3317 = vadd.f32 %v1916, %v1917
        %3318 = vadd.xlane.f32.xlu0 %v3317
        %v3319 = vpop.xlane.xlu0 %3318
        %v3320 = vadd.f32 %v1918, %v1919
        %3321 = vadd.xlane.f32.xlu0 %v3320
        %v3322 = vpop.xlane.xlu0 %3321
        %v3323 = vadd.f32 %v1920, %v1921
        %3324 = vadd.xlane.f32.xlu0 %v3323
        %v3325 = vpop.xlane.xlu0 %3324
        %v3326 = vadd.f32 %v1922, %v1923
        %3327 = vadd.xlane.f32.xlu0 %v3326
        %v3328 = vpop.xlane.xlu0 %3327
        %v3329 = vadd.f32 %v1924, %v1925
        %3330 = vadd.xlane.f32.xlu0 %v3329
        %v3331 = vpop.xlane.xlu0 %3330
        %v3332 = vadd.f32 %v1926, %v1927
        %3333 = vadd.xlane.f32.xlu0 %v3332
        %v3334 = vpop.xlane.xlu0 %3333
        %v3335 = vadd.f32 %v1928, %v1929
        %3336 = vadd.xlane.f32.xlu0 %v3335
        %v3337 = vpop.xlane.xlu0 %3336
        %v3338 = vadd.f32 %v1930, %v1931
        %3339 = vadd.xlane.f32.xlu0 %v3338
        %v3340 = vpop.xlane.xlu0 %3339
        %v3341 = vadd.f32 %v1932, %v1933
        %3342 = vadd.xlane.f32.xlu0 %v3341
        %v3343 = vpop.xlane.xlu0 %3342
        %v3344 = vadd.f32 %v1934, %v1935
        %3345 = vadd.xlane.f32.xlu0 %v3344
        %v3346 = vpop.xlane.xlu0 %3345
        %v3347 = vadd.f32 %v1936, %v1937
        %3348 = vadd.xlane.f32.xlu0 %v3347
        %v3349 = vpop.xlane.xlu0 %3348
        %v3350 = vadd.f32 %v1938, %v1939
        %3351 = vadd.xlane.f32.xlu0 %v3350
        %v3352 = vpop.xlane.xlu0 %3351
        %v3353 = vadd.f32 %v1940, %v1941
        %3354 = vadd.xlane.f32.xlu0 %v3353
        %v3355 = vpop.xlane.xlu0 %3354
        %v3356 = vadd.f32 %v1942, %v1943
        %3357 = vadd.xlane.f32.xlu0 %v3356
        %v3358 = vpop.xlane.xlu0 %3357
        %v3359 = vadd.f32 %v1944, %v1945
        %3360 = vadd.xlane.f32.xlu0 %v3359
        %v3361 = vpop.xlane.xlu0 %3360
        %v3362 = vadd.f32 %v1946, %v1947
        %3363 = vadd.xlane.f32.xlu0 %v3362
        %v3364 = vpop.xlane.xlu0 %3363
        %v3365 = vadd.f32 %v1948, %v1949
        %3366 = vadd.xlane.f32.xlu0 %v3365
        %v3367 = vpop.xlane.xlu0 %3366
        %v3368 = vadd.f32 %v1950, %v1951
        %3369 = vadd.xlane.f32.xlu0 %v3368
        %v3370 = vpop.xlane.xlu0 %3369
        %v3371 = vadd.f32 %v1952, %v1953
        %3372 = vadd.xlane.f32.xlu0 %v3371
        %v3373 = vpop.xlane.xlu0 %3372
        %v3374 = vadd.f32 %v1954, %v1955
        %3375 = vadd.xlane.f32.xlu0 %v3374
        %v3376 = vpop.xlane.xlu0 %3375
        %v3377 = vadd.f32 %v1956, %v1957
        %3378 = vadd.xlane.f32.xlu0 %v3377
        %v3379 = vpop.xlane.xlu0 %3378
        %v3380 = vadd.f32 %v1958, %v1959
        %3381 = vadd.xlane.f32.xlu0 %v3380
        %v3382 = vpop.xlane.xlu0 %3381
        %v3383 = vadd.f32 %v1960, %v1961
        %3384 = vadd.xlane.f32.xlu0 %v3383
        %v3385 = vpop.xlane.xlu0 %3384
        %v3386 = vadd.f32 %v1962, %v1963
        %3387 = vadd.xlane.f32.xlu0 %v3386
        %v3388 = vpop.xlane.xlu0 %3387
        %v3389 = vadd.f32 %v1964, %v1965
        %3390 = vadd.xlane.f32.xlu0 %v3389
        %v3391 = vpop.xlane.xlu0 %3390
        %v3392 = vadd.f32 %v1966, %v1967
        %3393 = vadd.xlane.f32.xlu0 %v3392
        %v3394 = vpop.xlane.xlu0 %3393
        %v3395 = vadd.f32 %v1968, %v1969
        %3396 = vadd.xlane.f32.xlu0 %v3395
        %v3397 = vpop.xlane.xlu0 %3396
        %v3398 = vadd.f32 %v1970, %v1971
        %3399 = vadd.xlane.f32.xlu0 %v3398
        %v3400 = vpop.xlane.xlu0 %3399
        %v3401 = vadd.f32 %v1972, %v1973
        %3402 = vadd.xlane.f32.xlu0 %v3401
        %v3403 = vpop.xlane.xlu0 %3402
        %v3404 = vadd.f32 %v1974, %v1975
        %3405 = vadd.xlane.f32.xlu0 %v3404
        %v3406 = vpop.xlane.xlu0 %3405
        %v3407 = vadd.f32 %v1976, %v1977
        %3408 = vadd.xlane.f32.xlu0 %v3407
        %v3409 = vpop.xlane.xlu0 %3408
        %v3410 = vadd.f32 %v1978, %v1979
        %3411 = vadd.xlane.f32.xlu0 %v3410
        %v3412 = vpop.xlane.xlu0 %3411
        %v3413 = vadd.f32 %v1980, %v1981
        %3414 = vadd.xlane.f32.xlu0 %v3413
        %v3415 = vpop.xlane.xlu0 %3414
        %v3416 = vadd.f32 %v1982, %v1983
        %3417 = vadd.xlane.f32.xlu0 %v3416
        %v3418 = vpop.xlane.xlu0 %3417
        %v3419 = vadd.f32 %v1984, %v1985
        %3420 = vadd.xlane.f32.xlu0 %v3419
        %v3421 = vpop.xlane.xlu0 %3420
        %v3422 = vadd.f32 %v1986, %v1987
        %3423 = vadd.xlane.f32.xlu0 %v3422
        %v3424 = vpop.xlane.xlu0 %3423
        %v3425 = vadd.f32 %v1988, %v1989
        %3426 = vadd.xlane.f32.xlu0 %v3425
        %v3427 = vpop.xlane.xlu0 %3426
        %v3428 = vadd.f32 %v1990, %v1991
        %3429 = vadd.xlane.f32.xlu0 %v3428
        %v3430 = vpop.xlane.xlu0 %3429
        %v3431 = vadd.f32 %v1992, %v1993
        %3432 = vadd.xlane.f32.xlu0 %v3431
        %v3433 = vpop.xlane.xlu0 %3432
        %v3434 = vadd.f32 %v1994, %v1995
        %3435 = vadd.xlane.f32.xlu0 %v3434
        %v3436 = vpop.xlane.xlu0 %3435
        %v3437 = vadd.f32 %v1996, %v1997
        %3438 = vadd.xlane.f32.xlu0 %v3437
        %v3439 = vpop.xlane.xlu0 %3438
        %v3440 = vadd.f32 %v1998, %v1999
        %3441 = vadd.xlane.f32.xlu0 %v3440
        %v3442 = vpop.xlane.xlu0 %3441
        %v3443 = vadd.f32 %v2000, %v2001
        %3444 = vadd.xlane.f32.xlu0 %v3443
        %v3445 = vpop.xlane.xlu0 %3444
        %v3446 = vadd.f32 %v2002, %v2003
        %3447 = vadd.xlane.f32.xlu0 %v3446
        %v3448 = vpop.xlane.xlu0 %3447
        %v3449 = vadd.f32 %v2004, %v2005
        %3450 = vadd.xlane.f32.xlu0 %v3449
        %v3451 = vpop.xlane.xlu0 %3450
        %v3452 = vadd.f32 %v2006, %v2007
        %3453 = vadd.xlane.f32.xlu0 %v3452
        %v3454 = vpop.xlane.xlu0 %3453
        %v3455 = vadd.f32 %v2008, %v2009
        %3456 = vadd.xlane.f32.xlu0 %v3455
        %v3457 = vpop.xlane.xlu0 %3456
        %v3458 = vadd.f32 %v2010, %v2011
        %3459 = vadd.xlane.f32.xlu0 %v3458
        %v3460 = vpop.xlane.xlu0 %3459
        %v3461 = vadd.f32 %v2012, %v2013
        %3462 = vadd.xlane.f32.xlu0 %v3461
        %v3463 = vpop.xlane.xlu0 %3462
        %v3464 = vadd.f32 %v2014, %v2015
        %3465 = vadd.xlane.f32.xlu0 %v3464
        %v3466 = vpop.xlane.xlu0 %3465
        %v3467 = vadd.f32 %v2016, %v2017
        %3468 = vadd.xlane.f32.xlu0 %v3467
        %v3469 = vpop.xlane.xlu0 %3468
        %v3470 = vadd.f32 %v2018, %v2019
        %3471 = vadd.xlane.f32.xlu0 %v3470
        %v3472 = vpop.xlane.xlu0 %3471
        %v3473 = vadd.f32 %v2020, %v2021
        %3474 = vadd.xlane.f32.xlu0 %v3473
        %v3475 = vpop.xlane.xlu0 %3474
        %v3476 = vadd.f32 %v2022, %v2023
        %3477 = vadd.xlane.f32.xlu0 %v3476
        %v3478 = vpop.xlane.xlu0 %3477
        %v3479 = vadd.f32 %v2024, %v2025
        %3480 = vadd.xlane.f32.xlu0 %v3479
        %v3481 = vpop.xlane.xlu0 %3480
        %v3482 = vadd.f32 %v2026, %v2027
        %3483 = vadd.xlane.f32.xlu0 %v3482
        %v3484 = vpop.xlane.xlu0 %3483
        %v3485 = vadd.f32 %v2028, %v2029
        %3486 = vadd.xlane.f32.xlu0 %v3485
        %v3487 = vpop.xlane.xlu0 %3486
        %v3488 = vadd.f32 %v2030, %v2031
        %3489 = vadd.xlane.f32.xlu0 %v3488
        %v3490 = vpop.xlane.xlu0 %3489
        %v3491 = vadd.f32 %v2032, %v2033
        %3492 = vadd.xlane.f32.xlu0 %v3491
        %v3493 = vpop.xlane.xlu0 %3492
        %v3494 = vadd.f32 %v2034, %v2035
        %3495 = vadd.xlane.f32.xlu0 %v3494
        %v3496 = vpop.xlane.xlu0 %3495
        %v3497 = vadd.f32 %v2036, %v2037
        %3498 = vadd.xlane.f32.xlu0 %v3497
        %v3499 = vpop.xlane.xlu0 %3498
        %v3500 = vadd.f32 %v2038, %v2039
        %3501 = vadd.xlane.f32.xlu0 %v3500
        %v3502 = vpop.xlane.xlu0 %3501
        %v3503 = vadd.f32 %v2040, %v2041
        %3504 = vadd.xlane.f32.xlu0 %v3503
        %v3505 = vpop.xlane.xlu0 %3504
        %v3506 = vadd.f32 %v2042, %v2043
        %3507 = vadd.xlane.f32.xlu0 %v3506
        %v3508 = vpop.xlane.xlu0 %3507
        %v3509 = vadd.f32 %v2044, %v2045
        %3510 = vadd.xlane.f32.xlu0 %v3509
        %v3511 = vpop.xlane.xlu0 %3510
        %v3512 = vadd.f32 %v2046, %v2047
        %3513 = vadd.xlane.f32.xlu0 %v3512
        %v3514 = vpop.xlane.xlu0 %3513
        %v3515 = vadd.f32 %v2048, %v2049
        %3516 = vadd.xlane.f32.xlu0 %v3515
        %v3517 = vpop.xlane.xlu0 %3516
        %v3518 = vadd.f32 %v2050, %v2051
        %3519 = vadd.xlane.f32.xlu0 %v3518
        %v3520 = vpop.xlane.xlu0 %3519
        %v3521 = vadd.f32 %v2052, %v2053
        %3522 = vadd.xlane.f32.xlu0 %v3521
        %v3523 = vpop.xlane.xlu0 %3522
        %v3524 = vadd.f32 %v2054, %v2055
        %3525 = vadd.xlane.f32.xlu0 %v3524
        %v3526 = vpop.xlane.xlu0 %3525
        %v3527 = vadd.f32 %v2056, %v2057
        %3528 = vadd.xlane.f32.xlu0 %v3527
        %v3529 = vpop.xlane.xlu0 %3528
        %v3530 = vadd.f32 %v2058, %v2059
        %3531 = vadd.xlane.f32.xlu0 %v3530
        %v3532 = vpop.xlane.xlu0 %3531
        %v3533 = vadd.f32 %v2060, %v2061
        %3534 = vadd.xlane.f32.xlu0 %v3533
        %v3535 = vpop.xlane.xlu0 %3534
        %v3536 = vadd.f32 %v2062, %v2063
        %3537 = vadd.xlane.f32.xlu0 %v3536
        %v3538 = vpop.xlane.xlu0 %3537
        %v3539 = vadd.f32 %v2064, %v2065
        %3540 = vadd.xlane.f32.xlu0 %v3539
        %v3541 = vpop.xlane.xlu0 %3540
        %v3542 = vadd.f32 %v2066, %v2067
        %3543 = vadd.xlane.f32.xlu0 %v3542
        %v3544 = vpop.xlane.xlu0 %3543
        %v3545 = vadd.f32 %v2068, %v2069
        %3546 = vadd.xlane.f32.xlu0 %v3545
        %v3547 = vpop.xlane.xlu0 %3546
        %v3548 = vadd.f32 %v2070, %v2071
        %3549 = vadd.xlane.f32.xlu0 %v3548
        %v3550 = vpop.xlane.xlu0 %3549
        %v3551 = vadd.f32 %v2072, %v2073
        %3552 = vadd.xlane.f32.xlu0 %v3551
        %v3553 = vpop.xlane.xlu0 %3552
        %v3554 = vadd.f32 %v2074, %v2075
        %3555 = vadd.xlane.f32.xlu0 %v3554
        %v3556 = vpop.xlane.xlu0 %3555
        %v3557 = vadd.f32 %v2076, %v2077
        %3558 = vadd.xlane.f32.xlu0 %v3557
        %v3559 = vpop.xlane.xlu0 %3558
        %v3560 = vadd.f32 %v2078, %v2079
        %3561 = vadd.xlane.f32.xlu0 %v3560
        %v3562 = vpop.xlane.xlu0 %3561
        %v3563 = vadd.f32 %v2080, %v2081
        %3564 = vadd.xlane.f32.xlu0 %v3563
        %v3565 = vpop.xlane.xlu0 %3564
        %v3566 = vadd.f32 %v2082, %v2083
        %3567 = vadd.xlane.f32.xlu0 %v3566
        %v3568 = vpop.xlane.xlu0 %3567
        %v3569 = vadd.f32 %v2084, %v2085
        %3570 = vadd.xlane.f32.xlu0 %v3569
        %v3571 = vpop.xlane.xlu0 %3570
        %v3572 = vadd.f32 %v2086, %v2087
        %3573 = vadd.xlane.f32.xlu0 %v3572
        %v3574 = vpop.xlane.xlu0 %3573
        %v3575 = vadd.f32 %v2088, %v2089
        %3576 = vadd.xlane.f32.xlu0 %v3575
        %v3577 = vpop.xlane.xlu0 %3576
        %v3578 = vadd.f32 %v2090, %v2091
        %3579 = vadd.xlane.f32.xlu0 %v3578
        %v3580 = vpop.xlane.xlu0 %3579
        %v3581 = vadd.f32 %v2092, %v2093
        %3582 = vadd.xlane.f32.xlu0 %v3581
        %v3583 = vpop.xlane.xlu0 %3582
        %v3584 = vadd.f32 %v2094, %v2095
        %3585 = vadd.xlane.f32.xlu0 %v3584
        %v3586 = vpop.xlane.xlu0 %3585
        %v3587 = vadd.f32 %v2096, %v2097
        %3588 = vadd.xlane.f32.xlu0 %v3587
        %v3589 = vpop.xlane.xlu0 %3588
        %v3590 = vadd.f32 %v2098, %v2099
        %3591 = vadd.xlane.f32.xlu0 %v3590
        %v3592 = vpop.xlane.xlu0 %3591
        %v3593 = vadd.f32 %v2100, %v2101
        %3594 = vadd.xlane.f32.xlu0 %v3593
        %v3595 = vpop.xlane.xlu0 %3594
        %v3596 = vadd.f32 %v2102, %v2103
        %3597 = vadd.xlane.f32.xlu0 %v3596
        %v3598 = vpop.xlane.xlu0 %3597
        %v3599 = vadd.f32 %v2104, %v2105
        %3600 = vadd.xlane.f32.xlu0 %v3599
        %v3601 = vpop.xlane.xlu0 %3600
        %v3602 = vadd.f32 %v2106, %v2107
        %3603 = vadd.xlane.f32.xlu0 %v3602
        %v3604 = vpop.xlane.xlu0 %3603
        %v3605 = vadd.f32 %v2108, %v2109
        %3606 = vadd.xlane.f32.xlu0 %v3605
        %v3607 = vpop.xlane.xlu0 %3606
        %v3608 = vadd.f32 %v2110, %v2111
        %3609 = vadd.xlane.f32.xlu0 %v3608
        %v3610 = vpop.xlane.xlu0 %3609
        %v3611 = vadd.f32 %v2112, %v2113
        %3612 = vadd.xlane.f32.xlu0 %v3611
        %v3613 = vpop.xlane.xlu0 %3612
        %v3614 = vadd.f32 %v2114, %v2115
        %3615 = vadd.xlane.f32.xlu0 %v3614
        %v3616 = vpop.xlane.xlu0 %3615
        %v3617 = vadd.f32 %v2116, %v2117
        %3618 = vadd.xlane.f32.xlu0 %v3617
        %v3619 = vpop.xlane.xlu0 %3618
        %v3620 = vadd.f32 %v2118, %v2119
        %3621 = vadd.xlane.f32.xlu0 %v3620
        %v3622 = vpop.xlane.xlu0 %3621
        %v3623 = vadd.f32 %v2120, %v2121
        %3624 = vadd.xlane.f32.xlu0 %v3623
        %v3625 = vpop.xlane.xlu0 %3624
        %v3626 = vadd.f32 %v2122, %v2123
        %3627 = vadd.xlane.f32.xlu0 %v3626
        %v3628 = vpop.xlane.xlu0 %3627
        %v3629 = vadd.f32 %v2124, %v2125
        %3630 = vadd.xlane.f32.xlu0 %v3629
        %v3631 = vpop.xlane.xlu0 %3630
        %v3632 = vadd.f32 %v2126, %v2127
        %3633 = vadd.xlane.f32.xlu0 %v3632
        %v3634 = vpop.xlane.xlu0 %3633
        %v3635 = vadd.f32 %v2128, %v2129
        %3636 = vadd.xlane.f32.xlu0 %v3635
        %v3637 = vpop.xlane.xlu0 %3636
        %v3638 = vadd.f32 %v2130, %v2131
        %3639 = vadd.xlane.f32.xlu0 %v3638
        %v3640 = vpop.xlane.xlu0 %3639
        %v3641 = vadd.f32 %v2132, %v2133
        %3642 = vadd.xlane.f32.xlu0 %v3641
        %v3643 = vpop.xlane.xlu0 %3642
        %v3644 = vadd.f32 %v2134, %v2135
        %3645 = vadd.xlane.f32.xlu0 %v3644
        %v3646 = vpop.xlane.xlu0 %3645
        %v3647 = vadd.f32 %v2136, %v2137
        %3648 = vadd.xlane.f32.xlu0 %v3647
        %v3649 = vpop.xlane.xlu0 %3648
        %v3650 = vadd.f32 %v2138, %v2139
        %3651 = vadd.xlane.f32.xlu0 %v3650
        %v3652 = vpop.xlane.xlu0 %3651
        %v3653 = vadd.f32 %v2140, %v2141
        %3654 = vadd.xlane.f32.xlu0 %v3653
        %v3655 = vpop.xlane.xlu0 %3654
        %v3656 = vadd.f32 %v2142, %v2143
        %3657 = vadd.xlane.f32.xlu0 %v3656
        %v3658 = vpop.xlane.xlu0 %3657
        %v3659 = vadd.f32 %v2144, %v2145
        %3660 = vadd.xlane.f32.xlu0 %v3659
        %v3661 = vpop.xlane.xlu0 %3660
        %v3662 = vadd.f32 %v2146, %v2147
        %3663 = vadd.xlane.f32.xlu0 %v3662
        %v3664 = vpop.xlane.xlu0 %3663
        %v3665 = vadd.f32 %v2148, %v2149
        %3666 = vadd.xlane.f32.xlu0 %v3665
        %v3667 = vpop.xlane.xlu0 %3666
        %v3668 = vadd.f32 %v2150, %v2151
        %3669 = vadd.xlane.f32.xlu0 %v3668
        %v3670 = vpop.xlane.xlu0 %3669
        %v3671 = vadd.f32 %v2152, %v2153
        %3672 = vadd.xlane.f32.xlu0 %v3671
        %v3673 = vpop.xlane.xlu0 %3672
        %v3674 = vadd.f32 %v2154, %v2155
        %3675 = vadd.xlane.f32.xlu0 %v3674
        %v3676 = vpop.xlane.xlu0 %3675
        %v3677 = vadd.f32 %v2156, %v2157
        %3678 = vadd.xlane.f32.xlu0 %v3677
        %v3679 = vpop.xlane.xlu0 %3678
        %v3680 = vadd.f32 %v2158, %v2159
        %3681 = vadd.xlane.f32.xlu0 %v3680
        %v3682 = vpop.xlane.xlu0 %3681
        %v3683 = vadd.f32 %v2160, %v2161
        %3684 = vadd.xlane.f32.xlu0 %v3683
        %v3685 = vpop.xlane.xlu0 %3684
        %v3686 = vadd.f32 %v2162, %v2163
        %3687 = vadd.xlane.f32.xlu0 %v3686
        %v3688 = vpop.xlane.xlu0 %3687
        %v3689 = vadd.f32 %v2164, %v2165
        %3690 = vadd.xlane.f32.xlu0 %v3689
        %v3691 = vpop.xlane.xlu0 %3690
        %v3692 = vadd.f32 %v2166, %v2167
        %3693 = vadd.xlane.f32.xlu0 %v3692
        %v3694 = vpop.xlane.xlu0 %3693
        %v3695 = vadd.f32 %v2168, %v2169
        %3696 = vadd.xlane.f32.xlu0 %v3695
        %v3697 = vpop.xlane.xlu0 %3696
        %v3698 = vadd.f32 %v2170, %v2171
        %3699 = vadd.xlane.f32.xlu0 %v3698
        %v3700 = vpop.xlane.xlu0 %3699
        %v3701 = vadd.f32 %v2172, %v2173
        %3702 = vadd.xlane.f32.xlu0 %v3701
        %v3703 = vpop.xlane.xlu0 %3702
        %v3704 = vadd.f32 %v2174, %v2175
        %3705 = vadd.xlane.f32.xlu0 %v3704
        %v3706 = vpop.xlane.xlu0 %3705
        %v3707 = vadd.f32 %v2176, %v2177
        %3708 = vadd.xlane.f32.xlu0 %v3707
        %v3709 = vpop.xlane.xlu0 %3708
        %v3710 = vadd.f32 %v2178, %v2179
        %3711 = vadd.xlane.f32.xlu0 %v3710
        %v3712 = vpop.xlane.xlu0 %3711
        %v3713 = vadd.f32 %v2180, %v2181
        %3714 = vadd.xlane.f32.xlu0 %v3713
        %v3715 = vpop.xlane.xlu0 %3714
        %v3716 = vadd.f32 %v2182, %v2183
        %3717 = vadd.xlane.f32.xlu0 %v3716
        %v3718 = vpop.xlane.xlu0 %3717
        %v3719 = vadd.f32 %v2184, %v2185
        %3720 = vadd.xlane.f32.xlu0 %v3719
        %v3721 = vpop.xlane.xlu0 %3720
        %v3722 = vmax.f32 %v2188, 1e-24
        %v3723 = vmax.f32 %v2191, 1e-24
        %v3724 = vmax.f32 %v2194, 1e-24
        %v3725 = vmax.f32 %v2197, 1e-24
        %v3726 = vmax.f32 %v2200, 1e-24
        %v3727 = vmax.f32 %v2203, 1e-24
        %v3728 = vmax.f32 %v2206, 1e-24
        %v3729 = vmax.f32 %v2209, 1e-24
        %v3730 = vmax.f32 %v2212, 1e-24
        %v3731 = vmax.f32 %v2215, 1e-24
        %v3732 = vmax.f32 %v2218, 1e-24
        %v3733 = vmax.f32 %v2221, 1e-24
        %v3734 = vmax.f32 %v2224, 1e-24
        %v3735 = vmax.f32 %v2227, 1e-24
        %v3736 = vmax.f32 %v2230, 1e-24
        %v3737 = vmax.f32 %v2233, 1e-24
        %v3738 = vmax.f32 %v2236, 1e-24
        %v3739 = vmax.f32 %v2239, 1e-24
        %v3740 = vmax.f32 %v2242, 1e-24
        %v3741 = vmax.f32 %v2245, 1e-24
        %v3742 = vmax.f32 %v2248, 1e-24
        %v3743 = vmax.f32 %v2251, 1e-24
        %v3744 = vmax.f32 %v2254, 1e-24
        %v3745 = vmax.f32 %v2257, 1e-24
        %v3746 = vmax.f32 %v2260, 1e-24
        %v3747 = vmax.f32 %v2263, 1e-24
        %v3748 = vmax.f32 %v2266, 1e-24
        %v3749 = vmax.f32 %v2269, 1e-24
        %v3750 = vmax.f32 %v2272, 1e-24
        %v3751 = vmax.f32 %v2275, 1e-24
        %v3752 = vmax.f32 %v2278, 1e-24
        %v3753 = vmax.f32 %v2281, 1e-24
        %v3754 = vmax.f32 %v2284, 1e-24
        %v3755 = vmax.f32 %v2287, 1e-24
        %v3756 = vmax.f32 %v2290, 1e-24
        %v3757 = vmax.f32 %v2293, 1e-24
        %v3758 = vmax.f32 %v2296, 1e-24
        %v3759 = vmax.f32 %v2299, 1e-24
        %v3760 = vmax.f32 %v2302, 1e-24
        %v3761 = vmax.f32 %v2305, 1e-24
        %v3762 = vmax.f32 %v2308, 1e-24
        %v3763 = vmax.f32 %v2311, 1e-24
        %v3764 = vmax.f32 %v2314, 1e-24
        %v3765 = vmax.f32 %v2317, 1e-24
        %v3766 = vmax.f32 %v2320, 1e-24
        %v3767 = vmax.f32 %v2323, 1e-24
        %v3768 = vmax.f32 %v2326, 1e-24
        %v3769 = vmax.f32 %v2329, 1e-24
        %v3770 = vmax.f32 %v2332, 1e-24
        %v3771 = vmax.f32 %v2335, 1e-24
        %v3772 = vmax.f32 %v2338, 1e-24
        %v3773 = vmax.f32 %v2341, 1e-24
        %v3774 = vmax.f32 %v2344, 1e-24
        %v3775 = vmax.f32 %v2347, 1e-24
        %v3776 = vmax.f32 %v2350, 1e-24
        %v3777 = vmax.f32 %v2353, 1e-24
        %v3778 = vmax.f32 %v2356, 1e-24
        %v3779 = vmax.f32 %v2359, 1e-24
        %v3780 = vmax.f32 %v2362, 1e-24
        %v3781 = vmax.f32 %v2365, 1e-24
        %v3782 = vmax.f32 %v2368, 1e-24
        %v3783 = vmax.f32 %v2371, 1e-24
        %v3784 = vmax.f32 %v2374, 1e-24
        %v3785 = vmax.f32 %v2377, 1e-24
        %v3786 = vmax.f32 %v2380, 1e-24
        %v3787 = vmax.f32 %v2383, 1e-24
        %v3788 = vmax.f32 %v2386, 1e-24
        %v3789 = vmax.f32 %v2389, 1e-24
        %v3790 = vmax.f32 %v2392, 1e-24
        %v3791 = vmax.f32 %v2395, 1e-24
        %v3792 = vmax.f32 %v2398, 1e-24
        %v3793 = vmax.f32 %v2401, 1e-24
        %v3794 = vmax.f32 %v2404, 1e-24
        %v3795 = vmax.f32 %v2407, 1e-24
        %v3796 = vmax.f32 %v2410, 1e-24
        %v3797 = vmax.f32 %v2413, 1e-24
        %v3798 = vmax.f32 %v2416, 1e-24
        %v3799 = vmax.f32 %v2419, 1e-24
        %v3800 = vmax.f32 %v2422, 1e-24
        %v3801 = vmax.f32 %v2425, 1e-24
        %v3802 = vmax.f32 %v2428, 1e-24
        %v3803 = vmax.f32 %v2431, 1e-24
        %v3804 = vmax.f32 %v2434, 1e-24
        %v3805 = vmax.f32 %v2437, 1e-24
        %v3806 = vmax.f32 %v2440, 1e-24
        %v3807 = vmax.f32 %v2443, 1e-24
        %v3808 = vmax.f32 %v2446, 1e-24
        %v3809 = vmax.f32 %v2449, 1e-24
        %v3810 = vmax.f32 %v2452, 1e-24
        %v3811 = vmax.f32 %v2455, 1e-24
        %v3812 = vmax.f32 %v2458, 1e-24
        %v3813 = vmax.f32 %v2461, 1e-24
        %v3814 = vmax.f32 %v2464, 1e-24
        %v3815 = vmax.f32 %v2467, 1e-24
        %v3816 = vmax.f32 %v2470, 1e-24
        %v3817 = vmax.f32 %v2473, 1e-24
        %v3818 = vmax.f32 %v2476, 1e-24
        %v3819 = vmax.f32 %v2479, 1e-24
        %v3820 = vmax.f32 %v2482, 1e-24
        %v3821 = vmax.f32 %v2485, 1e-24
        %v3822 = vmax.f32 %v2488, 1e-24
        %v3823 = vmax.f32 %v2491, 1e-24
        %v3824 = vmax.f32 %v2494, 1e-24
        %v3825 = vmax.f32 %v2497, 1e-24
        %v3826 = vmax.f32 %v2500, 1e-24
        %v3827 = vmax.f32 %v2503, 1e-24
        %v3828 = vmax.f32 %v2506, 1e-24
        %v3829 = vmax.f32 %v2509, 1e-24
        %v3830 = vmax.f32 %v2512, 1e-24
        %v3831 = vmax.f32 %v2515, 1e-24
        %v3832 = vmax.f32 %v2518, 1e-24
        %v3833 = vmax.f32 %v2521, 1e-24
        %v3834 = vmax.f32 %v2524, 1e-24
        %v3835 = vmax.f32 %v2527, 1e-24
        %v3836 = vmax.f32 %v2530, 1e-24
        %v3837 = vmax.f32 %v2533, 1e-24
        %v3838 = vmax.f32 %v2536, 1e-24
        %v3839 = vmax.f32 %v2539, 1e-24
        %v3840 = vmax.f32 %v2542, 1e-24
        %v3841 = vmax.f32 %v2545, 1e-24
        %v3842 = vmax.f32 %v2548, 1e-24
        %v3843 = vmax.f32 %v2551, 1e-24
        %v3844 = vmax.f32 %v2554, 1e-24
        %v3845 = vmax.f32 %v2557, 1e-24
        %v3846 = vmax.f32 %v2560, 1e-24
        %v3847 = vmax.f32 %v2563, 1e-24
        %v3848 = vmax.f32 %v2566, 1e-24
        %v3849 = vmax.f32 %v2569, 1e-24
        %v3850 = vmax.f32 %v2572, 1e-24
        %v3851 = vmax.f32 %v2575, 1e-24
        %v3852 = vmax.f32 %v2578, 1e-24
        %v3853 = vmax.f32 %v2581, 1e-24
        %v3854 = vmax.f32 %v2584, 1e-24
        %v3855 = vmax.f32 %v2587, 1e-24
        %v3856 = vmax.f32 %v2590, 1e-24
        %v3857 = vmax.f32 %v2593, 1e-24
        %v3858 = vmax.f32 %v2596, 1e-24
        %v3859 = vmax.f32 %v2599, 1e-24
        %v3860 = vmax.f32 %v2602, 1e-24
        %v3861 = vmax.f32 %v2605, 1e-24
        %v3862 = vmax.f32 %v2608, 1e-24
        %v3863 = vmax.f32 %v2611, 1e-24
        %v3864 = vmax.f32 %v2614, 1e-24
        %v3865 = vmax.f32 %v2617, 1e-24
        %v3866 = vmax.f32 %v2620, 1e-24
        %v3867 = vmax.f32 %v2623, 1e-24
        %v3868 = vmax.f32 %v2626, 1e-24
        %v3869 = vmax.f32 %v2629, 1e-24
        %v3870 = vmax.f32 %v2632, 1e-24
        %v3871 = vmax.f32 %v2635, 1e-24
        %v3872 = vmax.f32 %v2638, 1e-24
        %v3873 = vmax.f32 %v2641, 1e-24
        %v3874 = vmax.f32 %v2644, 1e-24
        %v3875 = vmax.f32 %v2647, 1e-24
        %v3876 = vmax.f32 %v2650, 1e-24
        %v3877 = vmax.f32 %v2653, 1e-24
        %v3878 = vmax.f32 %v2656, 1e-24
        %v3879 = vmax.f32 %v2659, 1e-24
        %v3880 = vmax.f32 %v2662, 1e-24
        %v3881 = vmax.f32 %v2665, 1e-24
        %v3882 = vmax.f32 %v2668, 1e-24
        %v3883 = vmax.f32 %v2671, 1e-24
        %v3884 = vmax.f32 %v2674, 1e-24
        %v3885 = vmax.f32 %v2677, 1e-24
        %v3886 = vmax.f32 %v2680, 1e-24
        %v3887 = vmax.f32 %v2683, 1e-24
        %v3888 = vmax.f32 %v2686, 1e-24
        %v3889 = vmax.f32 %v2689, 1e-24
        %v3890 = vmax.f32 %v2692, 1e-24
        %v3891 = vmax.f32 %v2695, 1e-24
        %v3892 = vmax.f32 %v2698, 1e-24
        %v3893 = vmax.f32 %v2701, 1e-24
        %v3894 = vmax.f32 %v2704, 1e-24
        %v3895 = vmax.f32 %v2707, 1e-24
        %v3896 = vmax.f32 %v2710, 1e-24
        %v3897 = vmax.f32 %v2713, 1e-24
        %v3898 = vmax.f32 %v2716, 1e-24
        %v3899 = vmax.f32 %v2719, 1e-24
        %v3900 = vmax.f32 %v2722, 1e-24
        %v3901 = vmax.f32 %v2725, 1e-24
        %v3902 = vmax.f32 %v2728, 1e-24
        %v3903 = vmax.f32 %v2731, 1e-24
        %v3904 = vmax.f32 %v2734, 1e-24
        %v3905 = vmax.f32 %v2737, 1e-24
        %v3906 = vmax.f32 %v2740, 1e-24
        %v3907 = vmax.f32 %v2743, 1e-24
        %v3908 = vmax.f32 %v2746, 1e-24
        %v3909 = vmax.f32 %v2749, 1e-24
        %v3910 = vmax.f32 %v2752, 1e-24
        %v3911 = vmax.f32 %v2755, 1e-24
        %v3912 = vmax.f32 %v2758, 1e-24
        %v3913 = vmax.f32 %v2761, 1e-24
        %v3914 = vmax.f32 %v2764, 1e-24
        %v3915 = vmax.f32 %v2767, 1e-24
        %v3916 = vmax.f32 %v2770, 1e-24
        %v3917 = vmax.f32 %v2773, 1e-24
        %v3918 = vmax.f32 %v2776, 1e-24
        %v3919 = vmax.f32 %v2779, 1e-24
        %v3920 = vmax.f32 %v2782, 1e-24
        %v3921 = vmax.f32 %v2785, 1e-24
        %v3922 = vmax.f32 %v2788, 1e-24
        %v3923 = vmax.f32 %v2791, 1e-24
        %v3924 = vmax.f32 %v2794, 1e-24
        %v3925 = vmax.f32 %v2797, 1e-24
        %v3926 = vmax.f32 %v2800, 1e-24
        %v3927 = vmax.f32 %v2803, 1e-24
        %v3928 = vmax.f32 %v2806, 1e-24
        %v3929 = vmax.f32 %v2809, 1e-24
        %v3930 = vmax.f32 %v2812, 1e-24
        %v3931 = vmax.f32 %v2815, 1e-24
        %v3932 = vmax.f32 %v2818, 1e-24
        %v3933 = vmax.f32 %v2821, 1e-24
        %v3934 = vmax.f32 %v2824, 1e-24
        %v3935 = vmax.f32 %v2827, 1e-24
        %v3936 = vmax.f32 %v2830, 1e-24
        %v3937 = vmax.f32 %v2833, 1e-24
        %v3938 = vmax.f32 %v2836, 1e-24
        %v3939 = vmax.f32 %v2839, 1e-24
        %v3940 = vmax.f32 %v2842, 1e-24
        %v3941 = vmax.f32 %v2845, 1e-24
        %v3942 = vmax.f32 %v2848, 1e-24
        %v3943 = vmax.f32 %v2851, 1e-24
        %v3944 = vmax.f32 %v2854, 1e-24
        %v3945 = vmax.f32 %v2857, 1e-24
        %v3946 = vmax.f32 %v2860, 1e-24
        %v3947 = vmax.f32 %v2863, 1e-24
        %v3948 = vmax.f32 %v2866, 1e-24
        %v3949 = vmax.f32 %v2869, 1e-24
        %v3950 = vmax.f32 %v2872, 1e-24
        %v3951 = vmax.f32 %v2875, 1e-24
        %v3952 = vmax.f32 %v2878, 1e-24
        %v3953 = vmax.f32 %v2881, 1e-24
        %v3954 = vmax.f32 %v2884, 1e-24
        %v3955 = vmax.f32 %v2887, 1e-24
        %v3956 = vmax.f32 %v2890, 1e-24
        %v3957 = vmax.f32 %v2893, 1e-24
        %v3958 = vmax.f32 %v2896, 1e-24
        %v3959 = vmax.f32 %v2899, 1e-24
        %v3960 = vmax.f32 %v2902, 1e-24
        %v3961 = vmax.f32 %v2905, 1e-24
        %v3962 = vmax.f32 %v2908, 1e-24
        %v3963 = vmax.f32 %v2911, 1e-24
        %v3964 = vmax.f32 %v2914, 1e-24
        %v3965 = vmax.f32 %v2917, 1e-24
        %v3966 = vmax.f32 %v2920, 1e-24
        %v3967 = vmax.f32 %v2923, 1e-24
        %v3968 = vmax.f32 %v2926, 1e-24
        %v3969 = vmax.f32 %v2929, 1e-24
        %v3970 = vmax.f32 %v2932, 1e-24
        %v3971 = vmax.f32 %v2935, 1e-24
        %v3972 = vmax.f32 %v2938, 1e-24
        %v3973 = vmax.f32 %v2941, 1e-24
        %v3974 = vmax.f32 %v2944, 1e-24
        %v3975 = vmax.f32 %v2947, 1e-24
        %v3976 = vmax.f32 %v2950, 1e-24
        %v3977 = vmax.f32 %v2953, 1e-24
        %v3978 = vmax.f32 %v2956, 1e-24
        %v3979 = vmax.f32 %v2959, 1e-24
        %v3980 = vmax.f32 %v2962, 1e-24
        %v3981 = vmax.f32 %v2965, 1e-24
        %v3982 = vmax.f32 %v2968, 1e-24
        %v3983 = vmax.f32 %v2971, 1e-24
        %v3984 = vmax.f32 %v2974, 1e-24
        %v3985 = vmax.f32 %v2977, 1e-24
        %v3986 = vmax.f32 %v2980, 1e-24
        %v3987 = vmax.f32 %v2983, 1e-24
        %v3988 = vmax.f32 %v2986, 1e-24
        %v3989 = vmax.f32 %v2989, 1e-24
        %v3990 = vmax.f32 %v2992, 1e-24
        %v3991 = vmax.f32 %v2995, 1e-24
        %v3992 = vmax.f32 %v2998, 1e-24
        %v3993 = vmax.f32 %v3001, 1e-24
        %v3994 = vmax.f32 %v3004, 1e-24
        %v3995 = vmax.f32 %v3007, 1e-24
        %v3996 = vmax.f32 %v3010, 1e-24
        %v3997 = vmax.f32 %v3013, 1e-24
        %v3998 = vmax.f32 %v3016, 1e-24
        %v3999 = vmax.f32 %v3019, 1e-24
        %v4000 = vmax.f32 %v3022, 1e-24
        %v4001 = vmax.f32 %v3025, 1e-24
        %v4002 = vmax.f32 %v3028, 1e-24
        %v4003 = vmax.f32 %v3031, 1e-24
        %v4004 = vmax.f32 %v3034, 1e-24
        %v4005 = vmax.f32 %v3037, 1e-24
        %v4006 = vmax.f32 %v3040, 1e-24
        %v4007 = vmax.f32 %v3043, 1e-24
        %v4008 = vmax.f32 %v3046, 1e-24
        %v4009 = vmax.f32 %v3049, 1e-24
        %v4010 = vmax.f32 %v3052, 1e-24
        %v4011 = vmax.f32 %v3055, 1e-24
        %v4012 = vmax.f32 %v3058, 1e-24
        %v4013 = vmax.f32 %v3061, 1e-24
        %v4014 = vmax.f32 %v3064, 1e-24
        %v4015 = vmax.f32 %v3067, 1e-24
        %v4016 = vmax.f32 %v3070, 1e-24
        %v4017 = vmax.f32 %v3073, 1e-24
        %v4018 = vmax.f32 %v3076, 1e-24
        %v4019 = vmax.f32 %v3079, 1e-24
        %v4020 = vmax.f32 %v3082, 1e-24
        %v4021 = vmax.f32 %v3085, 1e-24
        %v4022 = vmax.f32 %v3088, 1e-24
        %v4023 = vmax.f32 %v3091, 1e-24
        %v4024 = vmax.f32 %v3094, 1e-24
        %v4025 = vmax.f32 %v3097, 1e-24
        %v4026 = vmax.f32 %v3100, 1e-24
        %v4027 = vmax.f32 %v3103, 1e-24
        %v4028 = vmax.f32 %v3106, 1e-24
        %v4029 = vmax.f32 %v3109, 1e-24
        %v4030 = vmax.f32 %v3112, 1e-24
        %v4031 = vmax.f32 %v3115, 1e-24
        %v4032 = vmax.f32 %v3118, 1e-24
        %v4033 = vmax.f32 %v3121, 1e-24
        %v4034 = vmax.f32 %v3124, 1e-24
        %v4035 = vmax.f32 %v3127, 1e-24
        %v4036 = vmax.f32 %v3130, 1e-24
        %v4037 = vmax.f32 %v3133, 1e-24
        %v4038 = vmax.f32 %v3136, 1e-24
        %v4039 = vmax.f32 %v3139, 1e-24
        %v4040 = vmax.f32 %v3142, 1e-24
        %v4041 = vmax.f32 %v3145, 1e-24
        %v4042 = vmax.f32 %v3148, 1e-24
        %v4043 = vmax.f32 %v3151, 1e-24
        %v4044 = vmax.f32 %v3154, 1e-24
        %v4045 = vmax.f32 %v3157, 1e-24
        %v4046 = vmax.f32 %v3160, 1e-24
        %v4047 = vmax.f32 %v3163, 1e-24
        %v4048 = vmax.f32 %v3166, 1e-24
        %v4049 = vmax.f32 %v3169, 1e-24
        %v4050 = vmax.f32 %v3172, 1e-24
        %v4051 = vmax.f32 %v3175, 1e-24
        %v4052 = vmax.f32 %v3178, 1e-24
        %v4053 = vmax.f32 %v3181, 1e-24
        %v4054 = vmax.f32 %v3184, 1e-24
        %v4055 = vmax.f32 %v3187, 1e-24
        %v4056 = vmax.f32 %v3190, 1e-24
        %v4057 = vmax.f32 %v3193, 1e-24
        %v4058 = vmax.f32 %v3196, 1e-24
        %v4059 = vmax.f32 %v3199, 1e-24
        %v4060 = vmax.f32 %v3202, 1e-24
        %v4061 = vmax.f32 %v3205, 1e-24
        %v4062 = vmax.f32 %v3208, 1e-24
        %v4063 = vmax.f32 %v3211, 1e-24
        %v4064 = vmax.f32 %v3214, 1e-24
        %v4065 = vmax.f32 %v3217, 1e-24
        %v4066 = vmax.f32 %v3220, 1e-24
        %v4067 = vmax.f32 %v3223, 1e-24
        %v4068 = vmax.f32 %v3226, 1e-24
        %v4069 = vmax.f32 %v3229, 1e-24
        %v4070 = vmax.f32 %v3232, 1e-24
        %v4071 = vmax.f32 %v3235, 1e-24
        %v4072 = vmax.f32 %v3238, 1e-24
        %v4073 = vmax.f32 %v3241, 1e-24
        %v4074 = vmax.f32 %v3244, 1e-24
        %v4075 = vmax.f32 %v3247, 1e-24
        %v4076 = vmax.f32 %v3250, 1e-24
        %v4077 = vmax.f32 %v3253, 1e-24
        %v4078 = vmax.f32 %v3256, 1e-24
        %v4079 = vmax.f32 %v3259, 1e-24
        %v4080 = vmax.f32 %v3262, 1e-24
        %v4081 = vmax.f32 %v3265, 1e-24
        %v4082 = vmax.f32 %v3268, 1e-24
        %v4083 = vmax.f32 %v3271, 1e-24
        %v4084 = vmax.f32 %v3274, 1e-24
        %v4085 = vmax.f32 %v3277, 1e-24
        %v4086 = vmax.f32 %v3280, 1e-24
        %v4087 = vmax.f32 %v3283, 1e-24
        %v4088 = vmax.f32 %v3286, 1e-24
        %v4089 = vmax.f32 %v3289, 1e-24
        %v4090 = vmax.f32 %v3292, 1e-24
        %v4091 = vmax.f32 %v3295, 1e-24
        %v4092 = vmax.f32 %v3298, 1e-24
        %v4093 = vmax.f32 %v3301, 1e-24
        %v4094 = vmax.f32 %v3304, 1e-24
        %v4095 = vmax.f32 %v3307, 1e-24
        %v4096 = vmax.f32 %v3310, 1e-24
        %v4097 = vmax.f32 %v3313, 1e-24
        %v4098 = vmax.f32 %v3316, 1e-24
        %v4099 = vmax.f32 %v3319, 1e-24
        %v4100 = vmax.f32 %v3322, 1e-24
        %v4101 = vmax.f32 %v3325, 1e-24
        %v4102 = vmax.f32 %v3328, 1e-24
        %v4103 = vmax.f32 %v3331, 1e-24
        %v4104 = vmax.f32 %v3334, 1e-24
        %v4105 = vmax.f32 %v3337, 1e-24
        %v4106 = vmax.f32 %v3340, 1e-24
        %v4107 = vmax.f32 %v3343, 1e-24
        %v4108 = vmax.f32 %v3346, 1e-24
        %v4109 = vmax.f32 %v3349, 1e-24
        %v4110 = vmax.f32 %v3352, 1e-24
        %v4111 = vmax.f32 %v3355, 1e-24
        %v4112 = vmax.f32 %v3358, 1e-24
        %v4113 = vmax.f32 %v3361, 1e-24
        %v4114 = vmax.f32 %v3364, 1e-24
        %v4115 = vmax.f32 %v3367, 1e-24
        %v4116 = vmax.f32 %v3370, 1e-24
        %v4117 = vmax.f32 %v3373, 1e-24
        %v4118 = vmax.f32 %v3376, 1e-24
        %v4119 = vmax.f32 %v3379, 1e-24
        %v4120 = vmax.f32 %v3382, 1e-24
        %v4121 = vmax.f32 %v3385, 1e-24
        %v4122 = vmax.f32 %v3388, 1e-24
        %v4123 = vmax.f32 %v3391, 1e-24
        %v4124 = vmax.f32 %v3394, 1e-24
        %v4125 = vmax.f32 %v3397, 1e-24
        %v4126 = vmax.f32 %v3400, 1e-24
        %v4127 = vmax.f32 %v3403, 1e-24
        %v4128 = vmax.f32 %v3406, 1e-24
        %v4129 = vmax.f32 %v3409, 1e-24
        %v4130 = vmax.f32 %v3412, 1e-24
        %v4131 = vmax.f32 %v3415, 1e-24
        %v4132 = vmax.f32 %v3418, 1e-24
        %v4133 = vmax.f32 %v3421, 1e-24
        %v4134 = vmax.f32 %v3424, 1e-24
        %v4135 = vmax.f32 %v3427, 1e-24
        %v4136 = vmax.f32 %v3430, 1e-24
        %v4137 = vmax.f32 %v3433, 1e-24
        %v4138 = vmax.f32 %v3436, 1e-24
        %v4139 = vmax.f32 %v3439, 1e-24
        %v4140 = vmax.f32 %v3442, 1e-24
        %v4141 = vmax.f32 %v3445, 1e-24
        %v4142 = vmax.f32 %v3448, 1e-24
        %v4143 = vmax.f32 %v3451, 1e-24
        %v4144 = vmax.f32 %v3454, 1e-24
        %v4145 = vmax.f32 %v3457, 1e-24
        %v4146 = vmax.f32 %v3460, 1e-24
        %v4147 = vmax.f32 %v3463, 1e-24
        %v4148 = vmax.f32 %v3466, 1e-24
        %v4149 = vmax.f32 %v3469, 1e-24
        %v4150 = vmax.f32 %v3472, 1e-24
        %v4151 = vmax.f32 %v3475, 1e-24
        %v4152 = vmax.f32 %v3478, 1e-24
        %v4153 = vmax.f32 %v3481, 1e-24
        %v4154 = vmax.f32 %v3484, 1e-24
        %v4155 = vmax.f32 %v3487, 1e-24
        %v4156 = vmax.f32 %v3490, 1e-24
        %v4157 = vmax.f32 %v3493, 1e-24
        %v4158 = vmax.f32 %v3496, 1e-24
        %v4159 = vmax.f32 %v3499, 1e-24
        %v4160 = vmax.f32 %v3502, 1e-24
        %v4161 = vmax.f32 %v3505, 1e-24
        %v4162 = vmax.f32 %v3508, 1e-24
        %v4163 = vmax.f32 %v3511, 1e-24
        %v4164 = vmax.f32 %v3514, 1e-24
        %v4165 = vmax.f32 %v3517, 1e-24
        %v4166 = vmax.f32 %v3520, 1e-24
        %v4167 = vmax.f32 %v3523, 1e-24
        %v4168 = vmax.f32 %v3526, 1e-24
        %v4169 = vmax.f32 %v3529, 1e-24
        %v4170 = vmax.f32 %v3532, 1e-24
        %v4171 = vmax.f32 %v3535, 1e-24
        %v4172 = vmax.f32 %v3538, 1e-24
        %v4173 = vmax.f32 %v3541, 1e-24
        %v4174 = vmax.f32 %v3544, 1e-24
        %v4175 = vmax.f32 %v3547, 1e-24
        %v4176 = vmax.f32 %v3550, 1e-24
        %v4177 = vmax.f32 %v3553, 1e-24
        %v4178 = vmax.f32 %v3556, 1e-24
        %v4179 = vmax.f32 %v3559, 1e-24
        %v4180 = vmax.f32 %v3562, 1e-24
        %v4181 = vmax.f32 %v3565, 1e-24
        %v4182 = vmax.f32 %v3568, 1e-24
        %v4183 = vmax.f32 %v3571, 1e-24
        %v4184 = vmax.f32 %v3574, 1e-24
        %v4185 = vmax.f32 %v3577, 1e-24
        %v4186 = vmax.f32 %v3580, 1e-24
        %v4187 = vmax.f32 %v3583, 1e-24
        %v4188 = vmax.f32 %v3586, 1e-24
        %v4189 = vmax.f32 %v3589, 1e-24
        %v4190 = vmax.f32 %v3592, 1e-24
        %v4191 = vmax.f32 %v3595, 1e-24
        %v4192 = vmax.f32 %v3598, 1e-24
        %v4193 = vmax.f32 %v3601, 1e-24
        %v4194 = vmax.f32 %v3604, 1e-24
        %v4195 = vmax.f32 %v3607, 1e-24
        %v4196 = vmax.f32 %v3610, 1e-24
        %v4197 = vmax.f32 %v3613, 1e-24
        %v4198 = vmax.f32 %v3616, 1e-24
        %v4199 = vmax.f32 %v3619, 1e-24
        %v4200 = vmax.f32 %v3622, 1e-24
        %v4201 = vmax.f32 %v3625, 1e-24
        %v4202 = vmax.f32 %v3628, 1e-24
        %v4203 = vmax.f32 %v3631, 1e-24
        %v4204 = vmax.f32 %v3634, 1e-24
        %v4205 = vmax.f32 %v3637, 1e-24
        %v4206 = vmax.f32 %v3640, 1e-24
        %v4207 = vmax.f32 %v3643, 1e-24
        %v4208 = vmax.f32 %v3646, 1e-24
        %v4209 = vmax.f32 %v3649, 1e-24
        %v4210 = vmax.f32 %v3652, 1e-24
        %v4211 = vmax.f32 %v3655, 1e-24
        %v4212 = vmax.f32 %v3658, 1e-24
        %v4213 = vmax.f32 %v3661, 1e-24
        %v4214 = vmax.f32 %v3664, 1e-24
        %v4215 = vmax.f32 %v3667, 1e-24
        %v4216 = vmax.f32 %v3670, 1e-24
        %v4217 = vmax.f32 %v3673, 1e-24
        %v4218 = vmax.f32 %v3676, 1e-24
        %v4219 = vmax.f32 %v3679, 1e-24
        %v4220 = vmax.f32 %v3682, 1e-24
        %v4221 = vmax.f32 %v3685, 1e-24
        %v4222 = vmax.f32 %v3688, 1e-24
        %v4223 = vmax.f32 %v3691, 1e-24
        %v4224 = vmax.f32 %v3694, 1e-24
        %v4225 = vmax.f32 %v3697, 1e-24
        %v4226 = vmax.f32 %v3700, 1e-24
        %v4227 = vmax.f32 %v3703, 1e-24
        %v4228 = vmax.f32 %v3706, 1e-24
        %v4229 = vmax.f32 %v3709, 1e-24
        %v4230 = vmax.f32 %v3712, 1e-24
        %v4231 = vmax.f32 %v3715, 1e-24
        %v4232 = vmax.f32 %v3718, 1e-24
        %v4233 = vmax.f32 %v3721, 1e-24
        %v4234 = vrsqrt.pop %v3722
        %v4235 = vrsqrt.pop %v3723
        %v4236 = vrsqrt.pop %v3724
        %v4237 = vrsqrt.pop %v3725
        %v4238 = vrsqrt.pop %v3726
        %v4239 = vrsqrt.pop %v3727
        %v4240 = vrsqrt.pop %v3728
        %v4241 = vrsqrt.pop %v3729
        %v4242 = vrsqrt.pop %v3730
        %v4243 = vrsqrt.pop %v3731
        %v4244 = vrsqrt.pop %v3732
        %v4245 = vrsqrt.pop %v3733
        %v4246 = vrsqrt.pop %v3734
        %v4247 = vrsqrt.pop %v3735
        %v4248 = vrsqrt.pop %v3736
        %v4249 = vrsqrt.pop %v3737
        %v4250 = vrsqrt.pop %v3738
        %v4251 = vrsqrt.pop %v3739
        %v4252 = vrsqrt.pop %v3740
        %v4253 = vrsqrt.pop %v3741
        %v4254 = vrsqrt.pop %v3742
        %v4255 = vrsqrt.pop %v3743
        %v4256 = vrsqrt.pop %v3744
        %v4257 = vrsqrt.pop %v3745
        %v4258 = vrsqrt.pop %v3746
        %v4259 = vrsqrt.pop %v3747
        %v4260 = vrsqrt.pop %v3748
        %v4261 = vrsqrt.pop %v3749
        %v4262 = vrsqrt.pop %v3750
        %v4263 = vrsqrt.pop %v3751
        %v4264 = vrsqrt.pop %v3752
        %v4265 = vrsqrt.pop %v3753
        %v4266 = vrsqrt.pop %v3754
        %v4267 = vrsqrt.pop %v3755
        %v4268 = vrsqrt.pop %v3756
        %v4269 = vrsqrt.pop %v3757
        %v4270 = vrsqrt.pop %v3758
        %v4271 = vrsqrt.pop %v3759
        %v4272 = vrsqrt.pop %v3760
        %v4273 = vrsqrt.pop %v3761
        %v4274 = vrsqrt.pop %v3762
        %v4275 = vrsqrt.pop %v3763
        %v4276 = vrsqrt.pop %v3764
        %v4277 = vrsqrt.pop %v3765
        %v4278 = vrsqrt.pop %v3766
        %v4279 = vrsqrt.pop %v3767
        %v4280 = vrsqrt.pop %v3768
        %v4281 = vrsqrt.pop %v3769
        %v4282 = vrsqrt.pop %v3770
        %v4283 = vrsqrt.pop %v3771
        %v4284 = vrsqrt.pop %v3772
        %v4285 = vrsqrt.pop %v3773
        %v4286 = vrsqrt.pop %v3774
        %v4287 = vrsqrt.pop %v3775
        %v4288 = vrsqrt.pop %v3776
        %v4289 = vrsqrt.pop %v3777
        %v4290 = vrsqrt.pop %v3778
        %v4291 = vrsqrt.pop %v3779
        %v4292 = vrsqrt.pop %v3780
        %v4293 = vrsqrt.pop %v3781
        %v4294 = vrsqrt.pop %v3782
        %v4295 = vrsqrt.pop %v3783
        %v4296 = vrsqrt.pop %v3784
        %v4297 = vrsqrt.pop %v3785
        %v4298 = vrsqrt.pop %v3786
        %v4299 = vrsqrt.pop %v3787
        %v4300 = vrsqrt.pop %v3788
        %v4301 = vrsqrt.pop %v3789
        %v4302 = vrsqrt.pop %v3790
        %v4303 = vrsqrt.pop %v3791
        %v4304 = vrsqrt.pop %v3792
        %v4305 = vrsqrt.pop %v3793
        %v4306 = vrsqrt.pop %v3794
        %v4307 = vrsqrt.pop %v3795
        %v4308 = vrsqrt.pop %v3796
        %v4309 = vrsqrt.pop %v3797
        %v4310 = vrsqrt.pop %v3798
        %v4311 = vrsqrt.pop %v3799
        %v4312 = vrsqrt.pop %v3800
        %v4313 = vrsqrt.pop %v3801
        %v4314 = vrsqrt.pop %v3802
        %v4315 = vrsqrt.pop %v3803
        %v4316 = vrsqrt.pop %v3804
        %v4317 = vrsqrt.pop %v3805
        %v4318 = vrsqrt.pop %v3806
        %v4319 = vrsqrt.pop %v3807
        %v4320 = vrsqrt.pop %v3808
        %v4321 = vrsqrt.pop %v3809
        %v4322 = vrsqrt.pop %v3810
        %v4323 = vrsqrt.pop %v3811
        %v4324 = vrsqrt.pop %v3812
        %v4325 = vrsqrt.pop %v3813
        %v4326 = vrsqrt.pop %v3814
        %v4327 = vrsqrt.pop %v3815
        %v4328 = vrsqrt.pop %v3816
        %v4329 = vrsqrt.pop %v3817
        %v4330 = vrsqrt.pop %v3818
        %v4331 = vrsqrt.pop %v3819
        %v4332 = vrsqrt.pop %v3820
        %v4333 = vrsqrt.pop %v3821
        %v4334 = vrsqrt.pop %v3822
        %v4335 = vrsqrt.pop %v3823
        %v4336 = vrsqrt.pop %v3824
        %v4337 = vrsqrt.pop %v3825
        %v4338 = vrsqrt.pop %v3826
        %v4339 = vrsqrt.pop %v3827
        %v4340 = vrsqrt.pop %v3828
        %v4341 = vrsqrt.pop %v3829
        %v4342 = vrsqrt.pop %v3830
        %v4343 = vrsqrt.pop %v3831
        %v4344 = vrsqrt.pop %v3832
        %v4345 = vrsqrt.pop %v3833
        %v4346 = vrsqrt.pop %v3834
        %v4347 = vrsqrt.pop %v3835
        %v4348 = vrsqrt.pop %v3836
        %v4349 = vrsqrt.pop %v3837
        %v4350 = vrsqrt.pop %v3838
        %v4351 = vrsqrt.pop %v3839
        %v4352 = vrsqrt.pop %v3840
        %v4353 = vrsqrt.pop %v3841
        %v4354 = vrsqrt.pop %v3842
        %v4355 = vrsqrt.pop %v3843
        %v4356 = vrsqrt.pop %v3844
        %v4357 = vrsqrt.pop %v3845
        %v4358 = vrsqrt.pop %v3846
        %v4359 = vrsqrt.pop %v3847
        %v4360 = vrsqrt.pop %v3848
        %v4361 = vrsqrt.pop %v3849
        %v4362 = vrsqrt.pop %v3850
        %v4363 = vrsqrt.pop %v3851
        %v4364 = vrsqrt.pop %v3852
        %v4365 = vrsqrt.pop %v3853
        %v4366 = vrsqrt.pop %v3854
        %v4367 = vrsqrt.pop %v3855
        %v4368 = vrsqrt.pop %v3856
        %v4369 = vrsqrt.pop %v3857
        %v4370 = vrsqrt.pop %v3858
        %v4371 = vrsqrt.pop %v3859
        %v4372 = vrsqrt.pop %v3860
        %v4373 = vrsqrt.pop %v3861
        %v4374 = vrsqrt.pop %v3862
        %v4375 = vrsqrt.pop %v3863
        %v4376 = vrsqrt.pop %v3864
        %v4377 = vrsqrt.pop %v3865
        %v4378 = vrsqrt.pop %v3866
        %v4379 = vrsqrt.pop %v3867
        %v4380 = vrsqrt.pop %v3868
        %v4381 = vrsqrt.pop %v3869
        %v4382 = vrsqrt.pop %v3870
        %v4383 = vrsqrt.pop %v3871
        %v4384 = vrsqrt.pop %v3872
        %v4385 = vrsqrt.pop %v3873
        %v4386 = vrsqrt.pop %v3874
        %v4387 = vrsqrt.pop %v3875
        %v4388 = vrsqrt.pop %v3876
        %v4389 = vrsqrt.pop %v3877
        %v4390 = vrsqrt.pop %v3878
        %v4391 = vrsqrt.pop %v3879
        %v4392 = vrsqrt.pop %v3880
        %v4393 = vrsqrt.pop %v3881
        %v4394 = vrsqrt.pop %v3882
        %v4395 = vrsqrt.pop %v3883
        %v4396 = vrsqrt.pop %v3884
        %v4397 = vrsqrt.pop %v3885
        %v4398 = vrsqrt.pop %v3886
        %v4399 = vrsqrt.pop %v3887
        %v4400 = vrsqrt.pop %v3888
        %v4401 = vrsqrt.pop %v3889
        %v4402 = vrsqrt.pop %v3890
        %v4403 = vrsqrt.pop %v3891
        %v4404 = vrsqrt.pop %v3892
        %v4405 = vrsqrt.pop %v3893
        %v4406 = vrsqrt.pop %v3894
        %v4407 = vrsqrt.pop %v3895
        %v4408 = vrsqrt.pop %v3896
        %v4409 = vrsqrt.pop %v3897
        %v4410 = vrsqrt.pop %v3898
        %v4411 = vrsqrt.pop %v3899
        %v4412 = vrsqrt.pop %v3900
        %v4413 = vrsqrt.pop %v3901
        %v4414 = vrsqrt.pop %v3902
        %v4415 = vrsqrt.pop %v3903
        %v4416 = vrsqrt.pop %v3904
        %v4417 = vrsqrt.pop %v3905
        %v4418 = vrsqrt.pop %v3906
        %v4419 = vrsqrt.pop %v3907
        %v4420 = vrsqrt.pop %v3908
        %v4421 = vrsqrt.pop %v3909
        %v4422 = vrsqrt.pop %v3910
        %v4423 = vrsqrt.pop %v3911
        %v4424 = vrsqrt.pop %v3912
        %v4425 = vrsqrt.pop %v3913
        %v4426 = vrsqrt.pop %v3914
        %v4427 = vrsqrt.pop %v3915
        %v4428 = vrsqrt.pop %v3916
        %v4429 = vrsqrt.pop %v3917
        %v4430 = vrsqrt.pop %v3918
        %v4431 = vrsqrt.pop %v3919
        %v4432 = vrsqrt.pop %v3920
        %v4433 = vrsqrt.pop %v3921
        %v4434 = vrsqrt.pop %v3922
        %v4435 = vrsqrt.pop %v3923
        %v4436 = vrsqrt.pop %v3924
        %v4437 = vrsqrt.pop %v3925
        %v4438 = vrsqrt.pop %v3926
        %v4439 = vrsqrt.pop %v3927
        %v4440 = vrsqrt.pop %v3928
        %v4441 = vrsqrt.pop %v3929
        %v4442 = vrsqrt.pop %v3930
        %v4443 = vrsqrt.pop %v3931
        %v4444 = vrsqrt.pop %v3932
        %v4445 = vrsqrt.pop %v3933
        %v4446 = vrsqrt.pop %v3934
        %v4447 = vrsqrt.pop %v3935
        %v4448 = vrsqrt.pop %v3936
        %v4449 = vrsqrt.pop %v3937
        %v4450 = vrsqrt.pop %v3938
        %v4451 = vrsqrt.pop %v3939
        %v4452 = vrsqrt.pop %v3940
        %v4453 = vrsqrt.pop %v3941
        %v4454 = vrsqrt.pop %v3942
        %v4455 = vrsqrt.pop %v3943
        %v4456 = vrsqrt.pop %v3944
        %v4457 = vrsqrt.pop %v3945
        %v4458 = vrsqrt.pop %v3946
        %v4459 = vrsqrt.pop %v3947
        %v4460 = vrsqrt.pop %v3948
        %v4461 = vrsqrt.pop %v3949
        %v4462 = vrsqrt.pop %v3950
        %v4463 = vrsqrt.pop %v3951
        %v4464 = vrsqrt.pop %v3952
        %v4465 = vrsqrt.pop %v3953
        %v4466 = vrsqrt.pop %v3954
        %v4467 = vrsqrt.pop %v3955
        %v4468 = vrsqrt.pop %v3956
        %v4469 = vrsqrt.pop %v3957
        %v4470 = vrsqrt.pop %v3958
        %v4471 = vrsqrt.pop %v3959
        %v4472 = vrsqrt.pop %v3960
        %v4473 = vrsqrt.pop %v3961
        %v4474 = vrsqrt.pop %v3962
        %v4475 = vrsqrt.pop %v3963
        %v4476 = vrsqrt.pop %v3964
        %v4477 = vrsqrt.pop %v3965
        %v4478 = vrsqrt.pop %v3966
        %v4479 = vrsqrt.pop %v3967
        %v4480 = vrsqrt.pop %v3968
        %v4481 = vrsqrt.pop %v3969
        %v4482 = vrsqrt.pop %v3970
        %v4483 = vrsqrt.pop %v3971
        %v4484 = vrsqrt.pop %v3972
        %v4485 = vrsqrt.pop %v3973
        %v4486 = vrsqrt.pop %v3974
        %v4487 = vrsqrt.pop %v3975
        %v4488 = vrsqrt.pop %v3976
        %v4489 = vrsqrt.pop %v3977
        %v4490 = vrsqrt.pop %v3978
        %v4491 = vrsqrt.pop %v3979
        %v4492 = vrsqrt.pop %v3980
        %v4493 = vrsqrt.pop %v3981
        %v4494 = vrsqrt.pop %v3982
        %v4495 = vrsqrt.pop %v3983
        %v4496 = vrsqrt.pop %v3984
        %v4497 = vrsqrt.pop %v3985
        %v4498 = vrsqrt.pop %v3986
        %v4499 = vrsqrt.pop %v3987
        %v4500 = vrsqrt.pop %v3988
        %v4501 = vrsqrt.pop %v3989
        %v4502 = vrsqrt.pop %v3990
        %v4503 = vrsqrt.pop %v3991
        %v4504 = vrsqrt.pop %v3992
        %v4505 = vrsqrt.pop %v3993
        %v4506 = vrsqrt.pop %v3994
        %v4507 = vrsqrt.pop %v3995
        %v4508 = vrsqrt.pop %v3996
        %v4509 = vrsqrt.pop %v3997
        %v4510 = vrsqrt.pop %v3998
        %v4511 = vrsqrt.pop %v3999
        %v4512 = vrsqrt.pop %v4000
        %v4513 = vrsqrt.pop %v4001
        %v4514 = vrsqrt.pop %v4002
        %v4515 = vrsqrt.pop %v4003
        %v4516 = vrsqrt.pop %v4004
        %v4517 = vrsqrt.pop %v4005
        %v4518 = vrsqrt.pop %v4006
        %v4519 = vrsqrt.pop %v4007
        %v4520 = vrsqrt.pop %v4008
        %v4521 = vrsqrt.pop %v4009
        %v4522 = vrsqrt.pop %v4010
        %v4523 = vrsqrt.pop %v4011
        %v4524 = vrsqrt.pop %v4012
        %v4525 = vrsqrt.pop %v4013
        %v4526 = vrsqrt.pop %v4014
        %v4527 = vrsqrt.pop %v4015
        %v4528 = vrsqrt.pop %v4016
        %v4529 = vrsqrt.pop %v4017
        %v4530 = vrsqrt.pop %v4018
        %v4531 = vrsqrt.pop %v4019
        %v4532 = vrsqrt.pop %v4020
        %v4533 = vrsqrt.pop %v4021
        %v4534 = vrsqrt.pop %v4022
        %v4535 = vrsqrt.pop %v4023
        %v4536 = vrsqrt.pop %v4024
        %v4537 = vrsqrt.pop %v4025
        %v4538 = vrsqrt.pop %v4026
        %v4539 = vrsqrt.pop %v4027
        %v4540 = vrsqrt.pop %v4028
        %v4541 = vrsqrt.pop %v4029
        %v4542 = vrsqrt.pop %v4030
        %v4543 = vrsqrt.pop %v4031
        %v4544 = vrsqrt.pop %v4032
        %v4545 = vrsqrt.pop %v4033
        %v4546 = vrsqrt.pop %v4034
        %v4547 = vrsqrt.pop %v4035
        %v4548 = vrsqrt.pop %v4036
        %v4549 = vrsqrt.pop %v4037
        %v4550 = vrsqrt.pop %v4038
        %v4551 = vrsqrt.pop %v4039
        %v4552 = vrsqrt.pop %v4040
        %v4553 = vrsqrt.pop %v4041
        %v4554 = vrsqrt.pop %v4042
        %v4555 = vrsqrt.pop %v4043
        %v4556 = vrsqrt.pop %v4044
        %v4557 = vrsqrt.pop %v4045
        %v4558 = vrsqrt.pop %v4046
        %v4559 = vrsqrt.pop %v4047
        %v4560 = vrsqrt.pop %v4048
        %v4561 = vrsqrt.pop %v4049
        %v4562 = vrsqrt.pop %v4050
        %v4563 = vrsqrt.pop %v4051
        %v4564 = vrsqrt.pop %v4052
        %v4565 = vrsqrt.pop %v4053
        %v4566 = vrsqrt.pop %v4054
        %v4567 = vrsqrt.pop %v4055
        %v4568 = vrsqrt.pop %v4056
        %v4569 = vrsqrt.pop %v4057
        %v4570 = vrsqrt.pop %v4058
        %v4571 = vrsqrt.pop %v4059
        %v4572 = vrsqrt.pop %v4060
        %v4573 = vrsqrt.pop %v4061
        %v4574 = vrsqrt.pop %v4062
        %v4575 = vrsqrt.pop %v4063
        %v4576 = vrsqrt.pop %v4064
        %v4577 = vrsqrt.pop %v4065
        %v4578 = vrsqrt.pop %v4066
        %v4579 = vrsqrt.pop %v4067
        %v4580 = vrsqrt.pop %v4068
        %v4581 = vrsqrt.pop %v4069
        %v4582 = vrsqrt.pop %v4070
        %v4583 = vrsqrt.pop %v4071
        %v4584 = vrsqrt.pop %v4072
        %v4585 = vrsqrt.pop %v4073
        %v4586 = vrsqrt.pop %v4074
        %v4587 = vrsqrt.pop %v4075
        %v4588 = vrsqrt.pop %v4076
        %v4589 = vrsqrt.pop %v4077
        %v4590 = vrsqrt.pop %v4078
        %v4591 = vrsqrt.pop %v4079
        %v4592 = vrsqrt.pop %v4080
        %v4593 = vrsqrt.pop %v4081
        %v4594 = vrsqrt.pop %v4082
        %v4595 = vrsqrt.pop %v4083
        %v4596 = vrsqrt.pop %v4084
        %v4597 = vrsqrt.pop %v4085
        %v4598 = vrsqrt.pop %v4086
        %v4599 = vrsqrt.pop %v4087
        %v4600 = vrsqrt.pop %v4088
        %v4601 = vrsqrt.pop %v4089
        %v4602 = vrsqrt.pop %v4090
        %v4603 = vrsqrt.pop %v4091
        %v4604 = vrsqrt.pop %v4092
        %v4605 = vrsqrt.pop %v4093
        %v4606 = vrsqrt.pop %v4094
        %v4607 = vrsqrt.pop %v4095
        %v4608 = vrsqrt.pop %v4096
        %v4609 = vrsqrt.pop %v4097
        %v4610 = vrsqrt.pop %v4098
        %v4611 = vrsqrt.pop %v4099
        %v4612 = vrsqrt.pop %v4100
        %v4613 = vrsqrt.pop %v4101
        %v4614 = vrsqrt.pop %v4102
        %v4615 = vrsqrt.pop %v4103
        %v4616 = vrsqrt.pop %v4104
        %v4617 = vrsqrt.pop %v4105
        %v4618 = vrsqrt.pop %v4106
        %v4619 = vrsqrt.pop %v4107
        %v4620 = vrsqrt.pop %v4108
        %v4621 = vrsqrt.pop %v4109
        %v4622 = vrsqrt.pop %v4110
        %v4623 = vrsqrt.pop %v4111
        %v4624 = vrsqrt.pop %v4112
        %v4625 = vrsqrt.pop %v4113
        %v4626 = vrsqrt.pop %v4114
        %v4627 = vrsqrt.pop %v4115
        %v4628 = vrsqrt.pop %v4116
        %v4629 = vrsqrt.pop %v4117
        %v4630 = vrsqrt.pop %v4118
        %v4631 = vrsqrt.pop %v4119
        %v4632 = vrsqrt.pop %v4120
        %v4633 = vrsqrt.pop %v4121
        %v4634 = vrsqrt.pop %v4122
        %v4635 = vrsqrt.pop %v4123
        %v4636 = vrsqrt.pop %v4124
        %v4637 = vrsqrt.pop %v4125
        %v4638 = vrsqrt.pop %v4126
        %v4639 = vrsqrt.pop %v4127
        %v4640 = vrsqrt.pop %v4128
        %v4641 = vrsqrt.pop %v4129
        %v4642 = vrsqrt.pop %v4130
        %v4643 = vrsqrt.pop %v4131
        %v4644 = vrsqrt.pop %v4132
        %v4645 = vrsqrt.pop %v4133
        %v4646 = vrsqrt.pop %v4134
        %v4647 = vrsqrt.pop %v4135
        %v4648 = vrsqrt.pop %v4136
        %v4649 = vrsqrt.pop %v4137
        %v4650 = vrsqrt.pop %v4138
        %v4651 = vrsqrt.pop %v4139
        %v4652 = vrsqrt.pop %v4140
        %v4653 = vrsqrt.pop %v4141
        %v4654 = vrsqrt.pop %v4142
        %v4655 = vrsqrt.pop %v4143
        %v4656 = vrsqrt.pop %v4144
        %v4657 = vrsqrt.pop %v4145
        %v4658 = vrsqrt.pop %v4146
        %v4659 = vrsqrt.pop %v4147
        %v4660 = vrsqrt.pop %v4148
        %v4661 = vrsqrt.pop %v4149
        %v4662 = vrsqrt.pop %v4150
        %v4663 = vrsqrt.pop %v4151
        %v4664 = vrsqrt.pop %v4152
        %v4665 = vrsqrt.pop %v4153
        %v4666 = vrsqrt.pop %v4154
        %v4667 = vrsqrt.pop %v4155
        %v4668 = vrsqrt.pop %v4156
        %v4669 = vrsqrt.pop %v4157
        %v4670 = vrsqrt.pop %v4158
        %v4671 = vrsqrt.pop %v4159
        %v4672 = vrsqrt.pop %v4160
        %v4673 = vrsqrt.pop %v4161
        %v4674 = vrsqrt.pop %v4162
        %v4675 = vrsqrt.pop %v4163
        %v4676 = vrsqrt.pop %v4164
        %v4677 = vrsqrt.pop %v4165
        %v4678 = vrsqrt.pop %v4166
        %v4679 = vrsqrt.pop %v4167
        %v4680 = vrsqrt.pop %v4168
        %v4681 = vrsqrt.pop %v4169
        %v4682 = vrsqrt.pop %v4170
        %v4683 = vrsqrt.pop %v4171
        %v4684 = vrsqrt.pop %v4172
        %v4685 = vrsqrt.pop %v4173
        %v4686 = vrsqrt.pop %v4174
        %v4687 = vrsqrt.pop %v4175
        %v4688 = vrsqrt.pop %v4176
        %v4689 = vrsqrt.pop %v4177
        %v4690 = vrsqrt.pop %v4178
        %v4691 = vrsqrt.pop %v4179
        %v4692 = vrsqrt.pop %v4180
        %v4693 = vrsqrt.pop %v4181
        %v4694 = vrsqrt.pop %v4182
        %v4695 = vrsqrt.pop %v4183
        %v4696 = vrsqrt.pop %v4184
        %v4697 = vrsqrt.pop %v4185
        %v4698 = vrsqrt.pop %v4186
        %v4699 = vrsqrt.pop %v4187
        %v4700 = vrsqrt.pop %v4188
        %v4701 = vrsqrt.pop %v4189
        %v4702 = vrsqrt.pop %v4190
        %v4703 = vrsqrt.pop %v4191
        %v4704 = vrsqrt.pop %v4192
        %v4705 = vrsqrt.pop %v4193
        %v4706 = vrsqrt.pop %v4194
        %v4707 = vrsqrt.pop %v4195
        %v4708 = vrsqrt.pop %v4196
        %v4709 = vrsqrt.pop %v4197
        %v4710 = vrsqrt.pop %v4198
        %v4711 = vrsqrt.pop %v4199
        %v4712 = vrsqrt.pop %v4200
        %v4713 = vrsqrt.pop %v4201
        %v4714 = vrsqrt.pop %v4202
        %v4715 = vrsqrt.pop %v4203
        %v4716 = vrsqrt.pop %v4204
        %v4717 = vrsqrt.pop %v4205
        %v4718 = vrsqrt.pop %v4206
        %v4719 = vrsqrt.pop %v4207
        %v4720 = vrsqrt.pop %v4208
        %v4721 = vrsqrt.pop %v4209
        %v4722 = vrsqrt.pop %v4210
        %v4723 = vrsqrt.pop %v4211
        %v4724 = vrsqrt.pop %v4212
        %v4725 = vrsqrt.pop %v4213
        %v4726 = vrsqrt.pop %v4214
        %v4727 = vrsqrt.pop %v4215
        %v4728 = vrsqrt.pop %v4216
        %v4729 = vrsqrt.pop %v4217
        %v4730 = vrsqrt.pop %v4218
        %v4731 = vrsqrt.pop %v4219
        %v4732 = vrsqrt.pop %v4220
        %v4733 = vrsqrt.pop %v4221
        %v4734 = vrsqrt.pop %v4222
        %v4735 = vrsqrt.pop %v4223
        %v4736 = vrsqrt.pop %v4224
        %v4737 = vrsqrt.pop %v4225
        %v4738 = vrsqrt.pop %v4226
        %v4739 = vrsqrt.pop %v4227
        %v4740 = vrsqrt.pop %v4228
        %v4741 = vrsqrt.pop %v4229
        %v4742 = vrsqrt.pop %v4230
        %v4743 = vrsqrt.pop %v4231
        %v4744 = vrsqrt.pop %v4232
        %v4745 = vrsqrt.pop %v4233
        %v4746 = vmul.f32 %v138, %v4234
        %v4747 = vmul.f32 %v139, %v4234
        %v4748 = vmul.f32 %v140, %v4235
        %v4749 = vmul.f32 %v141, %v4235
        %v4750 = vmul.f32 %v142, %v4236
        %v4751 = vmul.f32 %v143, %v4236
        %v4752 = vmul.f32 %v144, %v4237
        %v4753 = vmul.f32 %v145, %v4237
        %v4754 = vmul.f32 %v146, %v4238
        %v4755 = vmul.f32 %v147, %v4238
        %v4756 = vmul.f32 %v148, %v4239
        %v4757 = vmul.f32 %v149, %v4239
        %v4758 = vmul.f32 %v150, %v4240
        %v4759 = vmul.f32 %v151, %v4240
        %v4760 = vmul.f32 %v152, %v4241
        %v4761 = vmul.f32 %v153, %v4241
        %v4762 = vmul.f32 %v154, %v4242
        %v4763 = vmul.f32 %v155, %v4242
        %v4764 = vmul.f32 %v156, %v4243
        %v4765 = vmul.f32 %v157, %v4243
        %v4766 = vmul.f32 %v158, %v4244
        %v4767 = vmul.f32 %v159, %v4244
        %v4768 = vmul.f32 %v160, %v4245
        %v4769 = vmul.f32 %v161, %v4245
        %v4770 = vmul.f32 %v162, %v4246
        %v4771 = vmul.f32 %v163, %v4246
        %v4772 = vmul.f32 %v164, %v4247
        %v4773 = vmul.f32 %v165, %v4247
        %v4774 = vmul.f32 %v166, %v4248
        %v4775 = vmul.f32 %v167, %v4248
        %v4776 = vmul.f32 %v168, %v4249
        %v4777 = vmul.f32 %v169, %v4249
        %v4778 = vmul.f32 %v170, %v4250
        %v4779 = vmul.f32 %v171, %v4250
        %v4780 = vmul.f32 %v172, %v4251
        %v4781 = vmul.f32 %v173, %v4251
        %v4782 = vmul.f32 %v174, %v4252
        %v4783 = vmul.f32 %v175, %v4252
        %v4784 = vmul.f32 %v176, %v4253
        %v4785 = vmul.f32 %v177, %v4253
        %v4786 = vmul.f32 %v178, %v4254
        %v4787 = vmul.f32 %v179, %v4254
        %v4788 = vmul.f32 %v180, %v4255
        %v4789 = vmul.f32 %v181, %v4255
        %v4790 = vmul.f32 %v182, %v4256
        %v4791 = vmul.f32 %v183, %v4256
        %v4792 = vmul.f32 %v184, %v4257
        %v4793 = vmul.f32 %v185, %v4257
        %v4794 = vmul.f32 %v186, %v4258
        %v4795 = vmul.f32 %v187, %v4258
        %v4796 = vmul.f32 %v188, %v4259
        %v4797 = vmul.f32 %v189, %v4259
        %v4798 = vmul.f32 %v190, %v4260
        %v4799 = vmul.f32 %v191, %v4260
        %v4800 = vmul.f32 %v192, %v4261
        %v4801 = vmul.f32 %v193, %v4261
        %v4802 = vmul.f32 %v194, %v4262
        %v4803 = vmul.f32 %v195, %v4262
        %v4804 = vmul.f32 %v196, %v4263
        %v4805 = vmul.f32 %v197, %v4263
        %v4806 = vmul.f32 %v198, %v4264
        %v4807 = vmul.f32 %v199, %v4264
        %v4808 = vmul.f32 %v200, %v4265
        %v4809 = vmul.f32 %v201, %v4265
        %v4810 = vmul.f32 %v202, %v4266
        %v4811 = vmul.f32 %v203, %v4266
        %v4812 = vmul.f32 %v204, %v4267
        %v4813 = vmul.f32 %v205, %v4267
        %v4814 = vmul.f32 %v206, %v4268
        %v4815 = vmul.f32 %v207, %v4268
        %v4816 = vmul.f32 %v208, %v4269
        %v4817 = vmul.f32 %v209, %v4269
        %v4818 = vmul.f32 %v210, %v4270
        %v4819 = vmul.f32 %v211, %v4270
        %v4820 = vmul.f32 %v212, %v4271
        %v4821 = vmul.f32 %v213, %v4271
        %v4822 = vmul.f32 %v214, %v4272
        %v4823 = vmul.f32 %v215, %v4272
        %v4824 = vmul.f32 %v216, %v4273
        %v4825 = vmul.f32 %v217, %v4273
        %v4826 = vmul.f32 %v218, %v4274
        %v4827 = vmul.f32 %v219, %v4274
        %v4828 = vmul.f32 %v220, %v4275
        %v4829 = vmul.f32 %v221, %v4275
        %v4830 = vmul.f32 %v222, %v4276
        %v4831 = vmul.f32 %v223, %v4276
        %v4832 = vmul.f32 %v224, %v4277
        %v4833 = vmul.f32 %v225, %v4277
        %v4834 = vmul.f32 %v226, %v4278
        %v4835 = vmul.f32 %v227, %v4278
        %v4836 = vmul.f32 %v228, %v4279
        %v4837 = vmul.f32 %v229, %v4279
        %v4838 = vmul.f32 %v230, %v4280
        %v4839 = vmul.f32 %v231, %v4280
        %v4840 = vmul.f32 %v232, %v4281
        %v4841 = vmul.f32 %v233, %v4281
        %v4842 = vmul.f32 %v234, %v4282
        %v4843 = vmul.f32 %v235, %v4282
        %v4844 = vmul.f32 %v236, %v4283
        %v4845 = vmul.f32 %v237, %v4283
        %v4846 = vmul.f32 %v238, %v4284
        %v4847 = vmul.f32 %v239, %v4284
        %v4848 = vmul.f32 %v240, %v4285
        %v4849 = vmul.f32 %v241, %v4285
        %v4850 = vmul.f32 %v242, %v4286
        %v4851 = vmul.f32 %v243, %v4286
        %v4852 = vmul.f32 %v244, %v4287
        %v4853 = vmul.f32 %v245, %v4287
        %v4854 = vmul.f32 %v246, %v4288
        %v4855 = vmul.f32 %v247, %v4288
        %v4856 = vmul.f32 %v248, %v4289
        %v4857 = vmul.f32 %v249, %v4289
        %v4858 = vmul.f32 %v250, %v4290
        %v4859 = vmul.f32 %v251, %v4290
        %v4860 = vmul.f32 %v252, %v4291
        %v4861 = vmul.f32 %v253, %v4291
        %v4862 = vmul.f32 %v254, %v4292
        %v4863 = vmul.f32 %v255, %v4292
        %v4864 = vmul.f32 %v256, %v4293
        %v4865 = vmul.f32 %v257, %v4293
        %v4866 = vmul.f32 %v258, %v4294
        %v4867 = vmul.f32 %v259, %v4294
        %v4868 = vmul.f32 %v260, %v4295
        %v4869 = vmul.f32 %v261, %v4295
        %v4870 = vmul.f32 %v262, %v4296
        %v4871 = vmul.f32 %v263, %v4296
        %v4872 = vmul.f32 %v264, %v4297
        %v4873 = vmul.f32 %v265, %v4297
        %v4874 = vmul.f32 %v266, %v4298
        %v4875 = vmul.f32 %v267, %v4298
        %v4876 = vmul.f32 %v268, %v4299
        %v4877 = vmul.f32 %v269, %v4299
        %v4878 = vmul.f32 %v270, %v4300
        %v4879 = vmul.f32 %v271, %v4300
        %v4880 = vmul.f32 %v272, %v4301
        %v4881 = vmul.f32 %v273, %v4301
        %v4882 = vmul.f32 %v274, %v4302
        %v4883 = vmul.f32 %v275, %v4302
        %v4884 = vmul.f32 %v276, %v4303
        %v4885 = vmul.f32 %v277, %v4303
        %v4886 = vmul.f32 %v278, %v4304
        %v4887 = vmul.f32 %v279, %v4304
        %v4888 = vmul.f32 %v280, %v4305
        %v4889 = vmul.f32 %v281, %v4305
        %v4890 = vmul.f32 %v282, %v4306
        %v4891 = vmul.f32 %v283, %v4306
        %v4892 = vmul.f32 %v284, %v4307
        %v4893 = vmul.f32 %v285, %v4307
        %v4894 = vmul.f32 %v286, %v4308
        %v4895 = vmul.f32 %v287, %v4308
        %v4896 = vmul.f32 %v288, %v4309
        %v4897 = vmul.f32 %v289, %v4309
        %v4898 = vmul.f32 %v290, %v4310
        %v4899 = vmul.f32 %v291, %v4310
        %v4900 = vmul.f32 %v292, %v4311
        %v4901 = vmul.f32 %v293, %v4311
        %v4902 = vmul.f32 %v294, %v4312
        %v4903 = vmul.f32 %v295, %v4312
        %v4904 = vmul.f32 %v296, %v4313
        %v4905 = vmul.f32 %v297, %v4313
        %v4906 = vmul.f32 %v298, %v4314
        %v4907 = vmul.f32 %v299, %v4314
        %v4908 = vmul.f32 %v300, %v4315
        %v4909 = vmul.f32 %v301, %v4315
        %v4910 = vmul.f32 %v302, %v4316
        %v4911 = vmul.f32 %v303, %v4316
        %v4912 = vmul.f32 %v304, %v4317
        %v4913 = vmul.f32 %v305, %v4317
        %v4914 = vmul.f32 %v306, %v4318
        %v4915 = vmul.f32 %v307, %v4318
        %v4916 = vmul.f32 %v308, %v4319
        %v4917 = vmul.f32 %v309, %v4319
        %v4918 = vmul.f32 %v310, %v4320
        %v4919 = vmul.f32 %v311, %v4320
        %v4920 = vmul.f32 %v312, %v4321
        %v4921 = vmul.f32 %v313, %v4321
        %v4922 = vmul.f32 %v314, %v4322
        %v4923 = vmul.f32 %v315, %v4322
        %v4924 = vmul.f32 %v316, %v4323
        %v4925 = vmul.f32 %v317, %v4323
        %v4926 = vmul.f32 %v318, %v4324
        %v4927 = vmul.f32 %v319, %v4324
        %v4928 = vmul.f32 %v320, %v4325
        %v4929 = vmul.f32 %v321, %v4325
        %v4930 = vmul.f32 %v322, %v4326
        %v4931 = vmul.f32 %v323, %v4326
        %v4932 = vmul.f32 %v324, %v4327
        %v4933 = vmul.f32 %v325, %v4327
        %v4934 = vmul.f32 %v326, %v4328
        %v4935 = vmul.f32 %v327, %v4328
        %v4936 = vmul.f32 %v328, %v4329
        %v4937 = vmul.f32 %v329, %v4329
        %v4938 = vmul.f32 %v330, %v4330
        %v4939 = vmul.f32 %v331, %v4330
        %v4940 = vmul.f32 %v332, %v4331
        %v4941 = vmul.f32 %v333, %v4331
        %v4942 = vmul.f32 %v334, %v4332
        %v4943 = vmul.f32 %v335, %v4332
        %v4944 = vmul.f32 %v336, %v4333
        %v4945 = vmul.f32 %v337, %v4333
        %v4946 = vmul.f32 %v338, %v4334
        %v4947 = vmul.f32 %v339, %v4334
        %v4948 = vmul.f32 %v340, %v4335
        %v4949 = vmul.f32 %v341, %v4335
        %v4950 = vmul.f32 %v342, %v4336
        %v4951 = vmul.f32 %v343, %v4336
        %v4952 = vmul.f32 %v344, %v4337
        %v4953 = vmul.f32 %v345, %v4337
        %v4954 = vmul.f32 %v346, %v4338
        %v4955 = vmul.f32 %v347, %v4338
        %v4956 = vmul.f32 %v348, %v4339
        %v4957 = vmul.f32 %v349, %v4339
        %v4958 = vmul.f32 %v350, %v4340
        %v4959 = vmul.f32 %v351, %v4340
        %v4960 = vmul.f32 %v352, %v4341
        %v4961 = vmul.f32 %v353, %v4341
        %v4962 = vmul.f32 %v354, %v4342
        %v4963 = vmul.f32 %v355, %v4342
        %v4964 = vmul.f32 %v356, %v4343
        %v4965 = vmul.f32 %v357, %v4343
        %v4966 = vmul.f32 %v358, %v4344
        %v4967 = vmul.f32 %v359, %v4344
        %v4968 = vmul.f32 %v360, %v4345
        %v4969 = vmul.f32 %v361, %v4345
        %v4970 = vmul.f32 %v362, %v4346
        %v4971 = vmul.f32 %v363, %v4346
        %v4972 = vmul.f32 %v364, %v4347
        %v4973 = vmul.f32 %v365, %v4347
        %v4974 = vmul.f32 %v366, %v4348
        %v4975 = vmul.f32 %v367, %v4348
        %v4976 = vmul.f32 %v368, %v4349
        %v4977 = vmul.f32 %v369, %v4349
        %v4978 = vmul.f32 %v370, %v4350
        %v4979 = vmul.f32 %v371, %v4350
        %v4980 = vmul.f32 %v372, %v4351
        %v4981 = vmul.f32 %v373, %v4351
        %v4982 = vmul.f32 %v374, %v4352
        %v4983 = vmul.f32 %v375, %v4352
        %v4984 = vmul.f32 %v376, %v4353
        %v4985 = vmul.f32 %v377, %v4353
        %v4986 = vmul.f32 %v378, %v4354
        %v4987 = vmul.f32 %v379, %v4354
        %v4988 = vmul.f32 %v380, %v4355
        %v4989 = vmul.f32 %v381, %v4355
        %v4990 = vmul.f32 %v382, %v4356
        %v4991 = vmul.f32 %v383, %v4356
        %v4992 = vmul.f32 %v384, %v4357
        %v4993 = vmul.f32 %v385, %v4357
        %v4994 = vmul.f32 %v386, %v4358
        %v4995 = vmul.f32 %v387, %v4358
        %v4996 = vmul.f32 %v388, %v4359
        %v4997 = vmul.f32 %v389, %v4359
        %v4998 = vmul.f32 %v390, %v4360
        %v4999 = vmul.f32 %v391, %v4360
        %v5000 = vmul.f32 %v392, %v4361
        %v5001 = vmul.f32 %v393, %v4361
        %v5002 = vmul.f32 %v394, %v4362
        %v5003 = vmul.f32 %v395, %v4362
        %v5004 = vmul.f32 %v396, %v4363
        %v5005 = vmul.f32 %v397, %v4363
        %v5006 = vmul.f32 %v398, %v4364
        %v5007 = vmul.f32 %v399, %v4364
        %v5008 = vmul.f32 %v400, %v4365
        %v5009 = vmul.f32 %v401, %v4365
        %v5010 = vmul.f32 %v402, %v4366
        %v5011 = vmul.f32 %v403, %v4366
        %v5012 = vmul.f32 %v404, %v4367
        %v5013 = vmul.f32 %v405, %v4367
        %v5014 = vmul.f32 %v406, %v4368
        %v5015 = vmul.f32 %v407, %v4368
        %v5016 = vmul.f32 %v408, %v4369
        %v5017 = vmul.f32 %v409, %v4369
        %v5018 = vmul.f32 %v410, %v4370
        %v5019 = vmul.f32 %v411, %v4370
        %v5020 = vmul.f32 %v412, %v4371
        %v5021 = vmul.f32 %v413, %v4371
        %v5022 = vmul.f32 %v414, %v4372
        %v5023 = vmul.f32 %v415, %v4372
        %v5024 = vmul.f32 %v416, %v4373
        %v5025 = vmul.f32 %v417, %v4373
        %v5026 = vmul.f32 %v418, %v4374
        %v5027 = vmul.f32 %v419, %v4374
        %v5028 = vmul.f32 %v420, %v4375
        %v5029 = vmul.f32 %v421, %v4375
        %v5030 = vmul.f32 %v422, %v4376
        %v5031 = vmul.f32 %v423, %v4376
        %v5032 = vmul.f32 %v424, %v4377
        %v5033 = vmul.f32 %v425, %v4377
        %v5034 = vmul.f32 %v426, %v4378
        %v5035 = vmul.f32 %v427, %v4378
        %v5036 = vmul.f32 %v428, %v4379
        %v5037 = vmul.f32 %v429, %v4379
        %v5038 = vmul.f32 %v430, %v4380
        %v5039 = vmul.f32 %v431, %v4380
        %v5040 = vmul.f32 %v432, %v4381
        %v5041 = vmul.f32 %v433, %v4381
        %v5042 = vmul.f32 %v434, %v4382
        %v5043 = vmul.f32 %v435, %v4382
        %v5044 = vmul.f32 %v436, %v4383
        %v5045 = vmul.f32 %v437, %v4383
        %v5046 = vmul.f32 %v438, %v4384
        %v5047 = vmul.f32 %v439, %v4384
        %v5048 = vmul.f32 %v440, %v4385
        %v5049 = vmul.f32 %v441, %v4385
        %v5050 = vmul.f32 %v442, %v4386
        %v5051 = vmul.f32 %v443, %v4386
        %v5052 = vmul.f32 %v444, %v4387
        %v5053 = vmul.f32 %v445, %v4387
        %v5054 = vmul.f32 %v446, %v4388
        %v5055 = vmul.f32 %v447, %v4388
        %v5056 = vmul.f32 %v448, %v4389
        %v5057 = vmul.f32 %v449, %v4389
        %v5058 = vmul.f32 %v450, %v4390
        %v5059 = vmul.f32 %v451, %v4390
        %v5060 = vmul.f32 %v452, %v4391
        %v5061 = vmul.f32 %v453, %v4391
        %v5062 = vmul.f32 %v454, %v4392
        %v5063 = vmul.f32 %v455, %v4392
        %v5064 = vmul.f32 %v456, %v4393
        %v5065 = vmul.f32 %v457, %v4393
        %v5066 = vmul.f32 %v458, %v4394
        %v5067 = vmul.f32 %v459, %v4394
        %v5068 = vmul.f32 %v460, %v4395
        %v5069 = vmul.f32 %v461, %v4395
        %v5070 = vmul.f32 %v462, %v4396
        %v5071 = vmul.f32 %v463, %v4396
        %v5072 = vmul.f32 %v464, %v4397
        %v5073 = vmul.f32 %v465, %v4397
        %v5074 = vmul.f32 %v466, %v4398
        %v5075 = vmul.f32 %v467, %v4398
        %v5076 = vmul.f32 %v468, %v4399
        %v5077 = vmul.f32 %v469, %v4399
        %v5078 = vmul.f32 %v470, %v4400
        %v5079 = vmul.f32 %v471, %v4400
        %v5080 = vmul.f32 %v472, %v4401
        %v5081 = vmul.f32 %v473, %v4401
        %v5082 = vmul.f32 %v474, %v4402
        %v5083 = vmul.f32 %v475, %v4402
        %v5084 = vmul.f32 %v476, %v4403
        %v5085 = vmul.f32 %v477, %v4403
        %v5086 = vmul.f32 %v478, %v4404
        %v5087 = vmul.f32 %v479, %v4404
        %v5088 = vmul.f32 %v480, %v4405
        %v5089 = vmul.f32 %v481, %v4405
        %v5090 = vmul.f32 %v482, %v4406
        %v5091 = vmul.f32 %v483, %v4406
        %v5092 = vmul.f32 %v484, %v4407
        %v5093 = vmul.f32 %v485, %v4407
        %v5094 = vmul.f32 %v486, %v4408
        %v5095 = vmul.f32 %v487, %v4408
        %v5096 = vmul.f32 %v488, %v4409
        %v5097 = vmul.f32 %v489, %v4409
        %v5098 = vmul.f32 %v490, %v4410
        %v5099 = vmul.f32 %v491, %v4410
        %v5100 = vmul.f32 %v492, %v4411
        %v5101 = vmul.f32 %v493, %v4411
        %v5102 = vmul.f32 %v494, %v4412
        %v5103 = vmul.f32 %v495, %v4412
        %v5104 = vmul.f32 %v496, %v4413
        %v5105 = vmul.f32 %v497, %v4413
        %v5106 = vmul.f32 %v498, %v4414
        %v5107 = vmul.f32 %v499, %v4414
        %v5108 = vmul.f32 %v500, %v4415
        %v5109 = vmul.f32 %v501, %v4415
        %v5110 = vmul.f32 %v502, %v4416
        %v5111 = vmul.f32 %v503, %v4416
        %v5112 = vmul.f32 %v504, %v4417
        %v5113 = vmul.f32 %v505, %v4417
        %v5114 = vmul.f32 %v506, %v4418
        %v5115 = vmul.f32 %v507, %v4418
        %v5116 = vmul.f32 %v508, %v4419
        %v5117 = vmul.f32 %v509, %v4419
        %v5118 = vmul.f32 %v510, %v4420
        %v5119 = vmul.f32 %v511, %v4420
        %v5120 = vmul.f32 %v512, %v4421
        %v5121 = vmul.f32 %v513, %v4421
        %v5122 = vmul.f32 %v514, %v4422
        %v5123 = vmul.f32 %v515, %v4422
        %v5124 = vmul.f32 %v516, %v4423
        %v5125 = vmul.f32 %v517, %v4423
        %v5126 = vmul.f32 %v518, %v4424
        %v5127 = vmul.f32 %v519, %v4424
        %v5128 = vmul.f32 %v520, %v4425
        %v5129 = vmul.f32 %v521, %v4425
        %v5130 = vmul.f32 %v522, %v4426
        %v5131 = vmul.f32 %v523, %v4426
        %v5132 = vmul.f32 %v524, %v4427
        %v5133 = vmul.f32 %v525, %v4427
        %v5134 = vmul.f32 %v526, %v4428
        %v5135 = vmul.f32 %v527, %v4428
        %v5136 = vmul.f32 %v528, %v4429
        %v5137 = vmul.f32 %v529, %v4429
        %v5138 = vmul.f32 %v530, %v4430
        %v5139 = vmul.f32 %v531, %v4430
        %v5140 = vmul.f32 %v532, %v4431
        %v5141 = vmul.f32 %v533, %v4431
        %v5142 = vmul.f32 %v534, %v4432
        %v5143 = vmul.f32 %v535, %v4432
        %v5144 = vmul.f32 %v536, %v4433
        %v5145 = vmul.f32 %v537, %v4433
        %v5146 = vmul.f32 %v538, %v4434
        %v5147 = vmul.f32 %v539, %v4434
        %v5148 = vmul.f32 %v540, %v4435
        %v5149 = vmul.f32 %v541, %v4435
        %v5150 = vmul.f32 %v542, %v4436
        %v5151 = vmul.f32 %v543, %v4436
        %v5152 = vmul.f32 %v544, %v4437
        %v5153 = vmul.f32 %v545, %v4437
        %v5154 = vmul.f32 %v546, %v4438
        %v5155 = vmul.f32 %v547, %v4438
        %v5156 = vmul.f32 %v548, %v4439
        %v5157 = vmul.f32 %v549, %v4439
        %v5158 = vmul.f32 %v550, %v4440
        %v5159 = vmul.f32 %v551, %v4440
        %v5160 = vmul.f32 %v552, %v4441
        %v5161 = vmul.f32 %v553, %v4441
        %v5162 = vmul.f32 %v554, %v4442
        %v5163 = vmul.f32 %v555, %v4442
        %v5164 = vmul.f32 %v556, %v4443
        %v5165 = vmul.f32 %v557, %v4443
        %v5166 = vmul.f32 %v558, %v4444
        %v5167 = vmul.f32 %v559, %v4444
        %v5168 = vmul.f32 %v560, %v4445
        %v5169 = vmul.f32 %v561, %v4445
        %v5170 = vmul.f32 %v562, %v4446
        %v5171 = vmul.f32 %v563, %v4446
        %v5172 = vmul.f32 %v564, %v4447
        %v5173 = vmul.f32 %v565, %v4447
        %v5174 = vmul.f32 %v566, %v4448
        %v5175 = vmul.f32 %v567, %v4448
        %v5176 = vmul.f32 %v568, %v4449
        %v5177 = vmul.f32 %v569, %v4449
        %v5178 = vmul.f32 %v570, %v4450
        %v5179 = vmul.f32 %v571, %v4450
        %v5180 = vmul.f32 %v572, %v4451
        %v5181 = vmul.f32 %v573, %v4451
        %v5182 = vmul.f32 %v574, %v4452
        %v5183 = vmul.f32 %v575, %v4452
        %v5184 = vmul.f32 %v576, %v4453
        %v5185 = vmul.f32 %v577, %v4453
        %v5186 = vmul.f32 %v578, %v4454
        %v5187 = vmul.f32 %v579, %v4454
        %v5188 = vmul.f32 %v580, %v4455
        %v5189 = vmul.f32 %v581, %v4455
        %v5190 = vmul.f32 %v582, %v4456
        %v5191 = vmul.f32 %v583, %v4456
        %v5192 = vmul.f32 %v584, %v4457
        %v5193 = vmul.f32 %v585, %v4457
        %v5194 = vmul.f32 %v586, %v4458
        %v5195 = vmul.f32 %v587, %v4458
        %v5196 = vmul.f32 %v588, %v4459
        %v5197 = vmul.f32 %v589, %v4459
        %v5198 = vmul.f32 %v590, %v4460
        %v5199 = vmul.f32 %v591, %v4460
        %v5200 = vmul.f32 %v592, %v4461
        %v5201 = vmul.f32 %v593, %v4461
        %v5202 = vmul.f32 %v594, %v4462
        %v5203 = vmul.f32 %v595, %v4462
        %v5204 = vmul.f32 %v596, %v4463
        %v5205 = vmul.f32 %v597, %v4463
        %v5206 = vmul.f32 %v598, %v4464
        %v5207 = vmul.f32 %v599, %v4464
        %v5208 = vmul.f32 %v600, %v4465
        %v5209 = vmul.f32 %v601, %v4465
        %v5210 = vmul.f32 %v602, %v4466
        %v5211 = vmul.f32 %v603, %v4466
        %v5212 = vmul.f32 %v604, %v4467
        %v5213 = vmul.f32 %v605, %v4467
        %v5214 = vmul.f32 %v606, %v4468
        %v5215 = vmul.f32 %v607, %v4468
        %v5216 = vmul.f32 %v608, %v4469
        %v5217 = vmul.f32 %v609, %v4469
        %v5218 = vmul.f32 %v610, %v4470
        %v5219 = vmul.f32 %v611, %v4470
        %v5220 = vmul.f32 %v612, %v4471
        %v5221 = vmul.f32 %v613, %v4471
        %v5222 = vmul.f32 %v614, %v4472
        %v5223 = vmul.f32 %v615, %v4472
        %v5224 = vmul.f32 %v616, %v4473
        %v5225 = vmul.f32 %v617, %v4473
        %v5226 = vmul.f32 %v618, %v4474
        %v5227 = vmul.f32 %v619, %v4474
        %v5228 = vmul.f32 %v620, %v4475
        %v5229 = vmul.f32 %v621, %v4475
        %v5230 = vmul.f32 %v622, %v4476
        %v5231 = vmul.f32 %v623, %v4476
        %v5232 = vmul.f32 %v624, %v4477
        %v5233 = vmul.f32 %v625, %v4477
        %v5234 = vmul.f32 %v626, %v4478
        %v5235 = vmul.f32 %v627, %v4478
        %v5236 = vmul.f32 %v628, %v4479
        %v5237 = vmul.f32 %v629, %v4479
        %v5238 = vmul.f32 %v630, %v4480
        %v5239 = vmul.f32 %v631, %v4480
        %v5240 = vmul.f32 %v632, %v4481
        %v5241 = vmul.f32 %v633, %v4481
        %v5242 = vmul.f32 %v634, %v4482
        %v5243 = vmul.f32 %v635, %v4482
        %v5244 = vmul.f32 %v636, %v4483
        %v5245 = vmul.f32 %v637, %v4483
        %v5246 = vmul.f32 %v638, %v4484
        %v5247 = vmul.f32 %v639, %v4484
        %v5248 = vmul.f32 %v640, %v4485
        %v5249 = vmul.f32 %v641, %v4485
        %v5250 = vmul.f32 %v642, %v4486
        %v5251 = vmul.f32 %v643, %v4486
        %v5252 = vmul.f32 %v644, %v4487
        %v5253 = vmul.f32 %v645, %v4487
        %v5254 = vmul.f32 %v646, %v4488
        %v5255 = vmul.f32 %v647, %v4488
        %v5256 = vmul.f32 %v648, %v4489
        %v5257 = vmul.f32 %v649, %v4489
        %v5258 = vmul.f32 %v650, %v4490
        %v5259 = vmul.f32 %v651, %v4490
        %v5260 = vmul.f32 %v652, %v4491
        %v5261 = vmul.f32 %v653, %v4491
        %v5262 = vmul.f32 %v654, %v4492
        %v5263 = vmul.f32 %v655, %v4492
        %v5264 = vmul.f32 %v656, %v4493
        %v5265 = vmul.f32 %v657, %v4493
        %v5266 = vmul.f32 %v658, %v4494
        %v5267 = vmul.f32 %v659, %v4494
        %v5268 = vmul.f32 %v660, %v4495
        %v5269 = vmul.f32 %v661, %v4495
        %v5270 = vmul.f32 %v662, %v4496
        %v5271 = vmul.f32 %v663, %v4496
        %v5272 = vmul.f32 %v664, %v4497
        %v5273 = vmul.f32 %v665, %v4497
        %v5274 = vmul.f32 %v666, %v4498
        %v5275 = vmul.f32 %v667, %v4498
        %v5276 = vmul.f32 %v668, %v4499
        %v5277 = vmul.f32 %v669, %v4499
        %v5278 = vmul.f32 %v670, %v4500
        %v5279 = vmul.f32 %v671, %v4500
        %v5280 = vmul.f32 %v672, %v4501
        %v5281 = vmul.f32 %v673, %v4501
        %v5282 = vmul.f32 %v674, %v4502
        %v5283 = vmul.f32 %v675, %v4502
        %v5284 = vmul.f32 %v676, %v4503
        %v5285 = vmul.f32 %v677, %v4503
        %v5286 = vmul.f32 %v678, %v4504
        %v5287 = vmul.f32 %v679, %v4504
        %v5288 = vmul.f32 %v680, %v4505
        %v5289 = vmul.f32 %v681, %v4505
        %v5290 = vmul.f32 %v682, %v4506
        %v5291 = vmul.f32 %v683, %v4506
        %v5292 = vmul.f32 %v684, %v4507
        %v5293 = vmul.f32 %v685, %v4507
        %v5294 = vmul.f32 %v686, %v4508
        %v5295 = vmul.f32 %v687, %v4508
        %v5296 = vmul.f32 %v688, %v4509
        %v5297 = vmul.f32 %v689, %v4509
        %v5298 = vmul.f32 %v690, %v4510
        %v5299 = vmul.f32 %v691, %v4510
        %v5300 = vmul.f32 %v692, %v4511
        %v5301 = vmul.f32 %v693, %v4511
        %v5302 = vmul.f32 %v694, %v4512
        %v5303 = vmul.f32 %v695, %v4512
        %v5304 = vmul.f32 %v696, %v4513
        %v5305 = vmul.f32 %v697, %v4513
        %v5306 = vmul.f32 %v698, %v4514
        %v5307 = vmul.f32 %v699, %v4514
        %v5308 = vmul.f32 %v700, %v4515
        %v5309 = vmul.f32 %v701, %v4515
        %v5310 = vmul.f32 %v702, %v4516
        %v5311 = vmul.f32 %v703, %v4516
        %v5312 = vmul.f32 %v704, %v4517
        %v5313 = vmul.f32 %v705, %v4517
        %v5314 = vmul.f32 %v706, %v4518
        %v5315 = vmul.f32 %v707, %v4518
        %v5316 = vmul.f32 %v708, %v4519
        %v5317 = vmul.f32 %v709, %v4519
        %v5318 = vmul.f32 %v710, %v4520
        %v5319 = vmul.f32 %v711, %v4520
        %v5320 = vmul.f32 %v712, %v4521
        %v5321 = vmul.f32 %v713, %v4521
        %v5322 = vmul.f32 %v714, %v4522
        %v5323 = vmul.f32 %v715, %v4522
        %v5324 = vmul.f32 %v716, %v4523
        %v5325 = vmul.f32 %v717, %v4523
        %v5326 = vmul.f32 %v718, %v4524
        %v5327 = vmul.f32 %v719, %v4524
        %v5328 = vmul.f32 %v720, %v4525
        %v5329 = vmul.f32 %v721, %v4525
        %v5330 = vmul.f32 %v722, %v4526
        %v5331 = vmul.f32 %v723, %v4526
        %v5332 = vmul.f32 %v724, %v4527
        %v5333 = vmul.f32 %v725, %v4527
        %v5334 = vmul.f32 %v726, %v4528
        %v5335 = vmul.f32 %v727, %v4528
        %v5336 = vmul.f32 %v728, %v4529
        %v5337 = vmul.f32 %v729, %v4529
        %v5338 = vmul.f32 %v730, %v4530
        %v5339 = vmul.f32 %v731, %v4530
        %v5340 = vmul.f32 %v732, %v4531
        %v5341 = vmul.f32 %v733, %v4531
        %v5342 = vmul.f32 %v734, %v4532
        %v5343 = vmul.f32 %v735, %v4532
        %v5344 = vmul.f32 %v736, %v4533
        %v5345 = vmul.f32 %v737, %v4533
        %v5346 = vmul.f32 %v738, %v4534
        %v5347 = vmul.f32 %v739, %v4534
        %v5348 = vmul.f32 %v740, %v4535
        %v5349 = vmul.f32 %v741, %v4535
        %v5350 = vmul.f32 %v742, %v4536
        %v5351 = vmul.f32 %v743, %v4536
        %v5352 = vmul.f32 %v744, %v4537
        %v5353 = vmul.f32 %v745, %v4537
        %v5354 = vmul.f32 %v746, %v4538
        %v5355 = vmul.f32 %v747, %v4538
        %v5356 = vmul.f32 %v748, %v4539
        %v5357 = vmul.f32 %v749, %v4539
        %v5358 = vmul.f32 %v750, %v4540
        %v5359 = vmul.f32 %v751, %v4540
        %v5360 = vmul.f32 %v752, %v4541
        %v5361 = vmul.f32 %v753, %v4541
        %v5362 = vmul.f32 %v754, %v4542
        %v5363 = vmul.f32 %v755, %v4542
        %v5364 = vmul.f32 %v756, %v4543
        %v5365 = vmul.f32 %v757, %v4543
        %v5366 = vmul.f32 %v758, %v4544
        %v5367 = vmul.f32 %v759, %v4544
        %v5368 = vmul.f32 %v760, %v4545
        %v5369 = vmul.f32 %v761, %v4545
        %v5370 = vmul.f32 %v762, %v4546
        %v5371 = vmul.f32 %v763, %v4546
        %v5372 = vmul.f32 %v764, %v4547
        %v5373 = vmul.f32 %v765, %v4547
        %v5374 = vmul.f32 %v766, %v4548
        %v5375 = vmul.f32 %v767, %v4548
        %v5376 = vmul.f32 %v768, %v4549
        %v5377 = vmul.f32 %v769, %v4549
        %v5378 = vmul.f32 %v770, %v4550
        %v5379 = vmul.f32 %v771, %v4550
        %v5380 = vmul.f32 %v772, %v4551
        %v5381 = vmul.f32 %v773, %v4551
        %v5382 = vmul.f32 %v774, %v4552
        %v5383 = vmul.f32 %v775, %v4552
        %v5384 = vmul.f32 %v776, %v4553
        %v5385 = vmul.f32 %v777, %v4553
        %v5386 = vmul.f32 %v778, %v4554
        %v5387 = vmul.f32 %v779, %v4554
        %v5388 = vmul.f32 %v780, %v4555
        %v5389 = vmul.f32 %v781, %v4555
        %v5390 = vmul.f32 %v782, %v4556
        %v5391 = vmul.f32 %v783, %v4556
        %v5392 = vmul.f32 %v784, %v4557
        %v5393 = vmul.f32 %v785, %v4557
        %v5394 = vmul.f32 %v786, %v4558
        %v5395 = vmul.f32 %v787, %v4558
        %v5396 = vmul.f32 %v788, %v4559
        %v5397 = vmul.f32 %v789, %v4559
        %v5398 = vmul.f32 %v790, %v4560
        %v5399 = vmul.f32 %v791, %v4560
        %v5400 = vmul.f32 %v792, %v4561
        %v5401 = vmul.f32 %v793, %v4561
        %v5402 = vmul.f32 %v794, %v4562
        %v5403 = vmul.f32 %v795, %v4562
        %v5404 = vmul.f32 %v796, %v4563
        %v5405 = vmul.f32 %v797, %v4563
        %v5406 = vmul.f32 %v798, %v4564
        %v5407 = vmul.f32 %v799, %v4564
        %v5408 = vmul.f32 %v800, %v4565
        %v5409 = vmul.f32 %v801, %v4565
        %v5410 = vmul.f32 %v802, %v4566
        %v5411 = vmul.f32 %v803, %v4566
        %v5412 = vmul.f32 %v804, %v4567
        %v5413 = vmul.f32 %v805, %v4567
        %v5414 = vmul.f32 %v806, %v4568
        %v5415 = vmul.f32 %v807, %v4568
        %v5416 = vmul.f32 %v808, %v4569
        %v5417 = vmul.f32 %v809, %v4569
        %v5418 = vmul.f32 %v810, %v4570
        %v5419 = vmul.f32 %v811, %v4570
        %v5420 = vmul.f32 %v812, %v4571
        %v5421 = vmul.f32 %v813, %v4571
        %v5422 = vmul.f32 %v814, %v4572
        %v5423 = vmul.f32 %v815, %v4572
        %v5424 = vmul.f32 %v816, %v4573
        %v5425 = vmul.f32 %v817, %v4573
        %v5426 = vmul.f32 %v818, %v4574
        %v5427 = vmul.f32 %v819, %v4574
        %v5428 = vmul.f32 %v820, %v4575
        %v5429 = vmul.f32 %v821, %v4575
        %v5430 = vmul.f32 %v822, %v4576
        %v5431 = vmul.f32 %v823, %v4576
        %v5432 = vmul.f32 %v824, %v4577
        %v5433 = vmul.f32 %v825, %v4577
        %v5434 = vmul.f32 %v826, %v4578
        %v5435 = vmul.f32 %v827, %v4578
        %v5436 = vmul.f32 %v828, %v4579
        %v5437 = vmul.f32 %v829, %v4579
        %v5438 = vmul.f32 %v830, %v4580
        %v5439 = vmul.f32 %v831, %v4580
        %v5440 = vmul.f32 %v832, %v4581
        %v5441 = vmul.f32 %v833, %v4581
        %v5442 = vmul.f32 %v834, %v4582
        %v5443 = vmul.f32 %v835, %v4582
        %v5444 = vmul.f32 %v836, %v4583
        %v5445 = vmul.f32 %v837, %v4583
        %v5446 = vmul.f32 %v838, %v4584
        %v5447 = vmul.f32 %v839, %v4584
        %v5448 = vmul.f32 %v840, %v4585
        %v5449 = vmul.f32 %v841, %v4585
        %v5450 = vmul.f32 %v842, %v4586
        %v5451 = vmul.f32 %v843, %v4586
        %v5452 = vmul.f32 %v844, %v4587
        %v5453 = vmul.f32 %v845, %v4587
        %v5454 = vmul.f32 %v846, %v4588
        %v5455 = vmul.f32 %v847, %v4588
        %v5456 = vmul.f32 %v848, %v4589
        %v5457 = vmul.f32 %v849, %v4589
        %v5458 = vmul.f32 %v850, %v4590
        %v5459 = vmul.f32 %v851, %v4590
        %v5460 = vmul.f32 %v852, %v4591
        %v5461 = vmul.f32 %v853, %v4591
        %v5462 = vmul.f32 %v854, %v4592
        %v5463 = vmul.f32 %v855, %v4592
        %v5464 = vmul.f32 %v856, %v4593
        %v5465 = vmul.f32 %v857, %v4593
        %v5466 = vmul.f32 %v858, %v4594
        %v5467 = vmul.f32 %v859, %v4594
        %v5468 = vmul.f32 %v860, %v4595
        %v5469 = vmul.f32 %v861, %v4595
        %v5470 = vmul.f32 %v862, %v4596
        %v5471 = vmul.f32 %v863, %v4596
        %v5472 = vmul.f32 %v864, %v4597
        %v5473 = vmul.f32 %v865, %v4597
        %v5474 = vmul.f32 %v866, %v4598
        %v5475 = vmul.f32 %v867, %v4598
        %v5476 = vmul.f32 %v868, %v4599
        %v5477 = vmul.f32 %v869, %v4599
        %v5478 = vmul.f32 %v870, %v4600
        %v5479 = vmul.f32 %v871, %v4600
        %v5480 = vmul.f32 %v872, %v4601
        %v5481 = vmul.f32 %v873, %v4601
        %v5482 = vmul.f32 %v874, %v4602
        %v5483 = vmul.f32 %v875, %v4602
        %v5484 = vmul.f32 %v876, %v4603
        %v5485 = vmul.f32 %v877, %v4603
        %v5486 = vmul.f32 %v878, %v4604
        %v5487 = vmul.f32 %v879, %v4604
        %v5488 = vmul.f32 %v880, %v4605
        %v5489 = vmul.f32 %v881, %v4605
        %v5490 = vmul.f32 %v882, %v4606
        %v5491 = vmul.f32 %v883, %v4606
        %v5492 = vmul.f32 %v884, %v4607
        %v5493 = vmul.f32 %v885, %v4607
        %v5494 = vmul.f32 %v886, %v4608
        %v5495 = vmul.f32 %v887, %v4608
        %v5496 = vmul.f32 %v888, %v4609
        %v5497 = vmul.f32 %v889, %v4609
        %v5498 = vmul.f32 %v890, %v4610
        %v5499 = vmul.f32 %v891, %v4610
        %v5500 = vmul.f32 %v892, %v4611
        %v5501 = vmul.f32 %v893, %v4611
        %v5502 = vmul.f32 %v894, %v4612
        %v5503 = vmul.f32 %v895, %v4612
        %v5504 = vmul.f32 %v896, %v4613
        %v5505 = vmul.f32 %v897, %v4613
        %v5506 = vmul.f32 %v898, %v4614
        %v5507 = vmul.f32 %v899, %v4614
        %v5508 = vmul.f32 %v900, %v4615
        %v5509 = vmul.f32 %v901, %v4615
        %v5510 = vmul.f32 %v902, %v4616
        %v5511 = vmul.f32 %v903, %v4616
        %v5512 = vmul.f32 %v904, %v4617
        %v5513 = vmul.f32 %v905, %v4617
        %v5514 = vmul.f32 %v906, %v4618
        %v5515 = vmul.f32 %v907, %v4618
        %v5516 = vmul.f32 %v908, %v4619
        %v5517 = vmul.f32 %v909, %v4619
        %v5518 = vmul.f32 %v910, %v4620
        %v5519 = vmul.f32 %v911, %v4620
        %v5520 = vmul.f32 %v912, %v4621
        %v5521 = vmul.f32 %v913, %v4621
        %v5522 = vmul.f32 %v914, %v4622
        %v5523 = vmul.f32 %v915, %v4622
        %v5524 = vmul.f32 %v916, %v4623
        %v5525 = vmul.f32 %v917, %v4623
        %v5526 = vmul.f32 %v918, %v4624
        %v5527 = vmul.f32 %v919, %v4624
        %v5528 = vmul.f32 %v920, %v4625
        %v5529 = vmul.f32 %v921, %v4625
        %v5530 = vmul.f32 %v922, %v4626
        %v5531 = vmul.f32 %v923, %v4626
        %v5532 = vmul.f32 %v924, %v4627
        %v5533 = vmul.f32 %v925, %v4627
        %v5534 = vmul.f32 %v926, %v4628
        %v5535 = vmul.f32 %v927, %v4628
        %v5536 = vmul.f32 %v928, %v4629
        %v5537 = vmul.f32 %v929, %v4629
        %v5538 = vmul.f32 %v930, %v4630
        %v5539 = vmul.f32 %v931, %v4630
        %v5540 = vmul.f32 %v932, %v4631
        %v5541 = vmul.f32 %v933, %v4631
        %v5542 = vmul.f32 %v934, %v4632
        %v5543 = vmul.f32 %v935, %v4632
        %v5544 = vmul.f32 %v936, %v4633
        %v5545 = vmul.f32 %v937, %v4633
        %v5546 = vmul.f32 %v938, %v4634
        %v5547 = vmul.f32 %v939, %v4634
        %v5548 = vmul.f32 %v940, %v4635
        %v5549 = vmul.f32 %v941, %v4635
        %v5550 = vmul.f32 %v942, %v4636
        %v5551 = vmul.f32 %v943, %v4636
        %v5552 = vmul.f32 %v944, %v4637
        %v5553 = vmul.f32 %v945, %v4637
        %v5554 = vmul.f32 %v946, %v4638
        %v5555 = vmul.f32 %v947, %v4638
        %v5556 = vmul.f32 %v948, %v4639
        %v5557 = vmul.f32 %v949, %v4639
        %v5558 = vmul.f32 %v950, %v4640
        %v5559 = vmul.f32 %v951, %v4640
        %v5560 = vmul.f32 %v952, %v4641
        %v5561 = vmul.f32 %v953, %v4641
        %v5562 = vmul.f32 %v954, %v4642
        %v5563 = vmul.f32 %v955, %v4642
        %v5564 = vmul.f32 %v956, %v4643
        %v5565 = vmul.f32 %v957, %v4643
        %v5566 = vmul.f32 %v958, %v4644
        %v5567 = vmul.f32 %v959, %v4644
        %v5568 = vmul.f32 %v960, %v4645
        %v5569 = vmul.f32 %v961, %v4645
        %v5570 = vmul.f32 %v962, %v4646
        %v5571 = vmul.f32 %v963, %v4646
        %v5572 = vmul.f32 %v964, %v4647
        %v5573 = vmul.f32 %v965, %v4647
        %v5574 = vmul.f32 %v966, %v4648
        %v5575 = vmul.f32 %v967, %v4648
        %v5576 = vmul.f32 %v968, %v4649
        %v5577 = vmul.f32 %v969, %v4649
        %v5578 = vmul.f32 %v970, %v4650
        %v5579 = vmul.f32 %v971, %v4650
        %v5580 = vmul.f32 %v972, %v4651
        %v5581 = vmul.f32 %v973, %v4651
        %v5582 = vmul.f32 %v974, %v4652
        %v5583 = vmul.f32 %v975, %v4652
        %v5584 = vmul.f32 %v976, %v4653
        %v5585 = vmul.f32 %v977, %v4653
        %v5586 = vmul.f32 %v978, %v4654
        %v5587 = vmul.f32 %v979, %v4654
        %v5588 = vmul.f32 %v980, %v4655
        %v5589 = vmul.f32 %v981, %v4655
        %v5590 = vmul.f32 %v982, %v4656
        %v5591 = vmul.f32 %v983, %v4656
        %v5592 = vmul.f32 %v984, %v4657
        %v5593 = vmul.f32 %v985, %v4657
        %v5594 = vmul.f32 %v986, %v4658
        %v5595 = vmul.f32 %v987, %v4658
        %v5596 = vmul.f32 %v988, %v4659
        %v5597 = vmul.f32 %v989, %v4659
        %v5598 = vmul.f32 %v990, %v4660
        %v5599 = vmul.f32 %v991, %v4660
        %v5600 = vmul.f32 %v992, %v4661
        %v5601 = vmul.f32 %v993, %v4661
        %v5602 = vmul.f32 %v994, %v4662
        %v5603 = vmul.f32 %v995, %v4662
        %v5604 = vmul.f32 %v996, %v4663
        %v5605 = vmul.f32 %v997, %v4663
        %v5606 = vmul.f32 %v998, %v4664
        %v5607 = vmul.f32 %v999, %v4664
        %v5608 = vmul.f32 %v1000, %v4665
        %v5609 = vmul.f32 %v1001, %v4665
        %v5610 = vmul.f32 %v1002, %v4666
        %v5611 = vmul.f32 %v1003, %v4666
        %v5612 = vmul.f32 %v1004, %v4667
        %v5613 = vmul.f32 %v1005, %v4667
        %v5614 = vmul.f32 %v1006, %v4668
        %v5615 = vmul.f32 %v1007, %v4668
        %v5616 = vmul.f32 %v1008, %v4669
        %v5617 = vmul.f32 %v1009, %v4669
        %v5618 = vmul.f32 %v1010, %v4670
        %v5619 = vmul.f32 %v1011, %v4670
        %v5620 = vmul.f32 %v1012, %v4671
        %v5621 = vmul.f32 %v1013, %v4671
        %v5622 = vmul.f32 %v1014, %v4672
        %v5623 = vmul.f32 %v1015, %v4672
        %v5624 = vmul.f32 %v1016, %v4673
        %v5625 = vmul.f32 %v1017, %v4673
        %v5626 = vmul.f32 %v1018, %v4674
        %v5627 = vmul.f32 %v1019, %v4674
        %v5628 = vmul.f32 %v1020, %v4675
        %v5629 = vmul.f32 %v1021, %v4675
        %v5630 = vmul.f32 %v1022, %v4676
        %v5631 = vmul.f32 %v1023, %v4676
        %v5632 = vmul.f32 %v1024, %v4677
        %v5633 = vmul.f32 %v1025, %v4677
        %v5634 = vmul.f32 %v1026, %v4678
        %v5635 = vmul.f32 %v1027, %v4678
        %v5636 = vmul.f32 %v1028, %v4679
        %v5637 = vmul.f32 %v1029, %v4679
        %v5638 = vmul.f32 %v1030, %v4680
        %v5639 = vmul.f32 %v1031, %v4680
        %v5640 = vmul.f32 %v1032, %v4681
        %v5641 = vmul.f32 %v1033, %v4681
        %v5642 = vmul.f32 %v1034, %v4682
        %v5643 = vmul.f32 %v1035, %v4682
        %v5644 = vmul.f32 %v1036, %v4683
        %v5645 = vmul.f32 %v1037, %v4683
        %v5646 = vmul.f32 %v1038, %v4684
        %v5647 = vmul.f32 %v1039, %v4684
        %v5648 = vmul.f32 %v1040, %v4685
        %v5649 = vmul.f32 %v1041, %v4685
        %v5650 = vmul.f32 %v1042, %v4686
        %v5651 = vmul.f32 %v1043, %v4686
        %v5652 = vmul.f32 %v1044, %v4687
        %v5653 = vmul.f32 %v1045, %v4687
        %v5654 = vmul.f32 %v1046, %v4688
        %v5655 = vmul.f32 %v1047, %v4688
        %v5656 = vmul.f32 %v1048, %v4689
        %v5657 = vmul.f32 %v1049, %v4689
        %v5658 = vmul.f32 %v1050, %v4690
        %v5659 = vmul.f32 %v1051, %v4690
        %v5660 = vmul.f32 %v1052, %v4691
        %v5661 = vmul.f32 %v1053, %v4691
        %v5662 = vmul.f32 %v1054, %v4692
        %v5663 = vmul.f32 %v1055, %v4692
        %v5664 = vmul.f32 %v1056, %v4693
        %v5665 = vmul.f32 %v1057, %v4693
        %v5666 = vmul.f32 %v1058, %v4694
        %v5667 = vmul.f32 %v1059, %v4694
        %v5668 = vmul.f32 %v1060, %v4695
        %v5669 = vmul.f32 %v1061, %v4695
        %v5670 = vmul.f32 %v1062, %v4696
        %v5671 = vmul.f32 %v1063, %v4696
        %v5672 = vmul.f32 %v1064, %v4697
        %v5673 = vmul.f32 %v1065, %v4697
        %v5674 = vmul.f32 %v1066, %v4698
        %v5675 = vmul.f32 %v1067, %v4698
        %v5676 = vmul.f32 %v1068, %v4699
        %v5677 = vmul.f32 %v1069, %v4699
        %v5678 = vmul.f32 %v1070, %v4700
        %v5679 = vmul.f32 %v1071, %v4700
        %v5680 = vmul.f32 %v1072, %v4701
        %v5681 = vmul.f32 %v1073, %v4701
        %v5682 = vmul.f32 %v1074, %v4702
        %v5683 = vmul.f32 %v1075, %v4702
        %v5684 = vmul.f32 %v1076, %v4703
        %v5685 = vmul.f32 %v1077, %v4703
        %v5686 = vmul.f32 %v1078, %v4704
        %v5687 = vmul.f32 %v1079, %v4704
        %v5688 = vmul.f32 %v1080, %v4705
        %v5689 = vmul.f32 %v1081, %v4705
        %v5690 = vmul.f32 %v1082, %v4706
        %v5691 = vmul.f32 %v1083, %v4706
        %v5692 = vmul.f32 %v1084, %v4707
        %v5693 = vmul.f32 %v1085, %v4707
        %v5694 = vmul.f32 %v1086, %v4708
        %v5695 = vmul.f32 %v1087, %v4708
        %v5696 = vmul.f32 %v1088, %v4709
        %v5697 = vmul.f32 %v1089, %v4709
        %v5698 = vmul.f32 %v1090, %v4710
        %v5699 = vmul.f32 %v1091, %v4710
        %v5700 = vmul.f32 %v1092, %v4711
        %v5701 = vmul.f32 %v1093, %v4711
        %v5702 = vmul.f32 %v1094, %v4712
        %v5703 = vmul.f32 %v1095, %v4712
        %v5704 = vmul.f32 %v1096, %v4713
        %v5705 = vmul.f32 %v1097, %v4713
        %v5706 = vmul.f32 %v1098, %v4714
        %v5707 = vmul.f32 %v1099, %v4714
        %v5708 = vmul.f32 %v1100, %v4715
        %v5709 = vmul.f32 %v1101, %v4715
        %v5710 = vmul.f32 %v1102, %v4716
        %v5711 = vmul.f32 %v1103, %v4716
        %v5712 = vmul.f32 %v1104, %v4717
        %v5713 = vmul.f32 %v1105, %v4717
        %v5714 = vmul.f32 %v1106, %v4718
        %v5715 = vmul.f32 %v1107, %v4718
        %v5716 = vmul.f32 %v1108, %v4719
        %v5717 = vmul.f32 %v1109, %v4719
        %v5718 = vmul.f32 %v1110, %v4720
        %v5719 = vmul.f32 %v1111, %v4720
        %v5720 = vmul.f32 %v1112, %v4721
        %v5721 = vmul.f32 %v1113, %v4721
        %v5722 = vmul.f32 %v1114, %v4722
        %v5723 = vmul.f32 %v1115, %v4722
        %v5724 = vmul.f32 %v1116, %v4723
        %v5725 = vmul.f32 %v1117, %v4723
        %v5726 = vmul.f32 %v1118, %v4724
        %v5727 = vmul.f32 %v1119, %v4724
        %v5728 = vmul.f32 %v1120, %v4725
        %v5729 = vmul.f32 %v1121, %v4725
        %v5730 = vmul.f32 %v1122, %v4726
        %v5731 = vmul.f32 %v1123, %v4726
        %v5732 = vmul.f32 %v1124, %v4727
        %v5733 = vmul.f32 %v1125, %v4727
        %v5734 = vmul.f32 %v1126, %v4728
        %v5735 = vmul.f32 %v1127, %v4728
        %v5736 = vmul.f32 %v1128, %v4729
        %v5737 = vmul.f32 %v1129, %v4729
        %v5738 = vmul.f32 %v1130, %v4730
        %v5739 = vmul.f32 %v1131, %v4730
        %v5740 = vmul.f32 %v1132, %v4731
        %v5741 = vmul.f32 %v1133, %v4731
        %v5742 = vmul.f32 %v1134, %v4732
        %v5743 = vmul.f32 %v1135, %v4732
        %v5744 = vmul.f32 %v1136, %v4733
        %v5745 = vmul.f32 %v1137, %v4733
        %v5746 = vmul.f32 %v1138, %v4734
        %v5747 = vmul.f32 %v1139, %v4734
        %v5748 = vmul.f32 %v1140, %v4735
        %v5749 = vmul.f32 %v1141, %v4735
        %v5750 = vmul.f32 %v1142, %v4736
        %v5751 = vmul.f32 %v1143, %v4736
        %v5752 = vmul.f32 %v1144, %v4737
        %v5753 = vmul.f32 %v1145, %v4737
        %v5754 = vmul.f32 %v1146, %v4738
        %v5755 = vmul.f32 %v1147, %v4738
        %v5756 = vmul.f32 %v1148, %v4739
        %v5757 = vmul.f32 %v1149, %v4739
        %v5758 = vmul.f32 %v1150, %v4740
        %v5759 = vmul.f32 %v1151, %v4740
        %v5760 = vmul.f32 %v1152, %v4741
        %v5761 = vmul.f32 %v1153, %v4741
        %v5762 = vmul.f32 %v1154, %v4742
        %v5763 = vmul.f32 %v1155, %v4742
        %v5764 = vmul.f32 %v1156, %v4743
        %v5765 = vmul.f32 %v1157, %v4743
        %v5766 = vmul.f32 %v1158, %v4744
        %v5767 = vmul.f32 %v1159, %v4744
        %v5768 = vmul.f32 %v1160, %v4745
        %v5769 = vmul.f32 %v1161, %v4745
        %5770 = vst [vmem:[%s135] sm:$0xff] %v4746
        %5771 = vst [vmem:[%s135 + $0x8] sm:$0xff] %v4747
        %5772 = vst [vmem:[%s135 + $0x10] sm:$0xff] %v4748
        %5773 = vst [vmem:[%s135 + $0x18] sm:$0xff] %v4749
        %5774 = vst [vmem:[%s135 + $0x20] sm:$0xff] %v4750
        %5775 = vst [vmem:[%s135 + $0x28] sm:$0xff] %v4751
        %5776 = vst [vmem:[%s135 + $0x30] sm:$0xff] %v4752
        %5777 = vst [vmem:[%s135 + $0x38] sm:$0xff] %v4753
        %5778 = vst [vmem:[%s135 + $0x40] sm:$0xff] %v4754
        %5779 = vst [vmem:[%s135 + $0x48] sm:$0xff] %v4755
        %5780 = vst [vmem:[%s135 + $0x50] sm:$0xff] %v4756
        %5781 = vst [vmem:[%s135 + $0x58] sm:$0xff] %v4757
        %5782 = vst [vmem:[%s135 + $0x60] sm:$0xff] %v4758
        %5783 = vst [vmem:[%s135 + $0x68] sm:$0xff] %v4759
        %5784 = vst [vmem:[%s135 + $0x70] sm:$0xff] %v4760
        %5785 = vst [vmem:[%s135 + $0x78] sm:$0xff] %v4761
        %5786 = vst [vmem:[%s135 + $0x80] sm:$0xff] %v4762
        %5787 = vst [vmem:[%s135 + $0x88] sm:$0xff] %v4763
        %5788 = vst [vmem:[%s135 + $0x90] sm:$0xff] %v4764
        %5789 = vst [vmem:[%s135 + $0x98] sm:$0xff] %v4765
        %5790 = vst [vmem:[%s135 + $0xa0] sm:$0xff] %v4766
        %5791 = vst [vmem:[%s135 + $0xa8] sm:$0xff] %v4767
        %5792 = vst [vmem:[%s135 + $0xb0] sm:$0xff] %v4768
        %5793 = vst [vmem:[%s135 + $0xb8] sm:$0xff] %v4769
        %5794 = vst [vmem:[%s135 + $0xc0] sm:$0xff] %v4770
        %5795 = vst [vmem:[%s135 + $0xc8] sm:$0xff] %v4771
        %5796 = vst [vmem:[%s135 + $0xd0] sm:$0xff] %v4772
        %5797 = vst [vmem:[%s135 + $0xd8] sm:$0xff] %v4773
        %5798 = vst [vmem:[%s135 + $0xe0] sm:$0xff] %v4774
        %5799 = vst [vmem:[%s135 + $0xe8] sm:$0xff] %v4775
        %5800 = vst [vmem:[%s135 + $0xf0] sm:$0xff] %v4776
        %5801 = vst [vmem:[%s135 + $0xf8] sm:$0xff] %v4777
        %5802 = vst [vmem:[%s135 + $0x100] sm:$0xff] %v4778
        %5803 = vst [vmem:[%s135 + $0x108] sm:$0xff] %v4779
        %5804 = vst [vmem:[%s135 + $0x110] sm:$0xff] %v4780
        %5805 = vst [vmem:[%s135 + $0x118] sm:$0xff] %v4781
        %5806 = vst [vmem:[%s135 + $0x120] sm:$0xff] %v4782
        %5807 = vst [vmem:[%s135 + $0x128] sm:$0xff] %v4783
        %5808 = vst [vmem:[%s135 + $0x130] sm:$0xff] %v4784
        %5809 = vst [vmem:[%s135 + $0x138] sm:$0xff] %v4785
        %5810 = vst [vmem:[%s135 + $0x140] sm:$0xff] %v4786
        %5811 = vst [vmem:[%s135 + $0x148] sm:$0xff] %v4787
        %5812 = vst [vmem:[%s135 + $0x150] sm:$0xff] %v4788
        %5813 = vst [vmem:[%s135 + $0x158] sm:$0xff] %v4789
        %5814 = vst [vmem:[%s135 + $0x160] sm:$0xff] %v4790
        %5815 = vst [vmem:[%s135 + $0x168] sm:$0xff] %v4791
        %5816 = vst [vmem:[%s135 + $0x170] sm:$0xff] %v4792
        %5817 = vst [vmem:[%s135 + $0x178] sm:$0xff] %v4793
        %5818 = vst [vmem:[%s135 + $0x180] sm:$0xff] %v4794
        %5819 = vst [vmem:[%s135 + $0x188] sm:$0xff] %v4795
        %5820 = vst [vmem:[%s135 + $0x190] sm:$0xff] %v4796
        %5821 = vst [vmem:[%s135 + $0x198] sm:$0xff] %v4797
        %5822 = vst [vmem:[%s135 + $0x1a0] sm:$0xff] %v4798
        %5823 = vst [vmem:[%s135 + $0x1a8] sm:$0xff] %v4799
        %5824 = vst [vmem:[%s135 + $0x1b0] sm:$0xff] %v4800
        %5825 = vst [vmem:[%s135 + $0x1b8] sm:$0xff] %v4801
        %5826 = vst [vmem:[%s135 + $0x1c0] sm:$0xff] %v4802
        %5827 = vst [vmem:[%s135 + $0x1c8] sm:$0xff] %v4803
        %5828 = vst [vmem:[%s135 + $0x1d0] sm:$0xff] %v4804
        %5829 = vst [vmem:[%s135 + $0x1d8] sm:$0xff] %v4805
        %5830 = vst [vmem:[%s135 + $0x1e0] sm:$0xff] %v4806
        %5831 = vst [vmem:[%s135 + $0x1e8] sm:$0xff] %v4807
        %5832 = vst [vmem:[%s135 + $0x1f0] sm:$0xff] %v4808
        %5833 = vst [vmem:[%s135 + $0x1f8] sm:$0xff] %v4809
        %5834 = vst [vmem:[%s135 + $0x200] sm:$0xff] %v4810
        %5835 = vst [vmem:[%s135 + $0x208] sm:$0xff] %v4811
        %5836 = vst [vmem:[%s135 + $0x210] sm:$0xff] %v4812
        %5837 = vst [vmem:[%s135 + $0x218] sm:$0xff] %v4813
        %5838 = vst [vmem:[%s135 + $0x220] sm:$0xff] %v4814
        %5839 = vst [vmem:[%s135 + $0x228] sm:$0xff] %v4815
        %5840 = vst [vmem:[%s135 + $0x230] sm:$0xff] %v4816
        %5841 = vst [vmem:[%s135 + $0x238] sm:$0xff] %v4817
        %5842 = vst [vmem:[%s135 + $0x240] sm:$0xff] %v4818
        %5843 = vst [vmem:[%s135 + $0x248] sm:$0xff] %v4819
        %5844 = vst [vmem:[%s135 + $0x250] sm:$0xff] %v4820
        %5845 = vst [vmem:[%s135 + $0x258] sm:$0xff] %v4821
        %5846 = vst [vmem:[%s135 + $0x260] sm:$0xff] %v4822
        %5847 = vst [vmem:[%s135 + $0x268] sm:$0xff] %v4823
        %5848 = vst [vmem:[%s135 + $0x270] sm:$0xff] %v4824
        %5849 = vst [vmem:[%s135 + $0x278] sm:$0xff] %v4825
        %5850 = vst [vmem:[%s135 + $0x280] sm:$0xff] %v4826
        %5851 = vst [vmem:[%s135 + $0x288] sm:$0xff] %v4827
        %5852 = vst [vmem:[%s135 + $0x290] sm:$0xff] %v4828
        %5853 = vst [vmem:[%s135 + $0x298] sm:$0xff] %v4829
        %5854 = vst [vmem:[%s135 + $0x2a0] sm:$0xff] %v4830
        %5855 = vst [vmem:[%s135 + $0x2a8] sm:$0xff] %v4831
        %5856 = vst [vmem:[%s135 + $0x2b0] sm:$0xff] %v4832
        %5857 = vst [vmem:[%s135 + $0x2b8] sm:$0xff] %v4833
        %5858 = vst [vmem:[%s135 + $0x2c0] sm:$0xff] %v4834
        %5859 = vst [vmem:[%s135 + $0x2c8] sm:$0xff] %v4835
        %5860 = vst [vmem:[%s135 + $0x2d0] sm:$0xff] %v4836
        %5861 = vst [vmem:[%s135 + $0x2d8] sm:$0xff] %v4837
        %5862 = vst [vmem:[%s135 + $0x2e0] sm:$0xff] %v4838
        %5863 = vst [vmem:[%s135 + $0x2e8] sm:$0xff] %v4839
        %5864 = vst [vmem:[%s135 + $0x2f0] sm:$0xff] %v4840
        %5865 = vst [vmem:[%s135 + $0x2f8] sm:$0xff] %v4841
        %5866 = vst [vmem:[%s135 + $0x300] sm:$0xff] %v4842
        %5867 = vst [vmem:[%s135 + $0x308] sm:$0xff] %v4843
        %5868 = vst [vmem:[%s135 + $0x310] sm:$0xff] %v4844
        %5869 = vst [vmem:[%s135 + $0x318] sm:$0xff] %v4845
        %5870 = vst [vmem:[%s135 + $0x320] sm:$0xff] %v4846
        %5871 = vst [vmem:[%s135 + $0x328] sm:$0xff] %v4847
        %5872 = vst [vmem:[%s135 + $0x330] sm:$0xff] %v4848
        %5873 = vst [vmem:[%s135 + $0x338] sm:$0xff] %v4849
        %5874 = vst [vmem:[%s135 + $0x340] sm:$0xff] %v4850
        %5875 = vst [vmem:[%s135 + $0x348] sm:$0xff] %v4851
        %5876 = vst [vmem:[%s135 + $0x350] sm:$0xff] %v4852
        %5877 = vst [vmem:[%s135 + $0x358] sm:$0xff] %v4853
        %5878 = vst [vmem:[%s135 + $0x360] sm:$0xff] %v4854
        %5879 = vst [vmem:[%s135 + $0x368] sm:$0xff] %v4855
        %5880 = vst [vmem:[%s135 + $0x370] sm:$0xff] %v4856
        %5881 = vst [vmem:[%s135 + $0x378] sm:$0xff] %v4857
        %5882 = vst [vmem:[%s135 + $0x380] sm:$0xff] %v4858
        %5883 = vst [vmem:[%s135 + $0x388] sm:$0xff] %v4859
        %5884 = vst [vmem:[%s135 + $0x390] sm:$0xff] %v4860
        %5885 = vst [vmem:[%s135 + $0x398] sm:$0xff] %v4861
        %5886 = vst [vmem:[%s135 + $0x3a0] sm:$0xff] %v4862
        %5887 = vst [vmem:[%s135 + $0x3a8] sm:$0xff] %v4863
        %5888 = vst [vmem:[%s135 + $0x3b0] sm:$0xff] %v4864
        %5889 = vst [vmem:[%s135 + $0x3b8] sm:$0xff] %v4865
        %5890 = vst [vmem:[%s135 + $0x3c0] sm:$0xff] %v4866
        %5891 = vst [vmem:[%s135 + $0x3c8] sm:$0xff] %v4867
        %5892 = vst [vmem:[%s135 + $0x3d0] sm:$0xff] %v4868
        %5893 = vst [vmem:[%s135 + $0x3d8] sm:$0xff] %v4869
        %5894 = vst [vmem:[%s135 + $0x3e0] sm:$0xff] %v4870
        %5895 = vst [vmem:[%s135 + $0x3e8] sm:$0xff] %v4871
        %5896 = vst [vmem:[%s135 + $0x3f0] sm:$0xff] %v4872
        %5897 = vst [vmem:[%s135 + $0x3f8] sm:$0xff] %v4873
        %5898 = vst [vmem:[%s135 + $0x400] sm:$0xff] %v4874
        %5899 = vst [vmem:[%s135 + $0x408] sm:$0xff] %v4875
        %5900 = vst [vmem:[%s135 + $0x410] sm:$0xff] %v4876
        %5901 = vst [vmem:[%s135 + $0x418] sm:$0xff] %v4877
        %5902 = vst [vmem:[%s135 + $0x420] sm:$0xff] %v4878
        %5903 = vst [vmem:[%s135 + $0x428] sm:$0xff] %v4879
        %5904 = vst [vmem:[%s135 + $0x430] sm:$0xff] %v4880
        %5905 = vst [vmem:[%s135 + $0x438] sm:$0xff] %v4881
        %5906 = vst [vmem:[%s135 + $0x440] sm:$0xff] %v4882
        %5907 = vst [vmem:[%s135 + $0x448] sm:$0xff] %v4883
        %5908 = vst [vmem:[%s135 + $0x450] sm:$0xff] %v4884
        %5909 = vst [vmem:[%s135 + $0x458] sm:$0xff] %v4885
        %5910 = vst [vmem:[%s135 + $0x460] sm:$0xff] %v4886
        %5911 = vst [vmem:[%s135 + $0x468] sm:$0xff] %v4887
        %5912 = vst [vmem:[%s135 + $0x470] sm:$0xff] %v4888
        %5913 = vst [vmem:[%s135 + $0x478] sm:$0xff] %v4889
        %5914 = vst [vmem:[%s135 + $0x480] sm:$0xff] %v4890
        %5915 = vst [vmem:[%s135 + $0x488] sm:$0xff] %v4891
        %5916 = vst [vmem:[%s135 + $0x490] sm:$0xff] %v4892
        %5917 = vst [vmem:[%s135 + $0x498] sm:$0xff] %v4893
        %5918 = vst [vmem:[%s135 + $0x4a0] sm:$0xff] %v4894
        %5919 = vst [vmem:[%s135 + $0x4a8] sm:$0xff] %v4895
        %5920 = vst [vmem:[%s135 + $0x4b0] sm:$0xff] %v4896
        %5921 = vst [vmem:[%s135 + $0x4b8] sm:$0xff] %v4897
        %5922 = vst [vmem:[%s135 + $0x4c0] sm:$0xff] %v4898
        %5923 = vst [vmem:[%s135 + $0x4c8] sm:$0xff] %v4899
        %5924 = vst [vmem:[%s135 + $0x4d0] sm:$0xff] %v4900
        %5925 = vst [vmem:[%s135 + $0x4d8] sm:$0xff] %v4901
        %5926 = vst [vmem:[%s135 + $0x4e0] sm:$0xff] %v4902
        %5927 = vst [vmem:[%s135 + $0x4e8] sm:$0xff] %v4903
        %5928 = vst [vmem:[%s135 + $0x4f0] sm:$0xff] %v4904
        %5929 = vst [vmem:[%s135 + $0x4f8] sm:$0xff] %v4905
        %5930 = vst [vmem:[%s135 + $0x500] sm:$0xff] %v4906
        %5931 = vst [vmem:[%s135 + $0x508] sm:$0xff] %v4907
        %5932 = vst [vmem:[%s135 + $0x510] sm:$0xff] %v4908
        %5933 = vst [vmem:[%s135 + $0x518] sm:$0xff] %v4909
        %5934 = vst [vmem:[%s135 + $0x520] sm:$0xff] %v4910
        %5935 = vst [vmem:[%s135 + $0x528] sm:$0xff] %v4911
        %5936 = vst [vmem:[%s135 + $0x530] sm:$0xff] %v4912
        %5937 = vst [vmem:[%s135 + $0x538] sm:$0xff] %v4913
        %5938 = vst [vmem:[%s135 + $0x540] sm:$0xff] %v4914
        %5939 = vst [vmem:[%s135 + $0x548] sm:$0xff] %v4915
        %5940 = vst [vmem:[%s135 + $0x550] sm:$0xff] %v4916
        %5941 = vst [vmem:[%s135 + $0x558] sm:$0xff] %v4917
        %5942 = vst [vmem:[%s135 + $0x560] sm:$0xff] %v4918
        %5943 = vst [vmem:[%s135 + $0x568] sm:$0xff] %v4919
        %5944 = vst [vmem:[%s135 + $0x570] sm:$0xff] %v4920
        %5945 = vst [vmem:[%s135 + $0x578] sm:$0xff] %v4921
        %5946 = vst [vmem:[%s135 + $0x580] sm:$0xff] %v4922
        %5947 = vst [vmem:[%s135 + $0x588] sm:$0xff] %v4923
        %5948 = vst [vmem:[%s135 + $0x590] sm:$0xff] %v4924
        %5949 = vst [vmem:[%s135 + $0x598] sm:$0xff] %v4925
        %5950 = vst [vmem:[%s135 + $0x5a0] sm:$0xff] %v4926
        %5951 = vst [vmem:[%s135 + $0x5a8] sm:$0xff] %v4927
        %5952 = vst [vmem:[%s135 + $0x5b0] sm:$0xff] %v4928
        %5953 = vst [vmem:[%s135 + $0x5b8] sm:$0xff] %v4929
        %5954 = vst [vmem:[%s135 + $0x5c0] sm:$0xff] %v4930
        %5955 = vst [vmem:[%s135 + $0x5c8] sm:$0xff] %v4931
        %5956 = vst [vmem:[%s135 + $0x5d0] sm:$0xff] %v4932
        %5957 = vst [vmem:[%s135 + $0x5d8] sm:$0xff] %v4933
        %5958 = vst [vmem:[%s135 + $0x5e0] sm:$0xff] %v4934
        %5959 = vst [vmem:[%s135 + $0x5e8] sm:$0xff] %v4935
        %5960 = vst [vmem:[%s135 + $0x5f0] sm:$0xff] %v4936
        %5961 = vst [vmem:[%s135 + $0x5f8] sm:$0xff] %v4937
        %5962 = vst [vmem:[%s135 + $0x600] sm:$0xff] %v4938
        %5963 = vst [vmem:[%s135 + $0x608] sm:$0xff] %v4939
        %5964 = vst [vmem:[%s135 + $0x610] sm:$0xff] %v4940
        %5965 = vst [vmem:[%s135 + $0x618] sm:$0xff] %v4941
        %5966 = vst [vmem:[%s135 + $0x620] sm:$0xff] %v4942
        %5967 = vst [vmem:[%s135 + $0x628] sm:$0xff] %v4943
        %5968 = vst [vmem:[%s135 + $0x630] sm:$0xff] %v4944
        %5969 = vst [vmem:[%s135 + $0x638] sm:$0xff] %v4945
        %5970 = vst [vmem:[%s135 + $0x640] sm:$0xff] %v4946
        %5971 = vst [vmem:[%s135 + $0x648] sm:$0xff] %v4947
        %5972 = vst [vmem:[%s135 + $0x650] sm:$0xff] %v4948
        %5973 = vst [vmem:[%s135 + $0x658] sm:$0xff] %v4949
        %5974 = vst [vmem:[%s135 + $0x660] sm:$0xff] %v4950
        %5975 = vst [vmem:[%s135 + $0x668] sm:$0xff] %v4951
        %5976 = vst [vmem:[%s135 + $0x670] sm:$0xff] %v4952
        %5977 = vst [vmem:[%s135 + $0x678] sm:$0xff] %v4953
        %5978 = vst [vmem:[%s135 + $0x680] sm:$0xff] %v4954
        %5979 = vst [vmem:[%s135 + $0x688] sm:$0xff] %v4955
        %5980 = vst [vmem:[%s135 + $0x690] sm:$0xff] %v4956
        %5981 = vst [vmem:[%s135 + $0x698] sm:$0xff] %v4957
        %5982 = vst [vmem:[%s135 + $0x6a0] sm:$0xff] %v4958
        %5983 = vst [vmem:[%s135 + $0x6a8] sm:$0xff] %v4959
        %5984 = vst [vmem:[%s135 + $0x6b0] sm:$0xff] %v4960
        %5985 = vst [vmem:[%s135 + $0x6b8] sm:$0xff] %v4961
        %5986 = vst [vmem:[%s135 + $0x6c0] sm:$0xff] %v4962
        %5987 = vst [vmem:[%s135 + $0x6c8] sm:$0xff] %v4963
        %5988 = vst [vmem:[%s135 + $0x6d0] sm:$0xff] %v4964
        %5989 = vst [vmem:[%s135 + $0x6d8] sm:$0xff] %v4965
        %5990 = vst [vmem:[%s135 + $0x6e0] sm:$0xff] %v4966
        %5991 = vst [vmem:[%s135 + $0x6e8] sm:$0xff] %v4967
        %5992 = vst [vmem:[%s135 + $0x6f0] sm:$0xff] %v4968
        %5993 = vst [vmem:[%s135 + $0x6f8] sm:$0xff] %v4969
        %5994 = vst [vmem:[%s135 + $0x700] sm:$0xff] %v4970
        %5995 = vst [vmem:[%s135 + $0x708] sm:$0xff] %v4971
        %5996 = vst [vmem:[%s135 + $0x710] sm:$0xff] %v4972
        %5997 = vst [vmem:[%s135 + $0x718] sm:$0xff] %v4973
        %5998 = vst [vmem:[%s135 + $0x720] sm:$0xff] %v4974
        %5999 = vst [vmem:[%s135 + $0x728] sm:$0xff] %v4975
        %6000 = vst [vmem:[%s135 + $0x730] sm:$0xff] %v4976
        %6001 = vst [vmem:[%s135 + $0x738] sm:$0xff] %v4977
        %6002 = vst [vmem:[%s135 + $0x740] sm:$0xff] %v4978
        %6003 = vst [vmem:[%s135 + $0x748] sm:$0xff] %v4979
        %6004 = vst [vmem:[%s135 + $0x750] sm:$0xff] %v4980
        %6005 = vst [vmem:[%s135 + $0x758] sm:$0xff] %v4981
        %6006 = vst [vmem:[%s135 + $0x760] sm:$0xff] %v4982
        %6007 = vst [vmem:[%s135 + $0x768] sm:$0xff] %v4983
        %6008 = vst [vmem:[%s135 + $0x770] sm:$0xff] %v4984
        %6009 = vst [vmem:[%s135 + $0x778] sm:$0xff] %v4985
        %6010 = vst [vmem:[%s135 + $0x780] sm:$0xff] %v4986
        %6011 = vst [vmem:[%s135 + $0x788] sm:$0xff] %v4987
        %6012 = vst [vmem:[%s135 + $0x790] sm:$0xff] %v4988
        %6013 = vst [vmem:[%s135 + $0x798] sm:$0xff] %v4989
        %6014 = vst [vmem:[%s135 + $0x7a0] sm:$0xff] %v4990
        %6015 = vst [vmem:[%s135 + $0x7a8] sm:$0xff] %v4991
        %6016 = vst [vmem:[%s135 + $0x7b0] sm:$0xff] %v4992
        %6017 = vst [vmem:[%s135 + $0x7b8] sm:$0xff] %v4993
        %6018 = vst [vmem:[%s135 + $0x7c0] sm:$0xff] %v4994
        %6019 = vst [vmem:[%s135 + $0x7c8] sm:$0xff] %v4995
        %6020 = vst [vmem:[%s135 + $0x7d0] sm:$0xff] %v4996
        %6021 = vst [vmem:[%s135 + $0x7d8] sm:$0xff] %v4997
        %6022 = vst [vmem:[%s135 + $0x7e0] sm:$0xff] %v4998
        %6023 = vst [vmem:[%s135 + $0x7e8] sm:$0xff] %v4999
        %6024 = vst [vmem:[%s135 + $0x7f0] sm:$0xff] %v5000
        %6025 = vst [vmem:[%s135 + $0x7f8] sm:$0xff] %v5001
        %6026 = vst [vmem:[%s135 + $0x800] sm:$0xff] %v5002
        %6027 = vst [vmem:[%s135 + $0x808] sm:$0xff] %v5003
        %6028 = vst [vmem:[%s135 + $0x810] sm:$0xff] %v5004
        %6029 = vst [vmem:[%s135 + $0x818] sm:$0xff] %v5005
        %6030 = vst [vmem:[%s135 + $0x820] sm:$0xff] %v5006
        %6031 = vst [vmem:[%s135 + $0x828] sm:$0xff] %v5007
        %6032 = vst [vmem:[%s135 + $0x830] sm:$0xff] %v5008
        %6033 = vst [vmem:[%s135 + $0x838] sm:$0xff] %v5009
        %6034 = vst [vmem:[%s135 + $0x840] sm:$0xff] %v5010
        %6035 = vst [vmem:[%s135 + $0x848] sm:$0xff] %v5011
        %6036 = vst [vmem:[%s135 + $0x850] sm:$0xff] %v5012
        %6037 = vst [vmem:[%s135 + $0x858] sm:$0xff] %v5013
        %6038 = vst [vmem:[%s135 + $0x860] sm:$0xff] %v5014
        %6039 = vst [vmem:[%s135 + $0x868] sm:$0xff] %v5015
        %6040 = vst [vmem:[%s135 + $0x870] sm:$0xff] %v5016
        %6041 = vst [vmem:[%s135 + $0x878] sm:$0xff] %v5017
        %6042 = vst [vmem:[%s135 + $0x880] sm:$0xff] %v5018
        %6043 = vst [vmem:[%s135 + $0x888] sm:$0xff] %v5019
        %6044 = vst [vmem:[%s135 + $0x890] sm:$0xff] %v5020
        %6045 = vst [vmem:[%s135 + $0x898] sm:$0xff] %v5021
        %6046 = vst [vmem:[%s135 + $0x8a0] sm:$0xff] %v5022
        %6047 = vst [vmem:[%s135 + $0x8a8] sm:$0xff] %v5023
        %6048 = vst [vmem:[%s135 + $0x8b0] sm:$0xff] %v5024
        %6049 = vst [vmem:[%s135 + $0x8b8] sm:$0xff] %v5025
        %6050 = vst [vmem:[%s135 + $0x8c0] sm:$0xff] %v5026
        %6051 = vst [vmem:[%s135 + $0x8c8] sm:$0xff] %v5027
        %6052 = vst [vmem:[%s135 + $0x8d0] sm:$0xff] %v5028
        %6053 = vst [vmem:[%s135 + $0x8d8] sm:$0xff] %v5029
        %6054 = vst [vmem:[%s135 + $0x8e0] sm:$0xff] %v5030
        %6055 = vst [vmem:[%s135 + $0x8e8] sm:$0xff] %v5031
        %6056 = vst [vmem:[%s135 + $0x8f0] sm:$0xff] %v5032
        %6057 = vst [vmem:[%s135 + $0x8f8] sm:$0xff] %v5033
        %6058 = vst [vmem:[%s135 + $0x900] sm:$0xff] %v5034
        %6059 = vst [vmem:[%s135 + $0x908] sm:$0xff] %v5035
        %6060 = vst [vmem:[%s135 + $0x910] sm:$0xff] %v5036
        %6061 = vst [vmem:[%s135 + $0x918] sm:$0xff] %v5037
        %6062 = vst [vmem:[%s135 + $0x920] sm:$0xff] %v5038
        %6063 = vst [vmem:[%s135 + $0x928] sm:$0xff] %v5039
        %6064 = vst [vmem:[%s135 + $0x930] sm:$0xff] %v5040
        %6065 = vst [vmem:[%s135 + $0x938] sm:$0xff] %v5041
        %6066 = vst [vmem:[%s135 + $0x940] sm:$0xff] %v5042
        %6067 = vst [vmem:[%s135 + $0x948] sm:$0xff] %v5043
        %6068 = vst [vmem:[%s135 + $0x950] sm:$0xff] %v5044
        %6069 = vst [vmem:[%s135 + $0x958] sm:$0xff] %v5045
        %6070 = vst [vmem:[%s135 + $0x960] sm:$0xff] %v5046
        %6071 = vst [vmem:[%s135 + $0x968] sm:$0xff] %v5047
        %6072 = vst [vmem:[%s135 + $0x970] sm:$0xff] %v5048
        %6073 = vst [vmem:[%s135 + $0x978] sm:$0xff] %v5049
        %6074 = vst [vmem:[%s135 + $0x980] sm:$0xff] %v5050
        %6075 = vst [vmem:[%s135 + $0x988] sm:$0xff] %v5051
        %6076 = vst [vmem:[%s135 + $0x990] sm:$0xff] %v5052
        %6077 = vst [vmem:[%s135 + $0x998] sm:$0xff] %v5053
        %6078 = vst [vmem:[%s135 + $0x9a0] sm:$0xff] %v5054
        %6079 = vst [vmem:[%s135 + $0x9a8] sm:$0xff] %v5055
        %6080 = vst [vmem:[%s135 + $0x9b0] sm:$0xff] %v5056
        %6081 = vst [vmem:[%s135 + $0x9b8] sm:$0xff] %v5057
        %6082 = vst [vmem:[%s135 + $0x9c0] sm:$0xff] %v5058
        %6083 = vst [vmem:[%s135 + $0x9c8] sm:$0xff] %v5059
        %6084 = vst [vmem:[%s135 + $0x9d0] sm:$0xff] %v5060
        %6085 = vst [vmem:[%s135 + $0x9d8] sm:$0xff] %v5061
        %6086 = vst [vmem:[%s135 + $0x9e0] sm:$0xff] %v5062
        %6087 = vst [vmem:[%s135 + $0x9e8] sm:$0xff] %v5063
        %6088 = vst [vmem:[%s135 + $0x9f0] sm:$0xff] %v5064
        %6089 = vst [vmem:[%s135 + $0x9f8] sm:$0xff] %v5065
        %6090 = vst [vmem:[%s135 + $0xa00] sm:$0xff] %v5066
        %6091 = vst [vmem:[%s135 + $0xa08] sm:$0xff] %v5067
        %6092 = vst [vmem:[%s135 + $0xa10] sm:$0xff] %v5068
        %6093 = vst [vmem:[%s135 + $0xa18] sm:$0xff] %v5069
        %6094 = vst [vmem:[%s135 + $0xa20] sm:$0xff] %v5070
        %6095 = vst [vmem:[%s135 + $0xa28] sm:$0xff] %v5071
        %6096 = vst [vmem:[%s135 + $0xa30] sm:$0xff] %v5072
        %6097 = vst [vmem:[%s135 + $0xa38] sm:$0xff] %v5073
        %6098 = vst [vmem:[%s135 + $0xa40] sm:$0xff] %v5074
        %6099 = vst [vmem:[%s135 + $0xa48] sm:$0xff] %v5075
        %6100 = vst [vmem:[%s135 + $0xa50] sm:$0xff] %v5076
        %6101 = vst [vmem:[%s135 + $0xa58] sm:$0xff] %v5077
        %6102 = vst [vmem:[%s135 + $0xa60] sm:$0xff] %v5078
        %6103 = vst [vmem:[%s135 + $0xa68] sm:$0xff] %v5079
        %6104 = vst [vmem:[%s135 + $0xa70] sm:$0xff] %v5080
        %6105 = vst [vmem:[%s135 + $0xa78] sm:$0xff] %v5081
        %6106 = vst [vmem:[%s135 + $0xa80] sm:$0xff] %v5082
        %6107 = vst [vmem:[%s135 + $0xa88] sm:$0xff] %v5083
        %6108 = vst [vmem:[%s135 + $0xa90] sm:$0xff] %v5084
        %6109 = vst [vmem:[%s135 + $0xa98] sm:$0xff] %v5085
        %6110 = vst [vmem:[%s135 + $0xaa0] sm:$0xff] %v5086
        %6111 = vst [vmem:[%s135 + $0xaa8] sm:$0xff] %v5087
        %6112 = vst [vmem:[%s135 + $0xab0] sm:$0xff] %v5088
        %6113 = vst [vmem:[%s135 + $0xab8] sm:$0xff] %v5089
        %6114 = vst [vmem:[%s135 + $0xac0] sm:$0xff] %v5090
        %6115 = vst [vmem:[%s135 + $0xac8] sm:$0xff] %v5091
        %6116 = vst [vmem:[%s135 + $0xad0] sm:$0xff] %v5092
        %6117 = vst [vmem:[%s135 + $0xad8] sm:$0xff] %v5093
        %6118 = vst [vmem:[%s135 + $0xae0] sm:$0xff] %v5094
        %6119 = vst [vmem:[%s135 + $0xae8] sm:$0xff] %v5095
        %6120 = vst [vmem:[%s135 + $0xaf0] sm:$0xff] %v5096
        %6121 = vst [vmem:[%s135 + $0xaf8] sm:$0xff] %v5097
        %6122 = vst [vmem:[%s135 + $0xb00] sm:$0xff] %v5098
        %6123 = vst [vmem:[%s135 + $0xb08] sm:$0xff] %v5099
        %6124 = vst [vmem:[%s135 + $0xb10] sm:$0xff] %v5100
        %6125 = vst [vmem:[%s135 + $0xb18] sm:$0xff] %v5101
        %6126 = vst [vmem:[%s135 + $0xb20] sm:$0xff] %v5102
        %6127 = vst [vmem:[%s135 + $0xb28] sm:$0xff] %v5103
        %6128 = vst [vmem:[%s135 + $0xb30] sm:$0xff] %v5104
        %6129 = vst [vmem:[%s135 + $0xb38] sm:$0xff] %v5105
        %6130 = vst [vmem:[%s135 + $0xb40] sm:$0xff] %v5106
        %6131 = vst [vmem:[%s135 + $0xb48] sm:$0xff] %v5107
        %6132 = vst [vmem:[%s135 + $0xb50] sm:$0xff] %v5108
        %6133 = vst [vmem:[%s135 + $0xb58] sm:$0xff] %v5109
        %6134 = vst [vmem:[%s135 + $0xb60] sm:$0xff] %v5110
        %6135 = vst [vmem:[%s135 + $0xb68] sm:$0xff] %v5111
        %6136 = vst [vmem:[%s135 + $0xb70] sm:$0xff] %v5112
        %6137 = vst [vmem:[%s135 + $0xb78] sm:$0xff] %v5113
        %6138 = vst [vmem:[%s135 + $0xb80] sm:$0xff] %v5114
        %6139 = vst [vmem:[%s135 + $0xb88] sm:$0xff] %v5115
        %6140 = vst [vmem:[%s135 + $0xb90] sm:$0xff] %v5116
        %6141 = vst [vmem:[%s135 + $0xb98] sm:$0xff] %v5117
        %6142 = vst [vmem:[%s135 + $0xba0] sm:$0xff] %v5118
        %6143 = vst [vmem:[%s135 + $0xba8] sm:$0xff] %v5119
        %6144 = vst [vmem:[%s135 + $0xbb0] sm:$0xff] %v5120
        %6145 = vst [vmem:[%s135 + $0xbb8] sm:$0xff] %v5121
        %6146 = vst [vmem:[%s135 + $0xbc0] sm:$0xff] %v5122
        %6147 = vst [vmem:[%s135 + $0xbc8] sm:$0xff] %v5123
        %6148 = vst [vmem:[%s135 + $0xbd0] sm:$0xff] %v5124
        %6149 = vst [vmem:[%s135 + $0xbd8] sm:$0xff] %v5125
        %6150 = vst [vmem:[%s135 + $0xbe0] sm:$0xff] %v5126
        %6151 = vst [vmem:[%s135 + $0xbe8] sm:$0xff] %v5127
        %6152 = vst [vmem:[%s135 + $0xbf0] sm:$0xff] %v5128
        %6153 = vst [vmem:[%s135 + $0xbf8] sm:$0xff] %v5129
        %6154 = vst [vmem:[%s135 + $0xc00] sm:$0xff] %v5130
        %6155 = vst [vmem:[%s135 + $0xc08] sm:$0xff] %v5131
        %6156 = vst [vmem:[%s135 + $0xc10] sm:$0xff] %v5132
        %6157 = vst [vmem:[%s135 + $0xc18] sm:$0xff] %v5133
        %6158 = vst [vmem:[%s135 + $0xc20] sm:$0xff] %v5134
        %6159 = vst [vmem:[%s135 + $0xc28] sm:$0xff] %v5135
        %6160 = vst [vmem:[%s135 + $0xc30] sm:$0xff] %v5136
        %6161 = vst [vmem:[%s135 + $0xc38] sm:$0xff] %v5137
        %6162 = vst [vmem:[%s135 + $0xc40] sm:$0xff] %v5138
        %6163 = vst [vmem:[%s135 + $0xc48] sm:$0xff] %v5139
        %6164 = vst [vmem:[%s135 + $0xc50] sm:$0xff] %v5140
        %6165 = vst [vmem:[%s135 + $0xc58] sm:$0xff] %v5141
        %6166 = vst [vmem:[%s135 + $0xc60] sm:$0xff] %v5142
        %6167 = vst [vmem:[%s135 + $0xc68] sm:$0xff] %v5143
        %6168 = vst [vmem:[%s135 + $0xc70] sm:$0xff] %v5144
        %6169 = vst [vmem:[%s135 + $0xc78] sm:$0xff] %v5145
        %6170 = vst [vmem:[%s135 + $0xc80] sm:$0xff] %v5146
        %6171 = vst [vmem:[%s135 + $0xc88] sm:$0xff] %v5147
        %6172 = vst [vmem:[%s135 + $0xc90] sm:$0xff] %v5148
        %6173 = vst [vmem:[%s135 + $0xc98] sm:$0xff] %v5149
        %6174 = vst [vmem:[%s135 + $0xca0] sm:$0xff] %v5150
        %6175 = vst [vmem:[%s135 + $0xca8] sm:$0xff] %v5151
        %6176 = vst [vmem:[%s135 + $0xcb0] sm:$0xff] %v5152
        %6177 = vst [vmem:[%s135 + $0xcb8] sm:$0xff] %v5153
        %6178 = vst [vmem:[%s135 + $0xcc0] sm:$0xff] %v5154
        %6179 = vst [vmem:[%s135 + $0xcc8] sm:$0xff] %v5155
        %6180 = vst [vmem:[%s135 + $0xcd0] sm:$0xff] %v5156
        %6181 = vst [vmem:[%s135 + $0xcd8] sm:$0xff] %v5157
        %6182 = vst [vmem:[%s135 + $0xce0] sm:$0xff] %v5158
        %6183 = vst [vmem:[%s135 + $0xce8] sm:$0xff] %v5159
        %6184 = vst [vmem:[%s135 + $0xcf0] sm:$0xff] %v5160
        %6185 = vst [vmem:[%s135 + $0xcf8] sm:$0xff] %v5161
        %6186 = vst [vmem:[%s135 + $0xd00] sm:$0xff] %v5162
        %6187 = vst [vmem:[%s135 + $0xd08] sm:$0xff] %v5163
        %6188 = vst [vmem:[%s135 + $0xd10] sm:$0xff] %v5164
        %6189 = vst [vmem:[%s135 + $0xd18] sm:$0xff] %v5165
        %6190 = vst [vmem:[%s135 + $0xd20] sm:$0xff] %v5166
        %6191 = vst [vmem:[%s135 + $0xd28] sm:$0xff] %v5167
        %6192 = vst [vmem:[%s135 + $0xd30] sm:$0xff] %v5168
        %6193 = vst [vmem:[%s135 + $0xd38] sm:$0xff] %v5169
        %6194 = vst [vmem:[%s135 + $0xd40] sm:$0xff] %v5170
        %6195 = vst [vmem:[%s135 + $0xd48] sm:$0xff] %v5171
        %6196 = vst [vmem:[%s135 + $0xd50] sm:$0xff] %v5172
        %6197 = vst [vmem:[%s135 + $0xd58] sm:$0xff] %v5173
        %6198 = vst [vmem:[%s135 + $0xd60] sm:$0xff] %v5174
        %6199 = vst [vmem:[%s135 + $0xd68] sm:$0xff] %v5175
        %6200 = vst [vmem:[%s135 + $0xd70] sm:$0xff] %v5176
        %6201 = vst [vmem:[%s135 + $0xd78] sm:$0xff] %v5177
        %6202 = vst [vmem:[%s135 + $0xd80] sm:$0xff] %v5178
        %6203 = vst [vmem:[%s135 + $0xd88] sm:$0xff] %v5179
        %6204 = vst [vmem:[%s135 + $0xd90] sm:$0xff] %v5180
        %6205 = vst [vmem:[%s135 + $0xd98] sm:$0xff] %v5181
        %6206 = vst [vmem:[%s135 + $0xda0] sm:$0xff] %v5182
        %6207 = vst [vmem:[%s135 + $0xda8] sm:$0xff] %v5183
        %6208 = vst [vmem:[%s135 + $0xdb0] sm:$0xff] %v5184
        %6209 = vst [vmem:[%s135 + $0xdb8] sm:$0xff] %v5185
        %6210 = vst [vmem:[%s135 + $0xdc0] sm:$0xff] %v5186
        %6211 = vst [vmem:[%s135 + $0xdc8] sm:$0xff] %v5187
        %6212 = vst [vmem:[%s135 + $0xdd0] sm:$0xff] %v5188
        %6213 = vst [vmem:[%s135 + $0xdd8] sm:$0xff] %v5189
        %6214 = vst [vmem:[%s135 + $0xde0] sm:$0xff] %v5190
        %6215 = vst [vmem:[%s135 + $0xde8] sm:$0xff] %v5191
        %6216 = vst [vmem:[%s135 + $0xdf0] sm:$0xff] %v5192
        %6217 = vst [vmem:[%s135 + $0xdf8] sm:$0xff] %v5193
        %6218 = vst [vmem:[%s135 + $0xe00] sm:$0xff] %v5194
        %6219 = vst [vmem:[%s135 + $0xe08] sm:$0xff] %v5195
        %6220 = vst [vmem:[%s135 + $0xe10] sm:$0xff] %v5196
        %6221 = vst [vmem:[%s135 + $0xe18] sm:$0xff] %v5197
        %6222 = vst [vmem:[%s135 + $0xe20] sm:$0xff] %v5198
        %6223 = vst [vmem:[%s135 + $0xe28] sm:$0xff] %v5199
        %6224 = vst [vmem:[%s135 + $0xe30] sm:$0xff] %v5200
        %6225 = vst [vmem:[%s135 + $0xe38] sm:$0xff] %v5201
        %6226 = vst [vmem:[%s135 + $0xe40] sm:$0xff] %v5202
        %6227 = vst [vmem:[%s135 + $0xe48] sm:$0xff] %v5203
        %6228 = vst [vmem:[%s135 + $0xe50] sm:$0xff] %v5204
        %6229 = vst [vmem:[%s135 + $0xe58] sm:$0xff] %v5205
        %6230 = vst [vmem:[%s135 + $0xe60] sm:$0xff] %v5206
        %6231 = vst [vmem:[%s135 + $0xe68] sm:$0xff] %v5207
        %6232 = vst [vmem:[%s135 + $0xe70] sm:$0xff] %v5208
        %6233 = vst [vmem:[%s135 + $0xe78] sm:$0xff] %v5209
        %6234 = vst [vmem:[%s135 + $0xe80] sm:$0xff] %v5210
        %6235 = vst [vmem:[%s135 + $0xe88] sm:$0xff] %v5211
        %6236 = vst [vmem:[%s135 + $0xe90] sm:$0xff] %v5212
        %6237 = vst [vmem:[%s135 + $0xe98] sm:$0xff] %v5213
        %6238 = vst [vmem:[%s135 + $0xea0] sm:$0xff] %v5214
        %6239 = vst [vmem:[%s135 + $0xea8] sm:$0xff] %v5215
        %6240 = vst [vmem:[%s135 + $0xeb0] sm:$0xff] %v5216
        %6241 = vst [vmem:[%s135 + $0xeb8] sm:$0xff] %v5217
        %6242 = vst [vmem:[%s135 + $0xec0] sm:$0xff] %v5218
        %6243 = vst [vmem:[%s135 + $0xec8] sm:$0xff] %v5219
        %6244 = vst [vmem:[%s135 + $0xed0] sm:$0xff] %v5220
        %6245 = vst [vmem:[%s135 + $0xed8] sm:$0xff] %v5221
        %6246 = vst [vmem:[%s135 + $0xee0] sm:$0xff] %v5222
        %6247 = vst [vmem:[%s135 + $0xee8] sm:$0xff] %v5223
        %6248 = vst [vmem:[%s135 + $0xef0] sm:$0xff] %v5224
        %6249 = vst [vmem:[%s135 + $0xef8] sm:$0xff] %v5225
        %6250 = vst [vmem:[%s135 + $0xf00] sm:$0xff] %v5226
        %6251 = vst [vmem:[%s135 + $0xf08] sm:$0xff] %v5227
        %6252 = vst [vmem:[%s135 + $0xf10] sm:$0xff] %v5228
        %6253 = vst [vmem:[%s135 + $0xf18] sm:$0xff] %v5229
        %6254 = vst [vmem:[%s135 + $0xf20] sm:$0xff] %v5230
        %6255 = vst [vmem:[%s135 + $0xf28] sm:$0xff] %v5231
        %6256 = vst [vmem:[%s135 + $0xf30] sm:$0xff] %v5232
        %6257 = vst [vmem:[%s135 + $0xf38] sm:$0xff] %v5233
        %6258 = vst [vmem:[%s135 + $0xf40] sm:$0xff] %v5234
        %6259 = vst [vmem:[%s135 + $0xf48] sm:$0xff] %v5235
        %6260 = vst [vmem:[%s135 + $0xf50] sm:$0xff] %v5236
        %6261 = vst [vmem:[%s135 + $0xf58] sm:$0xff] %v5237
        %6262 = vst [vmem:[%s135 + $0xf60] sm:$0xff] %v5238
        %6263 = vst [vmem:[%s135 + $0xf68] sm:$0xff] %v5239
        %6264 = vst [vmem:[%s135 + $0xf70] sm:$0xff] %v5240
        %6265 = vst [vmem:[%s135 + $0xf78] sm:$0xff] %v5241
        %6266 = vst [vmem:[%s135 + $0xf80] sm:$0xff] %v5242
        %6267 = vst [vmem:[%s135 + $0xf88] sm:$0xff] %v5243
        %6268 = vst [vmem:[%s135 + $0xf90] sm:$0xff] %v5244
        %6269 = vst [vmem:[%s135 + $0xf98] sm:$0xff] %v5245
        %6270 = vst [vmem:[%s135 + $0xfa0] sm:$0xff] %v5246
        %6271 = vst [vmem:[%s135 + $0xfa8] sm:$0xff] %v5247
        %6272 = vst [vmem:[%s135 + $0xfb0] sm:$0xff] %v5248
        %6273 = vst [vmem:[%s135 + $0xfb8] sm:$0xff] %v5249
        %6274 = vst [vmem:[%s135 + $0xfc0] sm:$0xff] %v5250
        %6275 = vst [vmem:[%s135 + $0xfc8] sm:$0xff] %v5251
        %6276 = vst [vmem:[%s135 + $0xfd0] sm:$0xff] %v5252
        %6277 = vst [vmem:[%s135 + $0xfd8] sm:$0xff] %v5253
        %6278 = vst [vmem:[%s135 + $0xfe0] sm:$0xff] %v5254
        %6279 = vst [vmem:[%s135 + $0xfe8] sm:$0xff] %v5255
        %6280 = vst [vmem:[%s135 + $0xff0] sm:$0xff] %v5256
        %6281 = vst [vmem:[%s135 + $0xff8] sm:$0xff] %v5257
        %6282 = vst [vmem:[%s135 + $0x1000] sm:$0xff] %v5258
        %6283 = vst [vmem:[%s135 + $0x1008] sm:$0xff] %v5259
        %6284 = vst [vmem:[%s135 + $0x1010] sm:$0xff] %v5260
        %6285 = vst [vmem:[%s135 + $0x1018] sm:$0xff] %v5261
        %6286 = vst [vmem:[%s135 + $0x1020] sm:$0xff] %v5262
        %6287 = vst [vmem:[%s135 + $0x1028] sm:$0xff] %v5263
        %6288 = vst [vmem:[%s135 + $0x1030] sm:$0xff] %v5264
        %6289 = vst [vmem:[%s135 + $0x1038] sm:$0xff] %v5265
        %6290 = vst [vmem:[%s135 + $0x1040] sm:$0xff] %v5266
        %6291 = vst [vmem:[%s135 + $0x1048] sm:$0xff] %v5267
        %6292 = vst [vmem:[%s135 + $0x1050] sm:$0xff] %v5268
        %6293 = vst [vmem:[%s135 + $0x1058] sm:$0xff] %v5269
        %6294 = vst [vmem:[%s135 + $0x1060] sm:$0xff] %v5270
        %6295 = vst [vmem:[%s135 + $0x1068] sm:$0xff] %v5271
        %6296 = vst [vmem:[%s135 + $0x1070] sm:$0xff] %v5272
        %6297 = vst [vmem:[%s135 + $0x1078] sm:$0xff] %v5273
        %6298 = vst [vmem:[%s135 + $0x1080] sm:$0xff] %v5274
        %6299 = vst [vmem:[%s135 + $0x1088] sm:$0xff] %v5275
        %6300 = vst [vmem:[%s135 + $0x1090] sm:$0xff] %v5276
        %6301 = vst [vmem:[%s135 + $0x1098] sm:$0xff] %v5277
        %6302 = vst [vmem:[%s135 + $0x10a0] sm:$0xff] %v5278
        %6303 = vst [vmem:[%s135 + $0x10a8] sm:$0xff] %v5279
        %6304 = vst [vmem:[%s135 + $0x10b0] sm:$0xff] %v5280
        %6305 = vst [vmem:[%s135 + $0x10b8] sm:$0xff] %v5281
        %6306 = vst [vmem:[%s135 + $0x10c0] sm:$0xff] %v5282
        %6307 = vst [vmem:[%s135 + $0x10c8] sm:$0xff] %v5283
        %6308 = vst [vmem:[%s135 + $0x10d0] sm:$0xff] %v5284
        %6309 = vst [vmem:[%s135 + $0x10d8] sm:$0xff] %v5285
        %6310 = vst [vmem:[%s135 + $0x10e0] sm:$0xff] %v5286
        %6311 = vst [vmem:[%s135 + $0x10e8] sm:$0xff] %v5287
        %6312 = vst [vmem:[%s135 + $0x10f0] sm:$0xff] %v5288
        %6313 = vst [vmem:[%s135 + $0x10f8] sm:$0xff] %v5289
        %6314 = vst [vmem:[%s135 + $0x1100] sm:$0xff] %v5290
        %6315 = vst [vmem:[%s135 + $0x1108] sm:$0xff] %v5291
        %6316 = vst [vmem:[%s135 + $0x1110] sm:$0xff] %v5292
        %6317 = vst [vmem:[%s135 + $0x1118] sm:$0xff] %v5293
        %6318 = vst [vmem:[%s135 + $0x1120] sm:$0xff] %v5294
        %6319 = vst [vmem:[%s135 + $0x1128] sm:$0xff] %v5295
        %6320 = vst [vmem:[%s135 + $0x1130] sm:$0xff] %v5296
        %6321 = vst [vmem:[%s135 + $0x1138] sm:$0xff] %v5297
        %6322 = vst [vmem:[%s135 + $0x1140] sm:$0xff] %v5298
        %6323 = vst [vmem:[%s135 + $0x1148] sm:$0xff] %v5299
        %6324 = vst [vmem:[%s135 + $0x1150] sm:$0xff] %v5300
        %6325 = vst [vmem:[%s135 + $0x1158] sm:$0xff] %v5301
        %6326 = vst [vmem:[%s135 + $0x1160] sm:$0xff] %v5302
        %6327 = vst [vmem:[%s135 + $0x1168] sm:$0xff] %v5303
        %6328 = vst [vmem:[%s135 + $0x1170] sm:$0xff] %v5304
        %6329 = vst [vmem:[%s135 + $0x1178] sm:$0xff] %v5305
        %6330 = vst [vmem:[%s135 + $0x1180] sm:$0xff] %v5306
        %6331 = vst [vmem:[%s135 + $0x1188] sm:$0xff] %v5307
        %6332 = vst [vmem:[%s135 + $0x1190] sm:$0xff] %v5308
        %6333 = vst [vmem:[%s135 + $0x1198] sm:$0xff] %v5309
        %6334 = vst [vmem:[%s135 + $0x11a0] sm:$0xff] %v5310
        %6335 = vst [vmem:[%s135 + $0x11a8] sm:$0xff] %v5311
        %6336 = vst [vmem:[%s135 + $0x11b0] sm:$0xff] %v5312
        %6337 = vst [vmem:[%s135 + $0x11b8] sm:$0xff] %v5313
        %6338 = vst [vmem:[%s135 + $0x11c0] sm:$0xff] %v5314
        %6339 = vst [vmem:[%s135 + $0x11c8] sm:$0xff] %v5315
        %6340 = vst [vmem:[%s135 + $0x11d0] sm:$0xff] %v5316
        %6341 = vst [vmem:[%s135 + $0x11d8] sm:$0xff] %v5317
        %6342 = vst [vmem:[%s135 + $0x11e0] sm:$0xff] %v5318
        %6343 = vst [vmem:[%s135 + $0x11e8] sm:$0xff] %v5319
        %6344 = vst [vmem:[%s135 + $0x11f0] sm:$0xff] %v5320
        %6345 = vst [vmem:[%s135 + $0x11f8] sm:$0xff] %v5321
        %6346 = vst [vmem:[%s135 + $0x1200] sm:$0xff] %v5322
        %6347 = vst [vmem:[%s135 + $0x1208] sm:$0xff] %v5323
        %6348 = vst [vmem:[%s135 + $0x1210] sm:$0xff] %v5324
        %6349 = vst [vmem:[%s135 + $0x1218] sm:$0xff] %v5325
        %6350 = vst [vmem:[%s135 + $0x1220] sm:$0xff] %v5326
        %6351 = vst [vmem:[%s135 + $0x1228] sm:$0xff] %v5327
        %6352 = vst [vmem:[%s135 + $0x1230] sm:$0xff] %v5328
        %6353 = vst [vmem:[%s135 + $0x1238] sm:$0xff] %v5329
        %6354 = vst [vmem:[%s135 + $0x1240] sm:$0xff] %v5330
        %6355 = vst [vmem:[%s135 + $0x1248] sm:$0xff] %v5331
        %6356 = vst [vmem:[%s135 + $0x1250] sm:$0xff] %v5332
        %6357 = vst [vmem:[%s135 + $0x1258] sm:$0xff] %v5333
        %6358 = vst [vmem:[%s135 + $0x1260] sm:$0xff] %v5334
        %6359 = vst [vmem:[%s135 + $0x1268] sm:$0xff] %v5335
        %6360 = vst [vmem:[%s135 + $0x1270] sm:$0xff] %v5336
        %6361 = vst [vmem:[%s135 + $0x1278] sm:$0xff] %v5337
        %6362 = vst [vmem:[%s135 + $0x1280] sm:$0xff] %v5338
        %6363 = vst [vmem:[%s135 + $0x1288] sm:$0xff] %v5339
        %6364 = vst [vmem:[%s135 + $0x1290] sm:$0xff] %v5340
        %6365 = vst [vmem:[%s135 + $0x1298] sm:$0xff] %v5341
        %6366 = vst [vmem:[%s135 + $0x12a0] sm:$0xff] %v5342
        %6367 = vst [vmem:[%s135 + $0x12a8] sm:$0xff] %v5343
        %6368 = vst [vmem:[%s135 + $0x12b0] sm:$0xff] %v5344
        %6369 = vst [vmem:[%s135 + $0x12b8] sm:$0xff] %v5345
        %6370 = vst [vmem:[%s135 + $0x12c0] sm:$0xff] %v5346
        %6371 = vst [vmem:[%s135 + $0x12c8] sm:$0xff] %v5347
        %6372 = vst [vmem:[%s135 + $0x12d0] sm:$0xff] %v5348
        %6373 = vst [vmem:[%s135 + $0x12d8] sm:$0xff] %v5349
        %6374 = vst [vmem:[%s135 + $0x12e0] sm:$0xff] %v5350
        %6375 = vst [vmem:[%s135 + $0x12e8] sm:$0xff] %v5351
        %6376 = vst [vmem:[%s135 + $0x12f0] sm:$0xff] %v5352
        %6377 = vst [vmem:[%s135 + $0x12f8] sm:$0xff] %v5353
        %6378 = vst [vmem:[%s135 + $0x1300] sm:$0xff] %v5354
        %6379 = vst [vmem:[%s135 + $0x1308] sm:$0xff] %v5355
        %6380 = vst [vmem:[%s135 + $0x1310] sm:$0xff] %v5356
        %6381 = vst [vmem:[%s135 + $0x1318] sm:$0xff] %v5357
        %6382 = vst [vmem:[%s135 + $0x1320] sm:$0xff] %v5358
        %6383 = vst [vmem:[%s135 + $0x1328] sm:$0xff] %v5359
        %6384 = vst [vmem:[%s135 + $0x1330] sm:$0xff] %v5360
        %6385 = vst [vmem:[%s135 + $0x1338] sm:$0xff] %v5361
        %6386 = vst [vmem:[%s135 + $0x1340] sm:$0xff] %v5362
        %6387 = vst [vmem:[%s135 + $0x1348] sm:$0xff] %v5363
        %6388 = vst [vmem:[%s135 + $0x1350] sm:$0xff] %v5364
        %6389 = vst [vmem:[%s135 + $0x1358] sm:$0xff] %v5365
        %6390 = vst [vmem:[%s135 + $0x1360] sm:$0xff] %v5366
        %6391 = vst [vmem:[%s135 + $0x1368] sm:$0xff] %v5367
        %6392 = vst [vmem:[%s135 + $0x1370] sm:$0xff] %v5368
        %6393 = vst [vmem:[%s135 + $0x1378] sm:$0xff] %v5369
        %6394 = vst [vmem:[%s135 + $0x1380] sm:$0xff] %v5370
        %6395 = vst [vmem:[%s135 + $0x1388] sm:$0xff] %v5371
        %6396 = vst [vmem:[%s135 + $0x1390] sm:$0xff] %v5372
        %6397 = vst [vmem:[%s135 + $0x1398] sm:$0xff] %v5373
        %6398 = vst [vmem:[%s135 + $0x13a0] sm:$0xff] %v5374
        %6399 = vst [vmem:[%s135 + $0x13a8] sm:$0xff] %v5375
        %6400 = vst [vmem:[%s135 + $0x13b0] sm:$0xff] %v5376
        %6401 = vst [vmem:[%s135 + $0x13b8] sm:$0xff] %v5377
        %6402 = vst [vmem:[%s135 + $0x13c0] sm:$0xff] %v5378
        %6403 = vst [vmem:[%s135 + $0x13c8] sm:$0xff] %v5379
        %6404 = vst [vmem:[%s135 + $0x13d0] sm:$0xff] %v5380
        %6405 = vst [vmem:[%s135 + $0x13d8] sm:$0xff] %v5381
        %6406 = vst [vmem:[%s135 + $0x13e0] sm:$0xff] %v5382
        %6407 = vst [vmem:[%s135 + $0x13e8] sm:$0xff] %v5383
        %6408 = vst [vmem:[%s135 + $0x13f0] sm:$0xff] %v5384
        %6409 = vst [vmem:[%s135 + $0x13f8] sm:$0xff] %v5385
        %6410 = vst [vmem:[%s135 + $0x1400] sm:$0xff] %v5386
        %6411 = vst [vmem:[%s135 + $0x1408] sm:$0xff] %v5387
        %6412 = vst [vmem:[%s135 + $0x1410] sm:$0xff] %v5388
        %6413 = vst [vmem:[%s135 + $0x1418] sm:$0xff] %v5389
        %6414 = vst [vmem:[%s135 + $0x1420] sm:$0xff] %v5390
        %6415 = vst [vmem:[%s135 + $0x1428] sm:$0xff] %v5391
        %6416 = vst [vmem:[%s135 + $0x1430] sm:$0xff] %v5392
        %6417 = vst [vmem:[%s135 + $0x1438] sm:$0xff] %v5393
        %6418 = vst [vmem:[%s135 + $0x1440] sm:$0xff] %v5394
        %6419 = vst [vmem:[%s135 + $0x1448] sm:$0xff] %v5395
        %6420 = vst [vmem:[%s135 + $0x1450] sm:$0xff] %v5396
        %6421 = vst [vmem:[%s135 + $0x1458] sm:$0xff] %v5397
        %6422 = vst [vmem:[%s135 + $0x1460] sm:$0xff] %v5398
        %6423 = vst [vmem:[%s135 + $0x1468] sm:$0xff] %v5399
        %6424 = vst [vmem:[%s135 + $0x1470] sm:$0xff] %v5400
        %6425 = vst [vmem:[%s135 + $0x1478] sm:$0xff] %v5401
        %6426 = vst [vmem:[%s135 + $0x1480] sm:$0xff] %v5402
        %6427 = vst [vmem:[%s135 + $0x1488] sm:$0xff] %v5403
        %6428 = vst [vmem:[%s135 + $0x1490] sm:$0xff] %v5404
        %6429 = vst [vmem:[%s135 + $0x1498] sm:$0xff] %v5405
        %6430 = vst [vmem:[%s135 + $0x14a0] sm:$0xff] %v5406
        %6431 = vst [vmem:[%s135 + $0x14a8] sm:$0xff] %v5407
        %6432 = vst [vmem:[%s135 + $0x14b0] sm:$0xff] %v5408
        %6433 = vst [vmem:[%s135 + $0x14b8] sm:$0xff] %v5409
        %6434 = vst [vmem:[%s135 + $0x14c0] sm:$0xff] %v5410
        %6435 = vst [vmem:[%s135 + $0x14c8] sm:$0xff] %v5411
        %6436 = vst [vmem:[%s135 + $0x14d0] sm:$0xff] %v5412
        %6437 = vst [vmem:[%s135 + $0x14d8] sm:$0xff] %v5413
        %6438 = vst [vmem:[%s135 + $0x14e0] sm:$0xff] %v5414
        %6439 = vst [vmem:[%s135 + $0x14e8] sm:$0xff] %v5415
        %6440 = vst [vmem:[%s135 + $0x14f0] sm:$0xff] %v5416
        %6441 = vst [vmem:[%s135 + $0x14f8] sm:$0xff] %v5417
        %6442 = vst [vmem:[%s135 + $0x1500] sm:$0xff] %v5418
        %6443 = vst [vmem:[%s135 + $0x1508] sm:$0xff] %v5419
        %6444 = vst [vmem:[%s135 + $0x1510] sm:$0xff] %v5420
        %6445 = vst [vmem:[%s135 + $0x1518] sm:$0xff] %v5421
        %6446 = vst [vmem:[%s135 + $0x1520] sm:$0xff] %v5422
        %6447 = vst [vmem:[%s135 + $0x1528] sm:$0xff] %v5423
        %6448 = vst [vmem:[%s135 + $0x1530] sm:$0xff] %v5424
        %6449 = vst [vmem:[%s135 + $0x1538] sm:$0xff] %v5425
        %6450 = vst [vmem:[%s135 + $0x1540] sm:$0xff] %v5426
        %6451 = vst [vmem:[%s135 + $0x1548] sm:$0xff] %v5427
        %6452 = vst [vmem:[%s135 + $0x1550] sm:$0xff] %v5428
        %6453 = vst [vmem:[%s135 + $0x1558] sm:$0xff] %v5429
        %6454 = vst [vmem:[%s135 + $0x1560] sm:$0xff] %v5430
        %6455 = vst [vmem:[%s135 + $0x1568] sm:$0xff] %v5431
        %6456 = vst [vmem:[%s135 + $0x1570] sm:$0xff] %v5432
        %6457 = vst [vmem:[%s135 + $0x1578] sm:$0xff] %v5433
        %6458 = vst [vmem:[%s135 + $0x1580] sm:$0xff] %v5434
        %6459 = vst [vmem:[%s135 + $0x1588] sm:$0xff] %v5435
        %6460 = vst [vmem:[%s135 + $0x1590] sm:$0xff] %v5436
        %6461 = vst [vmem:[%s135 + $0x1598] sm:$0xff] %v5437
        %6462 = vst [vmem:[%s135 + $0x15a0] sm:$0xff] %v5438
        %6463 = vst [vmem:[%s135 + $0x15a8] sm:$0xff] %v5439
        %6464 = vst [vmem:[%s135 + $0x15b0] sm:$0xff] %v5440
        %6465 = vst [vmem:[%s135 + $0x15b8] sm:$0xff] %v5441
        %6466 = vst [vmem:[%s135 + $0x15c0] sm:$0xff] %v5442
        %6467 = vst [vmem:[%s135 + $0x15c8] sm:$0xff] %v5443
        %6468 = vst [vmem:[%s135 + $0x15d0] sm:$0xff] %v5444
        %6469 = vst [vmem:[%s135 + $0x15d8] sm:$0xff] %v5445
        %6470 = vst [vmem:[%s135 + $0x15e0] sm:$0xff] %v5446
        %6471 = vst [vmem:[%s135 + $0x15e8] sm:$0xff] %v5447
        %6472 = vst [vmem:[%s135 + $0x15f0] sm:$0xff] %v5448
        %6473 = vst [vmem:[%s135 + $0x15f8] sm:$0xff] %v5449
        %6474 = vst [vmem:[%s135 + $0x1600] sm:$0xff] %v5450
        %6475 = vst [vmem:[%s135 + $0x1608] sm:$0xff] %v5451
        %6476 = vst [vmem:[%s135 + $0x1610] sm:$0xff] %v5452
        %6477 = vst [vmem:[%s135 + $0x1618] sm:$0xff] %v5453
        %6478 = vst [vmem:[%s135 + $0x1620] sm:$0xff] %v5454
        %6479 = vst [vmem:[%s135 + $0x1628] sm:$0xff] %v5455
        %6480 = vst [vmem:[%s135 + $0x1630] sm:$0xff] %v5456
        %6481 = vst [vmem:[%s135 + $0x1638] sm:$0xff] %v5457
        %6482 = vst [vmem:[%s135 + $0x1640] sm:$0xff] %v5458
        %6483 = vst [vmem:[%s135 + $0x1648] sm:$0xff] %v5459
        %6484 = vst [vmem:[%s135 + $0x1650] sm:$0xff] %v5460
        %6485 = vst [vmem:[%s135 + $0x1658] sm:$0xff] %v5461
        %6486 = vst [vmem:[%s135 + $0x1660] sm:$0xff] %v5462
        %6487 = vst [vmem:[%s135 + $0x1668] sm:$0xff] %v5463
        %6488 = vst [vmem:[%s135 + $0x1670] sm:$0xff] %v5464
        %6489 = vst [vmem:[%s135 + $0x1678] sm:$0xff] %v5465
        %6490 = vst [vmem:[%s135 + $0x1680] sm:$0xff] %v5466
        %6491 = vst [vmem:[%s135 + $0x1688] sm:$0xff] %v5467
        %6492 = vst [vmem:[%s135 + $0x1690] sm:$0xff] %v5468
        %6493 = vst [vmem:[%s135 + $0x1698] sm:$0xff] %v5469
        %6494 = vst [vmem:[%s135 + $0x16a0] sm:$0xff] %v5470
        %6495 = vst [vmem:[%s135 + $0x16a8] sm:$0xff] %v5471
        %6496 = vst [vmem:[%s135 + $0x16b0] sm:$0xff] %v5472
        %6497 = vst [vmem:[%s135 + $0x16b8] sm:$0xff] %v5473
        %6498 = vst [vmem:[%s135 + $0x16c0] sm:$0xff] %v5474
        %6499 = vst [vmem:[%s135 + $0x16c8] sm:$0xff] %v5475
        %6500 = vst [vmem:[%s135 + $0x16d0] sm:$0xff] %v5476
        %6501 = vst [vmem:[%s135 + $0x16d8] sm:$0xff] %v5477
        %6502 = vst [vmem:[%s135 + $0x16e0] sm:$0xff] %v5478
        %6503 = vst [vmem:[%s135 + $0x16e8] sm:$0xff] %v5479
        %6504 = vst [vmem:[%s135 + $0x16f0] sm:$0xff] %v5480
        %6505 = vst [vmem:[%s135 + $0x16f8] sm:$0xff] %v5481
        %6506 = vst [vmem:[%s135 + $0x1700] sm:$0xff] %v5482
        %6507 = vst [vmem:[%s135 + $0x1708] sm:$0xff] %v5483
        %6508 = vst [vmem:[%s135 + $0x1710] sm:$0xff] %v5484
        %6509 = vst [vmem:[%s135 + $0x1718] sm:$0xff] %v5485
        %6510 = vst [vmem:[%s135 + $0x1720] sm:$0xff] %v5486
        %6511 = vst [vmem:[%s135 + $0x1728] sm:$0xff] %v5487
        %6512 = vst [vmem:[%s135 + $0x1730] sm:$0xff] %v5488
        %6513 = vst [vmem:[%s135 + $0x1738] sm:$0xff] %v5489
        %6514 = vst [vmem:[%s135 + $0x1740] sm:$0xff] %v5490
        %6515 = vst [vmem:[%s135 + $0x1748] sm:$0xff] %v5491
        %6516 = vst [vmem:[%s135 + $0x1750] sm:$0xff] %v5492
        %6517 = vst [vmem:[%s135 + $0x1758] sm:$0xff] %v5493
        %6518 = vst [vmem:[%s135 + $0x1760] sm:$0xff] %v5494
        %6519 = vst [vmem:[%s135 + $0x1768] sm:$0xff] %v5495
        %6520 = vst [vmem:[%s135 + $0x1770] sm:$0xff] %v5496
        %6521 = vst [vmem:[%s135 + $0x1778] sm:$0xff] %v5497
        %6522 = vst [vmem:[%s135 + $0x1780] sm:$0xff] %v5498
        %6523 = vst [vmem:[%s135 + $0x1788] sm:$0xff] %v5499
        %6524 = vst [vmem:[%s135 + $0x1790] sm:$0xff] %v5500
        %6525 = vst [vmem:[%s135 + $0x1798] sm:$0xff] %v5501
        %6526 = vst [vmem:[%s135 + $0x17a0] sm:$0xff] %v5502
        %6527 = vst [vmem:[%s135 + $0x17a8] sm:$0xff] %v5503
        %6528 = vst [vmem:[%s135 + $0x17b0] sm:$0xff] %v5504
        %6529 = vst [vmem:[%s135 + $0x17b8] sm:$0xff] %v5505
        %6530 = vst [vmem:[%s135 + $0x17c0] sm:$0xff] %v5506
        %6531 = vst [vmem:[%s135 + $0x17c8] sm:$0xff] %v5507
        %6532 = vst [vmem:[%s135 + $0x17d0] sm:$0xff] %v5508
        %6533 = vst [vmem:[%s135 + $0x17d8] sm:$0xff] %v5509
        %6534 = vst [vmem:[%s135 + $0x17e0] sm:$0xff] %v5510
        %6535 = vst [vmem:[%s135 + $0x17e8] sm:$0xff] %v5511
        %6536 = vst [vmem:[%s135 + $0x17f0] sm:$0xff] %v5512
        %6537 = vst [vmem:[%s135 + $0x17f8] sm:$0xff] %v5513
        %6538 = vst [vmem:[%s135 + $0x1800] sm:$0xff] %v5514
        %6539 = vst [vmem:[%s135 + $0x1808] sm:$0xff] %v5515
        %6540 = vst [vmem:[%s135 + $0x1810] sm:$0xff] %v5516
        %6541 = vst [vmem:[%s135 + $0x1818] sm:$0xff] %v5517
        %6542 = vst [vmem:[%s135 + $0x1820] sm:$0xff] %v5518
        %6543 = vst [vmem:[%s135 + $0x1828] sm:$0xff] %v5519
        %6544 = vst [vmem:[%s135 + $0x1830] sm:$0xff] %v5520
        %6545 = vst [vmem:[%s135 + $0x1838] sm:$0xff] %v5521
        %6546 = vst [vmem:[%s135 + $0x1840] sm:$0xff] %v5522
        %6547 = vst [vmem:[%s135 + $0x1848] sm:$0xff] %v5523
        %6548 = vst [vmem:[%s135 + $0x1850] sm:$0xff] %v5524
        %6549 = vst [vmem:[%s135 + $0x1858] sm:$0xff] %v5525
        %6550 = vst [vmem:[%s135 + $0x1860] sm:$0xff] %v5526
        %6551 = vst [vmem:[%s135 + $0x1868] sm:$0xff] %v5527
        %6552 = vst [vmem:[%s135 + $0x1870] sm:$0xff] %v5528
        %6553 = vst [vmem:[%s135 + $0x1878] sm:$0xff] %v5529
        %6554 = vst [vmem:[%s135 + $0x1880] sm:$0xff] %v5530
        %6555 = vst [vmem:[%s135 + $0x1888] sm:$0xff] %v5531
        %6556 = vst [vmem:[%s135 + $0x1890] sm:$0xff] %v5532
        %6557 = vst [vmem:[%s135 + $0x1898] sm:$0xff] %v5533
        %6558 = vst [vmem:[%s135 + $0x18a0] sm:$0xff] %v5534
        %6559 = vst [vmem:[%s135 + $0x18a8] sm:$0xff] %v5535
        %6560 = vst [vmem:[%s135 + $0x18b0] sm:$0xff] %v5536
        %6561 = vst [vmem:[%s135 + $0x18b8] sm:$0xff] %v5537
        %6562 = vst [vmem:[%s135 + $0x18c0] sm:$0xff] %v5538
        %6563 = vst [vmem:[%s135 + $0x18c8] sm:$0xff] %v5539
        %6564 = vst [vmem:[%s135 + $0x18d0] sm:$0xff] %v5540
        %6565 = vst [vmem:[%s135 + $0x18d8] sm:$0xff] %v5541
        %6566 = vst [vmem:[%s135 + $0x18e0] sm:$0xff] %v5542
        %6567 = vst [vmem:[%s135 + $0x18e8] sm:$0xff] %v5543
        %6568 = vst [vmem:[%s135 + $0x18f0] sm:$0xff] %v5544
        %6569 = vst [vmem:[%s135 + $0x18f8] sm:$0xff] %v5545
        %6570 = vst [vmem:[%s135 + $0x1900] sm:$0xff] %v5546
        %6571 = vst [vmem:[%s135 + $0x1908] sm:$0xff] %v5547
        %6572 = vst [vmem:[%s135 + $0x1910] sm:$0xff] %v5548
        %6573 = vst [vmem:[%s135 + $0x1918] sm:$0xff] %v5549
        %6574 = vst [vmem:[%s135 + $0x1920] sm:$0xff] %v5550
        %6575 = vst [vmem:[%s135 + $0x1928] sm:$0xff] %v5551
        %6576 = vst [vmem:[%s135 + $0x1930] sm:$0xff] %v5552
        %6577 = vst [vmem:[%s135 + $0x1938] sm:$0xff] %v5553
        %6578 = vst [vmem:[%s135 + $0x1940] sm:$0xff] %v5554
        %6579 = vst [vmem:[%s135 + $0x1948] sm:$0xff] %v5555
        %6580 = vst [vmem:[%s135 + $0x1950] sm:$0xff] %v5556
        %6581 = vst [vmem:[%s135 + $0x1958] sm:$0xff] %v5557
        %6582 = vst [vmem:[%s135 + $0x1960] sm:$0xff] %v5558
        %6583 = vst [vmem:[%s135 + $0x1968] sm:$0xff] %v5559
        %6584 = vst [vmem:[%s135 + $0x1970] sm:$0xff] %v5560
        %6585 = vst [vmem:[%s135 + $0x1978] sm:$0xff] %v5561
        %6586 = vst [vmem:[%s135 + $0x1980] sm:$0xff] %v5562
        %6587 = vst [vmem:[%s135 + $0x1988] sm:$0xff] %v5563
        %6588 = vst [vmem:[%s135 + $0x1990] sm:$0xff] %v5564
        %6589 = vst [vmem:[%s135 + $0x1998] sm:$0xff] %v5565
        %6590 = vst [vmem:[%s135 + $0x19a0] sm:$0xff] %v5566
        %6591 = vst [vmem:[%s135 + $0x19a8] sm:$0xff] %v5567
        %6592 = vst [vmem:[%s135 + $0x19b0] sm:$0xff] %v5568
        %6593 = vst [vmem:[%s135 + $0x19b8] sm:$0xff] %v5569
        %6594 = vst [vmem:[%s135 + $0x19c0] sm:$0xff] %v5570
        %6595 = vst [vmem:[%s135 + $0x19c8] sm:$0xff] %v5571
        %6596 = vst [vmem:[%s135 + $0x19d0] sm:$0xff] %v5572
        %6597 = vst [vmem:[%s135 + $0x19d8] sm:$0xff] %v5573
        %6598 = vst [vmem:[%s135 + $0x19e0] sm:$0xff] %v5574
        %6599 = vst [vmem:[%s135 + $0x19e8] sm:$0xff] %v5575
        %6600 = vst [vmem:[%s135 + $0x19f0] sm:$0xff] %v5576
        %6601 = vst [vmem:[%s135 + $0x19f8] sm:$0xff] %v5577
        %6602 = vst [vmem:[%s135 + $0x1a00] sm:$0xff] %v5578
        %6603 = vst [vmem:[%s135 + $0x1a08] sm:$0xff] %v5579
        %6604 = vst [vmem:[%s135 + $0x1a10] sm:$0xff] %v5580
        %6605 = vst [vmem:[%s135 + $0x1a18] sm:$0xff] %v5581
        %6606 = vst [vmem:[%s135 + $0x1a20] sm:$0xff] %v5582
        %6607 = vst [vmem:[%s135 + $0x1a28] sm:$0xff] %v5583
        %6608 = vst [vmem:[%s135 + $0x1a30] sm:$0xff] %v5584
        %6609 = vst [vmem:[%s135 + $0x1a38] sm:$0xff] %v5585
        %6610 = vst [vmem:[%s135 + $0x1a40] sm:$0xff] %v5586
        %6611 = vst [vmem:[%s135 + $0x1a48] sm:$0xff] %v5587
        %6612 = vst [vmem:[%s135 + $0x1a50] sm:$0xff] %v5588
        %6613 = vst [vmem:[%s135 + $0x1a58] sm:$0xff] %v5589
        %6614 = vst [vmem:[%s135 + $0x1a60] sm:$0xff] %v5590
        %6615 = vst [vmem:[%s135 + $0x1a68] sm:$0xff] %v5591
        %6616 = vst [vmem:[%s135 + $0x1a70] sm:$0xff] %v5592
        %6617 = vst [vmem:[%s135 + $0x1a78] sm:$0xff] %v5593
        %6618 = vst [vmem:[%s135 + $0x1a80] sm:$0xff] %v5594
        %6619 = vst [vmem:[%s135 + $0x1a88] sm:$0xff] %v5595
        %6620 = vst [vmem:[%s135 + $0x1a90] sm:$0xff] %v5596
        %6621 = vst [vmem:[%s135 + $0x1a98] sm:$0xff] %v5597
        %6622 = vst [vmem:[%s135 + $0x1aa0] sm:$0xff] %v5598
        %6623 = vst [vmem:[%s135 + $0x1aa8] sm:$0xff] %v5599
        %6624 = vst [vmem:[%s135 + $0x1ab0] sm:$0xff] %v5600
        %6625 = vst [vmem:[%s135 + $0x1ab8] sm:$0xff] %v5601
        %6626 = vst [vmem:[%s135 + $0x1ac0] sm:$0xff] %v5602
        %6627 = vst [vmem:[%s135 + $0x1ac8] sm:$0xff] %v5603
        %6628 = vst [vmem:[%s135 + $0x1ad0] sm:$0xff] %v5604
        %6629 = vst [vmem:[%s135 + $0x1ad8] sm:$0xff] %v5605
        %6630 = vst [vmem:[%s135 + $0x1ae0] sm:$0xff] %v5606
        %6631 = vst [vmem:[%s135 + $0x1ae8] sm:$0xff] %v5607
        %6632 = vst [vmem:[%s135 + $0x1af0] sm:$0xff] %v5608
        %6633 = vst [vmem:[%s135 + $0x1af8] sm:$0xff] %v5609
        %6634 = vst [vmem:[%s135 + $0x1b00] sm:$0xff] %v5610
        %6635 = vst [vmem:[%s135 + $0x1b08] sm:$0xff] %v5611
        %6636 = vst [vmem:[%s135 + $0x1b10] sm:$0xff] %v5612
        %6637 = vst [vmem:[%s135 + $0x1b18] sm:$0xff] %v5613
        %6638 = vst [vmem:[%s135 + $0x1b20] sm:$0xff] %v5614
        %6639 = vst [vmem:[%s135 + $0x1b28] sm:$0xff] %v5615
        %6640 = vst [vmem:[%s135 + $0x1b30] sm:$0xff] %v5616
        %6641 = vst [vmem:[%s135 + $0x1b38] sm:$0xff] %v5617
        %6642 = vst [vmem:[%s135 + $0x1b40] sm:$0xff] %v5618
        %6643 = vst [vmem:[%s135 + $0x1b48] sm:$0xff] %v5619
        %6644 = vst [vmem:[%s135 + $0x1b50] sm:$0xff] %v5620
        %6645 = vst [vmem:[%s135 + $0x1b58] sm:$0xff] %v5621
        %6646 = vst [vmem:[%s135 + $0x1b60] sm:$0xff] %v5622
        %6647 = vst [vmem:[%s135 + $0x1b68] sm:$0xff] %v5623
        %6648 = vst [vmem:[%s135 + $0x1b70] sm:$0xff] %v5624
        %6649 = vst [vmem:[%s135 + $0x1b78] sm:$0xff] %v5625
        %6650 = vst [vmem:[%s135 + $0x1b80] sm:$0xff] %v5626
        %6651 = vst [vmem:[%s135 + $0x1b88] sm:$0xff] %v5627
        %6652 = vst [vmem:[%s135 + $0x1b90] sm:$0xff] %v5628
        %6653 = vst [vmem:[%s135 + $0x1b98] sm:$0xff] %v5629
        %6654 = vst [vmem:[%s135 + $0x1ba0] sm:$0xff] %v5630
        %6655 = vst [vmem:[%s135 + $0x1ba8] sm:$0xff] %v5631
        %6656 = vst [vmem:[%s135 + $0x1bb0] sm:$0xff] %v5632
        %6657 = vst [vmem:[%s135 + $0x1bb8] sm:$0xff] %v5633
        %6658 = vst [vmem:[%s135 + $0x1bc0] sm:$0xff] %v5634
        %6659 = vst [vmem:[%s135 + $0x1bc8] sm:$0xff] %v5635
        %6660 = vst [vmem:[%s135 + $0x1bd0] sm:$0xff] %v5636
        %6661 = vst [vmem:[%s135 + $0x1bd8] sm:$0xff] %v5637
        %6662 = vst [vmem:[%s135 + $0x1be0] sm:$0xff] %v5638
        %6663 = vst [vmem:[%s135 + $0x1be8] sm:$0xff] %v5639
        %6664 = vst [vmem:[%s135 + $0x1bf0] sm:$0xff] %v5640
        %6665 = vst [vmem:[%s135 + $0x1bf8] sm:$0xff] %v5641
        %6666 = vst [vmem:[%s135 + $0x1c00] sm:$0xff] %v5642
        %6667 = vst [vmem:[%s135 + $0x1c08] sm:$0xff] %v5643
        %6668 = vst [vmem:[%s135 + $0x1c10] sm:$0xff] %v5644
        %6669 = vst [vmem:[%s135 + $0x1c18] sm:$0xff] %v5645
        %6670 = vst [vmem:[%s135 + $0x1c20] sm:$0xff] %v5646
        %6671 = vst [vmem:[%s135 + $0x1c28] sm:$0xff] %v5647
        %6672 = vst [vmem:[%s135 + $0x1c30] sm:$0xff] %v5648
        %6673 = vst [vmem:[%s135 + $0x1c38] sm:$0xff] %v5649
        %6674 = vst [vmem:[%s135 + $0x1c40] sm:$0xff] %v5650
        %6675 = vst [vmem:[%s135 + $0x1c48] sm:$0xff] %v5651
        %6676 = vst [vmem:[%s135 + $0x1c50] sm:$0xff] %v5652
        %6677 = vst [vmem:[%s135 + $0x1c58] sm:$0xff] %v5653
        %6678 = vst [vmem:[%s135 + $0x1c60] sm:$0xff] %v5654
        %6679 = vst [vmem:[%s135 + $0x1c68] sm:$0xff] %v5655
        %6680 = vst [vmem:[%s135 + $0x1c70] sm:$0xff] %v5656
        %6681 = vst [vmem:[%s135 + $0x1c78] sm:$0xff] %v5657
        %6682 = vst [vmem:[%s135 + $0x1c80] sm:$0xff] %v5658
        %6683 = vst [vmem:[%s135 + $0x1c88] sm:$0xff] %v5659
        %6684 = vst [vmem:[%s135 + $0x1c90] sm:$0xff] %v5660
        %6685 = vst [vmem:[%s135 + $0x1c98] sm:$0xff] %v5661
        %6686 = vst [vmem:[%s135 + $0x1ca0] sm:$0xff] %v5662
        %6687 = vst [vmem:[%s135 + $0x1ca8] sm:$0xff] %v5663
        %6688 = vst [vmem:[%s135 + $0x1cb0] sm:$0xff] %v5664
        %6689 = vst [vmem:[%s135 + $0x1cb8] sm:$0xff] %v5665
        %6690 = vst [vmem:[%s135 + $0x1cc0] sm:$0xff] %v5666
        %6691 = vst [vmem:[%s135 + $0x1cc8] sm:$0xff] %v5667
        %6692 = vst [vmem:[%s135 + $0x1cd0] sm:$0xff] %v5668
        %6693 = vst [vmem:[%s135 + $0x1cd8] sm:$0xff] %v5669
        %6694 = vst [vmem:[%s135 + $0x1ce0] sm:$0xff] %v5670
        %6695 = vst [vmem:[%s135 + $0x1ce8] sm:$0xff] %v5671
        %6696 = vst [vmem:[%s135 + $0x1cf0] sm:$0xff] %v5672
        %6697 = vst [vmem:[%s135 + $0x1cf8] sm:$0xff] %v5673
        %6698 = vst [vmem:[%s135 + $0x1d00] sm:$0xff] %v5674
        %6699 = vst [vmem:[%s135 + $0x1d08] sm:$0xff] %v5675
        %6700 = vst [vmem:[%s135 + $0x1d10] sm:$0xff] %v5676
        %6701 = vst [vmem:[%s135 + $0x1d18] sm:$0xff] %v5677
        %6702 = vst [vmem:[%s135 + $0x1d20] sm:$0xff] %v5678
        %6703 = vst [vmem:[%s135 + $0x1d28] sm:$0xff] %v5679
        %6704 = vst [vmem:[%s135 + $0x1d30] sm:$0xff] %v5680
        %6705 = vst [vmem:[%s135 + $0x1d38] sm:$0xff] %v5681
        %6706 = vst [vmem:[%s135 + $0x1d40] sm:$0xff] %v5682
        %6707 = vst [vmem:[%s135 + $0x1d48] sm:$0xff] %v5683
        %6708 = vst [vmem:[%s135 + $0x1d50] sm:$0xff] %v5684
        %6709 = vst [vmem:[%s135 + $0x1d58] sm:$0xff] %v5685
        %6710 = vst [vmem:[%s135 + $0x1d60] sm:$0xff] %v5686
        %6711 = vst [vmem:[%s135 + $0x1d68] sm:$0xff] %v5687
        %6712 = vst [vmem:[%s135 + $0x1d70] sm:$0xff] %v5688
        %6713 = vst [vmem:[%s135 + $0x1d78] sm:$0xff] %v5689
        %6714 = vst [vmem:[%s135 + $0x1d80] sm:$0xff] %v5690
        %6715 = vst [vmem:[%s135 + $0x1d88] sm:$0xff] %v5691
        %6716 = vst [vmem:[%s135 + $0x1d90] sm:$0xff] %v5692
        %6717 = vst [vmem:[%s135 + $0x1d98] sm:$0xff] %v5693
        %6718 = vst [vmem:[%s135 + $0x1da0] sm:$0xff] %v5694
        %6719 = vst [vmem:[%s135 + $0x1da8] sm:$0xff] %v5695
        %6720 = vst [vmem:[%s135 + $0x1db0] sm:$0xff] %v5696
        %6721 = vst [vmem:[%s135 + $0x1db8] sm:$0xff] %v5697
        %6722 = vst [vmem:[%s135 + $0x1dc0] sm:$0xff] %v5698
        %6723 = vst [vmem:[%s135 + $0x1dc8] sm:$0xff] %v5699
        %6724 = vst [vmem:[%s135 + $0x1dd0] sm:$0xff] %v5700
        %6725 = vst [vmem:[%s135 + $0x1dd8] sm:$0xff] %v5701
        %6726 = vst [vmem:[%s135 + $0x1de0] sm:$0xff] %v5702
        %6727 = vst [vmem:[%s135 + $0x1de8] sm:$0xff] %v5703
        %6728 = vst [vmem:[%s135 + $0x1df0] sm:$0xff] %v5704
        %6729 = vst [vmem:[%s135 + $0x1df8] sm:$0xff] %v5705
        %6730 = vst [vmem:[%s135 + $0x1e00] sm:$0xff] %v5706
        %6731 = vst [vmem:[%s135 + $0x1e08] sm:$0xff] %v5707
        %6732 = vst [vmem:[%s135 + $0x1e10] sm:$0xff] %v5708
        %6733 = vst [vmem:[%s135 + $0x1e18] sm:$0xff] %v5709
        %6734 = vst [vmem:[%s135 + $0x1e20] sm:$0xff] %v5710
        %6735 = vst [vmem:[%s135 + $0x1e28] sm:$0xff] %v5711
        %6736 = vst [vmem:[%s135 + $0x1e30] sm:$0xff] %v5712
        %6737 = vst [vmem:[%s135 + $0x1e38] sm:$0xff] %v5713
        %6738 = vst [vmem:[%s135 + $0x1e40] sm:$0xff] %v5714
        %6739 = vst [vmem:[%s135 + $0x1e48] sm:$0xff] %v5715
        %6740 = vst [vmem:[%s135 + $0x1e50] sm:$0xff] %v5716
        %6741 = vst [vmem:[%s135 + $0x1e58] sm:$0xff] %v5717
        %6742 = vst [vmem:[%s135 + $0x1e60] sm:$0xff] %v5718
        %6743 = vst [vmem:[%s135 + $0x1e68] sm:$0xff] %v5719
        %6744 = vst [vmem:[%s135 + $0x1e70] sm:$0xff] %v5720
        %6745 = vst [vmem:[%s135 + $0x1e78] sm:$0xff] %v5721
        %6746 = vst [vmem:[%s135 + $0x1e80] sm:$0xff] %v5722
        %6747 = vst [vmem:[%s135 + $0x1e88] sm:$0xff] %v5723
        %6748 = vst [vmem:[%s135 + $0x1e90] sm:$0xff] %v5724
        %6749 = vst [vmem:[%s135 + $0x1e98] sm:$0xff] %v5725
        %6750 = vst [vmem:[%s135 + $0x1ea0] sm:$0xff] %v5726
        %6751 = vst [vmem:[%s135 + $0x1ea8] sm:$0xff] %v5727
        %6752 = vst [vmem:[%s135 + $0x1eb0] sm:$0xff] %v5728
        %6753 = vst [vmem:[%s135 + $0x1eb8] sm:$0xff] %v5729
        %6754 = vst [vmem:[%s135 + $0x1ec0] sm:$0xff] %v5730
        %6755 = vst [vmem:[%s135 + $0x1ec8] sm:$0xff] %v5731
        %6756 = vst [vmem:[%s135 + $0x1ed0] sm:$0xff] %v5732
        %6757 = vst [vmem:[%s135 + $0x1ed8] sm:$0xff] %v5733
        %6758 = vst [vmem:[%s135 + $0x1ee0] sm:$0xff] %v5734
        %6759 = vst [vmem:[%s135 + $0x1ee8] sm:$0xff] %v5735
        %6760 = vst [vmem:[%s135 + $0x1ef0] sm:$0xff] %v5736
        %6761 = vst [vmem:[%s135 + $0x1ef8] sm:$0xff] %v5737
        %6762 = vst [vmem:[%s135 + $0x1f00] sm:$0xff] %v5738
        %6763 = vst [vmem:[%s135 + $0x1f08] sm:$0xff] %v5739
        %6764 = vst [vmem:[%s135 + $0x1f10] sm:$0xff] %v5740
        %6765 = vst [vmem:[%s135 + $0x1f18] sm:$0xff] %v5741
        %6766 = vst [vmem:[%s135 + $0x1f20] sm:$0xff] %v5742
        %6767 = vst [vmem:[%s135 + $0x1f28] sm:$0xff] %v5743
        %6768 = vst [vmem:[%s135 + $0x1f30] sm:$0xff] %v5744
        %6769 = vst [vmem:[%s135 + $0x1f38] sm:$0xff] %v5745
        %6770 = vst [vmem:[%s135 + $0x1f40] sm:$0xff] %v5746
        %6771 = vst [vmem:[%s135 + $0x1f48] sm:$0xff] %v5747
        %6772 = vst [vmem:[%s135 + $0x1f50] sm:$0xff] %v5748
        %6773 = vst [vmem:[%s135 + $0x1f58] sm:$0xff] %v5749
        %6774 = vst [vmem:[%s135 + $0x1f60] sm:$0xff] %v5750
        %6775 = vst [vmem:[%s135 + $0x1f68] sm:$0xff] %v5751
        %6776 = vst [vmem:[%s135 + $0x1f70] sm:$0xff] %v5752
        %6777 = vst [vmem:[%s135 + $0x1f78] sm:$0xff] %v5753
        %6778 = vst [vmem:[%s135 + $0x1f80] sm:$0xff] %v5754
        %6779 = vst [vmem:[%s135 + $0x1f88] sm:$0xff] %v5755
        %6780 = vst [vmem:[%s135 + $0x1f90] sm:$0xff] %v5756
        %6781 = vst [vmem:[%s135 + $0x1f98] sm:$0xff] %v5757
        %6782 = vst [vmem:[%s135 + $0x1fa0] sm:$0xff] %v5758
        %6783 = vst [vmem:[%s135 + $0x1fa8] sm:$0xff] %v5759
        %6784 = vst [vmem:[%s135 + $0x1fb0] sm:$0xff] %v5760
        %6785 = vst [vmem:[%s135 + $0x1fb8] sm:$0xff] %v5761
        %6786 = vst [vmem:[%s135 + $0x1fc0] sm:$0xff] %v5762
        %6787 = vst [vmem:[%s135 + $0x1fc8] sm:$0xff] %v5763
        %6788 = vst [vmem:[%s135 + $0x1fd0] sm:$0xff] %v5764
        %6789 = vst [vmem:[%s135 + $0x1fd8] sm:$0xff] %v5765
        %6790 = vst [vmem:[%s135 + $0x1fe0] sm:$0xff] %v5766
        %6791 = vst [vmem:[%s135 + $0x1fe8] sm:$0xff] %v5767
        %6792 = vst [vmem:[%s135 + $0x1ff0] sm:$0xff] %v5768
        %6793 = vst [vmem:[%s135 + $0x1ff8] sm:$0xff] %v5769
        %s6794 = sand.u32 %s52, 1
        %s6795 = scalar_lea.sflag [#allocation4], %s6794
        %s6796 = sand.u32 %s52, 1
        %s6797 = smul.addr %s6796, 8192
        %s6798 = scalar_lea.vmem [#allocation5], %s6797
        // Predicated region
        $region29: #{tpu_custom_call.1} parent=23 // pred_check
          %p6799 = pneg %p62
        $region30: #{tpu_custom_call.1} parent=23 // pred_check_branch
          %6801 = sbr.rel (%p6799) target = $region32
        $region31: #{tpu_custom_call.1} parent=23 // pred_region
          %s6802 = smul.u32 512, %s18
          %s6804 = ssub.s32 131072, 131072
          %6805 = vsyncadd %s6795, %s6804
          %s6806 = smul.addr %s6802, 2
          %s6807 = smul.addr %s6806, 128
          %s6808 = scalar_lea.hbm %s1, %s6807
          %s6809 = sshll.u32 %s6798, 4
          %s6810 = int_to_ptr.vmem [resolvable:$true] %s6809
          %6815 = dma.vmem_to_hbm [thread:$0]  %s6810, 131072, %s6808, %s6795, 256, 256, 16
        $region32: #{tpu_custom_call.1} parent=23 // pred_fallthru
          _
      $region24: #{tpu_custom_call.1} parent=5 // pred_fallthru
        _
      %p6816 = scmp.le.s32.totalorder 2, %s13
      // Predicated region
      $region33: #{tpu_custom_call.1} parent=5 // pred_check
        %p6817 = pneg %p6816
      $region34: #{tpu_custom_call.1} parent=5 // pred_check_branch
        %6819 = sbr.rel (%p6817) target = $region36
      $region35: #{tpu_custom_call.1} parent=5 // pred_region
        %s6820 = ssub.s32 %s13, 2
        // Predicated region
        $region37: #{tpu_custom_call.1} parent=35 // pred_check
          %p6821 = pneg %p68
        $region38: #{tpu_custom_call.1} parent=35 // pred_check_branch
          %6823 = sbr.rel (%p6821) target = $region40
        $region39: #{tpu_custom_call.1} parent=35 // pred_region
          %s6824 = sand.u32 %s53, 1
          %s6825 = scalar_lea.sflag [#allocation4], %s6824
          %s6826 = sand.u32 %s53, 1
          %s6827 = smul.addr %s6826, 8192
          %s6828 = scalar_lea.vmem [#allocation5], %s6827
          %6829 = dma.done %s6825, 131072
        $region40: #{tpu_custom_call.1} parent=35 // pred_fallthru
          _
      $region36: #{tpu_custom_call.1} parent=5 // pred_fallthru
        _
    $region6: #{tpu_custom_call.1} parent=1 // loop_footer
      %s17 = sadd.s32 1, %s13
    $region7: #{tpu_custom_call.1} parent=1 // loop_footer_branch
      %12 = sbr.rel target = $region3
    $region8: #{tpu_custom_call.1} parent=1 // loop_exit
      _
    %6830 = vsyncpa [#allocation3], 1
    %s6831 = scalar_lea.sflag [#allocation3], 1
    %6832 = vsyncpa %s6831, 1
    %6833 = vsyncpa [#allocation4], 1
    %s6834 = scalar_lea.sflag [#allocation4], 1
    %6835 = vsyncpa %s6834, 1

</llo_original>
